<compile_context>
chip_gen: v5e
topology: v5e:2x2
jax: 0.10.0
libtpu: 0.0.40
codegen_flags: <defaults>
</compile_context>

<pallas_src>
import functools

import jax
import jax.numpy as jnp
from jax.experimental import pallas as pl
from jax.experimental.pallas import tpu as pltpu


def _round_up(x, m):
    return (x + m - 1) // m * m


# --------------------------------------------------------------------------------------
# Direct convolution kernel: P kernel-tap matmuls on the MXU, f32 accumulation.
# --------------------------------------------------------------------------------------
def _conv_kernel(x_ref, w_ref, b_ref, o_ref, *, kh, kw, wi, m):
    # x_ref : (1, S_p, Ci)       flattened (padded) NHWC input for one batch element
    # w_ref : (P, Ci, co_t)      per-tap weight slices for one Co tile
    # b_ref : (1, co_t)          bias (f32)
    # o_ref : (1, M_p, co_t)     flattened output rows (y * Wi + x)
    dn = (((1,), (0,)), ((), ()))          # contract Ci (lane dim of lhs, sublane dim of rhs)
    acc = None
    for p in range(kh * kw):               # short static loop, fully unrolled
        off = (p // kw) * wi + (p % kw)    # static row offset of this kernel tap
        xs = x_ref[0, pl.ds(off, m), :]    # (m, Ci)
        part = jax.lax.dot_general(xs, w_ref[p], dn,
                                   preferred_element_type=jnp.float32)
        acc = part if acc is None else acc + part
    o_ref[0] = (acc + b_ref[...]).astype(o_ref.dtype)


def _pick_co_tiling(co, ci, p, m_p, s_p, itemsize, budget):
    """Pick (Co_padded, co_tile) so double-buffered blocks fit the VMEM budget."""
    def need(co_t):
        return itemsize * (2 * s_p * ci + 2 * p * ci * co_t + 2 * m_p * co_t) + 8 * co_t
    if need(co) <= budget:
        return co, co                      # single full-extent tile, no channel padding
    co_p = _round_up(co, 128)
    cands = [c for c in range(co_p, 0, -128) if co_p % c == 0]
    for c in cands:
        if need(c) <= budget:
            return co_p, c
    return co_p, 128


def conv2d_valid(x_nhwc, w, b, *, co_budget_bytes=24 << 20):
    """Stride-1 VALID Conv2d.  x_nhwc: (B, Hi, Wi, Ci); w: (Co, Ci, KH, KW); b: (Co,).
    Returns (B, Ho, Wo, Co) with Ho = Hi-KH+1, Wo = Wi-KW+1."""
    B, Hi, Wi, Ci = x_nhwc.shape
    Co, Ci_w, KH, KW = w.shape
    assert Ci_w == Ci
    Ho, Wo = Hi - KH + 1, Wi - KW + 1
    assert Ho >= 1 and Wo >= 1
    P = KH * KW
    M = Ho * Wi                              # compute full-width rows; junk cols sliced later
    M_p = _round_up(M, 8)
    S_need = (KH - 1) * Wi + (KW - 1) + M_p  # max tap offset + rows read per tap
    S_p = _round_up(max(S_need, Hi * Wi), 8)

    itemsize = jnp.dtype(x_nhwc.dtype).itemsize
    Co_p, co_t = _pick_co_tiling(Co, Ci, P, M_p, S_p, itemsize, co_budget_bytes)
    nj = Co_p // co_t

    x_flat = x_nhwc.reshape(B, Hi * Wi, Ci)
    if S_p > Hi * Wi:
        x_flat = jnp.pad(x_flat, ((0, 0), (0, S_p - Hi * Wi), (0, 0)))

    wp = jnp.transpose(w, (2, 3, 1, 0)).reshape(P, Ci, Co)     # (tap, Ci, Co)
    bp = b.reshape(1, Co).astype(jnp.float32)
    if Co_p > Co:
        wp = jnp.pad(wp, ((0, 0), (0, 0), (0, Co_p - Co)))
        bp = jnp.pad(bp, ((0, 0), (0, Co_p - Co)))
    wp = wp.astype(x_nhwc.dtype)

    block_bytes = (itemsize * (2 * S_p * Ci + 2 * P * Ci * co_t + 2 * M_p * co_t)
                   + 8 * co_t)
    vmem_limit = int(min(max(block_bytes + (8 << 20), 32 << 20), 56 << 20))

    kern = functools.partial(_conv_kernel, kh=KH, kw=KW, wi=Wi, m=M_p)
    out = pl.pallas_call(
        kern,
        out_shape=jax.ShapeDtypeStruct((B, M_p, Co_p), x_nhwc.dtype),
        grid_spec=pltpu.PrefetchScalarGridSpec(
            num_scalar_prefetch=0,
            grid=(nj, B),                                       # weights reused across batch
            in_specs=[
                pl.BlockSpec((1, S_p, Ci), lambda j, bb: (bb, 0, 0)),
                pl.BlockSpec((P, Ci, co_t), lambda j, bb: (0, 0, j)),
                pl.BlockSpec((1, co_t), lambda j, bb: (0, j)),
            ],
            out_specs=pl.BlockSpec((1, M_p, co_t), lambda j, bb: (bb, 0, j)),
        ),
        compiler_params=pltpu.CompilerParams(
            dimension_semantics=("parallel", "parallel"),
            vmem_limit_bytes=vmem_limit,
        ),
    )(x_flat, wp, bp)

    out = out[:, :M, :Co].reshape(B, Ho, Wi, Co)[:, :, :Wo, :]
    return out


def conv_transpose2d_valid(x_nhwc, wt, b):
    """Stride-1, pad-0 ConvTranspose2d.  wt: (Cin, Cout, KH, KW) (PyTorch layout)."""
    KH, KW = wt.shape[2], wt.shape[3]
    xp = jnp.pad(x_nhwc, ((0, 0), (KH - 1, KH - 1), (KW - 1, KW - 1), (0, 0)))
    w_conv = jnp.transpose(wt[:, :, ::-1, ::-1], (1, 0, 2, 3))   # (Cout, Cin, KH, KW)
    return conv2d_valid(xp, w_conv, b)


# --------------------------------------------------------------------------------------
# BatchNorm apply (per-channel scale/shift), elementwise Pallas kernel.
# --------------------------------------------------------------------------------------
def _bn_kernel(x_ref, sc_ref, sh_ref, o_ref):
    o_ref[...] = x_ref[...] * sc_ref[...] + sh_ref[...]


def _bn_apply(y_flat, scale, shift):
    """y_flat: (B, N, C); scale/shift: (1, 1, C)."""
    B, N, C = y_flat.shape
    return pl.pallas_call(
        _bn_kernel,
        out_shape=jax.ShapeDtypeStruct((B, N, C), y_flat.dtype),
        grid_spec=pltpu.PrefetchScalarGridSpec(
            num_scalar_prefetch=0,
            grid=(B,),
            in_specs=[
                pl.BlockSpec((1, N, C), lambda bb: (bb, 0, 0)),
                pl.BlockSpec((1, 1, C), lambda bb: (0, 0, 0)),
                pl.BlockSpec((1, 1, C), lambda bb: (0, 0, 0)),
            ],
            out_specs=pl.BlockSpec((1, N, C), lambda bb: (bb, 0, 0)),
        ),
        compiler_params=pltpu.CompilerParams(dimension_semantics=("parallel",)),
    )(y_flat, scale, shift)


# --------------------------------------------------------------------------------------
# TFblock_v4 forward
# --------------------------------------------------------------------------------------
@jax.jit
def tfblock_v4_forward(x, params):
    """x: (B, dim_in, H, W) NCHW, exactly like the PyTorch module."""
    eps = 1e-5
    xh = jnp.transpose(x, (0, 2, 3, 1))                               # NHWC
    # encoder: Conv2d(dim_in -> dim_inter, kernel (4,2))
    y = conv2d_valid(xh, params["enc_w"], params["enc_b"])            # (B, H-3, W-1, dim_inter)

    # bn1: BatchNorm2d, training-mode (biased) batch statistics.
    # TODO(synk): the per-channel mean/var reduction is left to XLA; only the apply is Pallas.
    mean = jnp.mean(y, axis=(0, 1, 2))
    var = jnp.mean(jnp.square(y - mean), axis=(0, 1, 2))
    scale = params["bn_gamma"] * jax.lax.rsqrt(var + eps)
    shift = params["bn_beta"] - mean * scale
    Bn, Hn, Wn, Cn = y.shape
    y = _bn_apply(y.reshape(Bn, Hn * Wn, Cn),
                  scale.reshape(1, 1, Cn).astype(y.dtype),
                  shift.reshape(1, 1, Cn).astype(y.dtype)).reshape(Bn, Hn, Wn, Cn)

    # decoder / decoder1: ConvTranspose2d, stride 1, pad 0.
    y = conv_transpose2d_valid(y, params["dec_w"], params["dec_b"])
    y = conv_transpose2d_valid(y, params["dec1_w"], params["dec1_b"])
    return jnp.transpose(y, (0, 3, 1, 2))                             # back to NCHW


def init_tfblock_v4_params(key, dim_in=512, dim_inter=1024, dtype=jnp.float32):
    mid = (dim_in + dim_inter) // 2
    ks = jax.random.split(key, 8)

    def uni(k, shape, fan_in):
        bound = float(fan_in) ** -0.5
        return jax.random.uniform(k, shape, dtype, -bound, bound)

    return {
        # Conv2d weight layout (O, I, KH, KW), like PyTorch.
        "enc_w": uni(ks[0], (dim_inter, dim_in, 4, 2), dim_in * 4 * 2),
        "enc_b": uni(ks[1], (dim_inter,), dim_in * 4 * 2),
        "bn_gamma": 1.0 + 0.1 * jax.random.normal(ks[2], (dim_inter,), dtype),
        "bn_beta": 0.1 * jax.random.normal(ks[3], (dim_inter,), dtype),
        # ConvTranspose2d weight layout (Cin, Cout, KH, KW), like PyTorch.
        "dec_w": uni(ks[4], (dim_inter, mid, 3, 3), dim_inter * 3 * 3),
        "dec_b": uni(ks[5], (mid,), dim_inter * 3 * 3),
        "dec1_w": uni(ks[6], (mid, dim_in, 5, 5), mid * 5 * 5),
        "dec1_b": uni(ks[7], (dim_in,), mid * 5 * 5),
    }


# --------------------------------------------------------------------------------------
# Pure-XLA reference (for correctness checking only).
# --------------------------------------------------------------------------------------
def _ref_forward(x, params, eps=1e-5):
    dn = ("NCHW", "OIHW", "NCHW")
    hi = jax.lax.Precision.HIGHEST
    y = jax.lax.conv_general_dilated(x, params["enc_w"], (1, 1), "VALID",
                                     dimension_numbers=dn, precision=hi)
    y = y + params["enc_b"][None, :, None, None]
    mean = jnp.mean(y, axis=(0, 2, 3), keepdims=True)
    var = jnp.mean(jnp.square(y - mean), axis=(0, 2, 3), keepdims=True)
    y = (y - mean) * jax.lax.rsqrt(var + eps)
    y = y * params["bn_gamma"][None, :, None, None] + params["bn_beta"][None, :, None, None]

    def conv_t(z, wt, bias):
        kh, kw = wt.shape[2], wt.shape[3]
        zp = jnp.pad(z, ((0, 0), (0, 0), (kh - 1, kh - 1), (kw - 1, kw - 1)))
        wc = jnp.transpose(wt[:, :, ::-1, ::-1], (1, 0, 2, 3))
        o = jax.lax.conv_general_dilated(zp, wc, (1, 1), "VALID",
                                         dimension_numbers=dn, precision=hi)
        return o + bias[None, :, None, None]

    y = conv_t(y, params["dec_w"], params["dec_b"])
    y = conv_t(y, params["dec1_w"], params["dec1_b"])
    return y


if __name__ == "__main__":
    key = jax.random.PRNGKey(0)
    kx, kp = jax.random.split(key)

    # Small shapes consistent with the module (defaults 512/1024 scaled down).
    dim_in, dim_inter = 32, 64
    B, H, W = 2, 8, 8
    params = init_tfblock_v4_params(kp, dim_in=dim_in, dim_inter=dim_inter)
    x = jax.random.normal(kx, (B, dim_in, H, W), dtype=jnp.float32)

    out = jax.block_until_ready(tfblock_v4_forward(x, params))
    ref = jax.block_until_ready(_ref_forward(x, params))

    assert out.shape == (B, dim_in, H + 3, W + 5), out.shape
    assert bool(jnp.all(jnp.isfinite(out)))
    assert bool(jnp.allclose(out, ref, atol=2e-3, rtol=2e-3)), \
        float(jnp.max(jnp.abs(out - ref)))
    print("KERNEL_OK")
</pallas_src>

<mosaic_0001>
module attributes {stable_mosaic.version = 11 : i64} {
  func.func @_conv_kernel(%arg0: i32, %arg1: i32, %arg2: memref<1x72x32xf32, #tpu.memory_space<vmem>>, %arg3: memref<8x32x64xf32, #tpu.memory_space<vmem>>, %arg4: memref<1x64xf32, #tpu.memory_space<vmem>>, %arg5: memref<1x40x64xf32, #tpu.memory_space<vmem>>) attributes {dimension_semantics = [#tpu.dimension_semantics<parallel>, #tpu.dimension_semantics<parallel>], iteration_bounds = array<i64: 1, 2>, scalar_prefetch = 0 : i64, scratch_operands = 0 : i64, tpu.core_type = #tpu.core_type<tc>, window_params = [{transform_indices = @transform_0, window_bounds = array<i64: 1, 72, 32>}, {transform_indices = @transform_1, window_bounds = array<i64: 8, 32, 64>}, {transform_indices = @transform_2, window_bounds = array<i64: 1, 64>}, {transform_indices = @transform_3, window_bounds = array<i64: 1, 40, 64>}]} {
    %c0 = arith.constant 0 : index
    %c0_0 = arith.constant 0 : index
    %c0_1 = arith.constant 0 : index
    %0 = vector.load %arg2[%c0, %c0_0, %c0_1] : memref<1x72x32xf32, #tpu.memory_space<vmem>>, vector<1x40x32xf32>
    %1 = vector.shape_cast %0 : vector<1x40x32xf32> to vector<40x32xf32>
    %c0_2 = arith.constant 0 : index
    %c0_3 = arith.constant 0 : index
    %c0_4 = arith.constant 0 : index
    %2 = vector.load %arg3[%c0_2, %c0_3, %c0_4] : memref<8x32x64xf32, #tpu.memory_space<vmem>>, vector<1x32x64xf32>
    %3 = vector.shape_cast %2 : vector<1x32x64xf32> to vector<32x64xf32>
    %cst = arith.constant dense<0.000000e+00> : vector<40x64xf32>
    %4 = tpu.matmul %1, %3, %cst {dimension_numbers = #tpu.dot_dimension_numbers<[1], [0], [0], [1], [0, 0, 1, 1], [], []>} : vector<40x32xf32>, vector<32x64xf32>, vector<40x64xf32> -> vector<40x64xf32>
    %c0_5 = arith.constant 0 : index
    %c1 = arith.constant 1 : index
    %c0_6 = arith.constant 0 : index
    %5 = vector.load %arg2[%c0_5, %c1, %c0_6] : memref<1x72x32xf32, #tpu.memory_space<vmem>>, vector<1x40x32xf32>
    %6 = vector.shape_cast %5 : vector<1x40x32xf32> to vector<40x32xf32>
    %c1_7 = arith.constant 1 : index
    %c0_8 = arith.constant 0 : index
    %c0_9 = arith.constant 0 : index
    %7 = vector.load %arg3[%c1_7, %c0_8, %c0_9] : memref<8x32x64xf32, #tpu.memory_space<vmem>>, vector<1x32x64xf32>
    %8 = vector.shape_cast %7 : vector<1x32x64xf32> to vector<32x64xf32>
    %cst_10 = arith.constant dense<0.000000e+00> : vector<40x64xf32>
    %9 = tpu.matmul %6, %8, %cst_10 {dimension_numbers = #tpu.dot_dimension_numbers<[1], [0], [0], [1], [0, 0, 1, 1], [], []>} : vector<40x32xf32>, vector<32x64xf32>, vector<40x64xf32> -> vector<40x64xf32>
    %10 = arith.addf %4, %9 : vector<40x64xf32>
    %c0_11 = arith.constant 0 : index
    %c8 = arith.constant 8 : index
    %c0_12 = arith.constant 0 : index
    %11 = vector.load %arg2[%c0_11, %c8, %c0_12] : memref<1x72x32xf32, #tpu.memory_space<vmem>>, vector<1x40x32xf32>
    %12 = vector.shape_cast %11 : vector<1x40x32xf32> to vector<40x32xf32>
    %c2 = arith.constant 2 : index
    %c0_13 = arith.constant 0 : index
    %c0_14 = arith.constant 0 : index
    %13 = vector.load %arg3[%c2, %c0_13, %c0_14] : memref<8x32x64xf32, #tpu.memory_space<vmem>>, vector<1x32x64xf32>
    %14 = vector.shape_cast %13 : vector<1x32x64xf32> to vector<32x64xf32>
    %cst_15 = arith.constant dense<0.000000e+00> : vector<40x64xf32>
    %15 = tpu.matmul %12, %14, %cst_15 {dimension_numbers = #tpu.dot_dimension_numbers<[1], [0], [0], [1], [0, 0, 1, 1], [], []>} : vector<40x32xf32>, vector<32x64xf32>, vector<40x64xf32> -> vector<40x64xf32>
    %16 = arith.addf %10, %15 : vector<40x64xf32>
    %c0_16 = arith.constant 0 : index
    %c9 = arith.constant 9 : index
    %c0_17 = arith.constant 0 : index
    %17 = vector.load %arg2[%c0_16, %c9, %c0_17] : memref<1x72x32xf32, #tpu.memory_space<vmem>>, vector<1x40x32xf32>
    %18 = vector.shape_cast %17 : vector<1x40x32xf32> to vector<40x32xf32>
    %c3 = arith.constant 3 : index
    %c0_18 = arith.constant 0 : index
    %c0_19 = arith.constant 0 : index
    %19 = vector.load %arg3[%c3, %c0_18, %c0_19] : memref<8x32x64xf32, #tpu.memory_space<vmem>>, vector<1x32x64xf32>
    %20 = vector.shape_cast %19 : vector<1x32x64xf32> to vector<32x64xf32>
    %cst_20 = arith.constant dense<0.000000e+00> : vector<40x64xf32>
    %21 = tpu.matmul %18, %20, %cst_20 {dimension_numbers = #tpu.dot_dimension_numbers<[1], [0], [0], [1], [0, 0, 1, 1], [], []>} : vector<40x32xf32>, vector<32x64xf32>, vector<40x64xf32> -> vector<40x64xf32>
    %22 = arith.addf %16, %21 : vector<40x64xf32>
    %c0_21 = arith.constant 0 : index
    %c16 = arith.constant 16 : index
    %c0_22 = arith.constant 0 : index
    %23 = vector.load %arg2[%c0_21, %c16, %c0_22] : memref<1x72x32xf32, #tpu.memory_space<vmem>>, vector<1x40x32xf32>
    %24 = vector.shape_cast %23 : vector<1x40x32xf32> to vector<40x32xf32>
    %c4 = arith.constant 4 : index
    %c0_23 = arith.constant 0 : index
    %c0_24 = arith.constant 0 : index
    %25 = vector.load %arg3[%c4, %c0_23, %c0_24] : memref<8x32x64xf32, #tpu.memory_space<vmem>>, vector<1x32x64xf32>
    %26 = vector.shape_cast %25 : vector<1x32x64xf32> to vector<32x64xf32>
    %cst_25 = arith.constant dense<0.000000e+00> : vector<40x64xf32>
    %27 = tpu.matmul %24, %26, %cst_25 {dimension_numbers = #tpu.dot_dimension_numbers<[1], [0], [0], [1], [0, 0, 1, 1], [], []>} : vector<40x32xf32>, vector<32x64xf32>, vector<40x64xf32> -> vector<40x64xf32>
    %28 = arith.addf %22, %27 : vector<40x64xf32>
    %c0_26 = arith.constant 0 : index
    %c17 = arith.constant 17 : index
    %c0_27 = arith.constant 0 : index
    %29 = vector.load %arg2[%c0_26, %c17, %c0_27] : memref<1x72x32xf32, #tpu.memory_space<vmem>>, vector<1x40x32xf32>
    %30 = vector.shape_cast %29 : vector<1x40x32xf32> to vector<40x32xf32>
    %c5 = arith.constant 5 : index
    %c0_28 = arith.constant 0 : index
    %c0_29 = arith.constant 0 : index
    %31 = vector.load %arg3[%c5, %c0_28, %c0_29] : memref<8x32x64xf32, #tpu.memory_space<vmem>>, vector<1x32x64xf32>
    %32 = vector.shape_cast %31 : vector<1x32x64xf32> to vector<32x64xf32>
    %cst_30 = arith.constant dense<0.000000e+00> : vector<40x64xf32>
    %33 = tpu.matmul %30, %32, %cst_30 {dimension_numbers = #tpu.dot_dimension_numbers<[1], [0], [0], [1], [0, 0, 1, 1], [], []>} : vector<40x32xf32>, vector<32x64xf32>, vector<40x64xf32> -> vector<40x64xf32>
    %34 = arith.addf %28, %33 : vector<40x64xf32>
    %c0_31 = arith.constant 0 : index
    %c24 = arith.constant 24 : index
    %c0_32 = arith.constant 0 : index
    %35 = vector.load %arg2[%c0_31, %c24, %c0_32] : memref<1x72x32xf32, #tpu.memory_space<vmem>>, vector<1x40x32xf32>
    %36 = vector.shape_cast %35 : vector<1x40x32xf32> to vector<40x32xf32>
    %c6 = arith.constant 6 : index
    %c0_33 = arith.constant 0 : index
    %c0_34 = arith.constant 0 : index
    %37 = vector.load %arg3[%c6, %c0_33, %c0_34] : memref<8x32x64xf32, #tpu.memory_space<vmem>>, vector<1x32x64xf32>
    %38 = vector.shape_cast %37 : vector<1x32x64xf32> to vector<32x64xf32>
    %cst_35 = arith.constant dense<0.000000e+00> : vector<40x64xf32>
    %39 = tpu.matmul %36, %38, %cst_35 {dimension_numbers = #tpu.dot_dimension_numbers<[1], [0], [0], [1], [0, 0, 1, 1], [], []>} : vector<40x32xf32>, vector<32x64xf32>, vector<40x64xf32> -> vector<40x64xf32>
    %40 = arith.addf %34, %39 : vector<40x64xf32>
    %c0_36 = arith.constant 0 : index
    %c25 = arith.constant 25 : index
    %c0_37 = arith.constant 0 : index
    %41 = vector.load %arg2[%c0_36, %c25, %c0_37] : memref<1x72x32xf32, #tpu.memory_space<vmem>>, vector<1x40x32xf32>
    %42 = vector.shape_cast %41 : vector<1x40x32xf32> to vector<40x32xf32>
    %c7 = arith.constant 7 : index
    %c0_38 = arith.constant 0 : index
    %c0_39 = arith.constant 0 : index
    %43 = vector.load %arg3[%c7, %c0_38, %c0_39] : memref<8x32x64xf32, #tpu.memory_space<vmem>>, vector<1x32x64xf32>
    %44 = vector.shape_cast %43 : vector<1x32x64xf32> to vector<32x64xf32>
    %cst_40 = arith.constant dense<0.000000e+00> : vector<40x64xf32>
    %45 = tpu.matmul %42, %44, %cst_40 {dimension_numbers = #tpu.dot_dimension_numbers<[1], [0], [0], [1], [0, 0, 1, 1], [], []>} : vector<40x32xf32>, vector<32x64xf32>, vector<40x64xf32> -> vector<40x64xf32>
    %46 = arith.addf %40, %45 : vector<40x64xf32>
    %c0_41 = arith.constant 0 : index
    %c0_42 = arith.constant 0 : index
    %47 = vector.load %arg4[%c0_41, %c0_42] : memref<1x64xf32, #tpu.memory_space<vmem>>, vector<1x64xf32>
    %48 = vector.broadcast %47 : vector<1x64xf32> to vector<40x64xf32>
    %49 = arith.addf %46, %48 : vector<40x64xf32>
    %c0_43 = arith.constant 0 : index
    %c0_44 = arith.constant 0 : index
    %c0_45 = arith.constant 0 : index
    %50 = vector.load %arg5[%c0_43, %c0_44, %c0_45] : memref<1x40x64xf32, #tpu.memory_space<vmem>>, vector<1x40x64xf32>
    %51 = vector.shape_cast %50 : vector<1x40x64xf32> to vector<40x64xf32>
    %52 = vector.shape_cast %49 : vector<40x64xf32> to vector<1x40x64xf32>
    tpu.vector_store %arg5[%c0_43, %c0_44, %c0_45], %52 {strides = array<i32>} : memref<1x40x64xf32, #tpu.memory_space<vmem>>, vector<1x40x64xf32>,
    return
  }
  func.func @transform_0(%arg0: i32, %arg1: i32) -> (i32, i32, i32) {
    %c0_i32 = arith.constant 0 : i32
    %c0_i32_0 = arith.constant 0 : i32
    %c0_i32_1 = arith.constant 0 : i32
    return %arg1, %c0_i32, %c0_i32_0 : i32, i32, i32
  }
  func.func @transform_1(%arg0: i32, %arg1: i32) -> (i32, i32, i32) {
    %c0_i32 = arith.constant 0 : i32
    %c0_i32_0 = arith.constant 0 : i32
    %c0_i32_1 = arith.constant 0 : i32
    return %c0_i32, %c0_i32_0, %arg0 : i32, i32, i32
  }
  func.func @transform_2(%arg0: i32, %arg1: i32) -> (i32, i32) {
    %c0_i32 = arith.constant 0 : i32
    %c0_i32_0 = arith.constant 0 : i32
    return %c0_i32, %arg0 : i32, i32
  }
  func.func @transform_3(%arg0: i32, %arg1: i32) -> (i32, i32, i32) {
    %c0_i32 = arith.constant 0 : i32
    %c0_i32_0 = arith.constant 0 : i32
    return %arg1, %c0_i32, %arg0 : i32, i32, i32
  }
}

module attributes {stable_mosaic.version = 11 : i64} {
  func.func @_bn_kernel(%arg0: i32, %arg1: memref<1x35x64xf32, #tpu.memory_space<vmem>>, %arg2: memref<1x1x64xf32, #tpu.memory_space<vmem>>, %arg3: memref<1x1x64xf32, #tpu.memory_space<vmem>>, %arg4: memref<1x35x64xf32, #tpu.memory_space<vmem>>) attributes {dimension_semantics = [#tpu.dimension_semantics<parallel>], iteration_bounds = array<i64: 2>, scalar_prefetch = 0 : i64, scratch_operands = 0 : i64, tpu.core_type = #tpu.core_type<tc>, window_params = [{transform_indices = @transform_0, window_bounds = array<i64: 1, 35, 64>}, {pipeline_mode = #tpu.pipeline_mode<synchronous>, transform_indices = @transform_1, window_bounds = array<i64: 1, 1, 64>}, {pipeline_mode = #tpu.pipeline_mode<synchronous>, transform_indices = @transform_2, window_bounds = array<i64: 1, 1, 64>}, {transform_indices = @transform_3, window_bounds = array<i64: 1, 35, 64>}]} {
    %c0 = arith.constant 0 : index
    %c0_0 = arith.constant 0 : index
    %c0_1 = arith.constant 0 : index
    %0 = vector.load %arg1[%c0, %c0_0, %c0_1] : memref<1x35x64xf32, #tpu.memory_space<vmem>>, vector<1x35x64xf32>
    %c0_2 = arith.constant 0 : index
    %c0_3 = arith.constant 0 : index
    %c0_4 = arith.constant 0 : index
    %1 = vector.load %arg2[%c0_2, %c0_3, %c0_4] : memref<1x1x64xf32, #tpu.memory_space<vmem>>, vector<1x1x64xf32>
    %2 = vector.broadcast %1 : vector<1x1x64xf32> to vector<1x35x64xf32>
    %3 = arith.mulf %0, %2 : vector<1x35x64xf32>
    %c0_5 = arith.constant 0 : index
    %c0_6 = arith.constant 0 : index
    %c0_7 = arith.constant 0 : index
    %4 = vector.load %arg3[%c0_5, %c0_6, %c0_7] : memref<1x1x64xf32, #tpu.memory_space<vmem>>, vector<1x1x64xf32>
    %5 = vector.broadcast %4 : vector<1x1x64xf32> to vector<1x35x64xf32>
    %6 = arith.addf %3, %5 : vector<1x35x64xf32>
    %c0_8 = arith.constant 0 : index
    %c0_9 = arith.constant 0 : index
    %c0_10 = arith.constant 0 : index
    %7 = vector.load %arg4[%c0_8, %c0_9, %c0_10] : memref<1x35x64xf32, #tpu.memory_space<vmem>>, vector<1x35x64xf32>
    tpu.vector_store %arg4[%c0_8, %c0_9, %c0_10], %6 {strides = array<i32>} : memref<1x35x64xf32, #tpu.memory_space<vmem>>, vector<1x35x64xf32>,
    return
  }
  func.func @transform_0(%arg0: i32) -> (i32, i32, i32) {
    %c0_i32 = arith.constant 0 : i32
    %c0_i32_0 = arith.constant 0 : i32
    %c0_i32_1 = arith.constant 0 : i32
    return %arg0, %c0_i32, %c0_i32_0 : i32, i32, i32
  }
  func.func @transform_1(%arg0: i32) -> (i32, i32, i32) {
    %c0_i32 = arith.constant 0 : i32
    %c0_i32_0 = arith.constant 0 : i32
    %c0_i32_1 = arith.constant 0 : i32
    %c0_i32_2 = arith.constant 0 : i32
    return %c0_i32, %c0_i32_0, %c0_i32_1 : i32, i32, i32
  }
  func.func @transform_2(%arg0: i32) -> (i32, i32, i32) {
    %c0_i32 = arith.constant 0 : i32
    %c0_i32_0 = arith.constant 0 : i32
    %c0_i32_1 = arith.constant 0 : i32
    %c0_i32_2 = arith.constant 0 : i32
    return %c0_i32, %c0_i32_0, %c0_i32_1 : i32, i32, i32
  }
  func.func @transform_3(%arg0: i32) -> (i32, i32, i32) {
    %c0_i32 = arith.constant 0 : i32
    %c0_i32_0 = arith.constant 0 : i32
    %c0_i32_1 = arith.constant 0 : i32
    return %arg0, %c0_i32, %c0_i32_0 : i32, i32, i32
  }
}

module attributes {stable_mosaic.version = 11 : i64} {
  func.func @_conv_kernel(%arg0: i32, %arg1: i32, %arg2: memref<1x104x64xf32, #tpu.memory_space<vmem>>, %arg3: memref<9x64x48xf32, #tpu.memory_space<vmem>>, %arg4: memref<1x48xf32, #tpu.memory_space<vmem>>, %arg5: memref<1x80x48xf32, #tpu.memory_space<vmem>>) attributes {dimension_semantics = [#tpu.dimension_semantics<parallel>, #tpu.dimension_semantics<parallel>], iteration_bounds = array<i64: 1, 2>, scalar_prefetch = 0 : i64, scratch_operands = 0 : i64, tpu.core_type = #tpu.core_type<tc>, window_params = [{transform_indices = @transform_0, window_bounds = array<i64: 1, 104, 64>}, {transform_indices = @transform_1, window_bounds = array<i64: 9, 64, 48>}, {transform_indices = @transform_2, window_bounds = array<i64: 1, 48>}, {transform_indices = @transform_3, window_bounds = array<i64: 1, 80, 48>}]} {
    %c0 = arith.constant 0 : index
    %c0_0 = arith.constant 0 : index
    %c0_1 = arith.constant 0 : index
    %0 = vector.load %arg2[%c0, %c0_0, %c0_1] : memref<1x104x64xf32, #tpu.memory_space<vmem>>, vector<1x80x64xf32>
    %1 = vector.shape_cast %0 : vector<1x80x64xf32> to vector<80x64xf32>
    %c0_2 = arith.constant 0 : index
    %c0_3 = arith.constant 0 : index
    %c0_4 = arith.constant 0 : index
    %2 = vector.load %arg3[%c0_2, %c0_3, %c0_4] : memref<9x64x48xf32, #tpu.memory_space<vmem>>, vector<1x64x48xf32>
    %3 = vector.shape_cast %2 : vector<1x64x48xf32> to vector<64x48xf32>
    %cst = arith.constant dense<0.000000e+00> : vector<80x48xf32>
    %4 = tpu.matmul %1, %3, %cst {dimension_numbers = #tpu.dot_dimension_numbers<[1], [0], [0], [1], [0, 0, 1, 1], [], []>} : vector<80x64xf32>, vector<64x48xf32>, vector<80x48xf32> -> vector<80x48xf32>
    %c0_5 = arith.constant 0 : index
    %c1 = arith.constant 1 : index
    %c0_6 = arith.constant 0 : index
    %5 = vector.load %arg2[%c0_5, %c1, %c0_6] : memref<1x104x64xf32, #tpu.memory_space<vmem>>, vector<1x80x64xf32>
    %6 = vector.shape_cast %5 : vector<1x80x64xf32> to vector<80x64xf32>
    %c1_7 = arith.constant 1 : index
    %c0_8 = arith.constant 0 : index
    %c0_9 = arith.constant 0 : index
    %7 = vector.load %arg3[%c1_7, %c0_8, %c0_9] : memref<9x64x48xf32, #tpu.memory_space<vmem>>, vector<1x64x48xf32>
    %8 = vector.shape_cast %7 : vector<1x64x48xf32> to vector<64x48xf32>
    %cst_10 = arith.constant dense<0.000000e+00> : vector<80x48xf32>
    %9 = tpu.matmul %6, %8, %cst_10 {dimension_numbers = #tpu.dot_dimension_numbers<[1], [0], [0], [1], [0, 0, 1, 1], [], []>} : vector<80x64xf32>, vector<64x48xf32>, vector<80x48xf32> -> vector<80x48xf32>
    %10 = arith.addf %4, %9 : vector<80x48xf32>
    %c0_11 = arith.constant 0 : index
    %c2 = arith.constant 2 : index
    %c0_12 = arith.constant 0 : index
    %11 = vector.load %arg2[%c0_11, %c2, %c0_12] : memref<1x104x64xf32, #tpu.memory_space<vmem>>, vector<1x80x64xf32>
    %12 = vector.shape_cast %11 : vector<1x80x64xf32> to vector<80x64xf32>
    %c2_13 = arith.constant 2 : index
    %c0_14 = arith.constant 0 : index
    %c0_15 = arith.constant 0 : index
    %13 = vector.load %arg3[%c2_13, %c0_14, %c0_15] : memref<9x64x48xf32, #tpu.memory_space<vmem>>, vector<1x64x48xf32>
    %14 = vector.shape_cast %13 : vector<1x64x48xf32> to vector<64x48xf32>
    %cst_16 = arith.constant dense<0.000000e+00> : vector<80x48xf32>
    %15 = tpu.matmul %12, %14, %cst_16 {dimension_numbers = #tpu.dot_dimension_numbers<[1], [0], [0], [1], [0, 0, 1, 1], [], []>} : vector<80x64xf32>, vector<64x48xf32>, vector<80x48xf32> -> vector<80x48xf32>
    %16 = arith.addf %10, %15 : vector<80x48xf32>
    %c0_17 = arith.constant 0 : index
    %c11 = arith.constant 11 : index
    %c0_18 = arith.constant 0 : index
    %17 = vector.load %arg2[%c0_17, %c11, %c0_18] : memref<1x104x64xf32, #tpu.memory_space<vmem>>, vector<1x80x64xf32>
    %18 = vector.shape_cast %17 : vector<1x80x64xf32> to vector<80x64xf32>
    %c3 = arith.constant 3 : index
    %c0_19 = arith.constant 0 : index
    %c0_20 = arith.constant 0 : index
    %19 = vector.load %arg3[%c3, %c0_19, %c0_20] : memref<9x64x48xf32, #tpu.memory_space<vmem>>, vector<1x64x48xf32>
    %20 = vector.shape_cast %19 : vector<1x64x48xf32> to vector<64x48xf32>
    %cst_21 = arith.constant dense<0.000000e+00> : vector<80x48xf32>
    %21 = tpu.matmul %18, %20, %cst_21 {dimension_numbers = #tpu.dot_dimension_numbers<[1], [0], [0], [1], [0, 0, 1, 1], [], []>} : vector<80x64xf32>, vector<64x48xf32>, vector<80x48xf32> -> vector<80x48xf32>
    %22 = arith.addf %16, %21 : vector<80x48xf32>
    %c0_22 = arith.constant 0 : index
    %c12 = arith.constant 12 : index
    %c0_23 = arith.constant 0 : index
    %23 = vector.load %arg2[%c0_22, %c12, %c0_23] : memref<1x104x64xf32, #tpu.memory_space<vmem>>, vector<1x80x64xf32>
    %24 = vector.shape_cast %23 : vector<1x80x64xf32> to vector<80x64xf32>
    %c4 = arith.constant 4 : index
    %c0_24 = arith.constant 0 : index
    %c0_25 = arith.constant 0 : index
    %25 = vector.load %arg3[%c4, %c0_24, %c0_25] : memref<9x64x48xf32, #tpu.memory_space<vmem>>, vector<1x64x48xf32>
    %26 = vector.shape_cast %25 : vector<1x64x48xf32> to vector<64x48xf32>
    %cst_26 = arith.constant dense<0.000000e+00> : vector<80x48xf32>
    %27 = tpu.matmul %24, %26, %cst_26 {dimension_numbers = #tpu.dot_dimension_numbers<[1], [0], [0], [1], [0, 0, 1, 1], [], []>} : vector<80x64xf32>, vector<64x48xf32>, vector<80x48xf32> -> vector<80x48xf32>
    %28 = arith.addf %22, %27 : vector<80x48xf32>
    %c0_27 = arith.constant 0 : index
    %c13 = arith.constant 13 : index
    %c0_28 = arith.constant 0 : index
    %29 = vector.load %arg2[%c0_27, %c13, %c0_28] : memref<1x104x64xf32, #tpu.memory_space<vmem>>, vector<1x80x64xf32>
    %30 = vector.shape_cast %29 : vector<1x80x64xf32> to vector<80x64xf32>
    %c5 = arith.constant 5 : index
    %c0_29 = arith.constant 0 : index
    %c0_30 = arith.constant 0 : index
    %31 = vector.load %arg3[%c5, %c0_29, %c0_30] : memref<9x64x48xf32, #tpu.memory_space<vmem>>, vector<1x64x48xf32>
    %32 = vector.shape_cast %31 : vector<1x64x48xf32> to vector<64x48xf32>
    %cst_31 = arith.constant dense<0.000000e+00> : vector<80x48xf32>
    %33 = tpu.matmul %30, %32, %cst_31 {dimension_numbers = #tpu.dot_dimension_numbers<[1], [0], [0], [1], [0, 0, 1, 1], [], []>} : vector<80x64xf32>, vector<64x48xf32>, vector<80x48xf32> -> vector<80x48xf32>
    %34 = arith.addf %28, %33 : vector<80x48xf32>
    %c0_32 = arith.constant 0 : index
    %c22 = arith.constant 22 : index
    %c0_33 = arith.constant 0 : index
    %35 = vector.load %arg2[%c0_32, %c22, %c0_33] : memref<1x104x64xf32, #tpu.memory_space<vmem>>, vector<1x80x64xf32>
    %36 = vector.shape_cast %35 : vector<1x80x64xf32> to vector<80x64xf32>
    %c6 = arith.constant 6 : index
    %c0_34 = arith.constant 0 : index
    %c0_35 = arith.constant 0 : index
    %37 = vector.load %arg3[%c6, %c0_34, %c0_35] : memref<9x64x48xf32, #tpu.memory_space<vmem>>, vector<1x64x48xf32>
    %38 = vector.shape_cast %37 : vector<1x64x48xf32> to vector<64x48xf32>
    %cst_36 = arith.constant dense<0.000000e+00> : vector<80x48xf32>
    %39 = tpu.matmul %36, %38, %cst_36 {dimension_numbers = #tpu.dot_dimension_numbers<[1], [0], [0], [1], [0, 0, 1, 1], [], []>} : vector<80x64xf32>, vector<64x48xf32>, vector<80x48xf32> -> vector<80x48xf32>
    %40 = arith.addf %34, %39 : vector<80x48xf32>
    %c0_37 = arith.constant 0 : index
    %c23 = arith.constant 23 : index
    %c0_38 = arith.constant 0 : index
    %41 = vector.load %arg2[%c0_37, %c23, %c0_38] : memref<1x104x64xf32, #tpu.memory_space<vmem>>, vector<1x80x64xf32>
    %42 = vector.shape_cast %41 : vector<1x80x64xf32> to vector<80x64xf32>
    %c7 = arith.constant 7 : index
    %c0_39 = arith.constant 0 : index
    %c0_40 = arith.constant 0 : index
    %43 = vector.load %arg3[%c7, %c0_39, %c0_40] : memref<9x64x48xf32, #tpu.memory_space<vmem>>, vector<1x64x48xf32>
    %44 = vector.shape_cast %43 : vector<1x64x48xf32> to vector<64x48xf32>
    %cst_41 = arith.constant dense<0.000000e+00> : vector<80x48xf32>
    %45 = tpu.matmul %42, %44, %cst_41 {dimension_numbers = #tpu.dot_dimension_numbers<[1], [0], [0], [1], [0, 0, 1, 1], [], []>} : vector<80x64xf32>, vector<64x48xf32>, vector<80x48xf32> -> vector<80x48xf32>
    %46 = arith.addf %40, %45 : vector<80x48xf32>
    %c0_42 = arith.constant 0 : index
    %c24 = arith.constant 24 : index
    %c0_43 = arith.constant 0 : index
    %47 = vector.load %arg2[%c0_42, %c24, %c0_43] : memref<1x104x64xf32, #tpu.memory_space<vmem>>, vector<1x80x64xf32>
    %48 = vector.shape_cast %47 : vector<1x80x64xf32> to vector<80x64xf32>
    %c8 = arith.constant 8 : index
    %c0_44 = arith.constant 0 : index
    %c0_45 = arith.constant 0 : index
    %49 = vector.load %arg3[%c8, %c0_44, %c0_45] : memref<9x64x48xf32, #tpu.memory_space<vmem>>, vector<1x64x48xf32>
    %50 = vector.shape_cast %49 : vector<1x64x48xf32> to vector<64x48xf32>
    %cst_46 = arith.constant dense<0.000000e+00> : vector<80x48xf32>
    %51 = tpu.matmul %48, %50, %cst_46 {dimension_numbers = #tpu.dot_dimension_numbers<[1], [0], [0], [1], [0, 0, 1, 1], [], []>} : vector<80x64xf32>, vector<64x48xf32>, vector<80x48xf32> -> vector<80x48xf32>
    %52 = arith.addf %46, %51 : vector<80x48xf32>
    %c0_47 = arith.constant 0 : index
    %c0_48 = arith.constant 0 : index
    %53 = vector.load %arg4[%c0_47, %c0_48] : memref<1x48xf32, #tpu.memory_space<vmem>>, vector<1x48xf32>
    %54 = vector.broadcast %53 : vector<1x48xf32> to vector<80x48xf32>
    %55 = arith.addf %52, %54 : vector<80x48xf32>
    %c0_49 = arith.constant 0 : index
    %c0_50 = arith.constant 0 : index
    %c0_51 = arith.constant 0 : index
    %56 = vector.load %arg5[%c0_49, %c0_50, %c0_51] : memref<1x80x48xf32, #tpu.memory_space<vmem>>, vector<1x80x48xf32>
    %57 = vector.shape_cast %56 : vector<1x80x48xf32> to vector<80x48xf32>
    %58 = vector.shape_cast %55 : vector<80x48xf32> to vector<1x80x48xf32>
    tpu.vector_store %arg5[%c0_49, %c0_50, %c0_51], %58 {strides = array<i32>} : memref<1x80x48xf32, #tpu.memory_space<vmem>>, vector<1x80x48xf32>,
    return
  }
  func.func @transform_0(%arg0: i32, %arg1: i32) -> (i32, i32, i32) {
    %c0_i32 = arith.constant 0 : i32
    %c0_i32_0 = arith.constant 0 : i32
    %c0_i32_1 = arith.constant 0 : i32
    return %arg1, %c0_i32, %c0_i32_0 : i32, i32, i32
  }
  func.func @transform_1(%arg0: i32, %arg1: i32) -> (i32, i32, i32) {
    %c0_i32 = arith.constant 0 : i32
    %c0_i32_0 = arith.constant 0 : i32
    %c0_i32_1 = arith.constant 0 : i32
    return %c0_i32, %c0_i32_0, %arg0 : i32, i32, i32
  }
  func.func @transform_2(%arg0: i32, %arg1: i32) -> (i32, i32) {
    %c0_i32 = arith.constant 0 : i32
    %c0_i32_0 = arith.constant 0 : i32
    return %c0_i32, %arg0 : i32, i32
  }
  func.func @transform_3(%arg0: i32, %arg1: i32) -> (i32, i32, i32) {
    %c0_i32 = arith.constant 0 : i32
    %c0_i32_0 = arith.constant 0 : i32
    return %arg1, %c0_i32, %arg0 : i32, i32, i32
  }
}

module attributes {stable_mosaic.version = 11 : i64} {
  func.func @_conv_kernel(%arg0: i32, %arg1: i32, %arg2: memref<1x264x48xf32, #tpu.memory_space<vmem>>, %arg3: memref<25x48x32xf32, #tpu.memory_space<vmem>>, %arg4: memref<1x32xf32, #tpu.memory_space<vmem>>, %arg5: memref<1x192x32xf32, #tpu.memory_space<vmem>>) attributes {dimension_semantics = [#tpu.dimension_semantics<parallel>, #tpu.dimension_semantics<parallel>], iteration_bounds = array<i64: 1, 2>, scalar_prefetch = 0 : i64, scratch_operands = 0 : i64, tpu.core_type = #tpu.core_type<tc>, window_params = [{transform_indices = @transform_0, window_bounds = array<i64: 1, 264, 48>}, {transform_indices = @transform_1, window_bounds = array<i64: 25, 48, 32>}, {transform_indices = @transform_2, window_bounds = array<i64: 1, 32>}, {transform_indices = @transform_3, window_bounds = array<i64: 1, 192, 32>}]} {
    %c0 = arith.constant 0 : index
    %c0_0 = arith.constant 0 : index
    %c0_1 = arith.constant 0 : index
    %0 = vector.load %arg2[%c0, %c0_0, %c0_1] : memref<1x264x48xf32, #tpu.memory_space<vmem>>, vector<1x192x48xf32>
    %1 = vector.shape_cast %0 : vector<1x192x48xf32> to vector<192x48xf32>
    %c0_2 = arith.constant 0 : index
    %c0_3 = arith.constant 0 : index
    %c0_4 = arith.constant 0 : index
    %2 = vector.load %arg3[%c0_2, %c0_3, %c0_4] : memref<25x48x32xf32, #tpu.memory_space<vmem>>, vector<1x48x32xf32>
    %3 = vector.shape_cast %2 : vector<1x48x32xf32> to vector<48x32xf32>
    %cst = arith.constant dense<0.000000e+00> : vector<192x32xf32>
    %4 = tpu.matmul %1, %3, %cst {dimension_numbers = #tpu.dot_dimension_numbers<[1], [0], [0], [1], [0, 0, 1, 1], [], []>} : vector<192x48xf32>, vector<48x32xf32>, vector<192x32xf32> -> vector<192x32xf32>
    %c0_5 = arith.constant 0 : index
    %c1 = arith.constant 1 : index
    %c0_6 = arith.constant 0 : index
    %5 = vector.load %arg2[%c0_5, %c1, %c0_6] : memref<1x264x48xf32, #tpu.memory_space<vmem>>, vector<1x192x48xf32>
    %6 = vector.shape_cast %5 : vector<1x192x48xf32> to vector<192x48xf32>
    %c1_7 = arith.constant 1 : index
    %c0_8 = arith.constant 0 : index
    %c0_9 = arith.constant 0 : index
    %7 = vector.load %arg3[%c1_7, %c0_8, %c0_9] : memref<25x48x32xf32, #tpu.memory_space<vmem>>, vector<1x48x32xf32>
    %8 = vector.shape_cast %7 : vector<1x48x32xf32> to vector<48x32xf32>
    %cst_10 = arith.constant dense<0.000000e+00> : vector<192x32xf32>
    %9 = tpu.matmul %6, %8, %cst_10 {dimension_numbers = #tpu.dot_dimension_numbers<[1], [0], [0], [1], [0, 0, 1, 1], [], []>} : vector<192x48xf32>, vector<48x32xf32>, vector<192x32xf32> -> vector<192x32xf32>
    %10 = arith.addf %4, %9 : vector<192x32xf32>
    %c0_11 = arith.constant 0 : index
    %c2 = arith.constant 2 : index
    %c0_12 = arith.constant 0 : index
    %11 = vector.load %arg2[%c0_11, %c2, %c0_12] : memref<1x264x48xf32, #tpu.memory_space<vmem>>, vector<1x192x48xf32>
    %12 = vector.shape_cast %11 : vector<1x192x48xf32> to vector<192x48xf32>
    %c2_13 = arith.constant 2 : index
    %c0_14 = arith.constant 0 : index
    %c0_15 = arith.constant 0 : index
    %13 = vector.load %arg3[%c2_13, %c0_14, %c0_15] : memref<25x48x32xf32, #tpu.memory_space<vmem>>, vector<1x48x32xf32>
    %14 = vector.shape_cast %13 : vector<1x48x32xf32> to vector<48x32xf32>
    %cst_16 = arith.constant dense<0.000000e+00> : vector<192x32xf32>
    %15 = tpu.matmul %12, %14, %cst_16 {dimension_numbers = #tpu.dot_dimension_numbers<[1], [0], [0], [1], [0, 0, 1, 1], [], []>} : vector<192x48xf32>, vector<48x32xf32>, vector<192x32xf32> -> vector<192x32xf32>
    %16 = arith.addf %10, %15 : vector<192x32xf32>
    %c0_17 = arith.constant 0 : index
    %c3 = arith.constant 3 : index
    %c0_18 = arith.constant 0 : index
    %17 = vector.load %arg2[%c0_17, %c3, %c0_18] : memref<1x264x48xf32, #tpu.memory_space<vmem>>, vector<1x192x48xf32>
    %18 = vector.shape_cast %17 : vector<1x192x48xf32> to vector<192x48xf32>
    %c3_19 = arith.constant 3 : index
    %c0_20 = arith.constant 0 : index
    %c0_21 = arith.constant 0 : index
    %19 = vector.load %arg3[%c3_19, %c0_20, %c0_21] : memref<25x48x32xf32, #tpu.memory_space<vmem>>, vector<1x48x32xf32>
    %20 = vector.shape_cast %19 : vector<1x48x32xf32> to vector<48x32xf32>
    %cst_22 = arith.constant dense<0.000000e+00> : vector<192x32xf32>
    %21 = tpu.matmul %18, %20, %cst_22 {dimension_numbers = #tpu.dot_dimension_numbers<[1], [0], [0], [1], [0, 0, 1, 1], [], []>} : vector<192x48xf32>, vector<48x32xf32>, vector<192x32xf32> -> vector<192x32xf32>
    %22 = arith.addf %16, %21 : vector<192x32xf32>
    %c0_23 = arith.constant 0 : index
    %c4 = arith.constant 4 : index
    %c0_24 = arith.constant 0 : index
    %23 = vector.load %arg2[%c0_23, %c4, %c0_24] : memref<1x264x48xf32, #tpu.memory_space<vmem>>, vector<1x192x48xf32>
    %24 = vector.shape_cast %23 : vector<1x192x48xf32> to vector<192x48xf32>
    %c4_25 = arith.constant 4 : index
    %c0_26 = arith.constant 0 : index
    %c0_27 = arith.constant 0 : index
    %25 = vector.load %arg3[%c4_25, %c0_26, %c0_27] : memref<25x48x32xf32, #tpu.memory_space<vmem>>, vector<1x48x32xf32>
    %26 = vector.shape_cast %25 : vector<1x48x32xf32> to vector<48x32xf32>
    %cst_28 = arith.constant dense<0.000000e+00> : vector<192x32xf32>
    %27 = tpu.matmul %24, %26, %cst_28 {dimension_numbers = #tpu.dot_dimension_numbers<[1], [0], [0], [1], [0, 0, 1, 1], [], []>} : vector<192x48xf32>, vector<48x32xf32>, vector<192x32xf32> -> vector<192x32xf32>
    %28 = arith.addf %22, %27 : vector<192x32xf32>
    %c0_29 = arith.constant 0 : index
    %c17 = arith.constant 17 : index
    %c0_30 = arith.constant 0 : index
    %29 = vector.load %arg2[%c0_29, %c17, %c0_30] : memref<1x264x48xf32, #tpu.memory_space<vmem>>, vector<1x192x48xf32>
    %30 = vector.shape_cast %29 : vector<1x192x48xf32> to vector<192x48xf32>
    %c5 = arith.constant 5 : index
    %c0_31 = arith.constant 0 : index
    %c0_32 = arith.constant 0 : index
    %31 = vector.load %arg3[%c5, %c0_31, %c0_32] : memref<25x48x32xf32, #tpu.memory_space<vmem>>, vector<1x48x32xf32>
    %32 = vector.shape_cast %31 : vector<1x48x32xf32> to vector<48x32xf32>
    %cst_33 = arith.constant dense<0.000000e+00> : vector<192x32xf32>
    %33 = tpu.matmul %30, %32, %cst_33 {dimension_numbers = #tpu.dot_dimension_numbers<[1], [0], [0], [1], [0, 0, 1, 1], [], []>} : vector<192x48xf32>, vector<48x32xf32>, vector<192x32xf32> -> vector<192x32xf32>
    %34 = arith.addf %28, %33 : vector<192x32xf32>
    %c0_34 = arith.constant 0 : index
    %c18 = arith.constant 18 : index
    %c0_35 = arith.constant 0 : index
    %35 = vector.load %arg2[%c0_34, %c18, %c0_35] : memref<1x264x48xf32, #tpu.memory_space<vmem>>, vector<1x192x48xf32>
    %36 = vector.shape_cast %35 : vector<1x192x48xf32> to vector<192x48xf32>
    %c6 = arith.constant 6 : index
    %c0_36 = arith.constant 0 : index
    %c0_37 = arith.constant 0 : index
    %37 = vector.load %arg3[%c6, %c0_36, %c0_37] : memref<25x48x32xf32, #tpu.memory_space<vmem>>, vector<1x48x32xf32>
    %38 = vector.shape_cast %37 : vector<1x48x32xf32> to vector<48x32xf32>
    %cst_38 = arith.constant dense<0.000000e+00> : vector<192x32xf32>
    %39 = tpu.matmul %36, %38, %cst_38 {dimension_numbers = #tpu.dot_dimension_numbers<[1], [0], [0], [1], [0, 0, 1, 1], [], []>} : vector<192x48xf32>, vector<48x32xf32>, vector<192x32xf32> -> vector<192x32xf32>
    %40 = arith.addf %34, %39 : vector<192x32xf32>
    %c0_39 = arith.constant 0 : index
    %c19 = arith.constant 19 : index
    %c0_40 = arith.constant 0 : index
    %41 = vector.load %arg2[%c0_39, %c19, %c0_40] : memref<1x264x48xf32, #tpu.memory_space<vmem>>, vector<1x192x48xf32>
    %42 = vector.shape_cast %41 : vector<1x192x48xf32> to vector<192x48xf32>
    %c7 = arith.constant 7 : index
    %c0_41 = arith.constant 0 : index
    %c0_42 = arith.constant 0 : index
    %43 = vector.load %arg3[%c7, %c0_41, %c0_42] : memref<25x48x32xf32, #tpu.memory_space<vmem>>, vector<1x48x32xf32>
    %44 = vector.shape_cast %43 : vector<1x48x32xf32> to vector<48x32xf32>
    %cst_43 = arith.constant dense<0.000000e+00> : vector<192x32xf32>
    %45 = tpu.matmul %42, %44, %cst_43 {dimension_numbers = #tpu.dot_dimension_numbers<[1], [0], [0], [1], [0, 0, 1, 1], [], []>} : vector<192x48xf32>, vector<48x32xf32>, vector<192x32xf32> -> vector<192x32xf32>
    %46 = arith.addf %40, %45 : vector<192x32xf32>
    %c0_44 = arith.constant 0 : index
    %c20 = arith.constant 20 : index
    %c0_45 = arith.constant 0 : index
    %47 = vector.load %arg2[%c0_44, %c20, %c0_45] : memref<1x264x48xf32, #tpu.memory_space<vmem>>, vector<1x192x48xf32>
    %48 = vector.shape_cast %47 : vector<1x192x48xf32> to vector<192x48xf32>
    %c8 = arith.constant 8 : index
    %c0_46 = arith.constant 0 : index
    %c0_47 = arith.constant 0 : index
    %49 = vector.load %arg3[%c8, %c0_46, %c0_47] : memref<25x48x32xf32, #tpu.memory_space<vmem>>, vector<1x48x32xf32>
    %50 = vector.shape_cast %49 : vector<1x48x32xf32> to vector<48x32xf32>
    %cst_48 = arith.constant dense<0.000000e+00> : vector<192x32xf32>
    %51 = tpu.matmul %48, %50, %cst_48 {dimension_numbers = #tpu.dot_dimension_numbers<[1], [0], [0], [1], [0, 0, 1, 1], [], []>} : vector<192x48xf32>, vector<48x32xf32>, vector<192x32xf32> -> vector<192x32xf32>
    %52 = arith.addf %46, %51 : vector<192x32xf32>
    %c0_49 = arith.constant 0 : index
    %c21 = arith.constant 21 : index
    %c0_50 = arith.constant 0 : index
    %53 = vector.load %arg2[%c0_49, %c21, %c0_50] : memref<1x264x48xf32, #tpu.memory_space<vmem>>, vector<1x192x48xf32>
    %54 = vector.shape_cast %53 : vector<1x192x48xf32> to vector<192x48xf32>
    %c9 = arith.constant 9 : index
    %c0_51 = arith.constant 0 : index
    %c0_52 = arith.constant 0 : index
    %55 = vector.load %arg3[%c9, %c0_51, %c0_52] : memref<25x48x32xf32, #tpu.memory_space<vmem>>, vector<1x48x32xf32>
    %56 = vector.shape_cast %55 : vector<1x48x32xf32> to vector<48x32xf32>
    %cst_53 = arith.constant dense<0.000000e+00> : vector<192x32xf32>
    %57 = tpu.matmul %54, %56, %cst_53 {dimension_numbers = #tpu.dot_dimension_numbers<[1], [0], [0], [1], [0, 0, 1, 1], [], []>} : vector<192x48xf32>, vector<48x32xf32>, vector<192x32xf32> -> vector<192x32xf32>
    %58 = arith.addf %52, %57 : vector<192x32xf32>
    %c0_54 = arith.constant 0 : index
    %c34 = arith.constant 34 : index
    %c0_55 = arith.constant 0 : index
    %59 = vector.load %arg2[%c0_54, %c34, %c0_55] : memref<1x264x48xf32, #tpu.memory_space<vmem>>, vector<1x192x48xf32>
    %60 = vector.shape_cast %59 : vector<1x192x48xf32> to vector<192x48xf32>
    %c10 = arith.constant 10 : index
    %c0_56 = arith.constant 0 : index
    %c0_57 = arith.constant 0 : index
    %61 = vector.load %arg3[%c10, %c0_56, %c0_57] : memref<25x48x32xf32, #tpu.memory_space<vmem>>, vector<1x48x32xf32>
    %62 = vector.shape_cast %61 : vector<1x48x32xf32> to vector<48x32xf32>
    %cst_58 = arith.constant dense<0.000000e+00> : vector<192x32xf32>
    %63 = tpu.matmul %60, %62, %cst_58 {dimension_numbers = #tpu.dot_dimension_numbers<[1], [0], [0], [1], [0, 0, 1, 1], [], []>} : vector<192x48xf32>, vector<48x32xf32>, vector<192x32xf32> -> vector<192x32xf32>
    %64 = arith.addf %58, %63 : vector<192x32xf32>
    %c0_59 = arith.constant 0 : index
    %c35 = arith.constant 35 : index
    %c0_60 = arith.constant 0 : index
    %65 = vector.load %arg2[%c0_59, %c35, %c0_60] : memref<1x264x48xf32, #tpu.memory_space<vmem>>, vector<1x192x48xf32>
    %66 = vector.shape_cast %65 : vector<1x192x48xf32> to vector<192x48xf32>
    %c11 = arith.constant 11 : index
    %c0_61 = arith.constant 0 : index
    %c0_62 = arith.constant 0 : index
    %67 = vector.load %arg3[%c11, %c0_61, %c0_62] : memref<25x48x32xf32, #tpu.memory_space<vmem>>, vector<1x48x32xf32>
    %68 = vector.shape_cast %67 : vector<1x48x32xf32> to vector<48x32xf32>
    %cst_63 = arith.constant dense<0.000000e+00> : vector<192x32xf32>
    %69 = tpu.matmul %66, %68, %cst_63 {dimension_numbers = #tpu.dot_dimension_numbers<[1], [0], [0], [1], [0, 0, 1, 1], [], []>} : vector<192x48xf32>, vector<48x32xf32>, vector<192x32xf32> -> vector<192x32xf32>
    %70 = arith.addf %64, %69 : vector<192x32xf32>
    %c0_64 = arith.constant 0 : index
    %c36 = arith.constant 36 : index
    %c0_65 = arith.constant 0 : index
    %71 = vector.load %arg2[%c0_64, %c36, %c0_65] : memref<1x264x48xf32, #tpu.memory_space<vmem>>, vector<1x192x48xf32>
    %72 = vector.shape_cast %71 : vector<1x192x48xf32> to vector<192x48xf32>
    %c12 = arith.constant 12 : index
    %c0_66 = arith.constant 0 : index
    %c0_67 = arith.constant 0 : index
    %73 = vector.load %arg3[%c12, %c0_66, %c0_67] : memref<25x48x32xf32, #tpu.memory_space<vmem>>, vector<1x48x32xf32>
    %74 = vector.shape_cast %73 : vector<1x48x32xf32> to vector<48x32xf32>
    %cst_68 = arith.constant dense<0.000000e+00> : vector<192x32xf32>
    %75 = tpu.matmul %72, %74, %cst_68 {dimension_numbers = #tpu.dot_dimension_numbers<[1], [0], [0], [1], [0, 0, 1, 1], [], []>} : vector<192x48xf32>, vector<48x32xf32>, vector<192x32xf32> -> vector<192x32xf32>
    %76 = arith.addf %70, %75 : vector<192x32xf32>
    %c0_69 = arith.constant 0 : index
    %c37 = arith.constant 37 : index
    %c0_70 = arith.constant 0 : index
    %77 = vector.load %arg2[%c0_69, %c37, %c0_70] : memref<1x264x48xf32, #tpu.memory_space<vmem>>, vector<1x192x48xf32>
    %78 = vector.shape_cast %77 : vector<1x192x48xf32> to vector<192x48xf32>
    %c13 = arith.constant 13 : index
    %c0_71 = arith.constant 0 : index
    %c0_72 = arith.constant 0 : index
    %79 = vector.load %arg3[%c13, %c0_71, %c0_72] : memref<25x48x32xf32, #tpu.memory_space<vmem>>, vector<1x48x32xf32>
    %80 = vector.shape_cast %79 : vector<1x48x32xf32> to vector<48x32xf32>
    %cst_73 = arith.constant dense<0.000000e+00> : vector<192x32xf32>
    %81 = tpu.matmul %78, %80, %cst_73 {dimension_numbers = #tpu.dot_dimension_numbers<[1], [0], [0], [1], [0, 0, 1, 1], [], []>} : vector<192x48xf32>, vector<48x32xf32>, vector<192x32xf32> -> vector<192x32xf32>
    %82 = arith.addf %76, %81 : vector<192x32xf32>
    %c0_74 = arith.constant 0 : index
    %c38 = arith.constant 38 : index
    %c0_75 = arith.constant 0 : index
    %83 = vector.load %arg2[%c0_74, %c38, %c0_75] : memref<1x264x48xf32, #tpu.memory_space<vmem>>, vector<1x192x48xf32>
    %84 = vector.shape_cast %83 : vector<1x192x48xf32> to vector<192x48xf32>
    %c14 = arith.constant 14 : index
    %c0_76 = arith.constant 0 : index
    %c0_77 = arith.constant 0 : index
    %85 = vector.load %arg3[%c14, %c0_76, %c0_77] : memref<25x48x32xf32, #tpu.memory_space<vmem>>, vector<1x48x32xf32>
    %86 = vector.shape_cast %85 : vector<1x48x32xf32> to vector<48x32xf32>
    %cst_78 = arith.constant dense<0.000000e+00> : vector<192x32xf32>
    %87 = tpu.matmul %84, %86, %cst_78 {dimension_numbers = #tpu.dot_dimension_numbers<[1], [0], [0], [1], [0, 0, 1, 1], [], []>} : vector<192x48xf32>, vector<48x32xf32>, vector<192x32xf32> -> vector<192x32xf32>
    %88 = arith.addf %82, %87 : vector<192x32xf32>
    %c0_79 = arith.constant 0 : index
    %c51 = arith.constant 51 : index
    %c0_80 = arith.constant 0 : index
    %89 = vector.load %arg2[%c0_79, %c51, %c0_80] : memref<1x264x48xf32, #tpu.memory_space<vmem>>, vector<1x192x48xf32>
    %90 = vector.shape_cast %89 : vector<1x192x48xf32> to vector<192x48xf32>
    %c15 = arith.constant 15 : index
    %c0_81 = arith.constant 0 : index
    %c0_82 = arith.constant 0 : index
    %91 = vector.load %arg3[%c15, %c0_81, %c0_82] : memref<25x48x32xf32, #tpu.memory_space<vmem>>, vector<1x48x32xf32>
    %92 = vector.shape_cast %91 : vector<1x48x32xf32> to vector<48x32xf32>
    %cst_83 = arith.constant dense<0.000000e+00> : vector<192x32xf32>
    %93 = tpu.matmul %90, %92, %cst_83 {dimension_numbers = #tpu.dot_dimension_numbers<[1], [0], [0], [1], [0, 0, 1, 1], [], []>} : vector<192x48xf32>, vector<48x32xf32>, vector<192x32xf32> -> vector<192x32xf32>
    %94 = arith.addf %88, %93 : vector<192x32xf32>
    %c0_84 = arith.constant 0 : index
    %c52 = arith.constant 52 : index
    %c0_85 = arith.constant 0 : index
    %95 = vector.load %arg2[%c0_84, %c52, %c0_85] : memref<1x264x48xf32, #tpu.memory_space<vmem>>, vector<1x192x48xf32>
    %96 = vector.shape_cast %95 : vector<1x192x48xf32> to vector<192x48xf32>
    %c16 = arith.constant 16 : index
    %c0_86 = arith.constant 0 : index
    %c0_87 = arith.constant 0 : index
    %97 = vector.load %arg3[%c16, %c0_86, %c0_87] : memref<25x48x32xf32, #tpu.memory_space<vmem>>, vector<1x48x32xf32>
    %98 = vector.shape_cast %97 : vector<1x48x32xf32> to vector<48x32xf32>
    %cst_88 = arith.constant dense<0.000000e+00> : vector<192x32xf32>
    %99 = tpu.matmul %96, %98, %cst_88 {dimension_numbers = #tpu.dot_dimension_numbers<[1], [0], [0], [1], [0, 0, 1, 1], [], []>} : vector<192x48xf32>, vector<48x32xf32>, vector<192x32xf32> -> vector<192x32xf32>
    %100 = arith.addf %94, %99 : vector<192x32xf32>
    %c0_89 = arith.constant 0 : index
    %c53 = arith.constant 53 : index
    %c0_90 = arith.constant 0 : index
    %101 = vector.load %arg2[%c0_89, %c53, %c0_90] : memref<1x264x48xf32, #tpu.memory_space<vmem>>, vector<1x192x48xf32>
    %102 = vector.shape_cast %101 : vector<1x192x48xf32> to vector<192x48xf32>
    %c17_91 = arith.constant 17 : index
    %c0_92 = arith.constant 0 : index
    %c0_93 = arith.constant 0 : index
    %103 = vector.load %arg3[%c17_91, %c0_92, %c0_93] : memref<25x48x32xf32, #tpu.memory_space<vmem>>, vector<1x48x32xf32>
    %104 = vector.shape_cast %103 : vector<1x48x32xf32> to vector<48x32xf32>
    %cst_94 = arith.constant dense<0.000000e+00> : vector<192x32xf32>
    %105 = tpu.matmul %102, %104, %cst_94 {dimension_numbers = #tpu.dot_dimension_numbers<[1], [0], [0], [1], [0, 0, 1, 1], [], []>} : vector<192x48xf32>, vector<48x32xf32>, vector<192x32xf32> -> vector<192x32xf32>
    %106 = arith.addf %100, %105 : vector<192x32xf32>
    %c0_95 = arith.constant 0 : index
    %c54 = arith.constant 54 : index
    %c0_96 = arith.constant 0 : index
    %107 = vector.load %arg2[%c0_95, %c54, %c0_96] : memref<1x264x48xf32, #tpu.memory_space<vmem>>, vector<1x192x48xf32>
    %108 = vector.shape_cast %107 : vector<1x192x48xf32> to vector<192x48xf32>
    %c18_97 = arith.constant 18 : index
    %c0_98 = arith.constant 0 : index
    %c0_99 = arith.constant 0 : index
    %109 = vector.load %arg3[%c18_97, %c0_98, %c0_99] : memref<25x48x32xf32, #tpu.memory_space<vmem>>, vector<1x48x32xf32>
    %110 = vector.shape_cast %109 : vector<1x48x32xf32> to vector<48x32xf32>
    %cst_100 = arith.constant dense<0.000000e+00> : vector<192x32xf32>
    %111 = tpu.matmul %108, %110, %cst_100 {dimension_numbers = #tpu.dot_dimension_numbers<[1], [0], [0], [1], [0, 0, 1, 1], [], []>} : vector<192x48xf32>, vector<48x32xf32>, vector<192x32xf32> -> vector<192x32xf32>
    %112 = arith.addf %106, %111 : vector<192x32xf32>
    %c0_101 = arith.constant 0 : index
    %c55 = arith.constant 55 : index
    %c0_102 = arith.constant 0 : index
    %113 = vector.load %arg2[%c0_101, %c55, %c0_102] : memref<1x264x48xf32, #tpu.memory_space<vmem>>, vector<1x192x48xf32>
    %114 = vector.shape_cast %113 : vector<1x192x48xf32> to vector<192x48xf32>
    %c19_103 = arith.constant 19 : index
    %c0_104 = arith.constant 0 : index
    %c0_105 = arith.constant 0 : index
    %115 = vector.load %arg3[%c19_103, %c0_104, %c0_105] : memref<25x48x32xf32, #tpu.memory_space<vmem>>, vector<1x48x32xf32>
    %116 = vector.shape_cast %115 : vector<1x48x32xf32> to vector<48x32xf32>
    %cst_106 = arith.constant dense<0.000000e+00> : vector<192x32xf32>
    %117 = tpu.matmul %114, %116, %cst_106 {dimension_numbers = #tpu.dot_dimension_numbers<[1], [0], [0], [1], [0, 0, 1, 1], [], []>} : vector<192x48xf32>, vector<48x32xf32>, vector<192x32xf32> -> vector<192x32xf32>
    %118 = arith.addf %112, %117 : vector<192x32xf32>
    %c0_107 = arith.constant 0 : index
    %c68 = arith.constant 68 : index
    %c0_108 = arith.constant 0 : index
    %119 = vector.load %arg2[%c0_107, %c68, %c0_108] : memref<1x264x48xf32, #tpu.memory_space<vmem>>, vector<1x192x48xf32>
    %120 = vector.shape_cast %119 : vector<1x192x48xf32> to vector<192x48xf32>
    %c20_109 = arith.constant 20 : index
    %c0_110 = arith.constant 0 : index
    %c0_111 = arith.constant 0 : index
    %121 = vector.load %arg3[%c20_109, %c0_110, %c0_111] : memref<25x48x32xf32, #tpu.memory_space<vmem>>, vector<1x48x32xf32>
    %122 = vector.shape_cast %121 : vector<1x48x32xf32> to vector<48x32xf32>
    %cst_112 = arith.constant dense<0.000000e+00> : vector<192x32xf32>
    %123 = tpu.matmul %120, %122, %cst_112 {dimension_numbers = #tpu.dot_dimension_numbers<[1], [0], [0], [1], [0, 0, 1, 1], [], []>} : vector<192x48xf32>, vector<48x32xf32>, vector<192x32xf32> -> vector<192x32xf32>
    %124 = arith.addf %118, %123 : vector<192x32xf32>
    %c0_113 = arith.constant 0 : index
    %c69 = arith.constant 69 : index
    %c0_114 = arith.constant 0 : index
    %125 = vector.load %arg2[%c0_113, %c69, %c0_114] : memref<1x264x48xf32, #tpu.memory_space<vmem>>, vector<1x192x48xf32>
    %126 = vector.shape_cast %125 : vector<1x192x48xf32> to vector<192x48xf32>
    %c21_115 = arith.constant 21 : index
    %c0_116 = arith.constant 0 : index
    %c0_117 = arith.constant 0 : index
    %127 = vector.load %arg3[%c21_115, %c0_116, %c0_117] : memref<25x48x32xf32, #tpu.memory_space<vmem>>, vector<1x48x32xf32>
    %128 = vector.shape_cast %127 : vector<1x48x32xf32> to vector<48x32xf32>
    %cst_118 = arith.constant dense<0.000000e+00> : vector<192x32xf32>
    %129 = tpu.matmul %126, %128, %cst_118 {dimension_numbers = #tpu.dot_dimension_numbers<[1], [0], [0], [1], [0, 0, 1, 1], [], []>} : vector<192x48xf32>, vector<48x32xf32>, vector<192x32xf32> -> vector<192x32xf32>
    %130 = arith.addf %124, %129 : vector<192x32xf32>
    %c0_119 = arith.constant 0 : index
    %c70 = arith.constant 70 : index
    %c0_120 = arith.constant 0 : index
    %131 = vector.load %arg2[%c0_119, %c70, %c0_120] : memref<1x264x48xf32, #tpu.memory_space<vmem>>, vector<1x192x48xf32>
    %132 = vector.shape_cast %131 : vector<1x192x48xf32> to vector<192x48xf32>
    %c22 = arith.constant 22 : index
    %c0_121 = arith.constant 0 : index
    %c0_122 = arith.constant 0 : index
    %133 = vector.load %arg3[%c22, %c0_121, %c0_122] : memref<25x48x32xf32, #tpu.memory_space<vmem>>, vector<1x48x32xf32>
    %134 = vector.shape_cast %133 : vector<1x48x32xf32> to vector<48x32xf32>
    %cst_123 = arith.constant dense<0.000000e+00> : vector<192x32xf32>
    %135 = tpu.matmul %132, %134, %cst_123 {dimension_numbers = #tpu.dot_dimension_numbers<[1], [0], [0], [1], [0, 0, 1, 1], [], []>} : vector<192x48xf32>, vector<48x32xf32>, vector<192x32xf32> -> vector<192x32xf32>
    %136 = arith.addf %130, %135 : vector<192x32xf32>
    %c0_124 = arith.constant 0 : index
    %c71 = arith.constant 71 : index
    %c0_125 = arith.constant 0 : index
    %137 = vector.load %arg2[%c0_124, %c71, %c0_125] : memref<1x264x48xf32, #tpu.memory_space<vmem>>, vector<1x192x48xf32>
    %138 = vector.shape_cast %137 : vector<1x192x48xf32> to vector<192x48xf32>
    %c23 = arith.constant 23 : index
    %c0_126 = arith.constant 0 : index
    %c0_127 = arith.constant 0 : index
    %139 = vector.load %arg3[%c23, %c0_126, %c0_127] : memref<25x48x32xf32, #tpu.memory_space<vmem>>, vector<1x48x32xf32>
    %140 = vector.shape_cast %139 : vector<1x48x32xf32> to vector<48x32xf32>
    %cst_128 = arith.constant dense<0.000000e+00> : vector<192x32xf32>
    %141 = tpu.matmul %138, %140, %cst_128 {dimension_numbers = #tpu.dot_dimension_numbers<[1], [0], [0], [1], [0, 0, 1, 1], [], []>} : vector<192x48xf32>, vector<48x32xf32>, vector<192x32xf32> -> vector<192x32xf32>
    %142 = arith.addf %136, %141 : vector<192x32xf32>
    %c0_129 = arith.constant 0 : index
    %c72 = arith.constant 72 : index
    %c0_130 = arith.constant 0 : index
    %143 = vector.load %arg2[%c0_129, %c72, %c0_130] : memref<1x264x48xf32, #tpu.memory_space<vmem>>, vector<1x192x48xf32>
    %144 = vector.shape_cast %143 : vector<1x192x48xf32> to vector<192x48xf32>
    %c24 = arith.constant 24 : index
    %c0_131 = arith.constant 0 : index
    %c0_132 = arith.constant 0 : index
    %145 = vector.load %arg3[%c24, %c0_131, %c0_132] : memref<25x48x32xf32, #tpu.memory_space<vmem>>, vector<1x48x32xf32>
    %146 = vector.shape_cast %145 : vector<1x48x32xf32> to vector<48x32xf32>
    %cst_133 = arith.constant dense<0.000000e+00> : vector<192x32xf32>
    %147 = tpu.matmul %144, %146, %cst_133 {dimension_numbers = #tpu.dot_dimension_numbers<[1], [0], [0], [1], [0, 0, 1, 1], [], []>} : vector<192x48xf32>, vector<48x32xf32>, vector<192x32xf32> -> vector<192x32xf32>
    %148 = arith.addf %142, %147 : vector<192x32xf32>
    %c0_134 = arith.constant 0 : index
    %c0_135 = arith.constant 0 : index
    %149 = vector.load %arg4[%c0_134, %c0_135] : memref<1x32xf32, #tpu.memory_space<vmem>>, vector<1x32xf32>
    %150 = vector.broadcast %149 : vector<1x32xf32> to vector<192x32xf32>
    %151 = arith.addf %148, %150 : vector<192x32xf32>
    %c0_136 = arith.constant 0 : index
    %c0_137 = arith.constant 0 : index
    %c0_138 = arith.constant 0 : index
    %152 = vector.load %arg5[%c0_136, %c0_137, %c0_138] : memref<1x192x32xf32, #tpu.memory_space<vmem>>, vector<1x192x32xf32>
    %153 = vector.shape_cast %152 : vector<1x192x32xf32> to vector<192x32xf32>
    %154 = vector.shape_cast %151 : vector<192x32xf32> to vector<1x192x32xf32>
    tpu.vector_store %arg5[%c0_136, %c0_137, %c0_138], %154 {strides = array<i32>} : memref<1x192x32xf32, #tpu.memory_space<vmem>>, vector<1x192x32xf32>,
    return
  }
  func.func @transform_0(%arg0: i32, %arg1: i32) -> (i32, i32, i32) {
    %c0_i32 = arith.constant 0 : i32
    %c0_i32_0 = arith.constant 0 : i32
    %c0_i32_1 = arith.constant 0 : i32
    return %arg1, %c0_i32, %c0_i32_0 : i32, i32, i32
  }
  func.func @transform_1(%arg0: i32, %arg1: i32) -> (i32, i32, i32) {
    %c0_i32 = arith.constant 0 : i32
    %c0_i32_0 = arith.constant 0 : i32
    %c0_i32_1 = arith.constant 0 : i32
    return %c0_i32, %c0_i32_0, %arg0 : i32, i32, i32
  }
  func.func @transform_2(%arg0: i32, %arg1: i32) -> (i32, i32) {
    %c0_i32 = arith.constant 0 : i32
    %c0_i32_0 = arith.constant 0 : i32
    return %c0_i32, %arg0 : i32, i32
  }
  func.func @transform_3(%arg0: i32, %arg1: i32) -> (i32, i32, i32) {
    %c0_i32 = arith.constant 0 : i32
    %c0_i32_0 = arith.constant 0 : i32
    return %arg1, %c0_i32, %arg0 : i32, i32, i32
  }
}

</mosaic_0001>

<llo_original>
// kernel: tfblock_v4_forward.5
$region0: #{tfblock_v4_forward.5}
  #allocation0 [shape = 'u32[]', space=smem, size = 0x4, offset = 0x4, fixed_abs, tag = 'smem constant byte address 0x4 - core index']
  #allocation1 [shape = 'u32[72,128]{1,0:T(1,128)}', space=vmem, size = 0x9000, scoped, tag = 'internal scratch']
  %s0 = inlined_call_operand.vmem [shape: f32[2,35,64], index: 0, kind: input, shape index: {}]
  %s1 = inlined_call_operand.vmem [shape: f32[1,1,64], index: 1, kind: input, shape index: {}]
  %s2 = inlined_call_operand.vmem [shape: f32[1,1,64], index: 2, kind: input, shape index: {}]
  %s3 = inlined_call_operand.vmem [shape: f32[2,35,64], index: 3, kind: output, shape index: {}]
  %s4 = sld [smem:[#allocation0]]
  $region45: #{tfblock_v4_forward.5} parent=0
    _
  %s6 = ssub.s32 1, %s4
  %s7 = scalar_select 0, %s6, %s4
  loop: start=0, step=1, limit=4
  $region2: #{tfblock_v4_forward.5} parent=0 // loop_pre_header
    _
  $region3: #{tfblock_v4_forward.5} parent=0 // loop_header
    %s9 = sphi 0, %s13
    %p10 = scmp.ge.s32.totalorder %s9, 4
    %s19 = sphi 0, %s21
    %s22 = sphi 0, %s19
    %s23 = sphi 0, %s22
    %s39 = sphi 0, %s23
    %s43 = sphi 0, %s43
    %s45 = sphi 0, %s43
    %s46 = sphi 0, %s45
    %s60 = sphi 0, %s46
    %s64 = sphi 0, %s64
    %s66 = sphi 0, %s64
    %s67 = sphi 0, %s66
    %s81 = sphi 0, %s67
    %s87 = sphi 0, %s89
    %s90 = sphi 0, %s87
    %s91 = sphi 0, %s90
    %s107 = sphi 0, %s91
  $region4: #{tfblock_v4_forward.5} parent=0 // loop_header_branch
    %12 = sbr.rel (%p10) target = $region8
  $region5: #{tfblock_v4_forward.5} parent=0 // loop_body
    %s14 = ssub.s32 %s9, 1
    %s15 = ssub.s32 %s9, 2
    %s16 = sadd.s32 %s9, 1
    %s17 = ssub.s32 %s9, %s16
    %p18 = scmp.eq.s32.totalorder %s17, 0
    %s20 = sadd.s32 %s19, 1
    %s21 = scalar_select %p18, %s19, %s20
    %p24 = pneg %p18
    %p25 = scmp.eq.s32.totalorder %s9, 1
    %p26 = por %p24, %p25
    %p27 = scmp.ne.s32.totalorder %s19, %s22
    %p28 = scmp.eq.s32.totalorder %s9, 0
    %p29 = por %p27, %p28
    %p30 = scmp.ne.s32.totalorder %s19, %s22
    %p31 = scmp.eq.s32.totalorder %s14, 1
    %p32 = por %p30, %p31
    %p33 = scmp.ne.s32.totalorder %s22, %s23
    %p34 = scmp.eq.s32.totalorder %s14, 0
    %p35 = por %p33, %p34
    %p36 = scmp.ne.s32.totalorder %s22, %s23
    %p37 = scmp.eq.s32.totalorder %s15, 1
    %p38 = por %p36, %p37
    %p40 = scmp.ne.s32.totalorder %s23, %s39
    %p41 = scmp.eq.s32.totalorder %s15, 0
    %p42 = por %p40, %p41
    %s44 = sadd.s32 %s43, 1
    %p47 = scmp.eq.s32.totalorder %s9, 1
    %p48 = scmp.ne.s32.totalorder %s43, %s45
    %p49 = scmp.eq.s32.totalorder %s9, 0
    %p50 = por %p48, %p49
    %p51 = scmp.ne.s32.totalorder %s43, %s45
    %p52 = scmp.eq.s32.totalorder %s14, 1
    %p53 = por %p51, %p52
    %p54 = scmp.ne.s32.totalorder %s45, %s46
    %p55 = scmp.eq.s32.totalorder %s14, 0
    %p56 = por %p54, %p55
    %p57 = scmp.ne.s32.totalorder %s45, %s46
    %p58 = scmp.eq.s32.totalorder %s15, 1
    %p59 = por %p57, %p58
    %p61 = scmp.ne.s32.totalorder %s46, %s60
    %p62 = scmp.eq.s32.totalorder %s15, 0
    %p63 = por %p61, %p62
    %s65 = sadd.s32 %s64, 1
    %p68 = scmp.eq.s32.totalorder %s9, 1
    %p69 = scmp.ne.s32.totalorder %s64, %s66
    %p70 = scmp.eq.s32.totalorder %s9, 0
    %p71 = por %p69, %p70
    %p72 = scmp.ne.s32.totalorder %s64, %s66
    %p73 = scmp.eq.s32.totalorder %s14, 1
    %p74 = por %p72, %p73
    %p75 = scmp.ne.s32.totalorder %s66, %s67
    %p76 = scmp.eq.s32.totalorder %s14, 0
    %p77 = por %p75, %p76
    %p78 = scmp.ne.s32.totalorder %s66, %s67
    %p79 = scmp.eq.s32.totalorder %s15, 1
    %p80 = por %p78, %p79
    %p82 = scmp.ne.s32.totalorder %s67, %s81
    %p83 = scmp.eq.s32.totalorder %s15, 0
    %p84 = por %p82, %p83
    %s85 = ssub.s32 %s9, %s16
    %p86 = scmp.eq.s32.totalorder %s85, 0
    %s88 = sadd.s32 %s87, 1
    %s89 = scalar_select %p86, %s87, %s88
    %p92 = pneg %p86
    %p93 = scmp.eq.s32.totalorder %s9, 1
    %p94 = por %p92, %p93
    %p95 = scmp.ne.s32.totalorder %s87, %s90
    %p96 = scmp.eq.s32.totalorder %s9, 0
    %p97 = por %p95, %p96
    %p98 = scmp.ne.s32.totalorder %s87, %s90
    %p99 = scmp.eq.s32.totalorder %s14, 1
    %p100 = por %p98, %p99
    %p101 = scmp.ne.s32.totalorder %s90, %s91
    %p102 = scmp.eq.s32.totalorder %s14, 0
    %p103 = por %p101, %p102
    %p104 = scmp.ne.s32.totalorder %s90, %s91
    %p105 = scmp.eq.s32.totalorder %s15, 1
    %p106 = por %p104, %p105
    %p108 = scmp.ne.s32.totalorder %s91, %s107
    %p109 = scmp.eq.s32.totalorder %s15, 0
    %p110 = por %p108, %p109
    %p111 = scmp.le.s32.totalorder 1, %s9
    %p112 = scmp.lt.s32.totalorder %s9, 3
    %p113 = pnand %p111, %p112
    %p114 = pneg %p113
    // Predicated region
    $region9: #{tfblock_v4_forward.5} parent=5 // pred_check
      _
    $region10: #{tfblock_v4_forward.5} parent=5 // pred_check_branch
      %116 = sbr.rel (%p113) target = $region12
    $region11: #{tfblock_v4_forward.5} parent=5 // pred_region
      %s117 = ssub.s32 %s9, 1
      // Predicated region
      $region13: #{tfblock_v4_forward.5} parent=11 // pred_check
        %p118 = pneg %p56
      $region14: #{tfblock_v4_forward.5} parent=11 // pred_check_branch
        %120 = sbr.rel (%p118) target = $region16
      $region15: #{tfblock_v4_forward.5} parent=11 // pred_region
        _
      $region16: #{tfblock_v4_forward.5} parent=11 // pred_fallthru
        _
      // Predicated region
      $region17: #{tfblock_v4_forward.5} parent=11 // pred_check
        %p121 = pneg %p77
      $region18: #{tfblock_v4_forward.5} parent=11 // pred_check_branch
        %123 = sbr.rel (%p121) target = $region20
      $region19: #{tfblock_v4_forward.5} parent=11 // pred_region
        _
      $region20: #{tfblock_v4_forward.5} parent=11 // pred_fallthru
        _
    $region12: #{tfblock_v4_forward.5} parent=5 // pred_fallthru
      _
    %p124 = scmp.lt.s32.totalorder %s9, 2
    // Predicated region
    $region21: #{tfblock_v4_forward.5} parent=5 // pred_check
      %p125 = pneg %p124
    $region22: #{tfblock_v4_forward.5} parent=5 // pred_check_branch
      %127 = sbr.rel (%p125) target = $region24
    $region23: #{tfblock_v4_forward.5} parent=5 // pred_region
      // Predicated region
      $region25: #{tfblock_v4_forward.5} parent=23 // pred_check
        %p128 = pneg %p29
      $region26: #{tfblock_v4_forward.5} parent=23 // pred_check_branch
        %130 = sbr.rel (%p128) target = $region28
      $region27: #{tfblock_v4_forward.5} parent=23 // pred_region
        %p131 = scmp.lt.s32.totalorder %s9, 1
        %s132 = scalar_select %p131, %s9, 1
        %s133 = smul.addr %s132, 5
        %s134 = smul.addr %s133, 8
        %s135 = scalar_lea.vmem %s0, %s134
      $region28: #{tfblock_v4_forward.5} parent=23 // pred_fallthru
        _
    $region24: #{tfblock_v4_forward.5} parent=5 // pred_fallthru
      _
    %p136 = scmp.le.s32.totalorder 1, %s9
    %p137 = scmp.lt.s32.totalorder %s9, 3
    %p138 = pnand %p136, %p137
    %p139 = pneg %p138
    // Predicated region
    $region29: #{tfblock_v4_forward.5} parent=5 // pred_check
      _
    $region30: #{tfblock_v4_forward.5} parent=5 // pred_check_branch
      %141 = sbr.rel (%p138) target = $region32
    $region31: #{tfblock_v4_forward.5} parent=5 // pred_region
      %s142 = ssub.s32 %s9, 1
      %p143 = scmp.lt.s32.totalorder %s14, 1
      %s144 = scalar_select %p143, %s14, 1
      %s145 = smul.addr %s144, 5
      %s146 = smul.addr %s145, 8
      %s147 = scalar_lea.vmem %s0, %s146
      %p148 = pneg %p35
      %p149 = pneg %p32
      %p150 = pneg %p56
      %p151 = pneg %p53
      %p152 = pneg %p77
      %p153 = pneg %p74
      %p154 = pneg %p103
      %p155 = pneg %p100
      %p156 = scmp.lt.s32.totalorder %s14, 1
      %s157 = scalar_select %p156, %s14, 1
      %s158 = smul.addr %s157, 5
      %s159 = smul.addr %s158, 8
      %s160 = scalar_lea.vmem %s3, %s159
      %p161 = scmp.lt.s32.totalorder %s14, 1
      %s162 = scalar_select %p161, %s14, 1
      %s163 = smul.addr %s162, 5
      %s164 = smul.addr %s163, 8
      %s165 = scalar_lea.vmem %s0, %s164
      %p166 = scmp.lt.s32.totalorder %s14, 1
      %s167 = scalar_select %p166, %s14, 1
      %s168 = smul.addr %s167, 5
      %s169 = smul.addr %s168, 8
      %s170 = scalar_lea.vmem %s3, %s169
      %v171 = vld [vmem:[%s165] sm:$0xff]
      %v172 = vld [vmem:[%s165 + $0x8] sm:$0xff]
      %v173 = vld [vmem:[%s165 + $0x10] sm:$0xff]
      %v174 = vld [vmem:[%s165 + $0x18] sm:$0xff]
      %v175 = vld [vmem:[%s165 + $0x20] sm:$0x7]
      %v176 = vld [vmem:[%s1] sm:$0x1]
      %v178 = vperm.slane %v176, 0
      %v180 = vmul.f32 %v171, %v178
      %v181 = vmul.f32 %v172, %v178
      %v182 = vmul.f32 %v173, %v178
      %v183 = vmul.f32 %v174, %v178
      %v184 = vmul.f32 %v175, %v178
      %v185 = vld [vmem:[%s2] sm:$0x1]
      %v187 = vperm.slane %v185, 0
      %v189 = vadd.f32 %v180, %v187
      %v190 = vadd.f32 %v181, %v187
      %v191 = vadd.f32 %v182, %v187
      %v192 = vadd.f32 %v183, %v187
      %v193 = vadd.f32 %v184, %v187
      %vm194 = vcmask 523264
      %195 = vst.msk [vmem:[%s170] sm:$0xff] %vm194, %v189
      %196 = vst.msk [vmem:[%s170 + $0x8] sm:$0xff] %vm194, %v190
      %197 = vst.msk [vmem:[%s170 + $0x10] sm:$0xff] %vm194, %v191
      %198 = vst.msk [vmem:[%s170 + $0x18] sm:$0xff] %vm194, %v192
      %vm199 = vcmask 518144
      %200 = vst.msk [vmem:[%s170 + $0x20] sm:$0x7] %vm199, %v193
      %p201 = scmp.lt.s32.totalorder %s14, 1
      %s202 = scalar_select %p201, %s14, 1
      %s203 = smul.addr %s202, 5
      %s204 = smul.addr %s203, 8
      %s205 = scalar_lea.vmem %s3, %s204
      // Predicated region
      $region33: #{tfblock_v4_forward.5} parent=31 // pred_check
        %p206 = pneg %p100
      $region34: #{tfblock_v4_forward.5} parent=31 // pred_check_branch
        %208 = sbr.rel (%p206) target = $region36
      $region35: #{tfblock_v4_forward.5} parent=31 // pred_region
        _
      $region36: #{tfblock_v4_forward.5} parent=31 // pred_fallthru
        _
    $region32: #{tfblock_v4_forward.5} parent=5 // pred_fallthru
      _
    %p209 = scmp.le.s32.totalorder 2, %s9
    // Predicated region
    $region37: #{tfblock_v4_forward.5} parent=5 // pred_check
      %p210 = pneg %p209
    $region38: #{tfblock_v4_forward.5} parent=5 // pred_check_branch
      %212 = sbr.rel (%p210) target = $region40
    $region39: #{tfblock_v4_forward.5} parent=5 // pred_region
      %s213 = ssub.s32 %s9, 2
      // Predicated region
      $region41: #{tfblock_v4_forward.5} parent=39 // pred_check
        %p214 = pneg %p106
      $region42: #{tfblock_v4_forward.5} parent=39 // pred_check_branch
        %216 = sbr.rel (%p214) target = $region44
      $region43: #{tfblock_v4_forward.5} parent=39 // pred_region
        %p217 = scmp.lt.s32.totalorder %s15, 1
        %s218 = scalar_select %p217, %s15, 1
        %s219 = smul.addr %s218, 5
        %s220 = smul.addr %s219, 8
        %s221 = scalar_lea.vmem %s3, %s220
      $region44: #{tfblock_v4_forward.5} parent=39 // pred_fallthru
        _
    $region40: #{tfblock_v4_forward.5} parent=5 // pred_fallthru
      _
  $region6: #{tfblock_v4_forward.5} parent=0 // loop_footer
    %s13 = sadd.s32 1, %s9
  $region7: #{tfblock_v4_forward.5} parent=0 // loop_footer_branch
    %8 = sbr.rel target = $region3
  $region8: #{tfblock_v4_forward.5} parent=0 // loop_exit
    _

// kernel: tfblock_v4_forward.4
$region0: #{tfblock_v4_forward.4}
  #allocation0 [shape = 'u32[]', space=smem, size = 0x4, offset = 0x4, fixed_abs, tag = 'smem constant byte address 0x4 - core index']
  #allocation1 [shape = 'u32[72,128]{1,0:T(1,128)}', space=vmem, size = 0x9000, scoped, tag = 'internal scratch']
  %s0 = inlined_call_operand.vmem [shape: f32[2,72,32], index: 0, kind: input, shape index: {}]
  %s1 = inlined_call_operand.vmem [shape: f32[8,32,64], index: 1, kind: input, shape index: {}]
  %s2 = inlined_call_operand.vmem [shape: f32[1,64], index: 2, kind: input, shape index: {}]
  %s3 = inlined_call_operand.vmem [shape: f32[2,40,64], index: 3, kind: output, shape index: {}]
  %s4 = sld [smem:[#allocation0]]
  $region45: #{tfblock_v4_forward.4} parent=0
    _
  %s6 = ssub.s32 1, %s4
  %s7 = scalar_select 0, %s6, %s4
  loop: start=0, step=1, limit=4
  $region2: #{tfblock_v4_forward.4} parent=0 // loop_pre_header
    _
  $region3: #{tfblock_v4_forward.4} parent=0 // loop_header
    %s9 = sphi 0, %s13
    %p10 = scmp.ge.s32.totalorder %s9, 4
    %s16 = sphi 0, %s28
    %s17 = sphi 0, %s24
    %s18 = sphi 0, %s16
    %s19 = sphi 0, %s17
    %s20 = sphi 0, %s18
    %s21 = sphi 0, %s19
    %s31 = sphi 0, %s33
    %s34 = sphi 0, %s31
    %s35 = sphi 0, %s34
    %s51 = sphi 0, %s35
    %s57 = sphi 0, %s59
    %s60 = sphi 0, %s57
    %s61 = sphi 0, %s60
    %s77 = sphi 0, %s61
    %s83 = sphi 0, %s85
    %s86 = sphi 0, %s83
    %s87 = sphi 0, %s86
    %s103 = sphi 0, %s87
    %s111 = sphi 0, %s113
    %s114 = sphi 0, %s111
    %s115 = sphi 0, %s114
    %s131 = sphi 0, %s115
  $region4: #{tfblock_v4_forward.4} parent=0 // loop_header_branch
    %12 = sbr.rel (%p10) target = $region8
  $region5: #{tfblock_v4_forward.4} parent=0 // loop_body
    %s14 = ssub.s32 %s9, 1
    %s15 = ssub.s32 %s9, 2
    %s22 = sadd.s32 1, %s17
    %p23 = scmp.ge.s32.totalorder %s22, 2
    %s24 = scalar_select %p23, 0, %s22
    %s25 = sadd.s32 1, %s16
    %s26 = scalar_select %p23, %s25, %s16
    %p27 = scmp.ge.s32.totalorder %s26, 1
    %s28 = scalar_select %p27, 0, %s26
    %s29 = ssub.s32 %s17, %s24
    %p30 = scmp.eq.s32.totalorder %s29, 0
    %s32 = sadd.s32 %s31, 1
    %s33 = scalar_select %p30, %s31, %s32
    %p36 = pneg %p30
    %p37 = scmp.eq.s32.totalorder %s9, 1
    %p38 = por %p36, %p37
    %p39 = scmp.ne.s32.totalorder %s31, %s34
    %p40 = scmp.eq.s32.totalorder %s9, 0
    %p41 = por %p39, %p40
    %p42 = scmp.ne.s32.totalorder %s31, %s34
    %p43 = scmp.eq.s32.totalorder %s14, 1
    %p44 = por %p42, %p43
    %p45 = scmp.ne.s32.totalorder %s34, %s35
    %p46 = scmp.eq.s32.totalorder %s14, 0
    %p47 = por %p45, %p46
    %p48 = scmp.ne.s32.totalorder %s34, %s35
    %p49 = scmp.eq.s32.totalorder %s15, 1
    %p50 = por %p48, %p49
    %p52 = scmp.ne.s32.totalorder %s35, %s51
    %p53 = scmp.eq.s32.totalorder %s15, 0
    %p54 = por %p52, %p53
    %s55 = ssub.s32 %s16, %s28
    %p56 = scmp.eq.s32.totalorder %s55, 0
    %s58 = sadd.s32 %s57, 1
    %s59 = scalar_select %p56, %s57, %s58
    %p62 = pneg %p56
    %p63 = scmp.eq.s32.totalorder %s9, 1
    %p64 = por %p62, %p63
    %p65 = scmp.ne.s32.totalorder %s57, %s60
    %p66 = scmp.eq.s32.totalorder %s9, 0
    %p67 = por %p65, %p66
    %p68 = scmp.ne.s32.totalorder %s57, %s60
    %p69 = scmp.eq.s32.totalorder %s14, 1
    %p70 = por %p68, %p69
    %p71 = scmp.ne.s32.totalorder %s60, %s61
    %p72 = scmp.eq.s32.totalorder %s14, 0
    %p73 = por %p71, %p72
    %p74 = scmp.ne.s32.totalorder %s60, %s61
    %p75 = scmp.eq.s32.totalorder %s15, 1
    %p76 = por %p74, %p75
    %p78 = scmp.ne.s32.totalorder %s61, %s77
    %p79 = scmp.eq.s32.totalorder %s15, 0
    %p80 = por %p78, %p79
    %s81 = ssub.s32 %s16, %s28
    %p82 = scmp.eq.s32.totalorder %s81, 0
    %s84 = sadd.s32 %s83, 1
    %s85 = scalar_select %p82, %s83, %s84
    %p88 = pneg %p82
    %p89 = scmp.eq.s32.totalorder %s9, 1
    %p90 = por %p88, %p89
    %p91 = scmp.ne.s32.totalorder %s83, %s86
    %p92 = scmp.eq.s32.totalorder %s9, 0
    %p93 = por %p91, %p92
    %p94 = scmp.ne.s32.totalorder %s83, %s86
    %p95 = scmp.eq.s32.totalorder %s14, 1
    %p96 = por %p94, %p95
    %p97 = scmp.ne.s32.totalorder %s86, %s87
    %p98 = scmp.eq.s32.totalorder %s14, 0
    %p99 = por %p97, %p98
    %p100 = scmp.ne.s32.totalorder %s86, %s87
    %p101 = scmp.eq.s32.totalorder %s15, 1
    %p102 = por %p100, %p101
    %p104 = scmp.ne.s32.totalorder %s87, %s103
    %p105 = scmp.eq.s32.totalorder %s15, 0
    %p106 = por %p104, %p105
    %s107 = ssub.s32 %s17, %s24
    %s108 = ssub.s32 %s16, %s28
    %s109 = sor.u32 %s107, %s108
    %p110 = scmp.eq.s32.totalorder %s109, 0
    %s112 = sadd.s32 %s111, 1
    %s113 = scalar_select %p110, %s111, %s112
    %p116 = pneg %p110
    %p117 = scmp.eq.s32.totalorder %s9, 1
    %p118 = por %p116, %p117
    %p119 = scmp.ne.s32.totalorder %s111, %s114
    %p120 = scmp.eq.s32.totalorder %s9, 0
    %p121 = por %p119, %p120
    %p122 = scmp.ne.s32.totalorder %s111, %s114
    %p123 = scmp.eq.s32.totalorder %s14, 1
    %p124 = por %p122, %p123
    %p125 = scmp.ne.s32.totalorder %s114, %s115
    %p126 = scmp.eq.s32.totalorder %s14, 0
    %p127 = por %p125, %p126
    %p128 = scmp.ne.s32.totalorder %s114, %s115
    %p129 = scmp.eq.s32.totalorder %s15, 1
    %p130 = por %p128, %p129
    %p132 = scmp.ne.s32.totalorder %s115, %s131
    %p133 = scmp.eq.s32.totalorder %s15, 0
    %p134 = por %p132, %p133
    %p135 = scmp.le.s32.totalorder 1, %s9
    %p136 = scmp.lt.s32.totalorder %s9, 3
    %p137 = pnand %p135, %p136
    %p138 = pneg %p137
    // Predicated region
    $region9: #{tfblock_v4_forward.4} parent=5 // pred_check
      _
    $region10: #{tfblock_v4_forward.4} parent=5 // pred_check_branch
      %140 = sbr.rel (%p137) target = $region12
    $region11: #{tfblock_v4_forward.4} parent=5 // pred_region
      %s141 = ssub.s32 %s9, 1
      // Predicated region
      $region13: #{tfblock_v4_forward.4} parent=11 // pred_check
        %p142 = pneg %p73
      $region14: #{tfblock_v4_forward.4} parent=11 // pred_check_branch
        %144 = sbr.rel (%p142) target = $region16
      $region15: #{tfblock_v4_forward.4} parent=11 // pred_region
        %p145 = scmp.lt.s32.totalorder %s18, 0
        %s146 = scalar_select %p145, %s18, 0
        %s147 = smul.addr %s146, 8
        %s148 = scalar_lea.vmem %s1, %s147
      $region16: #{tfblock_v4_forward.4} parent=11 // pred_fallthru
        _
      // Predicated region
      $region17: #{tfblock_v4_forward.4} parent=11 // pred_check
        %p149 = pneg %p99
      $region18: #{tfblock_v4_forward.4} parent=11 // pred_check_branch
        %151 = sbr.rel (%p149) target = $region20
      $region19: #{tfblock_v4_forward.4} parent=11 // pred_region
        %p152 = scmp.lt.s32.totalorder %s18, 0
        %s153 = scalar_select %p152, %s18, 0
        %s154 = scalar_lea.vmem %s2, %s153
      $region20: #{tfblock_v4_forward.4} parent=11 // pred_fallthru
        _
    $region12: #{tfblock_v4_forward.4} parent=5 // pred_fallthru
      _
    %p155 = scmp.lt.s32.totalorder %s9, 2
    // Predicated region
    $region21: #{tfblock_v4_forward.4} parent=5 // pred_check
      %p156 = pneg %p155
    $region22: #{tfblock_v4_forward.4} parent=5 // pred_check_branch
      %158 = sbr.rel (%p156) target = $region24
    $region23: #{tfblock_v4_forward.4} parent=5 // pred_region
      // Predicated region
      $region25: #{tfblock_v4_forward.4} parent=23 // pred_check
        %p159 = pneg %p41
      $region26: #{tfblock_v4_forward.4} parent=23 // pred_check_branch
        %161 = sbr.rel (%p159) target = $region28
      $region27: #{tfblock_v4_forward.4} parent=23 // pred_region
        %p162 = scmp.lt.s32.totalorder %s17, 1
        %s163 = scalar_select %p162, %s17, 1
        %s164 = smul.addr %s163, 9
        %s165 = smul.addr %s164, 8
        %s166 = scalar_lea.vmem %s0, %s165
      $region28: #{tfblock_v4_forward.4} parent=23 // pred_fallthru
        _
    $region24: #{tfblock_v4_forward.4} parent=5 // pred_fallthru
      _
    %p167 = scmp.le.s32.totalorder 1, %s9
    %p168 = scmp.lt.s32.totalorder %s9, 3
    %p169 = pnand %p167, %p168
    %p170 = pneg %p169
    // Predicated region
    $region29: #{tfblock_v4_forward.4} parent=5 // pred_check
      _
    $region30: #{tfblock_v4_forward.4} parent=5 // pred_check_branch
      %172 = sbr.rel (%p169) target = $region32
    $region31: #{tfblock_v4_forward.4} parent=5 // pred_region
      %s173 = ssub.s32 %s9, 1
      %p174 = scmp.lt.s32.totalorder %s19, 1
      %s175 = scalar_select %p174, %s19, 1
      %s176 = smul.addr %s175, 9
      %s177 = smul.addr %s176, 8
      %s178 = scalar_lea.vmem %s0, %s177
      %p179 = pneg %p47
      %p180 = pneg %p44
      %p181 = scmp.lt.s32.totalorder %s18, 0
      %s182 = scalar_select %p181, %s18, 0
      %s183 = smul.addr %s182, 8
      %s184 = scalar_lea.vmem %s1, %s183
      %p185 = pneg %p73
      %p186 = pneg %p70
      %p187 = scmp.lt.s32.totalorder %s18, 0
      %s188 = scalar_select %p187, %s18, 0
      %s189 = scalar_lea.vmem %s2, %s188
      %p190 = pneg %p99
      %p191 = pneg %p96
      %p192 = pneg %p127
      %p193 = pneg %p124
      %p194 = scmp.lt.s32.totalorder %s19, 1
      %s195 = scalar_select %p194, %s19, 1
      %p196 = scmp.lt.s32.totalorder %s18, 0
      %s197 = scalar_select %p196, %s18, 0
      %s198 = smul.addr %s195, 5
      %s199 = sadd.s32 %s197, %s198
      %s200 = smul.addr %s199, 8
      %s201 = scalar_lea.vmem %s3, %s200
      %p202 = scmp.lt.s32.totalorder %s19, 1
      %s203 = scalar_select %p202, %s19, 1
      %s204 = smul.addr %s203, 9
      %s205 = smul.addr %s204, 8
      %s206 = scalar_lea.vmem %s0, %s205
      %p207 = scmp.lt.s32.totalorder %s18, 0
      %s208 = scalar_select %p207, %s18, 0
      %s209 = smul.addr %s208, 8
      %s210 = scalar_lea.vmem %s1, %s209
      %p211 = scmp.lt.s32.totalorder %s18, 0
      %s212 = scalar_select %p211, %s18, 0
      %s213 = scalar_lea.vmem %s2, %s212
      %p214 = scmp.lt.s32.totalorder %s19, 1
      %s215 = scalar_select %p214, %s19, 1
      %p216 = scmp.lt.s32.totalorder %s18, 0
      %s217 = scalar_select %p216, %s18, 0
      %s218 = smul.addr %s215, 5
      %s219 = sadd.s32 %s217, %s218
      %s220 = smul.addr %s219, 8
      %s221 = scalar_lea.vmem %s3, %s220
      %v222 = vld [vmem:[%s206] sm:$0xff]
      %v223 = vld [vmem:[%s206 + $0x8] sm:$0xff]
      %v224 = vld [vmem:[%s206 + $0x10] sm:$0xff]
      %v225 = vld [vmem:[%s206 + $0x18] sm:$0xff]
      %v226 = vld [vmem:[%s206 + $0x20] sm:$0xff]
      %v227 = vld [vmem:[%s210] sm:$0xff]
      %v228 = vld [vmem:[%s210 + $0x8] sm:$0xff]
      %v229 = vld [vmem:[%s210 + $0x10] sm:$0xff]
      %v230 = vld [vmem:[%s210 + $0x18] sm:$0xff]
      %v231 = vld [vmem:[%s206 + $0x1] sm:$0xff]
      %v232 = vld [vmem:[%s206 + $0x9] sm:$0xff]
      %v233 = vld [vmem:[%s206 + $0x11] sm:$0xff]
      %v234 = vld [vmem:[%s206 + $0x19] sm:$0xff]
      %v235 = vld [vmem:[%s206 + $0x21] sm:$0xff]
      %s236 = scalar_lea.vmem %s210, 32
      %v237 = vld [vmem:[%s236] sm:$0xff]
      %v238 = vld [vmem:[%s236 + $0x8] sm:$0xff]
      %v239 = vld [vmem:[%s236 + $0x10] sm:$0xff]
      %v240 = vld [vmem:[%s236 + $0x18] sm:$0xff]
      %vm241 = vcmask 261120
      %v243 = vsel %vm241, %v231, 0
      %v246 = vsel %vm241, %v232, 0
      %v249 = vsel %vm241, %v233, 0
      %v252 = vsel %vm241, %v234, 0
      %v255 = vsel %vm241, %v235, 0
      %257 = vmatpush.msra.mxu0 0.0
      %258 = vmatpush.msra.mxu0 0.0
      %259 = vmatpush.msra.mxu0 0.0
      %260 = vmatpush.msra.mxu0 0.0
      %261 = vmatpush.msra.mxu0 0.0
      %262 = vmatpush.msra.mxu0 0.0
      %263 = vmatpush.msra.mxu0 0.0
      %264 = vmatpush.msra.mxu0 0.0
      %265 = vmatpush.msra.mxu0 0.0
      %266 = vmatpush.msra.mxu0 0.0
      %267 = vmatpush.msra.mxu0 0.0
      %268 = vmatpush.msra.mxu0 0.0
      %269 = vmatpush.msra.mxu0 %v240
      %270 = vmatpush.msra.mxu0 %v239
      %271 = vmatpush.msra.mxu0 %v238
      %272 = vmatpush.msra.mxu0 %v237
      %273 = vmatmul.f32.gmra.mxu0 %v243
      %v274 = vpop.f32.mrf.mxu0
      %v275 = vadd.f32 0.0, %v274
      %276 = vmatmul.f32.gmra.mxu0 %v246
      %v277 = vpop.f32.mrf.mxu0
      %v278 = vadd.f32 0.0, %v277
      %279 = vmatmul.f32.gmra.mxu0 %v249
      %v280 = vpop.f32.mrf.mxu0
      %v281 = vadd.f32 0.0, %v280
      %282 = vmatmul.f32.gmra.mxu0 %v252
      %v283 = vpop.f32.mrf.mxu0
      %v284 = vadd.f32 0.0, %v283
      %285 = vmatmul.f32.gmra.mxu0 %v255
      %v286 = vpop.f32.mrf.mxu0
      %v287 = vadd.f32 0.0, %v286
      %288 = vdwg.mxu0
      %v290 = vsel %vm241, %v222, 0
      %v293 = vsel %vm241, %v223, 0
      %v296 = vsel %vm241, %v224, 0
      %v299 = vsel %vm241, %v225, 0
      %v302 = vsel %vm241, %v226, 0
      %304 = vmatpush.msra.mxu0 0.0
      %305 = vmatpush.msra.mxu0 0.0
      %306 = vmatpush.msra.mxu0 0.0
      %307 = vmatpush.msra.mxu0 0.0
      %308 = vmatpush.msra.mxu0 0.0
      %309 = vmatpush.msra.mxu0 0.0
      %310 = vmatpush.msra.mxu0 0.0
      %311 = vmatpush.msra.mxu0 0.0
      %312 = vmatpush.msra.mxu0 0.0
      %313 = vmatpush.msra.mxu0 0.0
      %314 = vmatpush.msra.mxu0 0.0
      %315 = vmatpush.msra.mxu0 0.0
      %316 = vmatpush.msra.mxu0 %v230
      %317 = vmatpush.msra.mxu0 %v229
      %318 = vmatpush.msra.mxu0 %v228
      %319 = vmatpush.msra.mxu0 %v227
      %320 = vmatmul.f32.gmra.mxu0 %v290
      %v321 = vpop.f32.mrf.mxu0
      %v322 = vadd.f32 %v275, %v321
      %323 = vmatmul.f32.gmra.mxu0 %v293
      %v324 = vpop.f32.mrf.mxu0
      %v325 = vadd.f32 %v278, %v324
      %326 = vmatmul.f32.gmra.mxu0 %v296
      %v327 = vpop.f32.mrf.mxu0
      %v328 = vadd.f32 %v281, %v327
      %329 = vmatmul.f32.gmra.mxu0 %v299
      %v330 = vpop.f32.mrf.mxu0
      %v331 = vadd.f32 %v284, %v330
      %332 = vmatmul.f32.gmra.mxu0 %v302
      %v333 = vpop.f32.mrf.mxu0
      %v334 = vadd.f32 %v287, %v333
      %335 = vdwg.mxu0
      %v336 = vld [vmem:[%s206 + $0x8] sm:$0xff]
      %v337 = vld [vmem:[%s206 + $0x10] sm:$0xff]
      %v338 = vld [vmem:[%s206 + $0x18] sm:$0xff]
      %v339 = vld [vmem:[%s206 + $0x20] sm:$0xff]
      %v340 = vld [vmem:[%s206 + $0x28] sm:$0xff]
      %s341 = scalar_lea.vmem %s210, 64
      %v342 = vld [vmem:[%s341] sm:$0xff]
      %v343 = vld [vmem:[%s341 + $0x8] sm:$0xff]
      %v344 = vld [vmem:[%s341 + $0x10] sm:$0xff]
      %v345 = vld [vmem:[%s341 + $0x18] sm:$0xff]
      %v347 = vsel %vm241, %v336, 0
      %v350 = vsel %vm241, %v337, 0
      %v353 = vsel %vm241, %v338, 0
      %v356 = vsel %vm241, %v339, 0
      %v359 = vsel %vm241, %v340, 0
      %361 = vmatpush.msra.mxu0 0.0
      %362 = vmatpush.msra.mxu0 0.0
      %363 = vmatpush.msra.mxu0 0.0
      %364 = vmatpush.msra.mxu0 0.0
      %365 = vmatpush.msra.mxu0 0.0
      %366 = vmatpush.msra.mxu0 0.0
      %367 = vmatpush.msra.mxu0 0.0
      %368 = vmatpush.msra.mxu0 0.0
      %369 = vmatpush.msra.mxu0 0.0
      %370 = vmatpush.msra.mxu0 0.0
      %371 = vmatpush.msra.mxu0 0.0
      %372 = vmatpush.msra.mxu0 0.0
      %373 = vmatpush.msra.mxu0 %v345
      %374 = vmatpush.msra.mxu0 %v344
      %375 = vmatpush.msra.mxu0 %v343
      %376 = vmatpush.msra.mxu0 %v342
      %377 = vmatmul.f32.gmra.mxu0 %v347
      %v378 = vpop.f32.mrf.mxu0
      %v379 = vadd.f32 0.0, %v378
      %380 = vmatmul.f32.gmra.mxu0 %v350
      %v381 = vpop.f32.mrf.mxu0
      %v382 = vadd.f32 0.0, %v381
      %383 = vmatmul.f32.gmra.mxu0 %v353
      %v384 = vpop.f32.mrf.mxu0
      %v385 = vadd.f32 0.0, %v384
      %386 = vmatmul.f32.gmra.mxu0 %v356
      %v387 = vpop.f32.mrf.mxu0
      %v388 = vadd.f32 0.0, %v387
      %389 = vmatmul.f32.gmra.mxu0 %v359
      %v390 = vpop.f32.mrf.mxu0
      %v391 = vadd.f32 0.0, %v390
      %392 = vdwg.mxu0
      %v393 = vadd.f32 %v322, %v379
      %v394 = vadd.f32 %v325, %v382
      %v395 = vadd.f32 %v328, %v385
      %v396 = vadd.f32 %v331, %v388
      %v397 = vadd.f32 %v334, %v391
      %v398 = vld [vmem:[%s206 + $0x9] sm:$0xff]
      %v399 = vld [vmem:[%s206 + $0x11] sm:$0xff]
      %v400 = vld [vmem:[%s206 + $0x19] sm:$0xff]
      %v401 = vld [vmem:[%s206 + $0x21] sm:$0xff]
      %v402 = vld [vmem:[%s206 + $0x29] sm:$0xff]
      %s403 = scalar_lea.vmem %s210, 96
      %v404 = vld [vmem:[%s403] sm:$0xff]
      %v405 = vld [vmem:[%s403 + $0x8] sm:$0xff]
      %v406 = vld [vmem:[%s403 + $0x10] sm:$0xff]
      %v407 = vld [vmem:[%s403 + $0x18] sm:$0xff]
      %v409 = vsel %vm241, %v398, 0
      %v412 = vsel %vm241, %v399, 0
      %v415 = vsel %vm241, %v400, 0
      %v418 = vsel %vm241, %v401, 0
      %v421 = vsel %vm241, %v402, 0
      %423 = vmatpush.msra.mxu0 0.0
      %424 = vmatpush.msra.mxu0 0.0
      %425 = vmatpush.msra.mxu0 0.0
      %426 = vmatpush.msra.mxu0 0.0
      %427 = vmatpush.msra.mxu0 0.0
      %428 = vmatpush.msra.mxu0 0.0
      %429 = vmatpush.msra.mxu0 0.0
      %430 = vmatpush.msra.mxu0 0.0
      %431 = vmatpush.msra.mxu0 0.0
      %432 = vmatpush.msra.mxu0 0.0
      %433 = vmatpush.msra.mxu0 0.0
      %434 = vmatpush.msra.mxu0 0.0
      %435 = vmatpush.msra.mxu0 %v407
      %436 = vmatpush.msra.mxu0 %v406
      %437 = vmatpush.msra.mxu0 %v405
      %438 = vmatpush.msra.mxu0 %v404
      %439 = vmatmul.f32.gmra.mxu0 %v409
      %v440 = vpop.f32.mrf.mxu0
      %v441 = vadd.f32 0.0, %v440
      %442 = vmatmul.f32.gmra.mxu0 %v412
      %v443 = vpop.f32.mrf.mxu0
      %v444 = vadd.f32 0.0, %v443
      %445 = vmatmul.f32.gmra.mxu0 %v415
      %v446 = vpop.f32.mrf.mxu0
      %v447 = vadd.f32 0.0, %v446
      %448 = vmatmul.f32.gmra.mxu0 %v418
      %v449 = vpop.f32.mrf.mxu0
      %v450 = vadd.f32 0.0, %v449
      %451 = vmatmul.f32.gmra.mxu0 %v421
      %v452 = vpop.f32.mrf.mxu0
      %v453 = vadd.f32 0.0, %v452
      %454 = vdwg.mxu0
      %v455 = vadd.f32 %v393, %v441
      %v456 = vadd.f32 %v394, %v444
      %v457 = vadd.f32 %v395, %v447
      %v458 = vadd.f32 %v396, %v450
      %v459 = vadd.f32 %v397, %v453
      %v460 = vld [vmem:[%s206 + $0x10] sm:$0xff]
      %v461 = vld [vmem:[%s206 + $0x18] sm:$0xff]
      %v462 = vld [vmem:[%s206 + $0x20] sm:$0xff]
      %v463 = vld [vmem:[%s206 + $0x28] sm:$0xff]
      %v464 = vld [vmem:[%s206 + $0x30] sm:$0xff]
      %s465 = scalar_lea.vmem %s210, 128
      %v466 = vld [vmem:[%s465] sm:$0xff]
      %v467 = vld [vmem:[%s465 + $0x8] sm:$0xff]
      %v468 = vld [vmem:[%s465 + $0x10] sm:$0xff]
      %v469 = vld [vmem:[%s465 + $0x18] sm:$0xff]
      %v471 = vsel %vm241, %v460, 0
      %v474 = vsel %vm241, %v461, 0
      %v477 = vsel %vm241, %v462, 0
      %v480 = vsel %vm241, %v463, 0
      %v483 = vsel %vm241, %v464, 0
      %485 = vmatpush.msra.mxu0 0.0
      %486 = vmatpush.msra.mxu0 0.0
      %487 = vmatpush.msra.mxu0 0.0
      %488 = vmatpush.msra.mxu0 0.0
      %489 = vmatpush.msra.mxu0 0.0
      %490 = vmatpush.msra.mxu0 0.0
      %491 = vmatpush.msra.mxu0 0.0
      %492 = vmatpush.msra.mxu0 0.0
      %493 = vmatpush.msra.mxu0 0.0
      %494 = vmatpush.msra.mxu0 0.0
      %495 = vmatpush.msra.mxu0 0.0
      %496 = vmatpush.msra.mxu0 0.0
      %497 = vmatpush.msra.mxu0 %v469
      %498 = vmatpush.msra.mxu0 %v468
      %499 = vmatpush.msra.mxu0 %v467
      %500 = vmatpush.msra.mxu0 %v466
      %501 = vmatmul.f32.gmra.mxu0 %v471
      %v502 = vpop.f32.mrf.mxu0
      %v503 = vadd.f32 0.0, %v502
      %504 = vmatmul.f32.gmra.mxu0 %v474
      %v505 = vpop.f32.mrf.mxu0
      %v506 = vadd.f32 0.0, %v505
      %507 = vmatmul.f32.gmra.mxu0 %v477
      %v508 = vpop.f32.mrf.mxu0
      %v509 = vadd.f32 0.0, %v508
      %510 = vmatmul.f32.gmra.mxu0 %v480
      %v511 = vpop.f32.mrf.mxu0
      %v512 = vadd.f32 0.0, %v511
      %513 = vmatmul.f32.gmra.mxu0 %v483
      %v514 = vpop.f32.mrf.mxu0
      %v515 = vadd.f32 0.0, %v514
      %516 = vdwg.mxu0
      %v517 = vadd.f32 %v455, %v503
      %v518 = vadd.f32 %v456, %v506
      %v519 = vadd.f32 %v457, %v509
      %v520 = vadd.f32 %v458, %v512
      %v521 = vadd.f32 %v459, %v515
      %v522 = vld [vmem:[%s206 + $0x11] sm:$0xff]
      %v523 = vld [vmem:[%s206 + $0x19] sm:$0xff]
      %v524 = vld [vmem:[%s206 + $0x21] sm:$0xff]
      %v525 = vld [vmem:[%s206 + $0x29] sm:$0xff]
      %v526 = vld [vmem:[%s206 + $0x31] sm:$0xff]
      %s527 = scalar_lea.vmem %s210, 160
      %v528 = vld [vmem:[%s527] sm:$0xff]
      %v529 = vld [vmem:[%s527 + $0x8] sm:$0xff]
      %v530 = vld [vmem:[%s527 + $0x10] sm:$0xff]
      %v531 = vld [vmem:[%s527 + $0x18] sm:$0xff]
      %v533 = vsel %vm241, %v522, 0
      %v536 = vsel %vm241, %v523, 0
      %v539 = vsel %vm241, %v524, 0
      %v542 = vsel %vm241, %v525, 0
      %v545 = vsel %vm241, %v526, 0
      %547 = vmatpush.msra.mxu0 0.0
      %548 = vmatpush.msra.mxu0 0.0
      %549 = vmatpush.msra.mxu0 0.0
      %550 = vmatpush.msra.mxu0 0.0
      %551 = vmatpush.msra.mxu0 0.0
      %552 = vmatpush.msra.mxu0 0.0
      %553 = vmatpush.msra.mxu0 0.0
      %554 = vmatpush.msra.mxu0 0.0
      %555 = vmatpush.msra.mxu0 0.0
      %556 = vmatpush.msra.mxu0 0.0
      %557 = vmatpush.msra.mxu0 0.0
      %558 = vmatpush.msra.mxu0 0.0
      %559 = vmatpush.msra.mxu0 %v531
      %560 = vmatpush.msra.mxu0 %v530
      %561 = vmatpush.msra.mxu0 %v529
      %562 = vmatpush.msra.mxu0 %v528
      %563 = vmatmul.f32.gmra.mxu0 %v533
      %v564 = vpop.f32.mrf.mxu0
      %v565 = vadd.f32 0.0, %v564
      %566 = vmatmul.f32.gmra.mxu0 %v536
      %v567 = vpop.f32.mrf.mxu0
      %v568 = vadd.f32 0.0, %v567
      %569 = vmatmul.f32.gmra.mxu0 %v539
      %v570 = vpop.f32.mrf.mxu0
      %v571 = vadd.f32 0.0, %v570
      %572 = vmatmul.f32.gmra.mxu0 %v542
      %v573 = vpop.f32.mrf.mxu0
      %v574 = vadd.f32 0.0, %v573
      %575 = vmatmul.f32.gmra.mxu0 %v545
      %v576 = vpop.f32.mrf.mxu0
      %v577 = vadd.f32 0.0, %v576
      %578 = vdwg.mxu0
      %v579 = vadd.f32 %v517, %v565
      %v580 = vadd.f32 %v518, %v568
      %v581 = vadd.f32 %v519, %v571
      %v582 = vadd.f32 %v520, %v574
      %v583 = vadd.f32 %v521, %v577
      %v584 = vld [vmem:[%s206 + $0x18] sm:$0xff]
      %v585 = vld [vmem:[%s206 + $0x20] sm:$0xff]
      %v586 = vld [vmem:[%s206 + $0x28] sm:$0xff]
      %v587 = vld [vmem:[%s206 + $0x30] sm:$0xff]
      %v588 = vld [vmem:[%s206 + $0x38] sm:$0xff]
      %s589 = scalar_lea.vmem %s210, 192
      %v590 = vld [vmem:[%s589] sm:$0xff]
      %v591 = vld [vmem:[%s589 + $0x8] sm:$0xff]
      %v592 = vld [vmem:[%s589 + $0x10] sm:$0xff]
      %v593 = vld [vmem:[%s589 + $0x18] sm:$0xff]
      %v595 = vsel %vm241, %v584, 0
      %v598 = vsel %vm241, %v585, 0
      %v601 = vsel %vm241, %v586, 0
      %v604 = vsel %vm241, %v587, 0
      %v607 = vsel %vm241, %v588, 0
      %609 = vmatpush.msra.mxu0 0.0
      %610 = vmatpush.msra.mxu0 0.0
      %611 = vmatpush.msra.mxu0 0.0
      %612 = vmatpush.msra.mxu0 0.0
      %613 = vmatpush.msra.mxu0 0.0
      %614 = vmatpush.msra.mxu0 0.0
      %615 = vmatpush.msra.mxu0 0.0
      %616 = vmatpush.msra.mxu0 0.0
      %617 = vmatpush.msra.mxu0 0.0
      %618 = vmatpush.msra.mxu0 0.0
      %619 = vmatpush.msra.mxu0 0.0
      %620 = vmatpush.msra.mxu0 0.0
      %621 = vmatpush.msra.mxu0 %v593
      %622 = vmatpush.msra.mxu0 %v592
      %623 = vmatpush.msra.mxu0 %v591
      %624 = vmatpush.msra.mxu0 %v590
      %625 = vmatmul.f32.gmra.mxu0 %v595
      %v626 = vpop.f32.mrf.mxu0
      %v627 = vadd.f32 0.0, %v626
      %628 = vmatmul.f32.gmra.mxu0 %v598
      %v629 = vpop.f32.mrf.mxu0
      %v630 = vadd.f32 0.0, %v629
      %631 = vmatmul.f32.gmra.mxu0 %v601
      %v632 = vpop.f32.mrf.mxu0
      %v633 = vadd.f32 0.0, %v632
      %634 = vmatmul.f32.gmra.mxu0 %v604
      %v635 = vpop.f32.mrf.mxu0
      %v636 = vadd.f32 0.0, %v635
      %637 = vmatmul.f32.gmra.mxu0 %v607
      %v638 = vpop.f32.mrf.mxu0
      %v639 = vadd.f32 0.0, %v638
      %640 = vdwg.mxu0
      %v641 = vadd.f32 %v579, %v627
      %v642 = vadd.f32 %v580, %v630
      %v643 = vadd.f32 %v581, %v633
      %v644 = vadd.f32 %v582, %v636
      %v645 = vadd.f32 %v583, %v639
      %v646 = vld [vmem:[%s206 + $0x19] sm:$0xff]
      %v647 = vld [vmem:[%s206 + $0x21] sm:$0xff]
      %v648 = vld [vmem:[%s206 + $0x29] sm:$0xff]
      %v649 = vld [vmem:[%s206 + $0x31] sm:$0xff]
      %v650 = vld [vmem:[%s206 + $0x39] sm:$0xff]
      %s651 = scalar_lea.vmem %s210, 224
      %v652 = vld [vmem:[%s651] sm:$0xff]
      %v653 = vld [vmem:[%s651 + $0x8] sm:$0xff]
      %v654 = vld [vmem:[%s651 + $0x10] sm:$0xff]
      %v655 = vld [vmem:[%s651 + $0x18] sm:$0xff]
      %v657 = vsel %vm241, %v646, 0
      %v660 = vsel %vm241, %v647, 0
      %v663 = vsel %vm241, %v648, 0
      %v666 = vsel %vm241, %v649, 0
      %v669 = vsel %vm241, %v650, 0
      %671 = vmatpush.msra.mxu0 0.0
      %672 = vmatpush.msra.mxu0 0.0
      %673 = vmatpush.msra.mxu0 0.0
      %674 = vmatpush.msra.mxu0 0.0
      %675 = vmatpush.msra.mxu0 0.0
      %676 = vmatpush.msra.mxu0 0.0
      %677 = vmatpush.msra.mxu0 0.0
      %678 = vmatpush.msra.mxu0 0.0
      %679 = vmatpush.msra.mxu0 0.0
      %680 = vmatpush.msra.mxu0 0.0
      %681 = vmatpush.msra.mxu0 0.0
      %682 = vmatpush.msra.mxu0 0.0
      %683 = vmatpush.msra.mxu0 %v655
      %684 = vmatpush.msra.mxu0 %v654
      %685 = vmatpush.msra.mxu0 %v653
      %686 = vmatpush.msra.mxu0 %v652
      %687 = vmatmul.f32.gmra.mxu0 %v657
      %v688 = vpop.f32.mrf.mxu0
      %v689 = vadd.f32 0.0, %v688
      %690 = vmatmul.f32.gmra.mxu0 %v660
      %v691 = vpop.f32.mrf.mxu0
      %v692 = vadd.f32 0.0, %v691
      %693 = vmatmul.f32.gmra.mxu0 %v663
      %v694 = vpop.f32.mrf.mxu0
      %v695 = vadd.f32 0.0, %v694
      %696 = vmatmul.f32.gmra.mxu0 %v666
      %v697 = vpop.f32.mrf.mxu0
      %v698 = vadd.f32 0.0, %v697
      %699 = vmatmul.f32.gmra.mxu0 %v669
      %v700 = vpop.f32.mrf.mxu0
      %v701 = vadd.f32 0.0, %v700
      %702 = vdwg.mxu0
      %v703 = vadd.f32 %v641, %v689
      %v704 = vadd.f32 %v642, %v692
      %v705 = vadd.f32 %v643, %v695
      %v706 = vadd.f32 %v644, %v698
      %v707 = vadd.f32 %v645, %v701
      %v708 = vld [vmem:[%s213] sm:$0x1]
      %v710 = vperm.slane %v708, 0
      %v712 = vadd.f32 %v703, %v710
      %v713 = vadd.f32 %v704, %v710
      %v714 = vadd.f32 %v705, %v710
      %v715 = vadd.f32 %v706, %v710
      %v716 = vadd.f32 %v707, %v710
      %vm717 = vcmask 523264
      %718 = vst.msk [vmem:[%s221] sm:$0xff] %vm717, %v712
      %719 = vst.msk [vmem:[%s221 + $0x8] sm:$0xff] %vm717, %v713
      %720 = vst.msk [vmem:[%s221 + $0x10] sm:$0xff] %vm717, %v714
      %721 = vst.msk [vmem:[%s221 + $0x18] sm:$0xff] %vm717, %v715
      %722 = vst.msk [vmem:[%s221 + $0x20] sm:$0xff] %vm717, %v716
      %p723 = scmp.lt.s32.totalorder %s19, 1
      %s724 = scalar_select %p723, %s19, 1
      %p725 = scmp.lt.s32.totalorder %s18, 0
      %s726 = scalar_select %p725, %s18, 0
      %s727 = smul.addr %s724, 5
      %s728 = sadd.s32 %s726, %s727
      %s729 = smul.addr %s728, 8
      %s730 = scalar_lea.vmem %s3, %s729
      // Predicated region
      $region33: #{tfblock_v4_forward.4} parent=31 // pred_check
        %p731 = pneg %p124
      $region34: #{tfblock_v4_forward.4} parent=31 // pred_check_branch
        %733 = sbr.rel (%p731) target = $region36
      $region35: #{tfblock_v4_forward.4} parent=31 // pred_region
        _
      $region36: #{tfblock_v4_forward.4} parent=31 // pred_fallthru
        _
    $region32: #{tfblock_v4_forward.4} parent=5 // pred_fallthru
      _
    %p734 = scmp.le.s32.totalorder 2, %s9
    // Predicated region
    $region37: #{tfblock_v4_forward.4} parent=5 // pred_check
      %p735 = pneg %p734
    $region38: #{tfblock_v4_forward.4} parent=5 // pred_check_branch
      %737 = sbr.rel (%p735) target = $region40
    $region39: #{tfblock_v4_forward.4} parent=5 // pred_region
      %s738 = ssub.s32 %s9, 2
      // Predicated region
      $region41: #{tfblock_v4_forward.4} parent=39 // pred_check
        %p739 = pneg %p130
      $region42: #{tfblock_v4_forward.4} parent=39 // pred_check_branch
        %741 = sbr.rel (%p739) target = $region44
      $region43: #{tfblock_v4_forward.4} parent=39 // pred_region
        %p742 = scmp.lt.s32.totalorder %s21, 1
        %s743 = scalar_select %p742, %s21, 1
        %p744 = scmp.lt.s32.totalorder %s20, 0
        %s745 = scalar_select %p744, %s20, 0
        %s746 = smul.addr %s743, 5
        %s747 = sadd.s32 %s745, %s746
        %s748 = smul.addr %s747, 8
        %s749 = scalar_lea.vmem %s3, %s748
      $region44: #{tfblock_v4_forward.4} parent=39 // pred_fallthru
        _
    $region40: #{tfblock_v4_forward.4} parent=5 // pred_fallthru
      _
  $region6: #{tfblock_v4_forward.4} parent=0 // loop_footer
    %s13 = sadd.s32 1, %s9
  $region7: #{tfblock_v4_forward.4} parent=0 // loop_footer_branch
    %8 = sbr.rel target = $region3
  $region8: #{tfblock_v4_forward.4} parent=0 // loop_exit
    _

// kernel: tfblock_v4_forward.6
$region0: #{tfblock_v4_forward.6}
  #allocation0 [shape = 'u32[]', space=smem, size = 0x4, offset = 0x4, fixed_abs, tag = 'smem constant byte address 0x4 - core index']
  #allocation1 [shape = 'u32[72,128]{1,0:T(1,128)}', space=vmem, size = 0x9000, scoped, tag = 'internal scratch']
  %s0 = inlined_call_operand.vmem [shape: f32[2,104,64], index: 0, kind: input, shape index: {}]
  %s1 = inlined_call_operand.vmem [shape: f32[9,64,48], index: 1, kind: input, shape index: {}]
  %s2 = inlined_call_operand.vmem [shape: f32[1,48], index: 2, kind: input, shape index: {}]
  %s3 = inlined_call_operand.vmem [shape: f32[2,80,48], index: 3, kind: output, shape index: {}]
  %s4 = sld [smem:[#allocation0]]
  $region45: #{tfblock_v4_forward.6} parent=0
    _
  %s6 = ssub.s32 1, %s4
  %s7 = scalar_select 0, %s6, %s4
  loop: start=0, step=1, limit=4
  $region2: #{tfblock_v4_forward.6} parent=0 // loop_pre_header
    _
  $region3: #{tfblock_v4_forward.6} parent=0 // loop_header
    %s9 = sphi 0, %s13
    %p10 = scmp.ge.s32.totalorder %s9, 4
    %s16 = sphi 0, %s28
    %s17 = sphi 0, %s24
    %s18 = sphi 0, %s16
    %s19 = sphi 0, %s17
    %s20 = sphi 0, %s18
    %s21 = sphi 0, %s19
    %s31 = sphi 0, %s33
    %s34 = sphi 0, %s31
    %s35 = sphi 0, %s34
    %s51 = sphi 0, %s35
    %s57 = sphi 0, %s59
    %s60 = sphi 0, %s57
    %s61 = sphi 0, %s60
    %s77 = sphi 0, %s61
    %s83 = sphi 0, %s85
    %s86 = sphi 0, %s83
    %s87 = sphi 0, %s86
    %s103 = sphi 0, %s87
    %s111 = sphi 0, %s113
    %s114 = sphi 0, %s111
    %s115 = sphi 0, %s114
    %s131 = sphi 0, %s115
  $region4: #{tfblock_v4_forward.6} parent=0 // loop_header_branch
    %12 = sbr.rel (%p10) target = $region8
  $region5: #{tfblock_v4_forward.6} parent=0 // loop_body
    %s14 = ssub.s32 %s9, 1
    %s15 = ssub.s32 %s9, 2
    %s22 = sadd.s32 1, %s17
    %p23 = scmp.ge.s32.totalorder %s22, 2
    %s24 = scalar_select %p23, 0, %s22
    %s25 = sadd.s32 1, %s16
    %s26 = scalar_select %p23, %s25, %s16
    %p27 = scmp.ge.s32.totalorder %s26, 1
    %s28 = scalar_select %p27, 0, %s26
    %s29 = ssub.s32 %s17, %s24
    %p30 = scmp.eq.s32.totalorder %s29, 0
    %s32 = sadd.s32 %s31, 1
    %s33 = scalar_select %p30, %s31, %s32
    %p36 = pneg %p30
    %p37 = scmp.eq.s32.totalorder %s9, 1
    %p38 = por %p36, %p37
    %p39 = scmp.ne.s32.totalorder %s31, %s34
    %p40 = scmp.eq.s32.totalorder %s9, 0
    %p41 = por %p39, %p40
    %p42 = scmp.ne.s32.totalorder %s31, %s34
    %p43 = scmp.eq.s32.totalorder %s14, 1
    %p44 = por %p42, %p43
    %p45 = scmp.ne.s32.totalorder %s34, %s35
    %p46 = scmp.eq.s32.totalorder %s14, 0
    %p47 = por %p45, %p46
    %p48 = scmp.ne.s32.totalorder %s34, %s35
    %p49 = scmp.eq.s32.totalorder %s15, 1
    %p50 = por %p48, %p49
    %p52 = scmp.ne.s32.totalorder %s35, %s51
    %p53 = scmp.eq.s32.totalorder %s15, 0
    %p54 = por %p52, %p53
    %s55 = ssub.s32 %s16, %s28
    %p56 = scmp.eq.s32.totalorder %s55, 0
    %s58 = sadd.s32 %s57, 1
    %s59 = scalar_select %p56, %s57, %s58
    %p62 = pneg %p56
    %p63 = scmp.eq.s32.totalorder %s9, 1
    %p64 = por %p62, %p63
    %p65 = scmp.ne.s32.totalorder %s57, %s60
    %p66 = scmp.eq.s32.totalorder %s9, 0
    %p67 = por %p65, %p66
    %p68 = scmp.ne.s32.totalorder %s57, %s60
    %p69 = scmp.eq.s32.totalorder %s14, 1
    %p70 = por %p68, %p69
    %p71 = scmp.ne.s32.totalorder %s60, %s61
    %p72 = scmp.eq.s32.totalorder %s14, 0
    %p73 = por %p71, %p72
    %p74 = scmp.ne.s32.totalorder %s60, %s61
    %p75 = scmp.eq.s32.totalorder %s15, 1
    %p76 = por %p74, %p75
    %p78 = scmp.ne.s32.totalorder %s61, %s77
    %p79 = scmp.eq.s32.totalorder %s15, 0
    %p80 = por %p78, %p79
    %s81 = ssub.s32 %s16, %s28
    %p82 = scmp.eq.s32.totalorder %s81, 0
    %s84 = sadd.s32 %s83, 1
    %s85 = scalar_select %p82, %s83, %s84
    %p88 = pneg %p82
    %p89 = scmp.eq.s32.totalorder %s9, 1
    %p90 = por %p88, %p89
    %p91 = scmp.ne.s32.totalorder %s83, %s86
    %p92 = scmp.eq.s32.totalorder %s9, 0
    %p93 = por %p91, %p92
    %p94 = scmp.ne.s32.totalorder %s83, %s86
    %p95 = scmp.eq.s32.totalorder %s14, 1
    %p96 = por %p94, %p95
    %p97 = scmp.ne.s32.totalorder %s86, %s87
    %p98 = scmp.eq.s32.totalorder %s14, 0
    %p99 = por %p97, %p98
    %p100 = scmp.ne.s32.totalorder %s86, %s87
    %p101 = scmp.eq.s32.totalorder %s15, 1
    %p102 = por %p100, %p101
    %p104 = scmp.ne.s32.totalorder %s87, %s103
    %p105 = scmp.eq.s32.totalorder %s15, 0
    %p106 = por %p104, %p105
    %s107 = ssub.s32 %s17, %s24
    %s108 = ssub.s32 %s16, %s28
    %s109 = sor.u32 %s107, %s108
    %p110 = scmp.eq.s32.totalorder %s109, 0
    %s112 = sadd.s32 %s111, 1
    %s113 = scalar_select %p110, %s111, %s112
    %p116 = pneg %p110
    %p117 = scmp.eq.s32.totalorder %s9, 1
    %p118 = por %p116, %p117
    %p119 = scmp.ne.s32.totalorder %s111, %s114
    %p120 = scmp.eq.s32.totalorder %s9, 0
    %p121 = por %p119, %p120
    %p122 = scmp.ne.s32.totalorder %s111, %s114
    %p123 = scmp.eq.s32.totalorder %s14, 1
    %p124 = por %p122, %p123
    %p125 = scmp.ne.s32.totalorder %s114, %s115
    %p126 = scmp.eq.s32.totalorder %s14, 0
    %p127 = por %p125, %p126
    %p128 = scmp.ne.s32.totalorder %s114, %s115
    %p129 = scmp.eq.s32.totalorder %s15, 1
    %p130 = por %p128, %p129
    %p132 = scmp.ne.s32.totalorder %s115, %s131
    %p133 = scmp.eq.s32.totalorder %s15, 0
    %p134 = por %p132, %p133
    %p135 = scmp.le.s32.totalorder 1, %s9
    %p136 = scmp.lt.s32.totalorder %s9, 3
    %p137 = pnand %p135, %p136
    %p138 = pneg %p137
    // Predicated region
    $region9: #{tfblock_v4_forward.6} parent=5 // pred_check
      _
    $region10: #{tfblock_v4_forward.6} parent=5 // pred_check_branch
      %140 = sbr.rel (%p137) target = $region12
    $region11: #{tfblock_v4_forward.6} parent=5 // pred_region
      %s141 = ssub.s32 %s9, 1
      // Predicated region
      $region13: #{tfblock_v4_forward.6} parent=11 // pred_check
        %p142 = pneg %p73
      $region14: #{tfblock_v4_forward.6} parent=11 // pred_check_branch
        %144 = sbr.rel (%p142) target = $region16
      $region15: #{tfblock_v4_forward.6} parent=11 // pred_region
        %p145 = scmp.lt.s32.totalorder %s18, 0
        %s146 = scalar_select %p145, %s18, 0
        %s147 = smul.addr %s146, 8
        %s148 = scalar_lea.vmem %s1, %s147
      $region16: #{tfblock_v4_forward.6} parent=11 // pred_fallthru
        _
      // Predicated region
      $region17: #{tfblock_v4_forward.6} parent=11 // pred_check
        %p149 = pneg %p99
      $region18: #{tfblock_v4_forward.6} parent=11 // pred_check_branch
        %151 = sbr.rel (%p149) target = $region20
      $region19: #{tfblock_v4_forward.6} parent=11 // pred_region
        %p152 = scmp.lt.s32.totalorder %s18, 0
        %s153 = scalar_select %p152, %s18, 0
        %s154 = scalar_lea.vmem %s2, %s153
      $region20: #{tfblock_v4_forward.6} parent=11 // pred_fallthru
        _
    $region12: #{tfblock_v4_forward.6} parent=5 // pred_fallthru
      _
    %p155 = scmp.lt.s32.totalorder %s9, 2
    // Predicated region
    $region21: #{tfblock_v4_forward.6} parent=5 // pred_check
      %p156 = pneg %p155
    $region22: #{tfblock_v4_forward.6} parent=5 // pred_check_branch
      %158 = sbr.rel (%p156) target = $region24
    $region23: #{tfblock_v4_forward.6} parent=5 // pred_region
      // Predicated region
      $region25: #{tfblock_v4_forward.6} parent=23 // pred_check
        %p159 = pneg %p41
      $region26: #{tfblock_v4_forward.6} parent=23 // pred_check_branch
        %161 = sbr.rel (%p159) target = $region28
      $region27: #{tfblock_v4_forward.6} parent=23 // pred_region
        %p162 = scmp.lt.s32.totalorder %s17, 1
        %s163 = scalar_select %p162, %s17, 1
        %s164 = smul.addr %s163, 13
        %s165 = smul.addr %s164, 8
        %s166 = scalar_lea.vmem %s0, %s165
      $region28: #{tfblock_v4_forward.6} parent=23 // pred_fallthru
        _
    $region24: #{tfblock_v4_forward.6} parent=5 // pred_fallthru
      _
    %p167 = scmp.le.s32.totalorder 1, %s9
    %p168 = scmp.lt.s32.totalorder %s9, 3
    %p169 = pnand %p167, %p168
    %p170 = pneg %p169
    // Predicated region
    $region29: #{tfblock_v4_forward.6} parent=5 // pred_check
      _
    $region30: #{tfblock_v4_forward.6} parent=5 // pred_check_branch
      %172 = sbr.rel (%p169) target = $region32
    $region31: #{tfblock_v4_forward.6} parent=5 // pred_region
      %s173 = ssub.s32 %s9, 1
      %p174 = scmp.lt.s32.totalorder %s19, 1
      %s175 = scalar_select %p174, %s19, 1
      %s176 = smul.addr %s175, 13
      %s177 = smul.addr %s176, 8
      %s178 = scalar_lea.vmem %s0, %s177
      %p179 = pneg %p47
      %p180 = pneg %p44
      %p181 = scmp.lt.s32.totalorder %s18, 0
      %s182 = scalar_select %p181, %s18, 0
      %s183 = smul.addr %s182, 8
      %s184 = scalar_lea.vmem %s1, %s183
      %p185 = pneg %p73
      %p186 = pneg %p70
      %p187 = scmp.lt.s32.totalorder %s18, 0
      %s188 = scalar_select %p187, %s18, 0
      %s189 = scalar_lea.vmem %s2, %s188
      %p190 = pneg %p99
      %p191 = pneg %p96
      %p192 = pneg %p127
      %p193 = pneg %p124
      %p194 = scmp.lt.s32.totalorder %s19, 1
      %s195 = scalar_select %p194, %s19, 1
      %p196 = scmp.lt.s32.totalorder %s18, 0
      %s197 = scalar_select %p196, %s18, 0
      %s198 = smul.addr %s195, 10
      %s199 = sadd.s32 %s197, %s198
      %s200 = smul.addr %s199, 8
      %s201 = scalar_lea.vmem %s3, %s200
      %p202 = scmp.lt.s32.totalorder %s19, 1
      %s203 = scalar_select %p202, %s19, 1
      %s204 = smul.addr %s203, 13
      %s205 = smul.addr %s204, 8
      %s206 = scalar_lea.vmem %s0, %s205
      %p207 = scmp.lt.s32.totalorder %s18, 0
      %s208 = scalar_select %p207, %s18, 0
      %s209 = smul.addr %s208, 8
      %s210 = scalar_lea.vmem %s1, %s209
      %p211 = scmp.lt.s32.totalorder %s18, 0
      %s212 = scalar_select %p211, %s18, 0
      %s213 = scalar_lea.vmem %s2, %s212
      %p214 = scmp.lt.s32.totalorder %s19, 1
      %s215 = scalar_select %p214, %s19, 1
      %p216 = scmp.lt.s32.totalorder %s18, 0
      %s217 = scalar_select %p216, %s18, 0
      %s218 = smul.addr %s215, 10
      %s219 = sadd.s32 %s217, %s218
      %s220 = smul.addr %s219, 8
      %s221 = scalar_lea.vmem %s3, %s220
      %v222 = vld [vmem:[%s206] sm:$0xff]
      %v223 = vld [vmem:[%s206 + $0x8] sm:$0xff]
      %v224 = vld [vmem:[%s206 + $0x10] sm:$0xff]
      %v225 = vld [vmem:[%s206 + $0x18] sm:$0xff]
      %v226 = vld [vmem:[%s206 + $0x20] sm:$0xff]
      %v227 = vld [vmem:[%s206 + $0x28] sm:$0xff]
      %v228 = vld [vmem:[%s206 + $0x30] sm:$0xff]
      %v229 = vld [vmem:[%s206 + $0x38] sm:$0xff]
      %v230 = vld [vmem:[%s206 + $0x40] sm:$0xff]
      %v231 = vld [vmem:[%s206 + $0x48] sm:$0xff]
      %v232 = vld [vmem:[%s210] sm:$0xff]
      %v233 = vld [vmem:[%s210 + $0x8] sm:$0xff]
      %v234 = vld [vmem:[%s210 + $0x10] sm:$0xff]
      %v235 = vld [vmem:[%s210 + $0x18] sm:$0xff]
      %v236 = vld [vmem:[%s210 + $0x20] sm:$0xff]
      %v237 = vld [vmem:[%s210 + $0x28] sm:$0xff]
      %v238 = vld [vmem:[%s210 + $0x30] sm:$0xff]
      %v239 = vld [vmem:[%s210 + $0x38] sm:$0xff]
      %v240 = vld [vmem:[%s206 + $0x1] sm:$0xff]
      %v241 = vld [vmem:[%s206 + $0x9] sm:$0xff]
      %v242 = vld [vmem:[%s206 + $0x11] sm:$0xff]
      %v243 = vld [vmem:[%s206 + $0x19] sm:$0xff]
      %v244 = vld [vmem:[%s206 + $0x21] sm:$0xff]
      %v245 = vld [vmem:[%s206 + $0x29] sm:$0xff]
      %v246 = vld [vmem:[%s206 + $0x31] sm:$0xff]
      %v247 = vld [vmem:[%s206 + $0x39] sm:$0xff]
      %v248 = vld [vmem:[%s206 + $0x41] sm:$0xff]
      %v249 = vld [vmem:[%s206 + $0x49] sm:$0xff]
      %s250 = scalar_lea.vmem %s210, 64
      %v251 = vld [vmem:[%s250] sm:$0xff]
      %v252 = vld [vmem:[%s250 + $0x8] sm:$0xff]
      %v253 = vld [vmem:[%s250 + $0x10] sm:$0xff]
      %v254 = vld [vmem:[%s250 + $0x18] sm:$0xff]
      %v255 = vld [vmem:[%s250 + $0x20] sm:$0xff]
      %v256 = vld [vmem:[%s250 + $0x28] sm:$0xff]
      %v257 = vld [vmem:[%s250 + $0x30] sm:$0xff]
      %v258 = vld [vmem:[%s250 + $0x38] sm:$0xff]
      %vm259 = vcmask 523264
      %v261 = vsel %vm259, %v240, 0
      %v264 = vsel %vm259, %v241, 0
      %v267 = vsel %vm259, %v242, 0
      %v270 = vsel %vm259, %v243, 0
      %v273 = vsel %vm259, %v244, 0
      %v276 = vsel %vm259, %v245, 0
      %v279 = vsel %vm259, %v246, 0
      %v282 = vsel %vm259, %v247, 0
      %v285 = vsel %vm259, %v248, 0
      %v288 = vsel %vm259, %v249, 0
      %290 = vmatpush.msra.mxu0 0.0
      %291 = vmatpush.msra.mxu0 0.0
      %292 = vmatpush.msra.mxu0 0.0
      %293 = vmatpush.msra.mxu0 0.0
      %294 = vmatpush.msra.mxu0 0.0
      %295 = vmatpush.msra.mxu0 0.0
      %296 = vmatpush.msra.mxu0 0.0
      %297 = vmatpush.msra.mxu0 0.0
      %298 = vmatpush.msra.mxu0 %v258
      %299 = vmatpush.msra.mxu0 %v257
      %300 = vmatpush.msra.mxu0 %v256
      %301 = vmatpush.msra.mxu0 %v255
      %302 = vmatpush.msra.mxu0 %v254
      %303 = vmatpush.msra.mxu0 %v253
      %304 = vmatpush.msra.mxu0 %v252
      %305 = vmatpush.msra.mxu0 %v251
      %306 = vmatmul.f32.gmra.mxu0 %v261
      %v307 = vpop.f32.mrf.mxu0
      %v308 = vadd.f32 0.0, %v307
      %309 = vmatmul.f32.gmra.mxu0 %v264
      %v310 = vpop.f32.mrf.mxu0
      %v311 = vadd.f32 0.0, %v310
      %312 = vmatmul.f32.gmra.mxu0 %v267
      %v313 = vpop.f32.mrf.mxu0
      %v314 = vadd.f32 0.0, %v313
      %315 = vmatmul.f32.gmra.mxu0 %v270
      %v316 = vpop.f32.mrf.mxu0
      %v317 = vadd.f32 0.0, %v316
      %318 = vmatmul.f32.gmra.mxu0 %v273
      %v319 = vpop.f32.mrf.mxu0
      %v320 = vadd.f32 0.0, %v319
      %321 = vmatmul.f32.gmra.mxu0 %v276
      %v322 = vpop.f32.mrf.mxu0
      %v323 = vadd.f32 0.0, %v322
      %324 = vmatmul.f32.gmra.mxu0 %v279
      %v325 = vpop.f32.mrf.mxu0
      %v326 = vadd.f32 0.0, %v325
      %327 = vmatmul.f32.gmra.mxu0 %v282
      %v328 = vpop.f32.mrf.mxu0
      %v329 = vadd.f32 0.0, %v328
      %330 = vmatmul.f32.gmra.mxu0 %v285
      %v331 = vpop.f32.mrf.mxu0
      %v332 = vadd.f32 0.0, %v331
      %333 = vmatmul.f32.gmra.mxu0 %v288
      %v334 = vpop.f32.mrf.mxu0
      %v335 = vadd.f32 0.0, %v334
      %336 = vdwg.mxu0
      %v338 = vsel %vm259, %v222, 0
      %v341 = vsel %vm259, %v223, 0
      %v344 = vsel %vm259, %v224, 0
      %v347 = vsel %vm259, %v225, 0
      %v350 = vsel %vm259, %v226, 0
      %v353 = vsel %vm259, %v227, 0
      %v356 = vsel %vm259, %v228, 0
      %v359 = vsel %vm259, %v229, 0
      %v362 = vsel %vm259, %v230, 0
      %v365 = vsel %vm259, %v231, 0
      %367 = vmatpush.msra.mxu0 0.0
      %368 = vmatpush.msra.mxu0 0.0
      %369 = vmatpush.msra.mxu0 0.0
      %370 = vmatpush.msra.mxu0 0.0
      %371 = vmatpush.msra.mxu0 0.0
      %372 = vmatpush.msra.mxu0 0.0
      %373 = vmatpush.msra.mxu0 0.0
      %374 = vmatpush.msra.mxu0 0.0
      %375 = vmatpush.msra.mxu0 %v239
      %376 = vmatpush.msra.mxu0 %v238
      %377 = vmatpush.msra.mxu0 %v237
      %378 = vmatpush.msra.mxu0 %v236
      %379 = vmatpush.msra.mxu0 %v235
      %380 = vmatpush.msra.mxu0 %v234
      %381 = vmatpush.msra.mxu0 %v233
      %382 = vmatpush.msra.mxu0 %v232
      %383 = vmatmul.f32.gmra.mxu0 %v338
      %v384 = vpop.f32.mrf.mxu0
      %v385 = vadd.f32 %v308, %v384
      %386 = vmatmul.f32.gmra.mxu0 %v341
      %v387 = vpop.f32.mrf.mxu0
      %v388 = vadd.f32 %v311, %v387
      %389 = vmatmul.f32.gmra.mxu0 %v344
      %v390 = vpop.f32.mrf.mxu0
      %v391 = vadd.f32 %v314, %v390
      %392 = vmatmul.f32.gmra.mxu0 %v347
      %v393 = vpop.f32.mrf.mxu0
      %v394 = vadd.f32 %v317, %v393
      %395 = vmatmul.f32.gmra.mxu0 %v350
      %v396 = vpop.f32.mrf.mxu0
      %v397 = vadd.f32 %v320, %v396
      %398 = vmatmul.f32.gmra.mxu0 %v353
      %v399 = vpop.f32.mrf.mxu0
      %v400 = vadd.f32 %v323, %v399
      %401 = vmatmul.f32.gmra.mxu0 %v356
      %v402 = vpop.f32.mrf.mxu0
      %v403 = vadd.f32 %v326, %v402
      %404 = vmatmul.f32.gmra.mxu0 %v359
      %v405 = vpop.f32.mrf.mxu0
      %v406 = vadd.f32 %v329, %v405
      %407 = vmatmul.f32.gmra.mxu0 %v362
      %v408 = vpop.f32.mrf.mxu0
      %v409 = vadd.f32 %v332, %v408
      %410 = vmatmul.f32.gmra.mxu0 %v365
      %v411 = vpop.f32.mrf.mxu0
      %v412 = vadd.f32 %v335, %v411
      %413 = vdwg.mxu0
      %v414 = vld [vmem:[%s206 + $0x2] sm:$0xff]
      %v415 = vld [vmem:[%s206 + $0xa] sm:$0xff]
      %v416 = vld [vmem:[%s206 + $0x12] sm:$0xff]
      %v417 = vld [vmem:[%s206 + $0x1a] sm:$0xff]
      %v418 = vld [vmem:[%s206 + $0x22] sm:$0xff]
      %v419 = vld [vmem:[%s206 + $0x2a] sm:$0xff]
      %v420 = vld [vmem:[%s206 + $0x32] sm:$0xff]
      %v421 = vld [vmem:[%s206 + $0x3a] sm:$0xff]
      %v422 = vld [vmem:[%s206 + $0x42] sm:$0xff]
      %v423 = vld [vmem:[%s206 + $0x4a] sm:$0xff]
      %s424 = scalar_lea.vmem %s210, 128
      %v425 = vld [vmem:[%s424] sm:$0xff]
      %v426 = vld [vmem:[%s424 + $0x8] sm:$0xff]
      %v427 = vld [vmem:[%s424 + $0x10] sm:$0xff]
      %v428 = vld [vmem:[%s424 + $0x18] sm:$0xff]
      %v429 = vld [vmem:[%s424 + $0x20] sm:$0xff]
      %v430 = vld [vmem:[%s424 + $0x28] sm:$0xff]
      %v431 = vld [vmem:[%s424 + $0x30] sm:$0xff]
      %v432 = vld [vmem:[%s424 + $0x38] sm:$0xff]
      %v434 = vsel %vm259, %v414, 0
      %v437 = vsel %vm259, %v415, 0
      %v440 = vsel %vm259, %v416, 0
      %v443 = vsel %vm259, %v417, 0
      %v446 = vsel %vm259, %v418, 0
      %v449 = vsel %vm259, %v419, 0
      %v452 = vsel %vm259, %v420, 0
      %v455 = vsel %vm259, %v421, 0
      %v458 = vsel %vm259, %v422, 0
      %v461 = vsel %vm259, %v423, 0
      %463 = vmatpush.msra.mxu0 0.0
      %464 = vmatpush.msra.mxu0 0.0
      %465 = vmatpush.msra.mxu0 0.0
      %466 = vmatpush.msra.mxu0 0.0
      %467 = vmatpush.msra.mxu0 0.0
      %468 = vmatpush.msra.mxu0 0.0
      %469 = vmatpush.msra.mxu0 0.0
      %470 = vmatpush.msra.mxu0 0.0
      %471 = vmatpush.msra.mxu0 %v432
      %472 = vmatpush.msra.mxu0 %v431
      %473 = vmatpush.msra.mxu0 %v430
      %474 = vmatpush.msra.mxu0 %v429
      %475 = vmatpush.msra.mxu0 %v428
      %476 = vmatpush.msra.mxu0 %v427
      %477 = vmatpush.msra.mxu0 %v426
      %478 = vmatpush.msra.mxu0 %v425
      %479 = vmatmul.f32.gmra.mxu0 %v434
      %v480 = vpop.f32.mrf.mxu0
      %v481 = vadd.f32 0.0, %v480
      %482 = vmatmul.f32.gmra.mxu0 %v437
      %v483 = vpop.f32.mrf.mxu0
      %v484 = vadd.f32 0.0, %v483
      %485 = vmatmul.f32.gmra.mxu0 %v440
      %v486 = vpop.f32.mrf.mxu0
      %v487 = vadd.f32 0.0, %v486
      %488 = vmatmul.f32.gmra.mxu0 %v443
      %v489 = vpop.f32.mrf.mxu0
      %v490 = vadd.f32 0.0, %v489
      %491 = vmatmul.f32.gmra.mxu0 %v446
      %v492 = vpop.f32.mrf.mxu0
      %v493 = vadd.f32 0.0, %v492
      %494 = vmatmul.f32.gmra.mxu0 %v449
      %v495 = vpop.f32.mrf.mxu0
      %v496 = vadd.f32 0.0, %v495
      %497 = vmatmul.f32.gmra.mxu0 %v452
      %v498 = vpop.f32.mrf.mxu0
      %v499 = vadd.f32 0.0, %v498
      %500 = vmatmul.f32.gmra.mxu0 %v455
      %v501 = vpop.f32.mrf.mxu0
      %v502 = vadd.f32 0.0, %v501
      %503 = vmatmul.f32.gmra.mxu0 %v458
      %v504 = vpop.f32.mrf.mxu0
      %v505 = vadd.f32 0.0, %v504
      %506 = vmatmul.f32.gmra.mxu0 %v461
      %v507 = vpop.f32.mrf.mxu0
      %v508 = vadd.f32 0.0, %v507
      %509 = vdwg.mxu0
      %v510 = vadd.f32 %v385, %v481
      %v511 = vadd.f32 %v388, %v484
      %v512 = vadd.f32 %v391, %v487
      %v513 = vadd.f32 %v394, %v490
      %v514 = vadd.f32 %v397, %v493
      %v515 = vadd.f32 %v400, %v496
      %v516 = vadd.f32 %v403, %v499
      %v517 = vadd.f32 %v406, %v502
      %v518 = vadd.f32 %v409, %v505
      %v519 = vadd.f32 %v412, %v508
      %v520 = vld [vmem:[%s206 + $0xb] sm:$0xff]
      %v521 = vld [vmem:[%s206 + $0x13] sm:$0xff]
      %v522 = vld [vmem:[%s206 + $0x1b] sm:$0xff]
      %v523 = vld [vmem:[%s206 + $0x23] sm:$0xff]
      %v524 = vld [vmem:[%s206 + $0x2b] sm:$0xff]
      %v525 = vld [vmem:[%s206 + $0x33] sm:$0xff]
      %v526 = vld [vmem:[%s206 + $0x3b] sm:$0xff]
      %v527 = vld [vmem:[%s206 + $0x43] sm:$0xff]
      %v528 = vld [vmem:[%s206 + $0x4b] sm:$0xff]
      %v529 = vld [vmem:[%s206 + $0x53] sm:$0xff]
      %s530 = scalar_lea.vmem %s210, 192
      %v531 = vld [vmem:[%s530] sm:$0xff]
      %v532 = vld [vmem:[%s530 + $0x8] sm:$0xff]
      %v533 = vld [vmem:[%s530 + $0x10] sm:$0xff]
      %v534 = vld [vmem:[%s530 + $0x18] sm:$0xff]
      %v535 = vld [vmem:[%s530 + $0x20] sm:$0xff]
      %v536 = vld [vmem:[%s530 + $0x28] sm:$0xff]
      %v537 = vld [vmem:[%s530 + $0x30] sm:$0xff]
      %v538 = vld [vmem:[%s530 + $0x38] sm:$0xff]
      %v540 = vsel %vm259, %v520, 0
      %v543 = vsel %vm259, %v521, 0
      %v546 = vsel %vm259, %v522, 0
      %v549 = vsel %vm259, %v523, 0
      %v552 = vsel %vm259, %v524, 0
      %v555 = vsel %vm259, %v525, 0
      %v558 = vsel %vm259, %v526, 0
      %v561 = vsel %vm259, %v527, 0
      %v564 = vsel %vm259, %v528, 0
      %v567 = vsel %vm259, %v529, 0
      %569 = vmatpush.msra.mxu0 0.0
      %570 = vmatpush.msra.mxu0 0.0
      %571 = vmatpush.msra.mxu0 0.0
      %572 = vmatpush.msra.mxu0 0.0
      %573 = vmatpush.msra.mxu0 0.0
      %574 = vmatpush.msra.mxu0 0.0
      %575 = vmatpush.msra.mxu0 0.0
      %576 = vmatpush.msra.mxu0 0.0
      %577 = vmatpush.msra.mxu0 %v538
      %578 = vmatpush.msra.mxu0 %v537
      %579 = vmatpush.msra.mxu0 %v536
      %580 = vmatpush.msra.mxu0 %v535
      %581 = vmatpush.msra.mxu0 %v534
      %582 = vmatpush.msra.mxu0 %v533
      %583 = vmatpush.msra.mxu0 %v532
      %584 = vmatpush.msra.mxu0 %v531
      %585 = vmatmul.f32.gmra.mxu0 %v540
      %v586 = vpop.f32.mrf.mxu0
      %v587 = vadd.f32 0.0, %v586
      %588 = vmatmul.f32.gmra.mxu0 %v543
      %v589 = vpop.f32.mrf.mxu0
      %v590 = vadd.f32 0.0, %v589
      %591 = vmatmul.f32.gmra.mxu0 %v546
      %v592 = vpop.f32.mrf.mxu0
      %v593 = vadd.f32 0.0, %v592
      %594 = vmatmul.f32.gmra.mxu0 %v549
      %v595 = vpop.f32.mrf.mxu0
      %v596 = vadd.f32 0.0, %v595
      %597 = vmatmul.f32.gmra.mxu0 %v552
      %v598 = vpop.f32.mrf.mxu0
      %v599 = vadd.f32 0.0, %v598
      %600 = vmatmul.f32.gmra.mxu0 %v555
      %v601 = vpop.f32.mrf.mxu0
      %v602 = vadd.f32 0.0, %v601
      %603 = vmatmul.f32.gmra.mxu0 %v558
      %v604 = vpop.f32.mrf.mxu0
      %v605 = vadd.f32 0.0, %v604
      %606 = vmatmul.f32.gmra.mxu0 %v561
      %v607 = vpop.f32.mrf.mxu0
      %v608 = vadd.f32 0.0, %v607
      %609 = vmatmul.f32.gmra.mxu0 %v564
      %v610 = vpop.f32.mrf.mxu0
      %v611 = vadd.f32 0.0, %v610
      %612 = vmatmul.f32.gmra.mxu0 %v567
      %v613 = vpop.f32.mrf.mxu0
      %v614 = vadd.f32 0.0, %v613
      %615 = vdwg.mxu0
      %v616 = vadd.f32 %v510, %v587
      %v617 = vadd.f32 %v511, %v590
      %v618 = vadd.f32 %v512, %v593
      %v619 = vadd.f32 %v513, %v596
      %v620 = vadd.f32 %v514, %v599
      %v621 = vadd.f32 %v515, %v602
      %v622 = vadd.f32 %v516, %v605
      %v623 = vadd.f32 %v517, %v608
      %v624 = vadd.f32 %v518, %v611
      %v625 = vadd.f32 %v519, %v614
      %v626 = vld [vmem:[%s206 + $0xc] sm:$0xff]
      %v627 = vld [vmem:[%s206 + $0x14] sm:$0xff]
      %v628 = vld [vmem:[%s206 + $0x1c] sm:$0xff]
      %v629 = vld [vmem:[%s206 + $0x24] sm:$0xff]
      %v630 = vld [vmem:[%s206 + $0x2c] sm:$0xff]
      %v631 = vld [vmem:[%s206 + $0x34] sm:$0xff]
      %v632 = vld [vmem:[%s206 + $0x3c] sm:$0xff]
      %v633 = vld [vmem:[%s206 + $0x44] sm:$0xff]
      %v634 = vld [vmem:[%s206 + $0x4c] sm:$0xff]
      %v635 = vld [vmem:[%s206 + $0x54] sm:$0xff]
      %s636 = scalar_lea.vmem %s210, 256
      %v637 = vld [vmem:[%s636] sm:$0xff]
      %v638 = vld [vmem:[%s636 + $0x8] sm:$0xff]
      %v639 = vld [vmem:[%s636 + $0x10] sm:$0xff]
      %v640 = vld [vmem:[%s636 + $0x18] sm:$0xff]
      %v641 = vld [vmem:[%s636 + $0x20] sm:$0xff]
      %v642 = vld [vmem:[%s636 + $0x28] sm:$0xff]
      %v643 = vld [vmem:[%s636 + $0x30] sm:$0xff]
      %v644 = vld [vmem:[%s636 + $0x38] sm:$0xff]
      %v646 = vsel %vm259, %v626, 0
      %v649 = vsel %vm259, %v627, 0
      %v652 = vsel %vm259, %v628, 0
      %v655 = vsel %vm259, %v629, 0
      %v658 = vsel %vm259, %v630, 0
      %v661 = vsel %vm259, %v631, 0
      %v664 = vsel %vm259, %v632, 0
      %v667 = vsel %vm259, %v633, 0
      %v670 = vsel %vm259, %v634, 0
      %v673 = vsel %vm259, %v635, 0
      %675 = vmatpush.msra.mxu0 0.0
      %676 = vmatpush.msra.mxu0 0.0
      %677 = vmatpush.msra.mxu0 0.0
      %678 = vmatpush.msra.mxu0 0.0
      %679 = vmatpush.msra.mxu0 0.0
      %680 = vmatpush.msra.mxu0 0.0
      %681 = vmatpush.msra.mxu0 0.0
      %682 = vmatpush.msra.mxu0 0.0
      %683 = vmatpush.msra.mxu0 %v644
      %684 = vmatpush.msra.mxu0 %v643
      %685 = vmatpush.msra.mxu0 %v642
      %686 = vmatpush.msra.mxu0 %v641
      %687 = vmatpush.msra.mxu0 %v640
      %688 = vmatpush.msra.mxu0 %v639
      %689 = vmatpush.msra.mxu0 %v638
      %690 = vmatpush.msra.mxu0 %v637
      %691 = vmatmul.f32.gmra.mxu0 %v646
      %v692 = vpop.f32.mrf.mxu0
      %v693 = vadd.f32 0.0, %v692
      %694 = vmatmul.f32.gmra.mxu0 %v649
      %v695 = vpop.f32.mrf.mxu0
      %v696 = vadd.f32 0.0, %v695
      %697 = vmatmul.f32.gmra.mxu0 %v652
      %v698 = vpop.f32.mrf.mxu0
      %v699 = vadd.f32 0.0, %v698
      %700 = vmatmul.f32.gmra.mxu0 %v655
      %v701 = vpop.f32.mrf.mxu0
      %v702 = vadd.f32 0.0, %v701
      %703 = vmatmul.f32.gmra.mxu0 %v658
      %v704 = vpop.f32.mrf.mxu0
      %v705 = vadd.f32 0.0, %v704
      %706 = vmatmul.f32.gmra.mxu0 %v661
      %v707 = vpop.f32.mrf.mxu0
      %v708 = vadd.f32 0.0, %v707
      %709 = vmatmul.f32.gmra.mxu0 %v664
      %v710 = vpop.f32.mrf.mxu0
      %v711 = vadd.f32 0.0, %v710
      %712 = vmatmul.f32.gmra.mxu0 %v667
      %v713 = vpop.f32.mrf.mxu0
      %v714 = vadd.f32 0.0, %v713
      %715 = vmatmul.f32.gmra.mxu0 %v670
      %v716 = vpop.f32.mrf.mxu0
      %v717 = vadd.f32 0.0, %v716
      %718 = vmatmul.f32.gmra.mxu0 %v673
      %v719 = vpop.f32.mrf.mxu0
      %v720 = vadd.f32 0.0, %v719
      %721 = vdwg.mxu0
      %v722 = vadd.f32 %v616, %v693
      %v723 = vadd.f32 %v617, %v696
      %v724 = vadd.f32 %v618, %v699
      %v725 = vadd.f32 %v619, %v702
      %v726 = vadd.f32 %v620, %v705
      %v727 = vadd.f32 %v621, %v708
      %v728 = vadd.f32 %v622, %v711
      %v729 = vadd.f32 %v623, %v714
      %v730 = vadd.f32 %v624, %v717
      %v731 = vadd.f32 %v625, %v720
      %v732 = vld [vmem:[%s206 + $0xd] sm:$0xff]
      %v733 = vld [vmem:[%s206 + $0x15] sm:$0xff]
      %v734 = vld [vmem:[%s206 + $0x1d] sm:$0xff]
      %v735 = vld [vmem:[%s206 + $0x25] sm:$0xff]
      %v736 = vld [vmem:[%s206 + $0x2d] sm:$0xff]
      %v737 = vld [vmem:[%s206 + $0x35] sm:$0xff]
      %v738 = vld [vmem:[%s206 + $0x3d] sm:$0xff]
      %v739 = vld [vmem:[%s206 + $0x45] sm:$0xff]
      %v740 = vld [vmem:[%s206 + $0x4d] sm:$0xff]
      %v741 = vld [vmem:[%s206 + $0x55] sm:$0xff]
      %s742 = scalar_lea.vmem %s210, 320
      %v743 = vld [vmem:[%s742] sm:$0xff]
      %v744 = vld [vmem:[%s742 + $0x8] sm:$0xff]
      %v745 = vld [vmem:[%s742 + $0x10] sm:$0xff]
      %v746 = vld [vmem:[%s742 + $0x18] sm:$0xff]
      %v747 = vld [vmem:[%s742 + $0x20] sm:$0xff]
      %v748 = vld [vmem:[%s742 + $0x28] sm:$0xff]
      %v749 = vld [vmem:[%s742 + $0x30] sm:$0xff]
      %v750 = vld [vmem:[%s742 + $0x38] sm:$0xff]
      %v752 = vsel %vm259, %v732, 0
      %v755 = vsel %vm259, %v733, 0
      %v758 = vsel %vm259, %v734, 0
      %v761 = vsel %vm259, %v735, 0
      %v764 = vsel %vm259, %v736, 0
      %v767 = vsel %vm259, %v737, 0
      %v770 = vsel %vm259, %v738, 0
      %v773 = vsel %vm259, %v739, 0
      %v776 = vsel %vm259, %v740, 0
      %v779 = vsel %vm259, %v741, 0
      %781 = vmatpush.msra.mxu0 0.0
      %782 = vmatpush.msra.mxu0 0.0
      %783 = vmatpush.msra.mxu0 0.0
      %784 = vmatpush.msra.mxu0 0.0
      %785 = vmatpush.msra.mxu0 0.0
      %786 = vmatpush.msra.mxu0 0.0
      %787 = vmatpush.msra.mxu0 0.0
      %788 = vmatpush.msra.mxu0 0.0
      %789 = vmatpush.msra.mxu0 %v750
      %790 = vmatpush.msra.mxu0 %v749
      %791 = vmatpush.msra.mxu0 %v748
      %792 = vmatpush.msra.mxu0 %v747
      %793 = vmatpush.msra.mxu0 %v746
      %794 = vmatpush.msra.mxu0 %v745
      %795 = vmatpush.msra.mxu0 %v744
      %796 = vmatpush.msra.mxu0 %v743
      %797 = vmatmul.f32.gmra.mxu0 %v752
      %v798 = vpop.f32.mrf.mxu0
      %v799 = vadd.f32 0.0, %v798
      %800 = vmatmul.f32.gmra.mxu0 %v755
      %v801 = vpop.f32.mrf.mxu0
      %v802 = vadd.f32 0.0, %v801
      %803 = vmatmul.f32.gmra.mxu0 %v758
      %v804 = vpop.f32.mrf.mxu0
      %v805 = vadd.f32 0.0, %v804
      %806 = vmatmul.f32.gmra.mxu0 %v761
      %v807 = vpop.f32.mrf.mxu0
      %v808 = vadd.f32 0.0, %v807
      %809 = vmatmul.f32.gmra.mxu0 %v764
      %v810 = vpop.f32.mrf.mxu0
      %v811 = vadd.f32 0.0, %v810
      %812 = vmatmul.f32.gmra.mxu0 %v767
      %v813 = vpop.f32.mrf.mxu0
      %v814 = vadd.f32 0.0, %v813
      %815 = vmatmul.f32.gmra.mxu0 %v770
      %v816 = vpop.f32.mrf.mxu0
      %v817 = vadd.f32 0.0, %v816
      %818 = vmatmul.f32.gmra.mxu0 %v773
      %v819 = vpop.f32.mrf.mxu0
      %v820 = vadd.f32 0.0, %v819
      %821 = vmatmul.f32.gmra.mxu0 %v776
      %v822 = vpop.f32.mrf.mxu0
      %v823 = vadd.f32 0.0, %v822
      %824 = vmatmul.f32.gmra.mxu0 %v779
      %v825 = vpop.f32.mrf.mxu0
      %v826 = vadd.f32 0.0, %v825
      %827 = vdwg.mxu0
      %v828 = vadd.f32 %v722, %v799
      %v829 = vadd.f32 %v723, %v802
      %v830 = vadd.f32 %v724, %v805
      %v831 = vadd.f32 %v725, %v808
      %v832 = vadd.f32 %v726, %v811
      %v833 = vadd.f32 %v727, %v814
      %v834 = vadd.f32 %v728, %v817
      %v835 = vadd.f32 %v729, %v820
      %v836 = vadd.f32 %v730, %v823
      %v837 = vadd.f32 %v731, %v826
      %v838 = vld [vmem:[%s206 + $0x16] sm:$0xff]
      %v839 = vld [vmem:[%s206 + $0x1e] sm:$0xff]
      %v840 = vld [vmem:[%s206 + $0x26] sm:$0xff]
      %v841 = vld [vmem:[%s206 + $0x2e] sm:$0xff]
      %v842 = vld [vmem:[%s206 + $0x36] sm:$0xff]
      %v843 = vld [vmem:[%s206 + $0x3e] sm:$0xff]
      %v844 = vld [vmem:[%s206 + $0x46] sm:$0xff]
      %v845 = vld [vmem:[%s206 + $0x4e] sm:$0xff]
      %v846 = vld [vmem:[%s206 + $0x56] sm:$0xff]
      %v847 = vld [vmem:[%s206 + $0x5e] sm:$0xff]
      %s848 = scalar_lea.vmem %s210, 384
      %v849 = vld [vmem:[%s848] sm:$0xff]
      %v850 = vld [vmem:[%s848 + $0x8] sm:$0xff]
      %v851 = vld [vmem:[%s848 + $0x10] sm:$0xff]
      %v852 = vld [vmem:[%s848 + $0x18] sm:$0xff]
      %v853 = vld [vmem:[%s848 + $0x20] sm:$0xff]
      %v854 = vld [vmem:[%s848 + $0x28] sm:$0xff]
      %v855 = vld [vmem:[%s848 + $0x30] sm:$0xff]
      %v856 = vld [vmem:[%s848 + $0x38] sm:$0xff]
      %v858 = vsel %vm259, %v838, 0
      %v861 = vsel %vm259, %v839, 0
      %v864 = vsel %vm259, %v840, 0
      %v867 = vsel %vm259, %v841, 0
      %v870 = vsel %vm259, %v842, 0
      %v873 = vsel %vm259, %v843, 0
      %v876 = vsel %vm259, %v844, 0
      %v879 = vsel %vm259, %v845, 0
      %v882 = vsel %vm259, %v846, 0
      %v885 = vsel %vm259, %v847, 0
      %887 = vmatpush.msra.mxu0 0.0
      %888 = vmatpush.msra.mxu0 0.0
      %889 = vmatpush.msra.mxu0 0.0
      %890 = vmatpush.msra.mxu0 0.0
      %891 = vmatpush.msra.mxu0 0.0
      %892 = vmatpush.msra.mxu0 0.0
      %893 = vmatpush.msra.mxu0 0.0
      %894 = vmatpush.msra.mxu0 0.0
      %895 = vmatpush.msra.mxu0 %v856
      %896 = vmatpush.msra.mxu0 %v855
      %897 = vmatpush.msra.mxu0 %v854
      %898 = vmatpush.msra.mxu0 %v853
      %899 = vmatpush.msra.mxu0 %v852
      %900 = vmatpush.msra.mxu0 %v851
      %901 = vmatpush.msra.mxu0 %v850
      %902 = vmatpush.msra.mxu0 %v849
      %903 = vmatmul.f32.gmra.mxu0 %v858
      %v904 = vpop.f32.mrf.mxu0
      %v905 = vadd.f32 0.0, %v904
      %906 = vmatmul.f32.gmra.mxu0 %v861
      %v907 = vpop.f32.mrf.mxu0
      %v908 = vadd.f32 0.0, %v907
      %909 = vmatmul.f32.gmra.mxu0 %v864
      %v910 = vpop.f32.mrf.mxu0
      %v911 = vadd.f32 0.0, %v910
      %912 = vmatmul.f32.gmra.mxu0 %v867
      %v913 = vpop.f32.mrf.mxu0
      %v914 = vadd.f32 0.0, %v913
      %915 = vmatmul.f32.gmra.mxu0 %v870
      %v916 = vpop.f32.mrf.mxu0
      %v917 = vadd.f32 0.0, %v916
      %918 = vmatmul.f32.gmra.mxu0 %v873
      %v919 = vpop.f32.mrf.mxu0
      %v920 = vadd.f32 0.0, %v919
      %921 = vmatmul.f32.gmra.mxu0 %v876
      %v922 = vpop.f32.mrf.mxu0
      %v923 = vadd.f32 0.0, %v922
      %924 = vmatmul.f32.gmra.mxu0 %v879
      %v925 = vpop.f32.mrf.mxu0
      %v926 = vadd.f32 0.0, %v925
      %927 = vmatmul.f32.gmra.mxu0 %v882
      %v928 = vpop.f32.mrf.mxu0
      %v929 = vadd.f32 0.0, %v928
      %930 = vmatmul.f32.gmra.mxu0 %v885
      %v931 = vpop.f32.mrf.mxu0
      %v932 = vadd.f32 0.0, %v931
      %933 = vdwg.mxu0
      %v934 = vadd.f32 %v828, %v905
      %v935 = vadd.f32 %v829, %v908
      %v936 = vadd.f32 %v830, %v911
      %v937 = vadd.f32 %v831, %v914
      %v938 = vadd.f32 %v832, %v917
      %v939 = vadd.f32 %v833, %v920
      %v940 = vadd.f32 %v834, %v923
      %v941 = vadd.f32 %v835, %v926
      %v942 = vadd.f32 %v836, %v929
      %v943 = vadd.f32 %v837, %v932
      %v944 = vld [vmem:[%s206 + $0x17] sm:$0xff]
      %v945 = vld [vmem:[%s206 + $0x1f] sm:$0xff]
      %v946 = vld [vmem:[%s206 + $0x27] sm:$0xff]
      %v947 = vld [vmem:[%s206 + $0x2f] sm:$0xff]
      %v948 = vld [vmem:[%s206 + $0x37] sm:$0xff]
      %v949 = vld [vmem:[%s206 + $0x3f] sm:$0xff]
      %v950 = vld [vmem:[%s206 + $0x47] sm:$0xff]
      %v951 = vld [vmem:[%s206 + $0x4f] sm:$0xff]
      %v952 = vld [vmem:[%s206 + $0x57] sm:$0xff]
      %v953 = vld [vmem:[%s206 + $0x5f] sm:$0xff]
      %s954 = scalar_lea.vmem %s210, 448
      %v955 = vld [vmem:[%s954] sm:$0xff]
      %v956 = vld [vmem:[%s954 + $0x8] sm:$0xff]
      %v957 = vld [vmem:[%s954 + $0x10] sm:$0xff]
      %v958 = vld [vmem:[%s954 + $0x18] sm:$0xff]
      %v959 = vld [vmem:[%s954 + $0x20] sm:$0xff]
      %v960 = vld [vmem:[%s954 + $0x28] sm:$0xff]
      %v961 = vld [vmem:[%s954 + $0x30] sm:$0xff]
      %v962 = vld [vmem:[%s954 + $0x38] sm:$0xff]
      %v964 = vsel %vm259, %v944, 0
      %v967 = vsel %vm259, %v945, 0
      %v970 = vsel %vm259, %v946, 0
      %v973 = vsel %vm259, %v947, 0
      %v976 = vsel %vm259, %v948, 0
      %v979 = vsel %vm259, %v949, 0
      %v982 = vsel %vm259, %v950, 0
      %v985 = vsel %vm259, %v951, 0
      %v988 = vsel %vm259, %v952, 0
      %v991 = vsel %vm259, %v953, 0
      %993 = vmatpush.msra.mxu0 0.0
      %994 = vmatpush.msra.mxu0 0.0
      %995 = vmatpush.msra.mxu0 0.0
      %996 = vmatpush.msra.mxu0 0.0
      %997 = vmatpush.msra.mxu0 0.0
      %998 = vmatpush.msra.mxu0 0.0
      %999 = vmatpush.msra.mxu0 0.0
      %1000 = vmatpush.msra.mxu0 0.0
      %1001 = vmatpush.msra.mxu0 %v962
      %1002 = vmatpush.msra.mxu0 %v961
      %1003 = vmatpush.msra.mxu0 %v960
      %1004 = vmatpush.msra.mxu0 %v959
      %1005 = vmatpush.msra.mxu0 %v958
      %1006 = vmatpush.msra.mxu0 %v957
      %1007 = vmatpush.msra.mxu0 %v956
      %1008 = vmatpush.msra.mxu0 %v955
      %1009 = vmatmul.f32.gmra.mxu0 %v964
      %v1010 = vpop.f32.mrf.mxu0
      %v1011 = vadd.f32 0.0, %v1010
      %1012 = vmatmul.f32.gmra.mxu0 %v967
      %v1013 = vpop.f32.mrf.mxu0
      %v1014 = vadd.f32 0.0, %v1013
      %1015 = vmatmul.f32.gmra.mxu0 %v970
      %v1016 = vpop.f32.mrf.mxu0
      %v1017 = vadd.f32 0.0, %v1016
      %1018 = vmatmul.f32.gmra.mxu0 %v973
      %v1019 = vpop.f32.mrf.mxu0
      %v1020 = vadd.f32 0.0, %v1019
      %1021 = vmatmul.f32.gmra.mxu0 %v976
      %v1022 = vpop.f32.mrf.mxu0
      %v1023 = vadd.f32 0.0, %v1022
      %1024 = vmatmul.f32.gmra.mxu0 %v979
      %v1025 = vpop.f32.mrf.mxu0
      %v1026 = vadd.f32 0.0, %v1025
      %1027 = vmatmul.f32.gmra.mxu0 %v982
      %v1028 = vpop.f32.mrf.mxu0
      %v1029 = vadd.f32 0.0, %v1028
      %1030 = vmatmul.f32.gmra.mxu0 %v985
      %v1031 = vpop.f32.mrf.mxu0
      %v1032 = vadd.f32 0.0, %v1031
      %1033 = vmatmul.f32.gmra.mxu0 %v988
      %v1034 = vpop.f32.mrf.mxu0
      %v1035 = vadd.f32 0.0, %v1034
      %1036 = vmatmul.f32.gmra.mxu0 %v991
      %v1037 = vpop.f32.mrf.mxu0
      %v1038 = vadd.f32 0.0, %v1037
      %1039 = vdwg.mxu0
      %v1040 = vadd.f32 %v934, %v1011
      %v1041 = vadd.f32 %v935, %v1014
      %v1042 = vadd.f32 %v936, %v1017
      %v1043 = vadd.f32 %v937, %v1020
      %v1044 = vadd.f32 %v938, %v1023
      %v1045 = vadd.f32 %v939, %v1026
      %v1046 = vadd.f32 %v940, %v1029
      %v1047 = vadd.f32 %v941, %v1032
      %v1048 = vadd.f32 %v942, %v1035
      %v1049 = vadd.f32 %v943, %v1038
      %v1050 = vld [vmem:[%s206 + $0x18] sm:$0xff]
      %v1051 = vld [vmem:[%s206 + $0x20] sm:$0xff]
      %v1052 = vld [vmem:[%s206 + $0x28] sm:$0xff]
      %v1053 = vld [vmem:[%s206 + $0x30] sm:$0xff]
      %v1054 = vld [vmem:[%s206 + $0x38] sm:$0xff]
      %v1055 = vld [vmem:[%s206 + $0x40] sm:$0xff]
      %v1056 = vld [vmem:[%s206 + $0x48] sm:$0xff]
      %v1057 = vld [vmem:[%s206 + $0x50] sm:$0xff]
      %v1058 = vld [vmem:[%s206 + $0x58] sm:$0xff]
      %v1059 = vld [vmem:[%s206 + $0x60] sm:$0xff]
      %s1060 = scalar_lea.vmem %s210, 512
      %v1061 = vld [vmem:[%s1060] sm:$0xff]
      %v1062 = vld [vmem:[%s1060 + $0x8] sm:$0xff]
      %v1063 = vld [vmem:[%s1060 + $0x10] sm:$0xff]
      %v1064 = vld [vmem:[%s1060 + $0x18] sm:$0xff]
      %v1065 = vld [vmem:[%s1060 + $0x20] sm:$0xff]
      %v1066 = vld [vmem:[%s1060 + $0x28] sm:$0xff]
      %v1067 = vld [vmem:[%s1060 + $0x30] sm:$0xff]
      %v1068 = vld [vmem:[%s1060 + $0x38] sm:$0xff]
      %v1070 = vsel %vm259, %v1050, 0
      %v1073 = vsel %vm259, %v1051, 0
      %v1076 = vsel %vm259, %v1052, 0
      %v1079 = vsel %vm259, %v1053, 0
      %v1082 = vsel %vm259, %v1054, 0
      %v1085 = vsel %vm259, %v1055, 0
      %v1088 = vsel %vm259, %v1056, 0
      %v1091 = vsel %vm259, %v1057, 0
      %v1094 = vsel %vm259, %v1058, 0
      %v1097 = vsel %vm259, %v1059, 0
      %1099 = vmatpush.msra.mxu0 0.0
      %1100 = vmatpush.msra.mxu0 0.0
      %1101 = vmatpush.msra.mxu0 0.0
      %1102 = vmatpush.msra.mxu0 0.0
      %1103 = vmatpush.msra.mxu0 0.0
      %1104 = vmatpush.msra.mxu0 0.0
      %1105 = vmatpush.msra.mxu0 0.0
      %1106 = vmatpush.msra.mxu0 0.0
      %1107 = vmatpush.msra.mxu0 %v1068
      %1108 = vmatpush.msra.mxu0 %v1067
      %1109 = vmatpush.msra.mxu0 %v1066
      %1110 = vmatpush.msra.mxu0 %v1065
      %1111 = vmatpush.msra.mxu0 %v1064
      %1112 = vmatpush.msra.mxu0 %v1063
      %1113 = vmatpush.msra.mxu0 %v1062
      %1114 = vmatpush.msra.mxu0 %v1061
      %1115 = vmatmul.f32.gmra.mxu0 %v1070
      %v1116 = vpop.f32.mrf.mxu0
      %v1117 = vadd.f32 0.0, %v1116
      %1118 = vmatmul.f32.gmra.mxu0 %v1073
      %v1119 = vpop.f32.mrf.mxu0
      %v1120 = vadd.f32 0.0, %v1119
      %1121 = vmatmul.f32.gmra.mxu0 %v1076
      %v1122 = vpop.f32.mrf.mxu0
      %v1123 = vadd.f32 0.0, %v1122
      %1124 = vmatmul.f32.gmra.mxu0 %v1079
      %v1125 = vpop.f32.mrf.mxu0
      %v1126 = vadd.f32 0.0, %v1125
      %1127 = vmatmul.f32.gmra.mxu0 %v1082
      %v1128 = vpop.f32.mrf.mxu0
      %v1129 = vadd.f32 0.0, %v1128
      %1130 = vmatmul.f32.gmra.mxu0 %v1085
      %v1131 = vpop.f32.mrf.mxu0
      %v1132 = vadd.f32 0.0, %v1131
      %1133 = vmatmul.f32.gmra.mxu0 %v1088
      %v1134 = vpop.f32.mrf.mxu0
      %v1135 = vadd.f32 0.0, %v1134
      %1136 = vmatmul.f32.gmra.mxu0 %v1091
      %v1137 = vpop.f32.mrf.mxu0
      %v1138 = vadd.f32 0.0, %v1137
      %1139 = vmatmul.f32.gmra.mxu0 %v1094
      %v1140 = vpop.f32.mrf.mxu0
      %v1141 = vadd.f32 0.0, %v1140
      %1142 = vmatmul.f32.gmra.mxu0 %v1097
      %v1143 = vpop.f32.mrf.mxu0
      %v1144 = vadd.f32 0.0, %v1143
      %1145 = vdwg.mxu0
      %v1146 = vadd.f32 %v1040, %v1117
      %v1147 = vadd.f32 %v1041, %v1120
      %v1148 = vadd.f32 %v1042, %v1123
      %v1149 = vadd.f32 %v1043, %v1126
      %v1150 = vadd.f32 %v1044, %v1129
      %v1151 = vadd.f32 %v1045, %v1132
      %v1152 = vadd.f32 %v1046, %v1135
      %v1153 = vadd.f32 %v1047, %v1138
      %v1154 = vadd.f32 %v1048, %v1141
      %v1155 = vadd.f32 %v1049, %v1144
      %v1156 = vld [vmem:[%s213] sm:$0x1]
      %v1158 = vperm.slane %v1156, 0
      %v1160 = vadd.f32 %v1146, %v1158
      %v1161 = vadd.f32 %v1147, %v1158
      %v1162 = vadd.f32 %v1148, %v1158
      %v1163 = vadd.f32 %v1149, %v1158
      %v1164 = vadd.f32 %v1150, %v1158
      %v1165 = vadd.f32 %v1151, %v1158
      %v1166 = vadd.f32 %v1152, %v1158
      %v1167 = vadd.f32 %v1153, %v1158
      %v1168 = vadd.f32 %v1154, %v1158
      %v1169 = vadd.f32 %v1155, %v1158
      %vm1170 = vcmask 392192
      %1171 = vst.msk [vmem:[%s221] sm:$0xff] %vm1170, %v1160
      %1172 = vst.msk [vmem:[%s221 + $0x8] sm:$0xff] %vm1170, %v1161
      %1173 = vst.msk [vmem:[%s221 + $0x10] sm:$0xff] %vm1170, %v1162
      %1174 = vst.msk [vmem:[%s221 + $0x18] sm:$0xff] %vm1170, %v1163
      %1175 = vst.msk [vmem:[%s221 + $0x20] sm:$0xff] %vm1170, %v1164
      %1176 = vst.msk [vmem:[%s221 + $0x28] sm:$0xff] %vm1170, %v1165
      %1177 = vst.msk [vmem:[%s221 + $0x30] sm:$0xff] %vm1170, %v1166
      %1178 = vst.msk [vmem:[%s221 + $0x38] sm:$0xff] %vm1170, %v1167
      %1179 = vst.msk [vmem:[%s221 + $0x40] sm:$0xff] %vm1170, %v1168
      %1180 = vst.msk [vmem:[%s221 + $0x48] sm:$0xff] %vm1170, %v1169
      %p1181 = scmp.lt.s32.totalorder %s19, 1
      %s1182 = scalar_select %p1181, %s19, 1
      %p1183 = scmp.lt.s32.totalorder %s18, 0
      %s1184 = scalar_select %p1183, %s18, 0
      %s1185 = smul.addr %s1182, 10
      %s1186 = sadd.s32 %s1184, %s1185
      %s1187 = smul.addr %s1186, 8
      %s1188 = scalar_lea.vmem %s3, %s1187
      // Predicated region
      $region33: #{tfblock_v4_forward.6} parent=31 // pred_check
        %p1189 = pneg %p124
      $region34: #{tfblock_v4_forward.6} parent=31 // pred_check_branch
        %1191 = sbr.rel (%p1189) target = $region36
      $region35: #{tfblock_v4_forward.6} parent=31 // pred_region
        _
      $region36: #{tfblock_v4_forward.6} parent=31 // pred_fallthru
        _
    $region32: #{tfblock_v4_forward.6} parent=5 // pred_fallthru
      _
    %p1192 = scmp.le.s32.totalorder 2, %s9
    // Predicated region
    $region37: #{tfblock_v4_forward.6} parent=5 // pred_check
      %p1193 = pneg %p1192
    $region38: #{tfblock_v4_forward.6} parent=5 // pred_check_branch
      %1195 = sbr.rel (%p1193) target = $region40
    $region39: #{tfblock_v4_forward.6} parent=5 // pred_region
      %s1196 = ssub.s32 %s9, 2
      // Predicated region
      $region41: #{tfblock_v4_forward.6} parent=39 // pred_check
        %p1197 = pneg %p130
      $region42: #{tfblock_v4_forward.6} parent=39 // pred_check_branch
        %1199 = sbr.rel (%p1197) target = $region44
      $region43: #{tfblock_v4_forward.6} parent=39 // pred_region
        %p1200 = scmp.lt.s32.totalorder %s21, 1
        %s1201 = scalar_select %p1200, %s21, 1
        %p1202 = scmp.lt.s32.totalorder %s20, 0
        %s1203 = scalar_select %p1202, %s20, 0
        %s1204 = smul.addr %s1201, 10
        %s1205 = sadd.s32 %s1203, %s1204
        %s1206 = smul.addr %s1205, 8
        %s1207 = scalar_lea.vmem %s3, %s1206
      $region44: #{tfblock_v4_forward.6} parent=39 // pred_fallthru
        _
    $region40: #{tfblock_v4_forward.6} parent=5 // pred_fallthru
      _
  $region6: #{tfblock_v4_forward.6} parent=0 // loop_footer
    %s13 = sadd.s32 1, %s9
  $region7: #{tfblock_v4_forward.6} parent=0 // loop_footer_branch
    %8 = sbr.rel target = $region3
  $region8: #{tfblock_v4_forward.6} parent=0 // loop_exit
    _

// kernel: tfblock_v4_forward.7
$region0: #{tfblock_v4_forward.7}
  #allocation0 [shape = 'u32[]', space=smem, size = 0x4, offset = 0x4, fixed_abs, tag = 'smem constant byte address 0x4 - core index']
  #allocation1 [shape = 'u32[72,128]{1,0:T(1,128)}', space=vmem, size = 0x9000, scoped, tag = 'internal scratch']
  %s0 = inlined_call_operand.vmem [shape: f32[2,264,48], index: 0, kind: input, shape index: {}]
  %s1 = inlined_call_operand.vmem [shape: f32[25,48,32], index: 1, kind: input, shape index: {}]
  %s2 = inlined_call_operand.vmem [shape: f32[1,32], index: 2, kind: input, shape index: {}]
  %s3 = inlined_call_operand.vmem [shape: f32[2,192,32], index: 3, kind: output, shape index: {}]
  %s4 = sld [smem:[#allocation0]]
  $region45: #{tfblock_v4_forward.7} parent=0
    _
  %s6 = ssub.s32 1, %s4
  %s7 = scalar_select 0, %s6, %s4
  loop: start=0, step=1, limit=4
  $region2: #{tfblock_v4_forward.7} parent=0 // loop_pre_header
    _
  $region3: #{tfblock_v4_forward.7} parent=0 // loop_header
    %s9 = sphi 0, %s13
    %p10 = scmp.ge.s32.totalorder %s9, 4
    %s16 = sphi 0, %s28
    %s17 = sphi 0, %s24
    %s18 = sphi 0, %s16
    %s19 = sphi 0, %s17
    %s20 = sphi 0, %s18
    %s21 = sphi 0, %s19
    %s31 = sphi 0, %s33
    %s34 = sphi 0, %s31
    %s35 = sphi 0, %s34
    %s51 = sphi 0, %s35
    %s57 = sphi 0, %s59
    %s60 = sphi 0, %s57
    %s61 = sphi 0, %s60
    %s77 = sphi 0, %s61
    %s83 = sphi 0, %s85
    %s86 = sphi 0, %s83
    %s87 = sphi 0, %s86
    %s103 = sphi 0, %s87
    %s111 = sphi 0, %s113
    %s114 = sphi 0, %s111
    %s115 = sphi 0, %s114
    %s131 = sphi 0, %s115
  $region4: #{tfblock_v4_forward.7} parent=0 // loop_header_branch
    %12 = sbr.rel (%p10) target = $region8
  $region5: #{tfblock_v4_forward.7} parent=0 // loop_body
    %s14 = ssub.s32 %s9, 1
    %s15 = ssub.s32 %s9, 2
    %s22 = sadd.s32 1, %s17
    %p23 = scmp.ge.s32.totalorder %s22, 2
    %s24 = scalar_select %p23, 0, %s22
    %s25 = sadd.s32 1, %s16
    %s26 = scalar_select %p23, %s25, %s16
    %p27 = scmp.ge.s32.totalorder %s26, 1
    %s28 = scalar_select %p27, 0, %s26
    %s29 = ssub.s32 %s17, %s24
    %p30 = scmp.eq.s32.totalorder %s29, 0
    %s32 = sadd.s32 %s31, 1
    %s33 = scalar_select %p30, %s31, %s32
    %p36 = pneg %p30
    %p37 = scmp.eq.s32.totalorder %s9, 1
    %p38 = por %p36, %p37
    %p39 = scmp.ne.s32.totalorder %s31, %s34
    %p40 = scmp.eq.s32.totalorder %s9, 0
    %p41 = por %p39, %p40
    %p42 = scmp.ne.s32.totalorder %s31, %s34
    %p43 = scmp.eq.s32.totalorder %s14, 1
    %p44 = por %p42, %p43
    %p45 = scmp.ne.s32.totalorder %s34, %s35
    %p46 = scmp.eq.s32.totalorder %s14, 0
    %p47 = por %p45, %p46
    %p48 = scmp.ne.s32.totalorder %s34, %s35
    %p49 = scmp.eq.s32.totalorder %s15, 1
    %p50 = por %p48, %p49
    %p52 = scmp.ne.s32.totalorder %s35, %s51
    %p53 = scmp.eq.s32.totalorder %s15, 0
    %p54 = por %p52, %p53
    %s55 = ssub.s32 %s16, %s28
    %p56 = scmp.eq.s32.totalorder %s55, 0
    %s58 = sadd.s32 %s57, 1
    %s59 = scalar_select %p56, %s57, %s58
    %p62 = pneg %p56
    %p63 = scmp.eq.s32.totalorder %s9, 1
    %p64 = por %p62, %p63
    %p65 = scmp.ne.s32.totalorder %s57, %s60
    %p66 = scmp.eq.s32.totalorder %s9, 0
    %p67 = por %p65, %p66
    %p68 = scmp.ne.s32.totalorder %s57, %s60
    %p69 = scmp.eq.s32.totalorder %s14, 1
    %p70 = por %p68, %p69
    %p71 = scmp.ne.s32.totalorder %s60, %s61
    %p72 = scmp.eq.s32.totalorder %s14, 0
    %p73 = por %p71, %p72
    %p74 = scmp.ne.s32.totalorder %s60, %s61
    %p75 = scmp.eq.s32.totalorder %s15, 1
    %p76 = por %p74, %p75
    %p78 = scmp.ne.s32.totalorder %s61, %s77
    %p79 = scmp.eq.s32.totalorder %s15, 0
    %p80 = por %p78, %p79
    %s81 = ssub.s32 %s16, %s28
    %p82 = scmp.eq.s32.totalorder %s81, 0
    %s84 = sadd.s32 %s83, 1
    %s85 = scalar_select %p82, %s83, %s84
    %p88 = pneg %p82
    %p89 = scmp.eq.s32.totalorder %s9, 1
    %p90 = por %p88, %p89
    %p91 = scmp.ne.s32.totalorder %s83, %s86
    %p92 = scmp.eq.s32.totalorder %s9, 0
    %p93 = por %p91, %p92
    %p94 = scmp.ne.s32.totalorder %s83, %s86
    %p95 = scmp.eq.s32.totalorder %s14, 1
    %p96 = por %p94, %p95
    %p97 = scmp.ne.s32.totalorder %s86, %s87
    %p98 = scmp.eq.s32.totalorder %s14, 0
    %p99 = por %p97, %p98
    %p100 = scmp.ne.s32.totalorder %s86, %s87
    %p101 = scmp.eq.s32.totalorder %s15, 1
    %p102 = por %p100, %p101
    %p104 = scmp.ne.s32.totalorder %s87, %s103
    %p105 = scmp.eq.s32.totalorder %s15, 0
    %p106 = por %p104, %p105
    %s107 = ssub.s32 %s17, %s24
    %s108 = ssub.s32 %s16, %s28
    %s109 = sor.u32 %s107, %s108
    %p110 = scmp.eq.s32.totalorder %s109, 0
    %s112 = sadd.s32 %s111, 1
    %s113 = scalar_select %p110, %s111, %s112
    %p116 = pneg %p110
    %p117 = scmp.eq.s32.totalorder %s9, 1
    %p118 = por %p116, %p117
    %p119 = scmp.ne.s32.totalorder %s111, %s114
    %p120 = scmp.eq.s32.totalorder %s9, 0
    %p121 = por %p119, %p120
    %p122 = scmp.ne.s32.totalorder %s111, %s114
    %p123 = scmp.eq.s32.totalorder %s14, 1
    %p124 = por %p122, %p123
    %p125 = scmp.ne.s32.totalorder %s114, %s115
    %p126 = scmp.eq.s32.totalorder %s14, 0
    %p127 = por %p125, %p126
    %p128 = scmp.ne.s32.totalorder %s114, %s115
    %p129 = scmp.eq.s32.totalorder %s15, 1
    %p130 = por %p128, %p129
    %p132 = scmp.ne.s32.totalorder %s115, %s131
    %p133 = scmp.eq.s32.totalorder %s15, 0
    %p134 = por %p132, %p133
    %p135 = scmp.le.s32.totalorder 1, %s9
    %p136 = scmp.lt.s32.totalorder %s9, 3
    %p137 = pnand %p135, %p136
    %p138 = pneg %p137
    // Predicated region
    $region9: #{tfblock_v4_forward.7} parent=5 // pred_check
      _
    $region10: #{tfblock_v4_forward.7} parent=5 // pred_check_branch
      %140 = sbr.rel (%p137) target = $region12
    $region11: #{tfblock_v4_forward.7} parent=5 // pred_region
      %s141 = ssub.s32 %s9, 1
      // Predicated region
      $region13: #{tfblock_v4_forward.7} parent=11 // pred_check
        %p142 = pneg %p73
      $region14: #{tfblock_v4_forward.7} parent=11 // pred_check_branch
        %144 = sbr.rel (%p142) target = $region16
      $region15: #{tfblock_v4_forward.7} parent=11 // pred_region
        %p145 = scmp.lt.s32.totalorder %s18, 0
        %s146 = scalar_select %p145, %s18, 0
        %s147 = smul.addr %s146, 8
        %s148 = scalar_lea.vmem %s1, %s147
      $region16: #{tfblock_v4_forward.7} parent=11 // pred_fallthru
        _
      // Predicated region
      $region17: #{tfblock_v4_forward.7} parent=11 // pred_check
        %p149 = pneg %p99
      $region18: #{tfblock_v4_forward.7} parent=11 // pred_check_branch
        %151 = sbr.rel (%p149) target = $region20
      $region19: #{tfblock_v4_forward.7} parent=11 // pred_region
        %p152 = scmp.lt.s32.totalorder %s18, 0
        %s153 = scalar_select %p152, %s18, 0
        %s154 = scalar_lea.vmem %s2, %s153
      $region20: #{tfblock_v4_forward.7} parent=11 // pred_fallthru
        _
    $region12: #{tfblock_v4_forward.7} parent=5 // pred_fallthru
      _
    %p155 = scmp.lt.s32.totalorder %s9, 2
    // Predicated region
    $region21: #{tfblock_v4_forward.7} parent=5 // pred_check
      %p156 = pneg %p155
    $region22: #{tfblock_v4_forward.7} parent=5 // pred_check_branch
      %158 = sbr.rel (%p156) target = $region24
    $region23: #{tfblock_v4_forward.7} parent=5 // pred_region
      // Predicated region
      $region25: #{tfblock_v4_forward.7} parent=23 // pred_check
        %p159 = pneg %p41
      $region26: #{tfblock_v4_forward.7} parent=23 // pred_check_branch
        %161 = sbr.rel (%p159) target = $region28
      $region27: #{tfblock_v4_forward.7} parent=23 // pred_region
        %p162 = scmp.lt.s32.totalorder %s17, 1
        %s163 = scalar_select %p162, %s17, 1
        %s164 = smul.addr %s163, 33
        %s165 = smul.addr %s164, 8
        %s166 = scalar_lea.vmem %s0, %s165
      $region28: #{tfblock_v4_forward.7} parent=23 // pred_fallthru
        _
    $region24: #{tfblock_v4_forward.7} parent=5 // pred_fallthru
      _
    %p167 = scmp.le.s32.totalorder 1, %s9
    %p168 = scmp.lt.s32.totalorder %s9, 3
    %p169 = pnand %p167, %p168
    %p170 = pneg %p169
    // Predicated region
    $region29: #{tfblock_v4_forward.7} parent=5 // pred_check
      _
    $region30: #{tfblock_v4_forward.7} parent=5 // pred_check_branch
      %172 = sbr.rel (%p169) target = $region32
    $region31: #{tfblock_v4_forward.7} parent=5 // pred_region
      %s173 = ssub.s32 %s9, 1
      %p174 = scmp.lt.s32.totalorder %s19, 1
      %s175 = scalar_select %p174, %s19, 1
      %s176 = smul.addr %s175, 33
      %s177 = smul.addr %s176, 8
      %s178 = scalar_lea.vmem %s0, %s177
      %p179 = pneg %p47
      %p180 = pneg %p44
      %p181 = scmp.lt.s32.totalorder %s18, 0
      %s182 = scalar_select %p181, %s18, 0
      %s183 = smul.addr %s182, 8
      %s184 = scalar_lea.vmem %s1, %s183
      %p185 = pneg %p73
      %p186 = pneg %p70
      %p187 = scmp.lt.s32.totalorder %s18, 0
      %s188 = scalar_select %p187, %s18, 0
      %s189 = scalar_lea.vmem %s2, %s188
      %p190 = pneg %p99
      %p191 = pneg %p96
      %p192 = pneg %p127
      %p193 = pneg %p124
      %p194 = scmp.lt.s32.totalorder %s19, 1
      %s195 = scalar_select %p194, %s19, 1
      %p196 = scmp.lt.s32.totalorder %s18, 0
      %s197 = scalar_select %p196, %s18, 0
      %s198 = smul.addr %s195, 24
      %s199 = sadd.s32 %s197, %s198
      %s200 = smul.addr %s199, 8
      %s201 = scalar_lea.vmem %s3, %s200
      %p202 = scmp.lt.s32.totalorder %s19, 1
      %s203 = scalar_select %p202, %s19, 1
      %s204 = smul.addr %s203, 33
      %s205 = smul.addr %s204, 8
      %s206 = scalar_lea.vmem %s0, %s205
      %p207 = scmp.lt.s32.totalorder %s18, 0
      %s208 = scalar_select %p207, %s18, 0
      %s209 = smul.addr %s208, 8
      %s210 = scalar_lea.vmem %s1, %s209
      %p211 = scmp.lt.s32.totalorder %s18, 0
      %s212 = scalar_select %p211, %s18, 0
      %s213 = scalar_lea.vmem %s2, %s212
      %p214 = scmp.lt.s32.totalorder %s19, 1
      %s215 = scalar_select %p214, %s19, 1
      %p216 = scmp.lt.s32.totalorder %s18, 0
      %s217 = scalar_select %p216, %s18, 0
      %s218 = smul.addr %s215, 24
      %s219 = sadd.s32 %s217, %s218
      %s220 = smul.addr %s219, 8
      %s221 = scalar_lea.vmem %s3, %s220
      %v222 = vld [vmem:[%s206] sm:$0xff]
      %v223 = vld [vmem:[%s206 + $0x8] sm:$0xff]
      %v224 = vld [vmem:[%s206 + $0x10] sm:$0xff]
      %v225 = vld [vmem:[%s206 + $0x18] sm:$0xff]
      %v226 = vld [vmem:[%s206 + $0x20] sm:$0xff]
      %v227 = vld [vmem:[%s206 + $0x28] sm:$0xff]
      %v228 = vld [vmem:[%s206 + $0x30] sm:$0xff]
      %v229 = vld [vmem:[%s206 + $0x38] sm:$0xff]
      %v230 = vld [vmem:[%s206 + $0x40] sm:$0xff]
      %v231 = vld [vmem:[%s206 + $0x48] sm:$0xff]
      %v232 = vld [vmem:[%s206 + $0x50] sm:$0xff]
      %v233 = vld [vmem:[%s206 + $0x58] sm:$0xff]
      %v234 = vld [vmem:[%s206 + $0x60] sm:$0xff]
      %v235 = vld [vmem:[%s206 + $0x68] sm:$0xff]
      %v236 = vld [vmem:[%s206 + $0x70] sm:$0xff]
      %v237 = vld [vmem:[%s206 + $0x78] sm:$0xff]
      %v238 = vld [vmem:[%s206 + $0x80] sm:$0xff]
      %v239 = vld [vmem:[%s206 + $0x88] sm:$0xff]
      %v240 = vld [vmem:[%s206 + $0x90] sm:$0xff]
      %v241 = vld [vmem:[%s206 + $0x98] sm:$0xff]
      %v242 = vld [vmem:[%s206 + $0xa0] sm:$0xff]
      %v243 = vld [vmem:[%s206 + $0xa8] sm:$0xff]
      %v244 = vld [vmem:[%s206 + $0xb0] sm:$0xff]
      %v245 = vld [vmem:[%s206 + $0xb8] sm:$0xff]
      %v246 = vld [vmem:[%s210] sm:$0xff]
      %v247 = vld [vmem:[%s210 + $0x8] sm:$0xff]
      %v248 = vld [vmem:[%s210 + $0x10] sm:$0xff]
      %v249 = vld [vmem:[%s210 + $0x18] sm:$0xff]
      %v250 = vld [vmem:[%s210 + $0x20] sm:$0xff]
      %v251 = vld [vmem:[%s210 + $0x28] sm:$0xff]
      %v252 = vld [vmem:[%s206 + $0x1] sm:$0xff]
      %v253 = vld [vmem:[%s206 + $0x9] sm:$0xff]
      %v254 = vld [vmem:[%s206 + $0x11] sm:$0xff]
      %v255 = vld [vmem:[%s206 + $0x19] sm:$0xff]
      %v256 = vld [vmem:[%s206 + $0x21] sm:$0xff]
      %v257 = vld [vmem:[%s206 + $0x29] sm:$0xff]
      %v258 = vld [vmem:[%s206 + $0x31] sm:$0xff]
      %v259 = vld [vmem:[%s206 + $0x39] sm:$0xff]
      %v260 = vld [vmem:[%s206 + $0x41] sm:$0xff]
      %v261 = vld [vmem:[%s206 + $0x49] sm:$0xff]
      %v262 = vld [vmem:[%s206 + $0x51] sm:$0xff]
      %v263 = vld [vmem:[%s206 + $0x59] sm:$0xff]
      %v264 = vld [vmem:[%s206 + $0x61] sm:$0xff]
      %v265 = vld [vmem:[%s206 + $0x69] sm:$0xff]
      %v266 = vld [vmem:[%s206 + $0x71] sm:$0xff]
      %v267 = vld [vmem:[%s206 + $0x79] sm:$0xff]
      %v268 = vld [vmem:[%s206 + $0x81] sm:$0xff]
      %v269 = vld [vmem:[%s206 + $0x89] sm:$0xff]
      %v270 = vld [vmem:[%s206 + $0x91] sm:$0xff]
      %v271 = vld [vmem:[%s206 + $0x99] sm:$0xff]
      %v272 = vld [vmem:[%s206 + $0xa1] sm:$0xff]
      %v273 = vld [vmem:[%s206 + $0xa9] sm:$0xff]
      %v274 = vld [vmem:[%s206 + $0xb1] sm:$0xff]
      %v275 = vld [vmem:[%s206 + $0xb9] sm:$0xff]
      %s276 = scalar_lea.vmem %s210, 48
      %v277 = vld [vmem:[%s276] sm:$0xff]
      %v278 = vld [vmem:[%s276 + $0x8] sm:$0xff]
      %v279 = vld [vmem:[%s276 + $0x10] sm:$0xff]
      %v280 = vld [vmem:[%s276 + $0x18] sm:$0xff]
      %v281 = vld [vmem:[%s276 + $0x20] sm:$0xff]
      %v282 = vld [vmem:[%s276 + $0x28] sm:$0xff]
      %vm283 = vcmask 392192
      %v285 = vsel %vm283, %v252, 0
      %v288 = vsel %vm283, %v253, 0
      %v291 = vsel %vm283, %v254, 0
      %v294 = vsel %vm283, %v255, 0
      %v297 = vsel %vm283, %v256, 0
      %v300 = vsel %vm283, %v257, 0
      %v303 = vsel %vm283, %v258, 0
      %v306 = vsel %vm283, %v259, 0
      %v309 = vsel %vm283, %v260, 0
      %v312 = vsel %vm283, %v261, 0
      %v315 = vsel %vm283, %v262, 0
      %v318 = vsel %vm283, %v263, 0
      %v321 = vsel %vm283, %v264, 0
      %v324 = vsel %vm283, %v265, 0
      %v327 = vsel %vm283, %v266, 0
      %v330 = vsel %vm283, %v267, 0
      %v333 = vsel %vm283, %v268, 0
      %v336 = vsel %vm283, %v269, 0
      %v339 = vsel %vm283, %v270, 0
      %v342 = vsel %vm283, %v271, 0
      %v345 = vsel %vm283, %v272, 0
      %v348 = vsel %vm283, %v273, 0
      %v351 = vsel %vm283, %v274, 0
      %v354 = vsel %vm283, %v275, 0
      %356 = vmatpush.msra.mxu0 0.0
      %357 = vmatpush.msra.mxu0 0.0
      %358 = vmatpush.msra.mxu0 0.0
      %359 = vmatpush.msra.mxu0 0.0
      %360 = vmatpush.msra.mxu0 0.0
      %361 = vmatpush.msra.mxu0 0.0
      %362 = vmatpush.msra.mxu0 0.0
      %363 = vmatpush.msra.mxu0 0.0
      %364 = vmatpush.msra.mxu0 0.0
      %365 = vmatpush.msra.mxu0 0.0
      %366 = vmatpush.msra.mxu0 %v282
      %367 = vmatpush.msra.mxu0 %v281
      %368 = vmatpush.msra.mxu0 %v280
      %369 = vmatpush.msra.mxu0 %v279
      %370 = vmatpush.msra.mxu0 %v278
      %371 = vmatpush.msra.mxu0 %v277
      %372 = vmatmul.f32.gmra.mxu0 %v285
      %v373 = vpop.f32.mrf.mxu0
      %v374 = vadd.f32 0.0, %v373
      %375 = vmatmul.f32.gmra.mxu0 %v288
      %v376 = vpop.f32.mrf.mxu0
      %v377 = vadd.f32 0.0, %v376
      %378 = vmatmul.f32.gmra.mxu0 %v291
      %v379 = vpop.f32.mrf.mxu0
      %v380 = vadd.f32 0.0, %v379
      %381 = vmatmul.f32.gmra.mxu0 %v294
      %v382 = vpop.f32.mrf.mxu0
      %v383 = vadd.f32 0.0, %v382
      %384 = vmatmul.f32.gmra.mxu0 %v297
      %v385 = vpop.f32.mrf.mxu0
      %v386 = vadd.f32 0.0, %v385
      %387 = vmatmul.f32.gmra.mxu0 %v300
      %v388 = vpop.f32.mrf.mxu0
      %v389 = vadd.f32 0.0, %v388
      %390 = vmatmul.f32.gmra.mxu0 %v303
      %v391 = vpop.f32.mrf.mxu0
      %v392 = vadd.f32 0.0, %v391
      %393 = vmatmul.f32.gmra.mxu0 %v306
      %v394 = vpop.f32.mrf.mxu0
      %v395 = vadd.f32 0.0, %v394
      %396 = vmatmul.f32.gmra.mxu0 %v309
      %v397 = vpop.f32.mrf.mxu0
      %v398 = vadd.f32 0.0, %v397
      %399 = vmatmul.f32.gmra.mxu0 %v312
      %v400 = vpop.f32.mrf.mxu0
      %v401 = vadd.f32 0.0, %v400
      %402 = vmatmul.f32.gmra.mxu0 %v315
      %v403 = vpop.f32.mrf.mxu0
      %v404 = vadd.f32 0.0, %v403
      %405 = vmatmul.f32.gmra.mxu0 %v318
      %v406 = vpop.f32.mrf.mxu0
      %v407 = vadd.f32 0.0, %v406
      %408 = vmatmul.f32.gmra.mxu0 %v321
      %v409 = vpop.f32.mrf.mxu0
      %v410 = vadd.f32 0.0, %v409
      %411 = vmatmul.f32.gmra.mxu0 %v324
      %v412 = vpop.f32.mrf.mxu0
      %v413 = vadd.f32 0.0, %v412
      %414 = vmatmul.f32.gmra.mxu0 %v327
      %v415 = vpop.f32.mrf.mxu0
      %v416 = vadd.f32 0.0, %v415
      %417 = vmatmul.f32.gmra.mxu0 %v330
      %v418 = vpop.f32.mrf.mxu0
      %v419 = vadd.f32 0.0, %v418
      %420 = vmatmul.f32.gmra.mxu0 %v333
      %v421 = vpop.f32.mrf.mxu0
      %v422 = vadd.f32 0.0, %v421
      %423 = vmatmul.f32.gmra.mxu0 %v336
      %v424 = vpop.f32.mrf.mxu0
      %v425 = vadd.f32 0.0, %v424
      %426 = vmatmul.f32.gmra.mxu0 %v339
      %v427 = vpop.f32.mrf.mxu0
      %v428 = vadd.f32 0.0, %v427
      %429 = vmatmul.f32.gmra.mxu0 %v342
      %v430 = vpop.f32.mrf.mxu0
      %v431 = vadd.f32 0.0, %v430
      %432 = vmatmul.f32.gmra.mxu0 %v345
      %v433 = vpop.f32.mrf.mxu0
      %v434 = vadd.f32 0.0, %v433
      %435 = vmatmul.f32.gmra.mxu0 %v348
      %v436 = vpop.f32.mrf.mxu0
      %v437 = vadd.f32 0.0, %v436
      %438 = vmatmul.f32.gmra.mxu0 %v351
      %v439 = vpop.f32.mrf.mxu0
      %v440 = vadd.f32 0.0, %v439
      %441 = vmatmul.f32.gmra.mxu0 %v354
      %v442 = vpop.f32.mrf.mxu0
      %v443 = vadd.f32 0.0, %v442
      %444 = vdwg.mxu0
      %v446 = vsel %vm283, %v222, 0
      %v449 = vsel %vm283, %v223, 0
      %v452 = vsel %vm283, %v224, 0
      %v455 = vsel %vm283, %v225, 0
      %v458 = vsel %vm283, %v226, 0
      %v461 = vsel %vm283, %v227, 0
      %v464 = vsel %vm283, %v228, 0
      %v467 = vsel %vm283, %v229, 0
      %v470 = vsel %vm283, %v230, 0
      %v473 = vsel %vm283, %v231, 0
      %v476 = vsel %vm283, %v232, 0
      %v479 = vsel %vm283, %v233, 0
      %v482 = vsel %vm283, %v234, 0
      %v485 = vsel %vm283, %v235, 0
      %v488 = vsel %vm283, %v236, 0
      %v491 = vsel %vm283, %v237, 0
      %v494 = vsel %vm283, %v238, 0
      %v497 = vsel %vm283, %v239, 0
      %v500 = vsel %vm283, %v240, 0
      %v503 = vsel %vm283, %v241, 0
      %v506 = vsel %vm283, %v242, 0
      %v509 = vsel %vm283, %v243, 0
      %v512 = vsel %vm283, %v244, 0
      %v515 = vsel %vm283, %v245, 0
      %517 = vmatpush.msra.mxu0 0.0
      %518 = vmatpush.msra.mxu0 0.0
      %519 = vmatpush.msra.mxu0 0.0
      %520 = vmatpush.msra.mxu0 0.0
      %521 = vmatpush.msra.mxu0 0.0
      %522 = vmatpush.msra.mxu0 0.0
      %523 = vmatpush.msra.mxu0 0.0
      %524 = vmatpush.msra.mxu0 0.0
      %525 = vmatpush.msra.mxu0 0.0
      %526 = vmatpush.msra.mxu0 0.0
      %527 = vmatpush.msra.mxu0 %v251
      %528 = vmatpush.msra.mxu0 %v250
      %529 = vmatpush.msra.mxu0 %v249
      %530 = vmatpush.msra.mxu0 %v248
      %531 = vmatpush.msra.mxu0 %v247
      %532 = vmatpush.msra.mxu0 %v246
      %533 = vmatmul.f32.gmra.mxu0 %v446
      %v534 = vpop.f32.mrf.mxu0
      %v535 = vadd.f32 %v374, %v534
      %536 = vmatmul.f32.gmra.mxu0 %v449
      %v537 = vpop.f32.mrf.mxu0
      %v538 = vadd.f32 %v377, %v537
      %539 = vmatmul.f32.gmra.mxu0 %v452
      %v540 = vpop.f32.mrf.mxu0
      %v541 = vadd.f32 %v380, %v540
      %542 = vmatmul.f32.gmra.mxu0 %v455
      %v543 = vpop.f32.mrf.mxu0
      %v544 = vadd.f32 %v383, %v543
      %545 = vmatmul.f32.gmra.mxu0 %v458
      %v546 = vpop.f32.mrf.mxu0
      %v547 = vadd.f32 %v386, %v546
      %548 = vmatmul.f32.gmra.mxu0 %v461
      %v549 = vpop.f32.mrf.mxu0
      %v550 = vadd.f32 %v389, %v549
      %551 = vmatmul.f32.gmra.mxu0 %v464
      %v552 = vpop.f32.mrf.mxu0
      %v553 = vadd.f32 %v392, %v552
      %554 = vmatmul.f32.gmra.mxu0 %v467
      %v555 = vpop.f32.mrf.mxu0
      %v556 = vadd.f32 %v395, %v555
      %557 = vmatmul.f32.gmra.mxu0 %v470
      %v558 = vpop.f32.mrf.mxu0
      %v559 = vadd.f32 %v398, %v558
      %560 = vmatmul.f32.gmra.mxu0 %v473
      %v561 = vpop.f32.mrf.mxu0
      %v562 = vadd.f32 %v401, %v561
      %563 = vmatmul.f32.gmra.mxu0 %v476
      %v564 = vpop.f32.mrf.mxu0
      %v565 = vadd.f32 %v404, %v564
      %566 = vmatmul.f32.gmra.mxu0 %v479
      %v567 = vpop.f32.mrf.mxu0
      %v568 = vadd.f32 %v407, %v567
      %569 = vmatmul.f32.gmra.mxu0 %v482
      %v570 = vpop.f32.mrf.mxu0
      %v571 = vadd.f32 %v410, %v570
      %572 = vmatmul.f32.gmra.mxu0 %v485
      %v573 = vpop.f32.mrf.mxu0
      %v574 = vadd.f32 %v413, %v573
      %575 = vmatmul.f32.gmra.mxu0 %v488
      %v576 = vpop.f32.mrf.mxu0
      %v577 = vadd.f32 %v416, %v576
      %578 = vmatmul.f32.gmra.mxu0 %v491
      %v579 = vpop.f32.mrf.mxu0
      %v580 = vadd.f32 %v419, %v579
      %581 = vmatmul.f32.gmra.mxu0 %v494
      %v582 = vpop.f32.mrf.mxu0
      %v583 = vadd.f32 %v422, %v582
      %584 = vmatmul.f32.gmra.mxu0 %v497
      %v585 = vpop.f32.mrf.mxu0
      %v586 = vadd.f32 %v425, %v585
      %587 = vmatmul.f32.gmra.mxu0 %v500
      %v588 = vpop.f32.mrf.mxu0
      %v589 = vadd.f32 %v428, %v588
      %590 = vmatmul.f32.gmra.mxu0 %v503
      %v591 = vpop.f32.mrf.mxu0
      %v592 = vadd.f32 %v431, %v591
      %593 = vmatmul.f32.gmra.mxu0 %v506
      %v594 = vpop.f32.mrf.mxu0
      %v595 = vadd.f32 %v434, %v594
      %596 = vmatmul.f32.gmra.mxu0 %v509
      %v597 = vpop.f32.mrf.mxu0
      %v598 = vadd.f32 %v437, %v597
      %599 = vmatmul.f32.gmra.mxu0 %v512
      %v600 = vpop.f32.mrf.mxu0
      %v601 = vadd.f32 %v440, %v600
      %602 = vmatmul.f32.gmra.mxu0 %v515
      %v603 = vpop.f32.mrf.mxu0
      %v604 = vadd.f32 %v443, %v603
      %605 = vdwg.mxu0
      %v606 = vld [vmem:[%s206 + $0x2] sm:$0xff]
      %v607 = vld [vmem:[%s206 + $0xa] sm:$0xff]
      %v608 = vld [vmem:[%s206 + $0x12] sm:$0xff]
      %v609 = vld [vmem:[%s206 + $0x1a] sm:$0xff]
      %v610 = vld [vmem:[%s206 + $0x22] sm:$0xff]
      %v611 = vld [vmem:[%s206 + $0x2a] sm:$0xff]
      %v612 = vld [vmem:[%s206 + $0x32] sm:$0xff]
      %v613 = vld [vmem:[%s206 + $0x3a] sm:$0xff]
      %v614 = vld [vmem:[%s206 + $0x42] sm:$0xff]
      %v615 = vld [vmem:[%s206 + $0x4a] sm:$0xff]
      %v616 = vld [vmem:[%s206 + $0x52] sm:$0xff]
      %v617 = vld [vmem:[%s206 + $0x5a] sm:$0xff]
      %v618 = vld [vmem:[%s206 + $0x62] sm:$0xff]
      %v619 = vld [vmem:[%s206 + $0x6a] sm:$0xff]
      %v620 = vld [vmem:[%s206 + $0x72] sm:$0xff]
      %v621 = vld [vmem:[%s206 + $0x7a] sm:$0xff]
      %v622 = vld [vmem:[%s206 + $0x82] sm:$0xff]
      %v623 = vld [vmem:[%s206 + $0x8a] sm:$0xff]
      %v624 = vld [vmem:[%s206 + $0x92] sm:$0xff]
      %v625 = vld [vmem:[%s206 + $0x9a] sm:$0xff]
      %v626 = vld [vmem:[%s206 + $0xa2] sm:$0xff]
      %v627 = vld [vmem:[%s206 + $0xaa] sm:$0xff]
      %v628 = vld [vmem:[%s206 + $0xb2] sm:$0xff]
      %v629 = vld [vmem:[%s206 + $0xba] sm:$0xff]
      %s630 = scalar_lea.vmem %s210, 96
      %v631 = vld [vmem:[%s630] sm:$0xff]
      %v632 = vld [vmem:[%s630 + $0x8] sm:$0xff]
      %v633 = vld [vmem:[%s630 + $0x10] sm:$0xff]
      %v634 = vld [vmem:[%s630 + $0x18] sm:$0xff]
      %v635 = vld [vmem:[%s630 + $0x20] sm:$0xff]
      %v636 = vld [vmem:[%s630 + $0x28] sm:$0xff]
      %v638 = vsel %vm283, %v606, 0
      %v641 = vsel %vm283, %v607, 0
      %v644 = vsel %vm283, %v608, 0
      %v647 = vsel %vm283, %v609, 0
      %v650 = vsel %vm283, %v610, 0
      %v653 = vsel %vm283, %v611, 0
      %v656 = vsel %vm283, %v612, 0
      %v659 = vsel %vm283, %v613, 0
      %v662 = vsel %vm283, %v614, 0
      %v665 = vsel %vm283, %v615, 0
      %v668 = vsel %vm283, %v616, 0
      %v671 = vsel %vm283, %v617, 0
      %v674 = vsel %vm283, %v618, 0
      %v677 = vsel %vm283, %v619, 0
      %v680 = vsel %vm283, %v620, 0
      %v683 = vsel %vm283, %v621, 0
      %v686 = vsel %vm283, %v622, 0
      %v689 = vsel %vm283, %v623, 0
      %v692 = vsel %vm283, %v624, 0
      %v695 = vsel %vm283, %v625, 0
      %v698 = vsel %vm283, %v626, 0
      %v701 = vsel %vm283, %v627, 0
      %v704 = vsel %vm283, %v628, 0
      %v707 = vsel %vm283, %v629, 0
      %709 = vmatpush.msra.mxu0 0.0
      %710 = vmatpush.msra.mxu0 0.0
      %711 = vmatpush.msra.mxu0 0.0
      %712 = vmatpush.msra.mxu0 0.0
      %713 = vmatpush.msra.mxu0 0.0
      %714 = vmatpush.msra.mxu0 0.0
      %715 = vmatpush.msra.mxu0 0.0
      %716 = vmatpush.msra.mxu0 0.0
      %717 = vmatpush.msra.mxu0 0.0
      %718 = vmatpush.msra.mxu0 0.0
      %719 = vmatpush.msra.mxu0 %v636
      %720 = vmatpush.msra.mxu0 %v635
      %721 = vmatpush.msra.mxu0 %v634
      %722 = vmatpush.msra.mxu0 %v633
      %723 = vmatpush.msra.mxu0 %v632
      %724 = vmatpush.msra.mxu0 %v631
      %725 = vmatmul.f32.gmra.mxu0 %v638
      %v726 = vpop.f32.mrf.mxu0
      %v727 = vadd.f32 0.0, %v726
      %728 = vmatmul.f32.gmra.mxu0 %v641
      %v729 = vpop.f32.mrf.mxu0
      %v730 = vadd.f32 0.0, %v729
      %731 = vmatmul.f32.gmra.mxu0 %v644
      %v732 = vpop.f32.mrf.mxu0
      %v733 = vadd.f32 0.0, %v732
      %734 = vmatmul.f32.gmra.mxu0 %v647
      %v735 = vpop.f32.mrf.mxu0
      %v736 = vadd.f32 0.0, %v735
      %737 = vmatmul.f32.gmra.mxu0 %v650
      %v738 = vpop.f32.mrf.mxu0
      %v739 = vadd.f32 0.0, %v738
      %740 = vmatmul.f32.gmra.mxu0 %v653
      %v741 = vpop.f32.mrf.mxu0
      %v742 = vadd.f32 0.0, %v741
      %743 = vmatmul.f32.gmra.mxu0 %v656
      %v744 = vpop.f32.mrf.mxu0
      %v745 = vadd.f32 0.0, %v744
      %746 = vmatmul.f32.gmra.mxu0 %v659
      %v747 = vpop.f32.mrf.mxu0
      %v748 = vadd.f32 0.0, %v747
      %749 = vmatmul.f32.gmra.mxu0 %v662
      %v750 = vpop.f32.mrf.mxu0
      %v751 = vadd.f32 0.0, %v750
      %752 = vmatmul.f32.gmra.mxu0 %v665
      %v753 = vpop.f32.mrf.mxu0
      %v754 = vadd.f32 0.0, %v753
      %755 = vmatmul.f32.gmra.mxu0 %v668
      %v756 = vpop.f32.mrf.mxu0
      %v757 = vadd.f32 0.0, %v756
      %758 = vmatmul.f32.gmra.mxu0 %v671
      %v759 = vpop.f32.mrf.mxu0
      %v760 = vadd.f32 0.0, %v759
      %761 = vmatmul.f32.gmra.mxu0 %v674
      %v762 = vpop.f32.mrf.mxu0
      %v763 = vadd.f32 0.0, %v762
      %764 = vmatmul.f32.gmra.mxu0 %v677
      %v765 = vpop.f32.mrf.mxu0
      %v766 = vadd.f32 0.0, %v765
      %767 = vmatmul.f32.gmra.mxu0 %v680
      %v768 = vpop.f32.mrf.mxu0
      %v769 = vadd.f32 0.0, %v768
      %770 = vmatmul.f32.gmra.mxu0 %v683
      %v771 = vpop.f32.mrf.mxu0
      %v772 = vadd.f32 0.0, %v771
      %773 = vmatmul.f32.gmra.mxu0 %v686
      %v774 = vpop.f32.mrf.mxu0
      %v775 = vadd.f32 0.0, %v774
      %776 = vmatmul.f32.gmra.mxu0 %v689
      %v777 = vpop.f32.mrf.mxu0
      %v778 = vadd.f32 0.0, %v777
      %779 = vmatmul.f32.gmra.mxu0 %v692
      %v780 = vpop.f32.mrf.mxu0
      %v781 = vadd.f32 0.0, %v780
      %782 = vmatmul.f32.gmra.mxu0 %v695
      %v783 = vpop.f32.mrf.mxu0
      %v784 = vadd.f32 0.0, %v783
      %785 = vmatmul.f32.gmra.mxu0 %v698
      %v786 = vpop.f32.mrf.mxu0
      %v787 = vadd.f32 0.0, %v786
      %788 = vmatmul.f32.gmra.mxu0 %v701
      %v789 = vpop.f32.mrf.mxu0
      %v790 = vadd.f32 0.0, %v789
      %791 = vmatmul.f32.gmra.mxu0 %v704
      %v792 = vpop.f32.mrf.mxu0
      %v793 = vadd.f32 0.0, %v792
      %794 = vmatmul.f32.gmra.mxu0 %v707
      %v795 = vpop.f32.mrf.mxu0
      %v796 = vadd.f32 0.0, %v795
      %797 = vdwg.mxu0
      %v798 = vadd.f32 %v535, %v727
      %v799 = vadd.f32 %v538, %v730
      %v800 = vadd.f32 %v541, %v733
      %v801 = vadd.f32 %v544, %v736
      %v802 = vadd.f32 %v547, %v739
      %v803 = vadd.f32 %v550, %v742
      %v804 = vadd.f32 %v553, %v745
      %v805 = vadd.f32 %v556, %v748
      %v806 = vadd.f32 %v559, %v751
      %v807 = vadd.f32 %v562, %v754
      %v808 = vadd.f32 %v565, %v757
      %v809 = vadd.f32 %v568, %v760
      %v810 = vadd.f32 %v571, %v763
      %v811 = vadd.f32 %v574, %v766
      %v812 = vadd.f32 %v577, %v769
      %v813 = vadd.f32 %v580, %v772
      %v814 = vadd.f32 %v583, %v775
      %v815 = vadd.f32 %v586, %v778
      %v816 = vadd.f32 %v589, %v781
      %v817 = vadd.f32 %v592, %v784
      %v818 = vadd.f32 %v595, %v787
      %v819 = vadd.f32 %v598, %v790
      %v820 = vadd.f32 %v601, %v793
      %v821 = vadd.f32 %v604, %v796
      %v822 = vld [vmem:[%s206 + $0x3] sm:$0xff]
      %v823 = vld [vmem:[%s206 + $0xb] sm:$0xff]
      %v824 = vld [vmem:[%s206 + $0x13] sm:$0xff]
      %v825 = vld [vmem:[%s206 + $0x1b] sm:$0xff]
      %v826 = vld [vmem:[%s206 + $0x23] sm:$0xff]
      %v827 = vld [vmem:[%s206 + $0x2b] sm:$0xff]
      %v828 = vld [vmem:[%s206 + $0x33] sm:$0xff]
      %v829 = vld [vmem:[%s206 + $0x3b] sm:$0xff]
      %v830 = vld [vmem:[%s206 + $0x43] sm:$0xff]
      %v831 = vld [vmem:[%s206 + $0x4b] sm:$0xff]
      %v832 = vld [vmem:[%s206 + $0x53] sm:$0xff]
      %v833 = vld [vmem:[%s206 + $0x5b] sm:$0xff]
      %v834 = vld [vmem:[%s206 + $0x63] sm:$0xff]
      %v835 = vld [vmem:[%s206 + $0x6b] sm:$0xff]
      %v836 = vld [vmem:[%s206 + $0x73] sm:$0xff]
      %v837 = vld [vmem:[%s206 + $0x7b] sm:$0xff]
      %v838 = vld [vmem:[%s206 + $0x83] sm:$0xff]
      %v839 = vld [vmem:[%s206 + $0x8b] sm:$0xff]
      %v840 = vld [vmem:[%s206 + $0x93] sm:$0xff]
      %v841 = vld [vmem:[%s206 + $0x9b] sm:$0xff]
      %v842 = vld [vmem:[%s206 + $0xa3] sm:$0xff]
      %v843 = vld [vmem:[%s206 + $0xab] sm:$0xff]
      %v844 = vld [vmem:[%s206 + $0xb3] sm:$0xff]
      %v845 = vld [vmem:[%s206 + $0xbb] sm:$0xff]
      %s846 = scalar_lea.vmem %s210, 144
      %v847 = vld [vmem:[%s846] sm:$0xff]
      %v848 = vld [vmem:[%s846 + $0x8] sm:$0xff]
      %v849 = vld [vmem:[%s846 + $0x10] sm:$0xff]
      %v850 = vld [vmem:[%s846 + $0x18] sm:$0xff]
      %v851 = vld [vmem:[%s846 + $0x20] sm:$0xff]
      %v852 = vld [vmem:[%s846 + $0x28] sm:$0xff]
      %v854 = vsel %vm283, %v822, 0
      %v857 = vsel %vm283, %v823, 0
      %v860 = vsel %vm283, %v824, 0
      %v863 = vsel %vm283, %v825, 0
      %v866 = vsel %vm283, %v826, 0
      %v869 = vsel %vm283, %v827, 0
      %v872 = vsel %vm283, %v828, 0
      %v875 = vsel %vm283, %v829, 0
      %v878 = vsel %vm283, %v830, 0
      %v881 = vsel %vm283, %v831, 0
      %v884 = vsel %vm283, %v832, 0
      %v887 = vsel %vm283, %v833, 0
      %v890 = vsel %vm283, %v834, 0
      %v893 = vsel %vm283, %v835, 0
      %v896 = vsel %vm283, %v836, 0
      %v899 = vsel %vm283, %v837, 0
      %v902 = vsel %vm283, %v838, 0
      %v905 = vsel %vm283, %v839, 0
      %v908 = vsel %vm283, %v840, 0
      %v911 = vsel %vm283, %v841, 0
      %v914 = vsel %vm283, %v842, 0
      %v917 = vsel %vm283, %v843, 0
      %v920 = vsel %vm283, %v844, 0
      %v923 = vsel %vm283, %v845, 0
      %925 = vmatpush.msra.mxu0 0.0
      %926 = vmatpush.msra.mxu0 0.0
      %927 = vmatpush.msra.mxu0 0.0
      %928 = vmatpush.msra.mxu0 0.0
      %929 = vmatpush.msra.mxu0 0.0
      %930 = vmatpush.msra.mxu0 0.0
      %931 = vmatpush.msra.mxu0 0.0
      %932 = vmatpush.msra.mxu0 0.0
      %933 = vmatpush.msra.mxu0 0.0
      %934 = vmatpush.msra.mxu0 0.0
      %935 = vmatpush.msra.mxu0 %v852
      %936 = vmatpush.msra.mxu0 %v851
      %937 = vmatpush.msra.mxu0 %v850
      %938 = vmatpush.msra.mxu0 %v849
      %939 = vmatpush.msra.mxu0 %v848
      %940 = vmatpush.msra.mxu0 %v847
      %941 = vmatmul.f32.gmra.mxu0 %v854
      %v942 = vpop.f32.mrf.mxu0
      %v943 = vadd.f32 0.0, %v942
      %944 = vmatmul.f32.gmra.mxu0 %v857
      %v945 = vpop.f32.mrf.mxu0
      %v946 = vadd.f32 0.0, %v945
      %947 = vmatmul.f32.gmra.mxu0 %v860
      %v948 = vpop.f32.mrf.mxu0
      %v949 = vadd.f32 0.0, %v948
      %950 = vmatmul.f32.gmra.mxu0 %v863
      %v951 = vpop.f32.mrf.mxu0
      %v952 = vadd.f32 0.0, %v951
      %953 = vmatmul.f32.gmra.mxu0 %v866
      %v954 = vpop.f32.mrf.mxu0
      %v955 = vadd.f32 0.0, %v954
      %956 = vmatmul.f32.gmra.mxu0 %v869
      %v957 = vpop.f32.mrf.mxu0
      %v958 = vadd.f32 0.0, %v957
      %959 = vmatmul.f32.gmra.mxu0 %v872
      %v960 = vpop.f32.mrf.mxu0
      %v961 = vadd.f32 0.0, %v960
      %962 = vmatmul.f32.gmra.mxu0 %v875
      %v963 = vpop.f32.mrf.mxu0
      %v964 = vadd.f32 0.0, %v963
      %965 = vmatmul.f32.gmra.mxu0 %v878
      %v966 = vpop.f32.mrf.mxu0
      %v967 = vadd.f32 0.0, %v966
      %968 = vmatmul.f32.gmra.mxu0 %v881
      %v969 = vpop.f32.mrf.mxu0
      %v970 = vadd.f32 0.0, %v969
      %971 = vmatmul.f32.gmra.mxu0 %v884
      %v972 = vpop.f32.mrf.mxu0
      %v973 = vadd.f32 0.0, %v972
      %974 = vmatmul.f32.gmra.mxu0 %v887
      %v975 = vpop.f32.mrf.mxu0
      %v976 = vadd.f32 0.0, %v975
      %977 = vmatmul.f32.gmra.mxu0 %v890
      %v978 = vpop.f32.mrf.mxu0
      %v979 = vadd.f32 0.0, %v978
      %980 = vmatmul.f32.gmra.mxu0 %v893
      %v981 = vpop.f32.mrf.mxu0
      %v982 = vadd.f32 0.0, %v981
      %983 = vmatmul.f32.gmra.mxu0 %v896
      %v984 = vpop.f32.mrf.mxu0
      %v985 = vadd.f32 0.0, %v984
      %986 = vmatmul.f32.gmra.mxu0 %v899
      %v987 = vpop.f32.mrf.mxu0
      %v988 = vadd.f32 0.0, %v987
      %989 = vmatmul.f32.gmra.mxu0 %v902
      %v990 = vpop.f32.mrf.mxu0
      %v991 = vadd.f32 0.0, %v990
      %992 = vmatmul.f32.gmra.mxu0 %v905
      %v993 = vpop.f32.mrf.mxu0
      %v994 = vadd.f32 0.0, %v993
      %995 = vmatmul.f32.gmra.mxu0 %v908
      %v996 = vpop.f32.mrf.mxu0
      %v997 = vadd.f32 0.0, %v996
      %998 = vmatmul.f32.gmra.mxu0 %v911
      %v999 = vpop.f32.mrf.mxu0
      %v1000 = vadd.f32 0.0, %v999
      %1001 = vmatmul.f32.gmra.mxu0 %v914
      %v1002 = vpop.f32.mrf.mxu0
      %v1003 = vadd.f32 0.0, %v1002
      %1004 = vmatmul.f32.gmra.mxu0 %v917
      %v1005 = vpop.f32.mrf.mxu0
      %v1006 = vadd.f32 0.0, %v1005
      %1007 = vmatmul.f32.gmra.mxu0 %v920
      %v1008 = vpop.f32.mrf.mxu0
      %v1009 = vadd.f32 0.0, %v1008
      %1010 = vmatmul.f32.gmra.mxu0 %v923
      %v1011 = vpop.f32.mrf.mxu0
      %v1012 = vadd.f32 0.0, %v1011
      %1013 = vdwg.mxu0
      %v1014 = vadd.f32 %v798, %v943
      %v1015 = vadd.f32 %v799, %v946
      %v1016 = vadd.f32 %v800, %v949
      %v1017 = vadd.f32 %v801, %v952
      %v1018 = vadd.f32 %v802, %v955
      %v1019 = vadd.f32 %v803, %v958
      %v1020 = vadd.f32 %v804, %v961
      %v1021 = vadd.f32 %v805, %v964
      %v1022 = vadd.f32 %v806, %v967
      %v1023 = vadd.f32 %v807, %v970
      %v1024 = vadd.f32 %v808, %v973
      %v1025 = vadd.f32 %v809, %v976
      %v1026 = vadd.f32 %v810, %v979
      %v1027 = vadd.f32 %v811, %v982
      %v1028 = vadd.f32 %v812, %v985
      %v1029 = vadd.f32 %v813, %v988
      %v1030 = vadd.f32 %v814, %v991
      %v1031 = vadd.f32 %v815, %v994
      %v1032 = vadd.f32 %v816, %v997
      %v1033 = vadd.f32 %v817, %v1000
      %v1034 = vadd.f32 %v818, %v1003
      %v1035 = vadd.f32 %v819, %v1006
      %v1036 = vadd.f32 %v820, %v1009
      %v1037 = vadd.f32 %v821, %v1012
      %v1038 = vld [vmem:[%s206 + $0x4] sm:$0xff]
      %v1039 = vld [vmem:[%s206 + $0xc] sm:$0xff]
      %v1040 = vld [vmem:[%s206 + $0x14] sm:$0xff]
      %v1041 = vld [vmem:[%s206 + $0x1c] sm:$0xff]
      %v1042 = vld [vmem:[%s206 + $0x24] sm:$0xff]
      %v1043 = vld [vmem:[%s206 + $0x2c] sm:$0xff]
      %v1044 = vld [vmem:[%s206 + $0x34] sm:$0xff]
      %v1045 = vld [vmem:[%s206 + $0x3c] sm:$0xff]
      %v1046 = vld [vmem:[%s206 + $0x44] sm:$0xff]
      %v1047 = vld [vmem:[%s206 + $0x4c] sm:$0xff]
      %v1048 = vld [vmem:[%s206 + $0x54] sm:$0xff]
      %v1049 = vld [vmem:[%s206 + $0x5c] sm:$0xff]
      %v1050 = vld [vmem:[%s206 + $0x64] sm:$0xff]
      %v1051 = vld [vmem:[%s206 + $0x6c] sm:$0xff]
      %v1052 = vld [vmem:[%s206 + $0x74] sm:$0xff]
      %v1053 = vld [vmem:[%s206 + $0x7c] sm:$0xff]
      %v1054 = vld [vmem:[%s206 + $0x84] sm:$0xff]
      %v1055 = vld [vmem:[%s206 + $0x8c] sm:$0xff]
      %v1056 = vld [vmem:[%s206 + $0x94] sm:$0xff]
      %v1057 = vld [vmem:[%s206 + $0x9c] sm:$0xff]
      %v1058 = vld [vmem:[%s206 + $0xa4] sm:$0xff]
      %v1059 = vld [vmem:[%s206 + $0xac] sm:$0xff]
      %v1060 = vld [vmem:[%s206 + $0xb4] sm:$0xff]
      %v1061 = vld [vmem:[%s206 + $0xbc] sm:$0xff]
      %s1062 = scalar_lea.vmem %s210, 192
      %v1063 = vld [vmem:[%s1062] sm:$0xff]
      %v1064 = vld [vmem:[%s1062 + $0x8] sm:$0xff]
      %v1065 = vld [vmem:[%s1062 + $0x10] sm:$0xff]
      %v1066 = vld [vmem:[%s1062 + $0x18] sm:$0xff]
      %v1067 = vld [vmem:[%s1062 + $0x20] sm:$0xff]
      %v1068 = vld [vmem:[%s1062 + $0x28] sm:$0xff]
      %v1070 = vsel %vm283, %v1038, 0
      %v1073 = vsel %vm283, %v1039, 0
      %v1076 = vsel %vm283, %v1040, 0
      %v1079 = vsel %vm283, %v1041, 0
      %v1082 = vsel %vm283, %v1042, 0
      %v1085 = vsel %vm283, %v1043, 0
      %v1088 = vsel %vm283, %v1044, 0
      %v1091 = vsel %vm283, %v1045, 0
      %v1094 = vsel %vm283, %v1046, 0
      %v1097 = vsel %vm283, %v1047, 0
      %v1100 = vsel %vm283, %v1048, 0
      %v1103 = vsel %vm283, %v1049, 0
      %v1106 = vsel %vm283, %v1050, 0
      %v1109 = vsel %vm283, %v1051, 0
      %v1112 = vsel %vm283, %v1052, 0
      %v1115 = vsel %vm283, %v1053, 0
      %v1118 = vsel %vm283, %v1054, 0
      %v1121 = vsel %vm283, %v1055, 0
      %v1124 = vsel %vm283, %v1056, 0
      %v1127 = vsel %vm283, %v1057, 0
      %v1130 = vsel %vm283, %v1058, 0
      %v1133 = vsel %vm283, %v1059, 0
      %v1136 = vsel %vm283, %v1060, 0
      %v1139 = vsel %vm283, %v1061, 0
      %1141 = vmatpush.msra.mxu0 0.0
      %1142 = vmatpush.msra.mxu0 0.0
      %1143 = vmatpush.msra.mxu0 0.0
      %1144 = vmatpush.msra.mxu0 0.0
      %1145 = vmatpush.msra.mxu0 0.0
      %1146 = vmatpush.msra.mxu0 0.0
      %1147 = vmatpush.msra.mxu0 0.0
      %1148 = vmatpush.msra.mxu0 0.0
      %1149 = vmatpush.msra.mxu0 0.0
      %1150 = vmatpush.msra.mxu0 0.0
      %1151 = vmatpush.msra.mxu0 %v1068
      %1152 = vmatpush.msra.mxu0 %v1067
      %1153 = vmatpush.msra.mxu0 %v1066
      %1154 = vmatpush.msra.mxu0 %v1065
      %1155 = vmatpush.msra.mxu0 %v1064
      %1156 = vmatpush.msra.mxu0 %v1063
      %1157 = vmatmul.f32.gmra.mxu0 %v1070
      %v1158 = vpop.f32.mrf.mxu0
      %v1159 = vadd.f32 0.0, %v1158
      %1160 = vmatmul.f32.gmra.mxu0 %v1073
      %v1161 = vpop.f32.mrf.mxu0
      %v1162 = vadd.f32 0.0, %v1161
      %1163 = vmatmul.f32.gmra.mxu0 %v1076
      %v1164 = vpop.f32.mrf.mxu0
      %v1165 = vadd.f32 0.0, %v1164
      %1166 = vmatmul.f32.gmra.mxu0 %v1079
      %v1167 = vpop.f32.mrf.mxu0
      %v1168 = vadd.f32 0.0, %v1167
      %1169 = vmatmul.f32.gmra.mxu0 %v1082
      %v1170 = vpop.f32.mrf.mxu0
      %v1171 = vadd.f32 0.0, %v1170
      %1172 = vmatmul.f32.gmra.mxu0 %v1085
      %v1173 = vpop.f32.mrf.mxu0
      %v1174 = vadd.f32 0.0, %v1173
      %1175 = vmatmul.f32.gmra.mxu0 %v1088
      %v1176 = vpop.f32.mrf.mxu0
      %v1177 = vadd.f32 0.0, %v1176
      %1178 = vmatmul.f32.gmra.mxu0 %v1091
      %v1179 = vpop.f32.mrf.mxu0
      %v1180 = vadd.f32 0.0, %v1179
      %1181 = vmatmul.f32.gmra.mxu0 %v1094
      %v1182 = vpop.f32.mrf.mxu0
      %v1183 = vadd.f32 0.0, %v1182
      %1184 = vmatmul.f32.gmra.mxu0 %v1097
      %v1185 = vpop.f32.mrf.mxu0
      %v1186 = vadd.f32 0.0, %v1185
      %1187 = vmatmul.f32.gmra.mxu0 %v1100
      %v1188 = vpop.f32.mrf.mxu0
      %v1189 = vadd.f32 0.0, %v1188
      %1190 = vmatmul.f32.gmra.mxu0 %v1103
      %v1191 = vpop.f32.mrf.mxu0
      %v1192 = vadd.f32 0.0, %v1191
      %1193 = vmatmul.f32.gmra.mxu0 %v1106
      %v1194 = vpop.f32.mrf.mxu0
      %v1195 = vadd.f32 0.0, %v1194
      %1196 = vmatmul.f32.gmra.mxu0 %v1109
      %v1197 = vpop.f32.mrf.mxu0
      %v1198 = vadd.f32 0.0, %v1197
      %1199 = vmatmul.f32.gmra.mxu0 %v1112
      %v1200 = vpop.f32.mrf.mxu0
      %v1201 = vadd.f32 0.0, %v1200
      %1202 = vmatmul.f32.gmra.mxu0 %v1115
      %v1203 = vpop.f32.mrf.mxu0
      %v1204 = vadd.f32 0.0, %v1203
      %1205 = vmatmul.f32.gmra.mxu0 %v1118
      %v1206 = vpop.f32.mrf.mxu0
      %v1207 = vadd.f32 0.0, %v1206
      %1208 = vmatmul.f32.gmra.mxu0 %v1121
      %v1209 = vpop.f32.mrf.mxu0
      %v1210 = vadd.f32 0.0, %v1209
      %1211 = vmatmul.f32.gmra.mxu0 %v1124
      %v1212 = vpop.f32.mrf.mxu0
      %v1213 = vadd.f32 0.0, %v1212
      %1214 = vmatmul.f32.gmra.mxu0 %v1127
      %v1215 = vpop.f32.mrf.mxu0
      %v1216 = vadd.f32 0.0, %v1215
      %1217 = vmatmul.f32.gmra.mxu0 %v1130
      %v1218 = vpop.f32.mrf.mxu0
      %v1219 = vadd.f32 0.0, %v1218
      %1220 = vmatmul.f32.gmra.mxu0 %v1133
      %v1221 = vpop.f32.mrf.mxu0
      %v1222 = vadd.f32 0.0, %v1221
      %1223 = vmatmul.f32.gmra.mxu0 %v1136
      %v1224 = vpop.f32.mrf.mxu0
      %v1225 = vadd.f32 0.0, %v1224
      %1226 = vmatmul.f32.gmra.mxu0 %v1139
      %v1227 = vpop.f32.mrf.mxu0
      %v1228 = vadd.f32 0.0, %v1227
      %1229 = vdwg.mxu0
      %v1230 = vadd.f32 %v1014, %v1159
      %v1231 = vadd.f32 %v1015, %v1162
      %v1232 = vadd.f32 %v1016, %v1165
      %v1233 = vadd.f32 %v1017, %v1168
      %v1234 = vadd.f32 %v1018, %v1171
      %v1235 = vadd.f32 %v1019, %v1174
      %v1236 = vadd.f32 %v1020, %v1177
      %v1237 = vadd.f32 %v1021, %v1180
      %v1238 = vadd.f32 %v1022, %v1183
      %v1239 = vadd.f32 %v1023, %v1186
      %v1240 = vadd.f32 %v1024, %v1189
      %v1241 = vadd.f32 %v1025, %v1192
      %v1242 = vadd.f32 %v1026, %v1195
      %v1243 = vadd.f32 %v1027, %v1198
      %v1244 = vadd.f32 %v1028, %v1201
      %v1245 = vadd.f32 %v1029, %v1204
      %v1246 = vadd.f32 %v1030, %v1207
      %v1247 = vadd.f32 %v1031, %v1210
      %v1248 = vadd.f32 %v1032, %v1213
      %v1249 = vadd.f32 %v1033, %v1216
      %v1250 = vadd.f32 %v1034, %v1219
      %v1251 = vadd.f32 %v1035, %v1222
      %v1252 = vadd.f32 %v1036, %v1225
      %v1253 = vadd.f32 %v1037, %v1228
      %v1254 = vld [vmem:[%s206 + $0x11] sm:$0xff]
      %v1255 = vld [vmem:[%s206 + $0x19] sm:$0xff]
      %v1256 = vld [vmem:[%s206 + $0x21] sm:$0xff]
      %v1257 = vld [vmem:[%s206 + $0x29] sm:$0xff]
      %v1258 = vld [vmem:[%s206 + $0x31] sm:$0xff]
      %v1259 = vld [vmem:[%s206 + $0x39] sm:$0xff]
      %v1260 = vld [vmem:[%s206 + $0x41] sm:$0xff]
      %v1261 = vld [vmem:[%s206 + $0x49] sm:$0xff]
      %v1262 = vld [vmem:[%s206 + $0x51] sm:$0xff]
      %v1263 = vld [vmem:[%s206 + $0x59] sm:$0xff]
      %v1264 = vld [vmem:[%s206 + $0x61] sm:$0xff]
      %v1265 = vld [vmem:[%s206 + $0x69] sm:$0xff]
      %v1266 = vld [vmem:[%s206 + $0x71] sm:$0xff]
      %v1267 = vld [vmem:[%s206 + $0x79] sm:$0xff]
      %v1268 = vld [vmem:[%s206 + $0x81] sm:$0xff]
      %v1269 = vld [vmem:[%s206 + $0x89] sm:$0xff]
      %v1270 = vld [vmem:[%s206 + $0x91] sm:$0xff]
      %v1271 = vld [vmem:[%s206 + $0x99] sm:$0xff]
      %v1272 = vld [vmem:[%s206 + $0xa1] sm:$0xff]
      %v1273 = vld [vmem:[%s206 + $0xa9] sm:$0xff]
      %v1274 = vld [vmem:[%s206 + $0xb1] sm:$0xff]
      %v1275 = vld [vmem:[%s206 + $0xb9] sm:$0xff]
      %v1276 = vld [vmem:[%s206 + $0xc1] sm:$0xff]
      %v1277 = vld [vmem:[%s206 + $0xc9] sm:$0xff]
      %s1278 = scalar_lea.vmem %s210, 240
      %v1279 = vld [vmem:[%s1278] sm:$0xff]
      %v1280 = vld [vmem:[%s1278 + $0x8] sm:$0xff]
      %v1281 = vld [vmem:[%s1278 + $0x10] sm:$0xff]
      %v1282 = vld [vmem:[%s1278 + $0x18] sm:$0xff]
      %v1283 = vld [vmem:[%s1278 + $0x20] sm:$0xff]
      %v1284 = vld [vmem:[%s1278 + $0x28] sm:$0xff]
      %v1286 = vsel %vm283, %v1254, 0
      %v1289 = vsel %vm283, %v1255, 0
      %v1292 = vsel %vm283, %v1256, 0
      %v1295 = vsel %vm283, %v1257, 0
      %v1298 = vsel %vm283, %v1258, 0
      %v1301 = vsel %vm283, %v1259, 0
      %v1304 = vsel %vm283, %v1260, 0
      %v1307 = vsel %vm283, %v1261, 0
      %v1310 = vsel %vm283, %v1262, 0
      %v1313 = vsel %vm283, %v1263, 0
      %v1316 = vsel %vm283, %v1264, 0
      %v1319 = vsel %vm283, %v1265, 0
      %v1322 = vsel %vm283, %v1266, 0
      %v1325 = vsel %vm283, %v1267, 0
      %v1328 = vsel %vm283, %v1268, 0
      %v1331 = vsel %vm283, %v1269, 0
      %v1334 = vsel %vm283, %v1270, 0
      %v1337 = vsel %vm283, %v1271, 0
      %v1340 = vsel %vm283, %v1272, 0
      %v1343 = vsel %vm283, %v1273, 0
      %v1346 = vsel %vm283, %v1274, 0
      %v1349 = vsel %vm283, %v1275, 0
      %v1352 = vsel %vm283, %v1276, 0
      %v1355 = vsel %vm283, %v1277, 0
      %1357 = vmatpush.msra.mxu0 0.0
      %1358 = vmatpush.msra.mxu0 0.0
      %1359 = vmatpush.msra.mxu0 0.0
      %1360 = vmatpush.msra.mxu0 0.0
      %1361 = vmatpush.msra.mxu0 0.0
      %1362 = vmatpush.msra.mxu0 0.0
      %1363 = vmatpush.msra.mxu0 0.0
      %1364 = vmatpush.msra.mxu0 0.0
      %1365 = vmatpush.msra.mxu0 0.0
      %1366 = vmatpush.msra.mxu0 0.0
      %1367 = vmatpush.msra.mxu0 %v1284
      %1368 = vmatpush.msra.mxu0 %v1283
      %1369 = vmatpush.msra.mxu0 %v1282
      %1370 = vmatpush.msra.mxu0 %v1281
      %1371 = vmatpush.msra.mxu0 %v1280
      %1372 = vmatpush.msra.mxu0 %v1279
      %1373 = vmatmul.f32.gmra.mxu0 %v1286
      %v1374 = vpop.f32.mrf.mxu0
      %v1375 = vadd.f32 0.0, %v1374
      %1376 = vmatmul.f32.gmra.mxu0 %v1289
      %v1377 = vpop.f32.mrf.mxu0
      %v1378 = vadd.f32 0.0, %v1377
      %1379 = vmatmul.f32.gmra.mxu0 %v1292
      %v1380 = vpop.f32.mrf.mxu0
      %v1381 = vadd.f32 0.0, %v1380
      %1382 = vmatmul.f32.gmra.mxu0 %v1295
      %v1383 = vpop.f32.mrf.mxu0
      %v1384 = vadd.f32 0.0, %v1383
      %1385 = vmatmul.f32.gmra.mxu0 %v1298
      %v1386 = vpop.f32.mrf.mxu0
      %v1387 = vadd.f32 0.0, %v1386
      %1388 = vmatmul.f32.gmra.mxu0 %v1301
      %v1389 = vpop.f32.mrf.mxu0
      %v1390 = vadd.f32 0.0, %v1389
      %1391 = vmatmul.f32.gmra.mxu0 %v1304
      %v1392 = vpop.f32.mrf.mxu0
      %v1393 = vadd.f32 0.0, %v1392
      %1394 = vmatmul.f32.gmra.mxu0 %v1307
      %v1395 = vpop.f32.mrf.mxu0
      %v1396 = vadd.f32 0.0, %v1395
      %1397 = vmatmul.f32.gmra.mxu0 %v1310
      %v1398 = vpop.f32.mrf.mxu0
      %v1399 = vadd.f32 0.0, %v1398
      %1400 = vmatmul.f32.gmra.mxu0 %v1313
      %v1401 = vpop.f32.mrf.mxu0
      %v1402 = vadd.f32 0.0, %v1401
      %1403 = vmatmul.f32.gmra.mxu0 %v1316
      %v1404 = vpop.f32.mrf.mxu0
      %v1405 = vadd.f32 0.0, %v1404
      %1406 = vmatmul.f32.gmra.mxu0 %v1319
      %v1407 = vpop.f32.mrf.mxu0
      %v1408 = vadd.f32 0.0, %v1407
      %1409 = vmatmul.f32.gmra.mxu0 %v1322
      %v1410 = vpop.f32.mrf.mxu0
      %v1411 = vadd.f32 0.0, %v1410
      %1412 = vmatmul.f32.gmra.mxu0 %v1325
      %v1413 = vpop.f32.mrf.mxu0
      %v1414 = vadd.f32 0.0, %v1413
      %1415 = vmatmul.f32.gmra.mxu0 %v1328
      %v1416 = vpop.f32.mrf.mxu0
      %v1417 = vadd.f32 0.0, %v1416
      %1418 = vmatmul.f32.gmra.mxu0 %v1331
      %v1419 = vpop.f32.mrf.mxu0
      %v1420 = vadd.f32 0.0, %v1419
      %1421 = vmatmul.f32.gmra.mxu0 %v1334
      %v1422 = vpop.f32.mrf.mxu0
      %v1423 = vadd.f32 0.0, %v1422
      %1424 = vmatmul.f32.gmra.mxu0 %v1337
      %v1425 = vpop.f32.mrf.mxu0
      %v1426 = vadd.f32 0.0, %v1425
      %1427 = vmatmul.f32.gmra.mxu0 %v1340
      %v1428 = vpop.f32.mrf.mxu0
      %v1429 = vadd.f32 0.0, %v1428
      %1430 = vmatmul.f32.gmra.mxu0 %v1343
      %v1431 = vpop.f32.mrf.mxu0
      %v1432 = vadd.f32 0.0, %v1431
      %1433 = vmatmul.f32.gmra.mxu0 %v1346
      %v1434 = vpop.f32.mrf.mxu0
      %v1435 = vadd.f32 0.0, %v1434
      %1436 = vmatmul.f32.gmra.mxu0 %v1349
      %v1437 = vpop.f32.mrf.mxu0
      %v1438 = vadd.f32 0.0, %v1437
      %1439 = vmatmul.f32.gmra.mxu0 %v1352
      %v1440 = vpop.f32.mrf.mxu0
      %v1441 = vadd.f32 0.0, %v1440
      %1442 = vmatmul.f32.gmra.mxu0 %v1355
      %v1443 = vpop.f32.mrf.mxu0
      %v1444 = vadd.f32 0.0, %v1443
      %1445 = vdwg.mxu0
      %v1446 = vadd.f32 %v1230, %v1375
      %v1447 = vadd.f32 %v1231, %v1378
      %v1448 = vadd.f32 %v1232, %v1381
      %v1449 = vadd.f32 %v1233, %v1384
      %v1450 = vadd.f32 %v1234, %v1387
      %v1451 = vadd.f32 %v1235, %v1390
      %v1452 = vadd.f32 %v1236, %v1393
      %v1453 = vadd.f32 %v1237, %v1396
      %v1454 = vadd.f32 %v1238, %v1399
      %v1455 = vadd.f32 %v1239, %v1402
      %v1456 = vadd.f32 %v1240, %v1405
      %v1457 = vadd.f32 %v1241, %v1408
      %v1458 = vadd.f32 %v1242, %v1411
      %v1459 = vadd.f32 %v1243, %v1414
      %v1460 = vadd.f32 %v1244, %v1417
      %v1461 = vadd.f32 %v1245, %v1420
      %v1462 = vadd.f32 %v1246, %v1423
      %v1463 = vadd.f32 %v1247, %v1426
      %v1464 = vadd.f32 %v1248, %v1429
      %v1465 = vadd.f32 %v1249, %v1432
      %v1466 = vadd.f32 %v1250, %v1435
      %v1467 = vadd.f32 %v1251, %v1438
      %v1468 = vadd.f32 %v1252, %v1441
      %v1469 = vadd.f32 %v1253, %v1444
      %v1470 = vld [vmem:[%s206 + $0x12] sm:$0xff]
      %v1471 = vld [vmem:[%s206 + $0x1a] sm:$0xff]
      %v1472 = vld [vmem:[%s206 + $0x22] sm:$0xff]
      %v1473 = vld [vmem:[%s206 + $0x2a] sm:$0xff]
      %v1474 = vld [vmem:[%s206 + $0x32] sm:$0xff]
      %v1475 = vld [vmem:[%s206 + $0x3a] sm:$0xff]
      %v1476 = vld [vmem:[%s206 + $0x42] sm:$0xff]
      %v1477 = vld [vmem:[%s206 + $0x4a] sm:$0xff]
      %v1478 = vld [vmem:[%s206 + $0x52] sm:$0xff]
      %v1479 = vld [vmem:[%s206 + $0x5a] sm:$0xff]
      %v1480 = vld [vmem:[%s206 + $0x62] sm:$0xff]
      %v1481 = vld [vmem:[%s206 + $0x6a] sm:$0xff]
      %v1482 = vld [vmem:[%s206 + $0x72] sm:$0xff]
      %v1483 = vld [vmem:[%s206 + $0x7a] sm:$0xff]
      %v1484 = vld [vmem:[%s206 + $0x82] sm:$0xff]
      %v1485 = vld [vmem:[%s206 + $0x8a] sm:$0xff]
      %v1486 = vld [vmem:[%s206 + $0x92] sm:$0xff]
      %v1487 = vld [vmem:[%s206 + $0x9a] sm:$0xff]
      %v1488 = vld [vmem:[%s206 + $0xa2] sm:$0xff]
      %v1489 = vld [vmem:[%s206 + $0xaa] sm:$0xff]
      %v1490 = vld [vmem:[%s206 + $0xb2] sm:$0xff]
      %v1491 = vld [vmem:[%s206 + $0xba] sm:$0xff]
      %v1492 = vld [vmem:[%s206 + $0xc2] sm:$0xff]
      %v1493 = vld [vmem:[%s206 + $0xca] sm:$0xff]
      %s1494 = scalar_lea.vmem %s210, 288
      %v1495 = vld [vmem:[%s1494] sm:$0xff]
      %v1496 = vld [vmem:[%s1494 + $0x8] sm:$0xff]
      %v1497 = vld [vmem:[%s1494 + $0x10] sm:$0xff]
      %v1498 = vld [vmem:[%s1494 + $0x18] sm:$0xff]
      %v1499 = vld [vmem:[%s1494 + $0x20] sm:$0xff]
      %v1500 = vld [vmem:[%s1494 + $0x28] sm:$0xff]
      %v1502 = vsel %vm283, %v1470, 0
      %v1505 = vsel %vm283, %v1471, 0
      %v1508 = vsel %vm283, %v1472, 0
      %v1511 = vsel %vm283, %v1473, 0
      %v1514 = vsel %vm283, %v1474, 0
      %v1517 = vsel %vm283, %v1475, 0
      %v1520 = vsel %vm283, %v1476, 0
      %v1523 = vsel %vm283, %v1477, 0
      %v1526 = vsel %vm283, %v1478, 0
      %v1529 = vsel %vm283, %v1479, 0
      %v1532 = vsel %vm283, %v1480, 0
      %v1535 = vsel %vm283, %v1481, 0
      %v1538 = vsel %vm283, %v1482, 0
      %v1541 = vsel %vm283, %v1483, 0
      %v1544 = vsel %vm283, %v1484, 0
      %v1547 = vsel %vm283, %v1485, 0
      %v1550 = vsel %vm283, %v1486, 0
      %v1553 = vsel %vm283, %v1487, 0
      %v1556 = vsel %vm283, %v1488, 0
      %v1559 = vsel %vm283, %v1489, 0
      %v1562 = vsel %vm283, %v1490, 0
      %v1565 = vsel %vm283, %v1491, 0
      %v1568 = vsel %vm283, %v1492, 0
      %v1571 = vsel %vm283, %v1493, 0
      %1573 = vmatpush.msra.mxu0 0.0
      %1574 = vmatpush.msra.mxu0 0.0
      %1575 = vmatpush.msra.mxu0 0.0
      %1576 = vmatpush.msra.mxu0 0.0
      %1577 = vmatpush.msra.mxu0 0.0
      %1578 = vmatpush.msra.mxu0 0.0
      %1579 = vmatpush.msra.mxu0 0.0
      %1580 = vmatpush.msra.mxu0 0.0
      %1581 = vmatpush.msra.mxu0 0.0
      %1582 = vmatpush.msra.mxu0 0.0
      %1583 = vmatpush.msra.mxu0 %v1500
      %1584 = vmatpush.msra.mxu0 %v1499
      %1585 = vmatpush.msra.mxu0 %v1498
      %1586 = vmatpush.msra.mxu0 %v1497
      %1587 = vmatpush.msra.mxu0 %v1496
      %1588 = vmatpush.msra.mxu0 %v1495
      %1589 = vmatmul.f32.gmra.mxu0 %v1502
      %v1590 = vpop.f32.mrf.mxu0
      %v1591 = vadd.f32 0.0, %v1590
      %1592 = vmatmul.f32.gmra.mxu0 %v1505
      %v1593 = vpop.f32.mrf.mxu0
      %v1594 = vadd.f32 0.0, %v1593
      %1595 = vmatmul.f32.gmra.mxu0 %v1508
      %v1596 = vpop.f32.mrf.mxu0
      %v1597 = vadd.f32 0.0, %v1596
      %1598 = vmatmul.f32.gmra.mxu0 %v1511
      %v1599 = vpop.f32.mrf.mxu0
      %v1600 = vadd.f32 0.0, %v1599
      %1601 = vmatmul.f32.gmra.mxu0 %v1514
      %v1602 = vpop.f32.mrf.mxu0
      %v1603 = vadd.f32 0.0, %v1602
      %1604 = vmatmul.f32.gmra.mxu0 %v1517
      %v1605 = vpop.f32.mrf.mxu0
      %v1606 = vadd.f32 0.0, %v1605
      %1607 = vmatmul.f32.gmra.mxu0 %v1520
      %v1608 = vpop.f32.mrf.mxu0
      %v1609 = vadd.f32 0.0, %v1608
      %1610 = vmatmul.f32.gmra.mxu0 %v1523
      %v1611 = vpop.f32.mrf.mxu0
      %v1612 = vadd.f32 0.0, %v1611
      %1613 = vmatmul.f32.gmra.mxu0 %v1526
      %v1614 = vpop.f32.mrf.mxu0
      %v1615 = vadd.f32 0.0, %v1614
      %1616 = vmatmul.f32.gmra.mxu0 %v1529
      %v1617 = vpop.f32.mrf.mxu0
      %v1618 = vadd.f32 0.0, %v1617
      %1619 = vmatmul.f32.gmra.mxu0 %v1532
      %v1620 = vpop.f32.mrf.mxu0
      %v1621 = vadd.f32 0.0, %v1620
      %1622 = vmatmul.f32.gmra.mxu0 %v1535
      %v1623 = vpop.f32.mrf.mxu0
      %v1624 = vadd.f32 0.0, %v1623
      %1625 = vmatmul.f32.gmra.mxu0 %v1538
      %v1626 = vpop.f32.mrf.mxu0
      %v1627 = vadd.f32 0.0, %v1626
      %1628 = vmatmul.f32.gmra.mxu0 %v1541
      %v1629 = vpop.f32.mrf.mxu0
      %v1630 = vadd.f32 0.0, %v1629
      %1631 = vmatmul.f32.gmra.mxu0 %v1544
      %v1632 = vpop.f32.mrf.mxu0
      %v1633 = vadd.f32 0.0, %v1632
      %1634 = vmatmul.f32.gmra.mxu0 %v1547
      %v1635 = vpop.f32.mrf.mxu0
      %v1636 = vadd.f32 0.0, %v1635
      %1637 = vmatmul.f32.gmra.mxu0 %v1550
      %v1638 = vpop.f32.mrf.mxu0
      %v1639 = vadd.f32 0.0, %v1638
      %1640 = vmatmul.f32.gmra.mxu0 %v1553
      %v1641 = vpop.f32.mrf.mxu0
      %v1642 = vadd.f32 0.0, %v1641
      %1643 = vmatmul.f32.gmra.mxu0 %v1556
      %v1644 = vpop.f32.mrf.mxu0
      %v1645 = vadd.f32 0.0, %v1644
      %1646 = vmatmul.f32.gmra.mxu0 %v1559
      %v1647 = vpop.f32.mrf.mxu0
      %v1648 = vadd.f32 0.0, %v1647
      %1649 = vmatmul.f32.gmra.mxu0 %v1562
      %v1650 = vpop.f32.mrf.mxu0
      %v1651 = vadd.f32 0.0, %v1650
      %1652 = vmatmul.f32.gmra.mxu0 %v1565
      %v1653 = vpop.f32.mrf.mxu0
      %v1654 = vadd.f32 0.0, %v1653
      %1655 = vmatmul.f32.gmra.mxu0 %v1568
      %v1656 = vpop.f32.mrf.mxu0
      %v1657 = vadd.f32 0.0, %v1656
      %1658 = vmatmul.f32.gmra.mxu0 %v1571
      %v1659 = vpop.f32.mrf.mxu0
      %v1660 = vadd.f32 0.0, %v1659
      %1661 = vdwg.mxu0
      %v1662 = vadd.f32 %v1446, %v1591
      %v1663 = vadd.f32 %v1447, %v1594
      %v1664 = vadd.f32 %v1448, %v1597
      %v1665 = vadd.f32 %v1449, %v1600
      %v1666 = vadd.f32 %v1450, %v1603
      %v1667 = vadd.f32 %v1451, %v1606
      %v1668 = vadd.f32 %v1452, %v1609
      %v1669 = vadd.f32 %v1453, %v1612
      %v1670 = vadd.f32 %v1454, %v1615
      %v1671 = vadd.f32 %v1455, %v1618
      %v1672 = vadd.f32 %v1456, %v1621
      %v1673 = vadd.f32 %v1457, %v1624
      %v1674 = vadd.f32 %v1458, %v1627
      %v1675 = vadd.f32 %v1459, %v1630
      %v1676 = vadd.f32 %v1460, %v1633
      %v1677 = vadd.f32 %v1461, %v1636
      %v1678 = vadd.f32 %v1462, %v1639
      %v1679 = vadd.f32 %v1463, %v1642
      %v1680 = vadd.f32 %v1464, %v1645
      %v1681 = vadd.f32 %v1465, %v1648
      %v1682 = vadd.f32 %v1466, %v1651
      %v1683 = vadd.f32 %v1467, %v1654
      %v1684 = vadd.f32 %v1468, %v1657
      %v1685 = vadd.f32 %v1469, %v1660
      %v1686 = vld [vmem:[%s206 + $0x13] sm:$0xff]
      %v1687 = vld [vmem:[%s206 + $0x1b] sm:$0xff]
      %v1688 = vld [vmem:[%s206 + $0x23] sm:$0xff]
      %v1689 = vld [vmem:[%s206 + $0x2b] sm:$0xff]
      %v1690 = vld [vmem:[%s206 + $0x33] sm:$0xff]
      %v1691 = vld [vmem:[%s206 + $0x3b] sm:$0xff]
      %v1692 = vld [vmem:[%s206 + $0x43] sm:$0xff]
      %v1693 = vld [vmem:[%s206 + $0x4b] sm:$0xff]
      %v1694 = vld [vmem:[%s206 + $0x53] sm:$0xff]
      %v1695 = vld [vmem:[%s206 + $0x5b] sm:$0xff]
      %v1696 = vld [vmem:[%s206 + $0x63] sm:$0xff]
      %v1697 = vld [vmem:[%s206 + $0x6b] sm:$0xff]
      %v1698 = vld [vmem:[%s206 + $0x73] sm:$0xff]
      %v1699 = vld [vmem:[%s206 + $0x7b] sm:$0xff]
      %v1700 = vld [vmem:[%s206 + $0x83] sm:$0xff]
      %v1701 = vld [vmem:[%s206 + $0x8b] sm:$0xff]
      %v1702 = vld [vmem:[%s206 + $0x93] sm:$0xff]
      %v1703 = vld [vmem:[%s206 + $0x9b] sm:$0xff]
      %v1704 = vld [vmem:[%s206 + $0xa3] sm:$0xff]
      %v1705 = vld [vmem:[%s206 + $0xab] sm:$0xff]
      %v1706 = vld [vmem:[%s206 + $0xb3] sm:$0xff]
      %v1707 = vld [vmem:[%s206 + $0xbb] sm:$0xff]
      %v1708 = vld [vmem:[%s206 + $0xc3] sm:$0xff]
      %v1709 = vld [vmem:[%s206 + $0xcb] sm:$0xff]
      %s1710 = scalar_lea.vmem %s210, 336
      %v1711 = vld [vmem:[%s1710] sm:$0xff]
      %v1712 = vld [vmem:[%s1710 + $0x8] sm:$0xff]
      %v1713 = vld [vmem:[%s1710 + $0x10] sm:$0xff]
      %v1714 = vld [vmem:[%s1710 + $0x18] sm:$0xff]
      %v1715 = vld [vmem:[%s1710 + $0x20] sm:$0xff]
      %v1716 = vld [vmem:[%s1710 + $0x28] sm:$0xff]
      %v1718 = vsel %vm283, %v1686, 0
      %v1721 = vsel %vm283, %v1687, 0
      %v1724 = vsel %vm283, %v1688, 0
      %v1727 = vsel %vm283, %v1689, 0
      %v1730 = vsel %vm283, %v1690, 0
      %v1733 = vsel %vm283, %v1691, 0
      %v1736 = vsel %vm283, %v1692, 0
      %v1739 = vsel %vm283, %v1693, 0
      %v1742 = vsel %vm283, %v1694, 0
      %v1745 = vsel %vm283, %v1695, 0
      %v1748 = vsel %vm283, %v1696, 0
      %v1751 = vsel %vm283, %v1697, 0
      %v1754 = vsel %vm283, %v1698, 0
      %v1757 = vsel %vm283, %v1699, 0
      %v1760 = vsel %vm283, %v1700, 0
      %v1763 = vsel %vm283, %v1701, 0
      %v1766 = vsel %vm283, %v1702, 0
      %v1769 = vsel %vm283, %v1703, 0
      %v1772 = vsel %vm283, %v1704, 0
      %v1775 = vsel %vm283, %v1705, 0
      %v1778 = vsel %vm283, %v1706, 0
      %v1781 = vsel %vm283, %v1707, 0
      %v1784 = vsel %vm283, %v1708, 0
      %v1787 = vsel %vm283, %v1709, 0
      %1789 = vmatpush.msra.mxu0 0.0
      %1790 = vmatpush.msra.mxu0 0.0
      %1791 = vmatpush.msra.mxu0 0.0
      %1792 = vmatpush.msra.mxu0 0.0
      %1793 = vmatpush.msra.mxu0 0.0
      %1794 = vmatpush.msra.mxu0 0.0
      %1795 = vmatpush.msra.mxu0 0.0
      %1796 = vmatpush.msra.mxu0 0.0
      %1797 = vmatpush.msra.mxu0 0.0
      %1798 = vmatpush.msra.mxu0 0.0
      %1799 = vmatpush.msra.mxu0 %v1716
      %1800 = vmatpush.msra.mxu0 %v1715
      %1801 = vmatpush.msra.mxu0 %v1714
      %1802 = vmatpush.msra.mxu0 %v1713
      %1803 = vmatpush.msra.mxu0 %v1712
      %1804 = vmatpush.msra.mxu0 %v1711
      %1805 = vmatmul.f32.gmra.mxu0 %v1718
      %v1806 = vpop.f32.mrf.mxu0
      %v1807 = vadd.f32 0.0, %v1806
      %1808 = vmatmul.f32.gmra.mxu0 %v1721
      %v1809 = vpop.f32.mrf.mxu0
      %v1810 = vadd.f32 0.0, %v1809
      %1811 = vmatmul.f32.gmra.mxu0 %v1724
      %v1812 = vpop.f32.mrf.mxu0
      %v1813 = vadd.f32 0.0, %v1812
      %1814 = vmatmul.f32.gmra.mxu0 %v1727
      %v1815 = vpop.f32.mrf.mxu0
      %v1816 = vadd.f32 0.0, %v1815
      %1817 = vmatmul.f32.gmra.mxu0 %v1730
      %v1818 = vpop.f32.mrf.mxu0
      %v1819 = vadd.f32 0.0, %v1818
      %1820 = vmatmul.f32.gmra.mxu0 %v1733
      %v1821 = vpop.f32.mrf.mxu0
      %v1822 = vadd.f32 0.0, %v1821
      %1823 = vmatmul.f32.gmra.mxu0 %v1736
      %v1824 = vpop.f32.mrf.mxu0
      %v1825 = vadd.f32 0.0, %v1824
      %1826 = vmatmul.f32.gmra.mxu0 %v1739
      %v1827 = vpop.f32.mrf.mxu0
      %v1828 = vadd.f32 0.0, %v1827
      %1829 = vmatmul.f32.gmra.mxu0 %v1742
      %v1830 = vpop.f32.mrf.mxu0
      %v1831 = vadd.f32 0.0, %v1830
      %1832 = vmatmul.f32.gmra.mxu0 %v1745
      %v1833 = vpop.f32.mrf.mxu0
      %v1834 = vadd.f32 0.0, %v1833
      %1835 = vmatmul.f32.gmra.mxu0 %v1748
      %v1836 = vpop.f32.mrf.mxu0
      %v1837 = vadd.f32 0.0, %v1836
      %1838 = vmatmul.f32.gmra.mxu0 %v1751
      %v1839 = vpop.f32.mrf.mxu0
      %v1840 = vadd.f32 0.0, %v1839
      %1841 = vmatmul.f32.gmra.mxu0 %v1754
      %v1842 = vpop.f32.mrf.mxu0
      %v1843 = vadd.f32 0.0, %v1842
      %1844 = vmatmul.f32.gmra.mxu0 %v1757
      %v1845 = vpop.f32.mrf.mxu0
      %v1846 = vadd.f32 0.0, %v1845
      %1847 = vmatmul.f32.gmra.mxu0 %v1760
      %v1848 = vpop.f32.mrf.mxu0
      %v1849 = vadd.f32 0.0, %v1848
      %1850 = vmatmul.f32.gmra.mxu0 %v1763
      %v1851 = vpop.f32.mrf.mxu0
      %v1852 = vadd.f32 0.0, %v1851
      %1853 = vmatmul.f32.gmra.mxu0 %v1766
      %v1854 = vpop.f32.mrf.mxu0
      %v1855 = vadd.f32 0.0, %v1854
      %1856 = vmatmul.f32.gmra.mxu0 %v1769
      %v1857 = vpop.f32.mrf.mxu0
      %v1858 = vadd.f32 0.0, %v1857
      %1859 = vmatmul.f32.gmra.mxu0 %v1772
      %v1860 = vpop.f32.mrf.mxu0
      %v1861 = vadd.f32 0.0, %v1860
      %1862 = vmatmul.f32.gmra.mxu0 %v1775
      %v1863 = vpop.f32.mrf.mxu0
      %v1864 = vadd.f32 0.0, %v1863
      %1865 = vmatmul.f32.gmra.mxu0 %v1778
      %v1866 = vpop.f32.mrf.mxu0
      %v1867 = vadd.f32 0.0, %v1866
      %1868 = vmatmul.f32.gmra.mxu0 %v1781
      %v1869 = vpop.f32.mrf.mxu0
      %v1870 = vadd.f32 0.0, %v1869
      %1871 = vmatmul.f32.gmra.mxu0 %v1784
      %v1872 = vpop.f32.mrf.mxu0
      %v1873 = vadd.f32 0.0, %v1872
      %1874 = vmatmul.f32.gmra.mxu0 %v1787
      %v1875 = vpop.f32.mrf.mxu0
      %v1876 = vadd.f32 0.0, %v1875
      %1877 = vdwg.mxu0
      %v1878 = vadd.f32 %v1662, %v1807
      %v1879 = vadd.f32 %v1663, %v1810
      %v1880 = vadd.f32 %v1664, %v1813
      %v1881 = vadd.f32 %v1665, %v1816
      %v1882 = vadd.f32 %v1666, %v1819
      %v1883 = vadd.f32 %v1667, %v1822
      %v1884 = vadd.f32 %v1668, %v1825
      %v1885 = vadd.f32 %v1669, %v1828
      %v1886 = vadd.f32 %v1670, %v1831
      %v1887 = vadd.f32 %v1671, %v1834
      %v1888 = vadd.f32 %v1672, %v1837
      %v1889 = vadd.f32 %v1673, %v1840
      %v1890 = vadd.f32 %v1674, %v1843
      %v1891 = vadd.f32 %v1675, %v1846
      %v1892 = vadd.f32 %v1676, %v1849
      %v1893 = vadd.f32 %v1677, %v1852
      %v1894 = vadd.f32 %v1678, %v1855
      %v1895 = vadd.f32 %v1679, %v1858
      %v1896 = vadd.f32 %v1680, %v1861
      %v1897 = vadd.f32 %v1681, %v1864
      %v1898 = vadd.f32 %v1682, %v1867
      %v1899 = vadd.f32 %v1683, %v1870
      %v1900 = vadd.f32 %v1684, %v1873
      %v1901 = vadd.f32 %v1685, %v1876
      %v1902 = vld [vmem:[%s206 + $0x14] sm:$0xff]
      %v1903 = vld [vmem:[%s206 + $0x1c] sm:$0xff]
      %v1904 = vld [vmem:[%s206 + $0x24] sm:$0xff]
      %v1905 = vld [vmem:[%s206 + $0x2c] sm:$0xff]
      %v1906 = vld [vmem:[%s206 + $0x34] sm:$0xff]
      %v1907 = vld [vmem:[%s206 + $0x3c] sm:$0xff]
      %v1908 = vld [vmem:[%s206 + $0x44] sm:$0xff]
      %v1909 = vld [vmem:[%s206 + $0x4c] sm:$0xff]
      %v1910 = vld [vmem:[%s206 + $0x54] sm:$0xff]
      %v1911 = vld [vmem:[%s206 + $0x5c] sm:$0xff]
      %v1912 = vld [vmem:[%s206 + $0x64] sm:$0xff]
      %v1913 = vld [vmem:[%s206 + $0x6c] sm:$0xff]
      %v1914 = vld [vmem:[%s206 + $0x74] sm:$0xff]
      %v1915 = vld [vmem:[%s206 + $0x7c] sm:$0xff]
      %v1916 = vld [vmem:[%s206 + $0x84] sm:$0xff]
      %v1917 = vld [vmem:[%s206 + $0x8c] sm:$0xff]
      %v1918 = vld [vmem:[%s206 + $0x94] sm:$0xff]
      %v1919 = vld [vmem:[%s206 + $0x9c] sm:$0xff]
      %v1920 = vld [vmem:[%s206 + $0xa4] sm:$0xff]
      %v1921 = vld [vmem:[%s206 + $0xac] sm:$0xff]
      %v1922 = vld [vmem:[%s206 + $0xb4] sm:$0xff]
      %v1923 = vld [vmem:[%s206 + $0xbc] sm:$0xff]
      %v1924 = vld [vmem:[%s206 + $0xc4] sm:$0xff]
      %v1925 = vld [vmem:[%s206 + $0xcc] sm:$0xff]
      %s1926 = scalar_lea.vmem %s210, 384
      %v1927 = vld [vmem:[%s1926] sm:$0xff]
      %v1928 = vld [vmem:[%s1926 + $0x8] sm:$0xff]
      %v1929 = vld [vmem:[%s1926 + $0x10] sm:$0xff]
      %v1930 = vld [vmem:[%s1926 + $0x18] sm:$0xff]
      %v1931 = vld [vmem:[%s1926 + $0x20] sm:$0xff]
      %v1932 = vld [vmem:[%s1926 + $0x28] sm:$0xff]
      %v1934 = vsel %vm283, %v1902, 0
      %v1937 = vsel %vm283, %v1903, 0
      %v1940 = vsel %vm283, %v1904, 0
      %v1943 = vsel %vm283, %v1905, 0
      %v1946 = vsel %vm283, %v1906, 0
      %v1949 = vsel %vm283, %v1907, 0
      %v1952 = vsel %vm283, %v1908, 0
      %v1955 = vsel %vm283, %v1909, 0
      %v1958 = vsel %vm283, %v1910, 0
      %v1961 = vsel %vm283, %v1911, 0
      %v1964 = vsel %vm283, %v1912, 0
      %v1967 = vsel %vm283, %v1913, 0
      %v1970 = vsel %vm283, %v1914, 0
      %v1973 = vsel %vm283, %v1915, 0
      %v1976 = vsel %vm283, %v1916, 0
      %v1979 = vsel %vm283, %v1917, 0
      %v1982 = vsel %vm283, %v1918, 0
      %v1985 = vsel %vm283, %v1919, 0
      %v1988 = vsel %vm283, %v1920, 0
      %v1991 = vsel %vm283, %v1921, 0
      %v1994 = vsel %vm283, %v1922, 0
      %v1997 = vsel %vm283, %v1923, 0
      %v2000 = vsel %vm283, %v1924, 0
      %v2003 = vsel %vm283, %v1925, 0
      %2005 = vmatpush.msra.mxu0 0.0
      %2006 = vmatpush.msra.mxu0 0.0
      %2007 = vmatpush.msra.mxu0 0.0
      %2008 = vmatpush.msra.mxu0 0.0
      %2009 = vmatpush.msra.mxu0 0.0
      %2010 = vmatpush.msra.mxu0 0.0
      %2011 = vmatpush.msra.mxu0 0.0
      %2012 = vmatpush.msra.mxu0 0.0
      %2013 = vmatpush.msra.mxu0 0.0
      %2014 = vmatpush.msra.mxu0 0.0
      %2015 = vmatpush.msra.mxu0 %v1932
      %2016 = vmatpush.msra.mxu0 %v1931
      %2017 = vmatpush.msra.mxu0 %v1930
      %2018 = vmatpush.msra.mxu0 %v1929
      %2019 = vmatpush.msra.mxu0 %v1928
      %2020 = vmatpush.msra.mxu0 %v1927
      %2021 = vmatmul.f32.gmra.mxu0 %v1934
      %v2022 = vpop.f32.mrf.mxu0
      %v2023 = vadd.f32 0.0, %v2022
      %2024 = vmatmul.f32.gmra.mxu0 %v1937
      %v2025 = vpop.f32.mrf.mxu0
      %v2026 = vadd.f32 0.0, %v2025
      %2027 = vmatmul.f32.gmra.mxu0 %v1940
      %v2028 = vpop.f32.mrf.mxu0
      %v2029 = vadd.f32 0.0, %v2028
      %2030 = vmatmul.f32.gmra.mxu0 %v1943
      %v2031 = vpop.f32.mrf.mxu0
      %v2032 = vadd.f32 0.0, %v2031
      %2033 = vmatmul.f32.gmra.mxu0 %v1946
      %v2034 = vpop.f32.mrf.mxu0
      %v2035 = vadd.f32 0.0, %v2034
      %2036 = vmatmul.f32.gmra.mxu0 %v1949
      %v2037 = vpop.f32.mrf.mxu0
      %v2038 = vadd.f32 0.0, %v2037
      %2039 = vmatmul.f32.gmra.mxu0 %v1952
      %v2040 = vpop.f32.mrf.mxu0
      %v2041 = vadd.f32 0.0, %v2040
      %2042 = vmatmul.f32.gmra.mxu0 %v1955
      %v2043 = vpop.f32.mrf.mxu0
      %v2044 = vadd.f32 0.0, %v2043
      %2045 = vmatmul.f32.gmra.mxu0 %v1958
      %v2046 = vpop.f32.mrf.mxu0
      %v2047 = vadd.f32 0.0, %v2046
      %2048 = vmatmul.f32.gmra.mxu0 %v1961
      %v2049 = vpop.f32.mrf.mxu0
      %v2050 = vadd.f32 0.0, %v2049
      %2051 = vmatmul.f32.gmra.mxu0 %v1964
      %v2052 = vpop.f32.mrf.mxu0
      %v2053 = vadd.f32 0.0, %v2052
      %2054 = vmatmul.f32.gmra.mxu0 %v1967
      %v2055 = vpop.f32.mrf.mxu0
      %v2056 = vadd.f32 0.0, %v2055
      %2057 = vmatmul.f32.gmra.mxu0 %v1970
      %v2058 = vpop.f32.mrf.mxu0
      %v2059 = vadd.f32 0.0, %v2058
      %2060 = vmatmul.f32.gmra.mxu0 %v1973
      %v2061 = vpop.f32.mrf.mxu0
      %v2062 = vadd.f32 0.0, %v2061
      %2063 = vmatmul.f32.gmra.mxu0 %v1976
      %v2064 = vpop.f32.mrf.mxu0
      %v2065 = vadd.f32 0.0, %v2064
      %2066 = vmatmul.f32.gmra.mxu0 %v1979
      %v2067 = vpop.f32.mrf.mxu0
      %v2068 = vadd.f32 0.0, %v2067
      %2069 = vmatmul.f32.gmra.mxu0 %v1982
      %v2070 = vpop.f32.mrf.mxu0
      %v2071 = vadd.f32 0.0, %v2070
      %2072 = vmatmul.f32.gmra.mxu0 %v1985
      %v2073 = vpop.f32.mrf.mxu0
      %v2074 = vadd.f32 0.0, %v2073
      %2075 = vmatmul.f32.gmra.mxu0 %v1988
      %v2076 = vpop.f32.mrf.mxu0
      %v2077 = vadd.f32 0.0, %v2076
      %2078 = vmatmul.f32.gmra.mxu0 %v1991
      %v2079 = vpop.f32.mrf.mxu0
      %v2080 = vadd.f32 0.0, %v2079
      %2081 = vmatmul.f32.gmra.mxu0 %v1994
      %v2082 = vpop.f32.mrf.mxu0
      %v2083 = vadd.f32 0.0, %v2082
      %2084 = vmatmul.f32.gmra.mxu0 %v1997
      %v2085 = vpop.f32.mrf.mxu0
      %v2086 = vadd.f32 0.0, %v2085
      %2087 = vmatmul.f32.gmra.mxu0 %v2000
      %v2088 = vpop.f32.mrf.mxu0
      %v2089 = vadd.f32 0.0, %v2088
      %2090 = vmatmul.f32.gmra.mxu0 %v2003
      %v2091 = vpop.f32.mrf.mxu0
      %v2092 = vadd.f32 0.0, %v2091
      %2093 = vdwg.mxu0
      %v2094 = vadd.f32 %v1878, %v2023
      %v2095 = vadd.f32 %v1879, %v2026
      %v2096 = vadd.f32 %v1880, %v2029
      %v2097 = vadd.f32 %v1881, %v2032
      %v2098 = vadd.f32 %v1882, %v2035
      %v2099 = vadd.f32 %v1883, %v2038
      %v2100 = vadd.f32 %v1884, %v2041
      %v2101 = vadd.f32 %v1885, %v2044
      %v2102 = vadd.f32 %v1886, %v2047
      %v2103 = vadd.f32 %v1887, %v2050
      %v2104 = vadd.f32 %v1888, %v2053
      %v2105 = vadd.f32 %v1889, %v2056
      %v2106 = vadd.f32 %v1890, %v2059
      %v2107 = vadd.f32 %v1891, %v2062
      %v2108 = vadd.f32 %v1892, %v2065
      %v2109 = vadd.f32 %v1893, %v2068
      %v2110 = vadd.f32 %v1894, %v2071
      %v2111 = vadd.f32 %v1895, %v2074
      %v2112 = vadd.f32 %v1896, %v2077
      %v2113 = vadd.f32 %v1897, %v2080
      %v2114 = vadd.f32 %v1898, %v2083
      %v2115 = vadd.f32 %v1899, %v2086
      %v2116 = vadd.f32 %v1900, %v2089
      %v2117 = vadd.f32 %v1901, %v2092
      %v2118 = vld [vmem:[%s206 + $0x15] sm:$0xff]
      %v2119 = vld [vmem:[%s206 + $0x1d] sm:$0xff]
      %v2120 = vld [vmem:[%s206 + $0x25] sm:$0xff]
      %v2121 = vld [vmem:[%s206 + $0x2d] sm:$0xff]
      %v2122 = vld [vmem:[%s206 + $0x35] sm:$0xff]
      %v2123 = vld [vmem:[%s206 + $0x3d] sm:$0xff]
      %v2124 = vld [vmem:[%s206 + $0x45] sm:$0xff]
      %v2125 = vld [vmem:[%s206 + $0x4d] sm:$0xff]
      %v2126 = vld [vmem:[%s206 + $0x55] sm:$0xff]
      %v2127 = vld [vmem:[%s206 + $0x5d] sm:$0xff]
      %v2128 = vld [vmem:[%s206 + $0x65] sm:$0xff]
      %v2129 = vld [vmem:[%s206 + $0x6d] sm:$0xff]
      %v2130 = vld [vmem:[%s206 + $0x75] sm:$0xff]
      %v2131 = vld [vmem:[%s206 + $0x7d] sm:$0xff]
      %v2132 = vld [vmem:[%s206 + $0x85] sm:$0xff]
      %v2133 = vld [vmem:[%s206 + $0x8d] sm:$0xff]
      %v2134 = vld [vmem:[%s206 + $0x95] sm:$0xff]
      %v2135 = vld [vmem:[%s206 + $0x9d] sm:$0xff]
      %v2136 = vld [vmem:[%s206 + $0xa5] sm:$0xff]
      %v2137 = vld [vmem:[%s206 + $0xad] sm:$0xff]
      %v2138 = vld [vmem:[%s206 + $0xb5] sm:$0xff]
      %v2139 = vld [vmem:[%s206 + $0xbd] sm:$0xff]
      %v2140 = vld [vmem:[%s206 + $0xc5] sm:$0xff]
      %v2141 = vld [vmem:[%s206 + $0xcd] sm:$0xff]
      %s2142 = scalar_lea.vmem %s210, 432
      %v2143 = vld [vmem:[%s2142] sm:$0xff]
      %v2144 = vld [vmem:[%s2142 + $0x8] sm:$0xff]
      %v2145 = vld [vmem:[%s2142 + $0x10] sm:$0xff]
      %v2146 = vld [vmem:[%s2142 + $0x18] sm:$0xff]
      %v2147 = vld [vmem:[%s2142 + $0x20] sm:$0xff]
      %v2148 = vld [vmem:[%s2142 + $0x28] sm:$0xff]
      %v2150 = vsel %vm283, %v2118, 0
      %v2153 = vsel %vm283, %v2119, 0
      %v2156 = vsel %vm283, %v2120, 0
      %v2159 = vsel %vm283, %v2121, 0
      %v2162 = vsel %vm283, %v2122, 0
      %v2165 = vsel %vm283, %v2123, 0
      %v2168 = vsel %vm283, %v2124, 0
      %v2171 = vsel %vm283, %v2125, 0
      %v2174 = vsel %vm283, %v2126, 0
      %v2177 = vsel %vm283, %v2127, 0
      %v2180 = vsel %vm283, %v2128, 0
      %v2183 = vsel %vm283, %v2129, 0
      %v2186 = vsel %vm283, %v2130, 0
      %v2189 = vsel %vm283, %v2131, 0
      %v2192 = vsel %vm283, %v2132, 0
      %v2195 = vsel %vm283, %v2133, 0
      %v2198 = vsel %vm283, %v2134, 0
      %v2201 = vsel %vm283, %v2135, 0
      %v2204 = vsel %vm283, %v2136, 0
      %v2207 = vsel %vm283, %v2137, 0
      %v2210 = vsel %vm283, %v2138, 0
      %v2213 = vsel %vm283, %v2139, 0
      %v2216 = vsel %vm283, %v2140, 0
      %v2219 = vsel %vm283, %v2141, 0
      %2221 = vmatpush.msra.mxu0 0.0
      %2222 = vmatpush.msra.mxu0 0.0
      %2223 = vmatpush.msra.mxu0 0.0
      %2224 = vmatpush.msra.mxu0 0.0
      %2225 = vmatpush.msra.mxu0 0.0
      %2226 = vmatpush.msra.mxu0 0.0
      %2227 = vmatpush.msra.mxu0 0.0
      %2228 = vmatpush.msra.mxu0 0.0
      %2229 = vmatpush.msra.mxu0 0.0
      %2230 = vmatpush.msra.mxu0 0.0
      %2231 = vmatpush.msra.mxu0 %v2148
      %2232 = vmatpush.msra.mxu0 %v2147
      %2233 = vmatpush.msra.mxu0 %v2146
      %2234 = vmatpush.msra.mxu0 %v2145
      %2235 = vmatpush.msra.mxu0 %v2144
      %2236 = vmatpush.msra.mxu0 %v2143
      %2237 = vmatmul.f32.gmra.mxu0 %v2150
      %v2238 = vpop.f32.mrf.mxu0
      %v2239 = vadd.f32 0.0, %v2238
      %2240 = vmatmul.f32.gmra.mxu0 %v2153
      %v2241 = vpop.f32.mrf.mxu0
      %v2242 = vadd.f32 0.0, %v2241
      %2243 = vmatmul.f32.gmra.mxu0 %v2156
      %v2244 = vpop.f32.mrf.mxu0
      %v2245 = vadd.f32 0.0, %v2244
      %2246 = vmatmul.f32.gmra.mxu0 %v2159
      %v2247 = vpop.f32.mrf.mxu0
      %v2248 = vadd.f32 0.0, %v2247
      %2249 = vmatmul.f32.gmra.mxu0 %v2162
      %v2250 = vpop.f32.mrf.mxu0
      %v2251 = vadd.f32 0.0, %v2250
      %2252 = vmatmul.f32.gmra.mxu0 %v2165
      %v2253 = vpop.f32.mrf.mxu0
      %v2254 = vadd.f32 0.0, %v2253
      %2255 = vmatmul.f32.gmra.mxu0 %v2168
      %v2256 = vpop.f32.mrf.mxu0
      %v2257 = vadd.f32 0.0, %v2256
      %2258 = vmatmul.f32.gmra.mxu0 %v2171
      %v2259 = vpop.f32.mrf.mxu0
      %v2260 = vadd.f32 0.0, %v2259
      %2261 = vmatmul.f32.gmra.mxu0 %v2174
      %v2262 = vpop.f32.mrf.mxu0
      %v2263 = vadd.f32 0.0, %v2262
      %2264 = vmatmul.f32.gmra.mxu0 %v2177
      %v2265 = vpop.f32.mrf.mxu0
      %v2266 = vadd.f32 0.0, %v2265
      %2267 = vmatmul.f32.gmra.mxu0 %v2180
      %v2268 = vpop.f32.mrf.mxu0
      %v2269 = vadd.f32 0.0, %v2268
      %2270 = vmatmul.f32.gmra.mxu0 %v2183
      %v2271 = vpop.f32.mrf.mxu0
      %v2272 = vadd.f32 0.0, %v2271
      %2273 = vmatmul.f32.gmra.mxu0 %v2186
      %v2274 = vpop.f32.mrf.mxu0
      %v2275 = vadd.f32 0.0, %v2274
      %2276 = vmatmul.f32.gmra.mxu0 %v2189
      %v2277 = vpop.f32.mrf.mxu0
      %v2278 = vadd.f32 0.0, %v2277
      %2279 = vmatmul.f32.gmra.mxu0 %v2192
      %v2280 = vpop.f32.mrf.mxu0
      %v2281 = vadd.f32 0.0, %v2280
      %2282 = vmatmul.f32.gmra.mxu0 %v2195
      %v2283 = vpop.f32.mrf.mxu0
      %v2284 = vadd.f32 0.0, %v2283
      %2285 = vmatmul.f32.gmra.mxu0 %v2198
      %v2286 = vpop.f32.mrf.mxu0
      %v2287 = vadd.f32 0.0, %v2286
      %2288 = vmatmul.f32.gmra.mxu0 %v2201
      %v2289 = vpop.f32.mrf.mxu0
      %v2290 = vadd.f32 0.0, %v2289
      %2291 = vmatmul.f32.gmra.mxu0 %v2204
      %v2292 = vpop.f32.mrf.mxu0
      %v2293 = vadd.f32 0.0, %v2292
      %2294 = vmatmul.f32.gmra.mxu0 %v2207
      %v2295 = vpop.f32.mrf.mxu0
      %v2296 = vadd.f32 0.0, %v2295
      %2297 = vmatmul.f32.gmra.mxu0 %v2210
      %v2298 = vpop.f32.mrf.mxu0
      %v2299 = vadd.f32 0.0, %v2298
      %2300 = vmatmul.f32.gmra.mxu0 %v2213
      %v2301 = vpop.f32.mrf.mxu0
      %v2302 = vadd.f32 0.0, %v2301
      %2303 = vmatmul.f32.gmra.mxu0 %v2216
      %v2304 = vpop.f32.mrf.mxu0
      %v2305 = vadd.f32 0.0, %v2304
      %2306 = vmatmul.f32.gmra.mxu0 %v2219
      %v2307 = vpop.f32.mrf.mxu0
      %v2308 = vadd.f32 0.0, %v2307
      %2309 = vdwg.mxu0
      %v2310 = vadd.f32 %v2094, %v2239
      %v2311 = vadd.f32 %v2095, %v2242
      %v2312 = vadd.f32 %v2096, %v2245
      %v2313 = vadd.f32 %v2097, %v2248
      %v2314 = vadd.f32 %v2098, %v2251
      %v2315 = vadd.f32 %v2099, %v2254
      %v2316 = vadd.f32 %v2100, %v2257
      %v2317 = vadd.f32 %v2101, %v2260
      %v2318 = vadd.f32 %v2102, %v2263
      %v2319 = vadd.f32 %v2103, %v2266
      %v2320 = vadd.f32 %v2104, %v2269
      %v2321 = vadd.f32 %v2105, %v2272
      %v2322 = vadd.f32 %v2106, %v2275
      %v2323 = vadd.f32 %v2107, %v2278
      %v2324 = vadd.f32 %v2108, %v2281
      %v2325 = vadd.f32 %v2109, %v2284
      %v2326 = vadd.f32 %v2110, %v2287
      %v2327 = vadd.f32 %v2111, %v2290
      %v2328 = vadd.f32 %v2112, %v2293
      %v2329 = vadd.f32 %v2113, %v2296
      %v2330 = vadd.f32 %v2114, %v2299
      %v2331 = vadd.f32 %v2115, %v2302
      %v2332 = vadd.f32 %v2116, %v2305
      %v2333 = vadd.f32 %v2117, %v2308
      %v2334 = vld [vmem:[%s206 + $0x22] sm:$0xff]
      %v2335 = vld [vmem:[%s206 + $0x2a] sm:$0xff]
      %v2336 = vld [vmem:[%s206 + $0x32] sm:$0xff]
      %v2337 = vld [vmem:[%s206 + $0x3a] sm:$0xff]
      %v2338 = vld [vmem:[%s206 + $0x42] sm:$0xff]
      %v2339 = vld [vmem:[%s206 + $0x4a] sm:$0xff]
      %v2340 = vld [vmem:[%s206 + $0x52] sm:$0xff]
      %v2341 = vld [vmem:[%s206 + $0x5a] sm:$0xff]
      %v2342 = vld [vmem:[%s206 + $0x62] sm:$0xff]
      %v2343 = vld [vmem:[%s206 + $0x6a] sm:$0xff]
      %v2344 = vld [vmem:[%s206 + $0x72] sm:$0xff]
      %v2345 = vld [vmem:[%s206 + $0x7a] sm:$0xff]
      %v2346 = vld [vmem:[%s206 + $0x82] sm:$0xff]
      %v2347 = vld [vmem:[%s206 + $0x8a] sm:$0xff]
      %v2348 = vld [vmem:[%s206 + $0x92] sm:$0xff]
      %v2349 = vld [vmem:[%s206 + $0x9a] sm:$0xff]
      %v2350 = vld [vmem:[%s206 + $0xa2] sm:$0xff]
      %v2351 = vld [vmem:[%s206 + $0xaa] sm:$0xff]
      %v2352 = vld [vmem:[%s206 + $0xb2] sm:$0xff]
      %v2353 = vld [vmem:[%s206 + $0xba] sm:$0xff]
      %v2354 = vld [vmem:[%s206 + $0xc2] sm:$0xff]
      %v2355 = vld [vmem:[%s206 + $0xca] sm:$0xff]
      %v2356 = vld [vmem:[%s206 + $0xd2] sm:$0xff]
      %v2357 = vld [vmem:[%s206 + $0xda] sm:$0xff]
      %s2358 = scalar_lea.vmem %s210, 480
      %v2359 = vld [vmem:[%s2358] sm:$0xff]
      %v2360 = vld [vmem:[%s2358 + $0x8] sm:$0xff]
      %v2361 = vld [vmem:[%s2358 + $0x10] sm:$0xff]
      %v2362 = vld [vmem:[%s2358 + $0x18] sm:$0xff]
      %v2363 = vld [vmem:[%s2358 + $0x20] sm:$0xff]
      %v2364 = vld [vmem:[%s2358 + $0x28] sm:$0xff]
      %v2366 = vsel %vm283, %v2334, 0
      %v2369 = vsel %vm283, %v2335, 0
      %v2372 = vsel %vm283, %v2336, 0
      %v2375 = vsel %vm283, %v2337, 0
      %v2378 = vsel %vm283, %v2338, 0
      %v2381 = vsel %vm283, %v2339, 0
      %v2384 = vsel %vm283, %v2340, 0
      %v2387 = vsel %vm283, %v2341, 0
      %v2390 = vsel %vm283, %v2342, 0
      %v2393 = vsel %vm283, %v2343, 0
      %v2396 = vsel %vm283, %v2344, 0
      %v2399 = vsel %vm283, %v2345, 0
      %v2402 = vsel %vm283, %v2346, 0
      %v2405 = vsel %vm283, %v2347, 0
      %v2408 = vsel %vm283, %v2348, 0
      %v2411 = vsel %vm283, %v2349, 0
      %v2414 = vsel %vm283, %v2350, 0
      %v2417 = vsel %vm283, %v2351, 0
      %v2420 = vsel %vm283, %v2352, 0
      %v2423 = vsel %vm283, %v2353, 0
      %v2426 = vsel %vm283, %v2354, 0
      %v2429 = vsel %vm283, %v2355, 0
      %v2432 = vsel %vm283, %v2356, 0
      %v2435 = vsel %vm283, %v2357, 0
      %2437 = vmatpush.msra.mxu0 0.0
      %2438 = vmatpush.msra.mxu0 0.0
      %2439 = vmatpush.msra.mxu0 0.0
      %2440 = vmatpush.msra.mxu0 0.0
      %2441 = vmatpush.msra.mxu0 0.0
      %2442 = vmatpush.msra.mxu0 0.0
      %2443 = vmatpush.msra.mxu0 0.0
      %2444 = vmatpush.msra.mxu0 0.0
      %2445 = vmatpush.msra.mxu0 0.0
      %2446 = vmatpush.msra.mxu0 0.0
      %2447 = vmatpush.msra.mxu0 %v2364
      %2448 = vmatpush.msra.mxu0 %v2363
      %2449 = vmatpush.msra.mxu0 %v2362
      %2450 = vmatpush.msra.mxu0 %v2361
      %2451 = vmatpush.msra.mxu0 %v2360
      %2452 = vmatpush.msra.mxu0 %v2359
      %2453 = vmatmul.f32.gmra.mxu0 %v2366
      %v2454 = vpop.f32.mrf.mxu0
      %v2455 = vadd.f32 0.0, %v2454
      %2456 = vmatmul.f32.gmra.mxu0 %v2369
      %v2457 = vpop.f32.mrf.mxu0
      %v2458 = vadd.f32 0.0, %v2457
      %2459 = vmatmul.f32.gmra.mxu0 %v2372
      %v2460 = vpop.f32.mrf.mxu0
      %v2461 = vadd.f32 0.0, %v2460
      %2462 = vmatmul.f32.gmra.mxu0 %v2375
      %v2463 = vpop.f32.mrf.mxu0
      %v2464 = vadd.f32 0.0, %v2463
      %2465 = vmatmul.f32.gmra.mxu0 %v2378
      %v2466 = vpop.f32.mrf.mxu0
      %v2467 = vadd.f32 0.0, %v2466
      %2468 = vmatmul.f32.gmra.mxu0 %v2381
      %v2469 = vpop.f32.mrf.mxu0
      %v2470 = vadd.f32 0.0, %v2469
      %2471 = vmatmul.f32.gmra.mxu0 %v2384
      %v2472 = vpop.f32.mrf.mxu0
      %v2473 = vadd.f32 0.0, %v2472
      %2474 = vmatmul.f32.gmra.mxu0 %v2387
      %v2475 = vpop.f32.mrf.mxu0
      %v2476 = vadd.f32 0.0, %v2475
      %2477 = vmatmul.f32.gmra.mxu0 %v2390
      %v2478 = vpop.f32.mrf.mxu0
      %v2479 = vadd.f32 0.0, %v2478
      %2480 = vmatmul.f32.gmra.mxu0 %v2393
      %v2481 = vpop.f32.mrf.mxu0
      %v2482 = vadd.f32 0.0, %v2481
      %2483 = vmatmul.f32.gmra.mxu0 %v2396
      %v2484 = vpop.f32.mrf.mxu0
      %v2485 = vadd.f32 0.0, %v2484
      %2486 = vmatmul.f32.gmra.mxu0 %v2399
      %v2487 = vpop.f32.mrf.mxu0
      %v2488 = vadd.f32 0.0, %v2487
      %2489 = vmatmul.f32.gmra.mxu0 %v2402
      %v2490 = vpop.f32.mrf.mxu0
      %v2491 = vadd.f32 0.0, %v2490
      %2492 = vmatmul.f32.gmra.mxu0 %v2405
      %v2493 = vpop.f32.mrf.mxu0
      %v2494 = vadd.f32 0.0, %v2493
      %2495 = vmatmul.f32.gmra.mxu0 %v2408
      %v2496 = vpop.f32.mrf.mxu0
      %v2497 = vadd.f32 0.0, %v2496
      %2498 = vmatmul.f32.gmra.mxu0 %v2411
      %v2499 = vpop.f32.mrf.mxu0
      %v2500 = vadd.f32 0.0, %v2499
      %2501 = vmatmul.f32.gmra.mxu0 %v2414
      %v2502 = vpop.f32.mrf.mxu0
      %v2503 = vadd.f32 0.0, %v2502
      %2504 = vmatmul.f32.gmra.mxu0 %v2417
      %v2505 = vpop.f32.mrf.mxu0
      %v2506 = vadd.f32 0.0, %v2505
      %2507 = vmatmul.f32.gmra.mxu0 %v2420
      %v2508 = vpop.f32.mrf.mxu0
      %v2509 = vadd.f32 0.0, %v2508
      %2510 = vmatmul.f32.gmra.mxu0 %v2423
      %v2511 = vpop.f32.mrf.mxu0
      %v2512 = vadd.f32 0.0, %v2511
      %2513 = vmatmul.f32.gmra.mxu0 %v2426
      %v2514 = vpop.f32.mrf.mxu0
      %v2515 = vadd.f32 0.0, %v2514
      %2516 = vmatmul.f32.gmra.mxu0 %v2429
      %v2517 = vpop.f32.mrf.mxu0
      %v2518 = vadd.f32 0.0, %v2517
      %2519 = vmatmul.f32.gmra.mxu0 %v2432
      %v2520 = vpop.f32.mrf.mxu0
      %v2521 = vadd.f32 0.0, %v2520
      %2522 = vmatmul.f32.gmra.mxu0 %v2435
      %v2523 = vpop.f32.mrf.mxu0
      %v2524 = vadd.f32 0.0, %v2523
      %2525 = vdwg.mxu0
      %v2526 = vadd.f32 %v2310, %v2455
      %v2527 = vadd.f32 %v2311, %v2458
      %v2528 = vadd.f32 %v2312, %v2461
      %v2529 = vadd.f32 %v2313, %v2464
      %v2530 = vadd.f32 %v2314, %v2467
      %v2531 = vadd.f32 %v2315, %v2470
      %v2532 = vadd.f32 %v2316, %v2473
      %v2533 = vadd.f32 %v2317, %v2476
      %v2534 = vadd.f32 %v2318, %v2479
      %v2535 = vadd.f32 %v2319, %v2482
      %v2536 = vadd.f32 %v2320, %v2485
      %v2537 = vadd.f32 %v2321, %v2488
      %v2538 = vadd.f32 %v2322, %v2491
      %v2539 = vadd.f32 %v2323, %v2494
      %v2540 = vadd.f32 %v2324, %v2497
      %v2541 = vadd.f32 %v2325, %v2500
      %v2542 = vadd.f32 %v2326, %v2503
      %v2543 = vadd.f32 %v2327, %v2506
      %v2544 = vadd.f32 %v2328, %v2509
      %v2545 = vadd.f32 %v2329, %v2512
      %v2546 = vadd.f32 %v2330, %v2515
      %v2547 = vadd.f32 %v2331, %v2518
      %v2548 = vadd.f32 %v2332, %v2521
      %v2549 = vadd.f32 %v2333, %v2524
      %v2550 = vld [vmem:[%s206 + $0x23] sm:$0xff]
      %v2551 = vld [vmem:[%s206 + $0x2b] sm:$0xff]
      %v2552 = vld [vmem:[%s206 + $0x33] sm:$0xff]
      %v2553 = vld [vmem:[%s206 + $0x3b] sm:$0xff]
      %v2554 = vld [vmem:[%s206 + $0x43] sm:$0xff]
      %v2555 = vld [vmem:[%s206 + $0x4b] sm:$0xff]
      %v2556 = vld [vmem:[%s206 + $0x53] sm:$0xff]
      %v2557 = vld [vmem:[%s206 + $0x5b] sm:$0xff]
      %v2558 = vld [vmem:[%s206 + $0x63] sm:$0xff]
      %v2559 = vld [vmem:[%s206 + $0x6b] sm:$0xff]
      %v2560 = vld [vmem:[%s206 + $0x73] sm:$0xff]
      %v2561 = vld [vmem:[%s206 + $0x7b] sm:$0xff]
      %v2562 = vld [vmem:[%s206 + $0x83] sm:$0xff]
      %v2563 = vld [vmem:[%s206 + $0x8b] sm:$0xff]
      %v2564 = vld [vmem:[%s206 + $0x93] sm:$0xff]
      %v2565 = vld [vmem:[%s206 + $0x9b] sm:$0xff]
      %v2566 = vld [vmem:[%s206 + $0xa3] sm:$0xff]
      %v2567 = vld [vmem:[%s206 + $0xab] sm:$0xff]
      %v2568 = vld [vmem:[%s206 + $0xb3] sm:$0xff]
      %v2569 = vld [vmem:[%s206 + $0xbb] sm:$0xff]
      %v2570 = vld [vmem:[%s206 + $0xc3] sm:$0xff]
      %v2571 = vld [vmem:[%s206 + $0xcb] sm:$0xff]
      %v2572 = vld [vmem:[%s206 + $0xd3] sm:$0xff]
      %v2573 = vld [vmem:[%s206 + $0xdb] sm:$0xff]
      %s2574 = scalar_lea.vmem %s210, 528
      %v2575 = vld [vmem:[%s2574] sm:$0xff]
      %v2576 = vld [vmem:[%s2574 + $0x8] sm:$0xff]
      %v2577 = vld [vmem:[%s2574 + $0x10] sm:$0xff]
      %v2578 = vld [vmem:[%s2574 + $0x18] sm:$0xff]
      %v2579 = vld [vmem:[%s2574 + $0x20] sm:$0xff]
      %v2580 = vld [vmem:[%s2574 + $0x28] sm:$0xff]
      %v2582 = vsel %vm283, %v2550, 0
      %v2585 = vsel %vm283, %v2551, 0
      %v2588 = vsel %vm283, %v2552, 0
      %v2591 = vsel %vm283, %v2553, 0
      %v2594 = vsel %vm283, %v2554, 0
      %v2597 = vsel %vm283, %v2555, 0
      %v2600 = vsel %vm283, %v2556, 0
      %v2603 = vsel %vm283, %v2557, 0
      %v2606 = vsel %vm283, %v2558, 0
      %v2609 = vsel %vm283, %v2559, 0
      %v2612 = vsel %vm283, %v2560, 0
      %v2615 = vsel %vm283, %v2561, 0
      %v2618 = vsel %vm283, %v2562, 0
      %v2621 = vsel %vm283, %v2563, 0
      %v2624 = vsel %vm283, %v2564, 0
      %v2627 = vsel %vm283, %v2565, 0
      %v2630 = vsel %vm283, %v2566, 0
      %v2633 = vsel %vm283, %v2567, 0
      %v2636 = vsel %vm283, %v2568, 0
      %v2639 = vsel %vm283, %v2569, 0
      %v2642 = vsel %vm283, %v2570, 0
      %v2645 = vsel %vm283, %v2571, 0
      %v2648 = vsel %vm283, %v2572, 0
      %v2651 = vsel %vm283, %v2573, 0
      %2653 = vmatpush.msra.mxu0 0.0
      %2654 = vmatpush.msra.mxu0 0.0
      %2655 = vmatpush.msra.mxu0 0.0
      %2656 = vmatpush.msra.mxu0 0.0
      %2657 = vmatpush.msra.mxu0 0.0
      %2658 = vmatpush.msra.mxu0 0.0
      %2659 = vmatpush.msra.mxu0 0.0
      %2660 = vmatpush.msra.mxu0 0.0
      %2661 = vmatpush.msra.mxu0 0.0
      %2662 = vmatpush.msra.mxu0 0.0
      %2663 = vmatpush.msra.mxu0 %v2580
      %2664 = vmatpush.msra.mxu0 %v2579
      %2665 = vmatpush.msra.mxu0 %v2578
      %2666 = vmatpush.msra.mxu0 %v2577
      %2667 = vmatpush.msra.mxu0 %v2576
      %2668 = vmatpush.msra.mxu0 %v2575
      %2669 = vmatmul.f32.gmra.mxu0 %v2582
      %v2670 = vpop.f32.mrf.mxu0
      %v2671 = vadd.f32 0.0, %v2670
      %2672 = vmatmul.f32.gmra.mxu0 %v2585
      %v2673 = vpop.f32.mrf.mxu0
      %v2674 = vadd.f32 0.0, %v2673
      %2675 = vmatmul.f32.gmra.mxu0 %v2588
      %v2676 = vpop.f32.mrf.mxu0
      %v2677 = vadd.f32 0.0, %v2676
      %2678 = vmatmul.f32.gmra.mxu0 %v2591
      %v2679 = vpop.f32.mrf.mxu0
      %v2680 = vadd.f32 0.0, %v2679
      %2681 = vmatmul.f32.gmra.mxu0 %v2594
      %v2682 = vpop.f32.mrf.mxu0
      %v2683 = vadd.f32 0.0, %v2682
      %2684 = vmatmul.f32.gmra.mxu0 %v2597
      %v2685 = vpop.f32.mrf.mxu0
      %v2686 = vadd.f32 0.0, %v2685
      %2687 = vmatmul.f32.gmra.mxu0 %v2600
      %v2688 = vpop.f32.mrf.mxu0
      %v2689 = vadd.f32 0.0, %v2688
      %2690 = vmatmul.f32.gmra.mxu0 %v2603
      %v2691 = vpop.f32.mrf.mxu0
      %v2692 = vadd.f32 0.0, %v2691
      %2693 = vmatmul.f32.gmra.mxu0 %v2606
      %v2694 = vpop.f32.mrf.mxu0
      %v2695 = vadd.f32 0.0, %v2694
      %2696 = vmatmul.f32.gmra.mxu0 %v2609
      %v2697 = vpop.f32.mrf.mxu0
      %v2698 = vadd.f32 0.0, %v2697
      %2699 = vmatmul.f32.gmra.mxu0 %v2612
      %v2700 = vpop.f32.mrf.mxu0
      %v2701 = vadd.f32 0.0, %v2700
      %2702 = vmatmul.f32.gmra.mxu0 %v2615
      %v2703 = vpop.f32.mrf.mxu0
      %v2704 = vadd.f32 0.0, %v2703
      %2705 = vmatmul.f32.gmra.mxu0 %v2618
      %v2706 = vpop.f32.mrf.mxu0
      %v2707 = vadd.f32 0.0, %v2706
      %2708 = vmatmul.f32.gmra.mxu0 %v2621
      %v2709 = vpop.f32.mrf.mxu0
      %v2710 = vadd.f32 0.0, %v2709
      %2711 = vmatmul.f32.gmra.mxu0 %v2624
      %v2712 = vpop.f32.mrf.mxu0
      %v2713 = vadd.f32 0.0, %v2712
      %2714 = vmatmul.f32.gmra.mxu0 %v2627
      %v2715 = vpop.f32.mrf.mxu0
      %v2716 = vadd.f32 0.0, %v2715
      %2717 = vmatmul.f32.gmra.mxu0 %v2630
      %v2718 = vpop.f32.mrf.mxu0
      %v2719 = vadd.f32 0.0, %v2718
      %2720 = vmatmul.f32.gmra.mxu0 %v2633
      %v2721 = vpop.f32.mrf.mxu0
      %v2722 = vadd.f32 0.0, %v2721
      %2723 = vmatmul.f32.gmra.mxu0 %v2636
      %v2724 = vpop.f32.mrf.mxu0
      %v2725 = vadd.f32 0.0, %v2724
      %2726 = vmatmul.f32.gmra.mxu0 %v2639
      %v2727 = vpop.f32.mrf.mxu0
      %v2728 = vadd.f32 0.0, %v2727
      %2729 = vmatmul.f32.gmra.mxu0 %v2642
      %v2730 = vpop.f32.mrf.mxu0
      %v2731 = vadd.f32 0.0, %v2730
      %2732 = vmatmul.f32.gmra.mxu0 %v2645
      %v2733 = vpop.f32.mrf.mxu0
      %v2734 = vadd.f32 0.0, %v2733
      %2735 = vmatmul.f32.gmra.mxu0 %v2648
      %v2736 = vpop.f32.mrf.mxu0
      %v2737 = vadd.f32 0.0, %v2736
      %2738 = vmatmul.f32.gmra.mxu0 %v2651
      %v2739 = vpop.f32.mrf.mxu0
      %v2740 = vadd.f32 0.0, %v2739
      %2741 = vdwg.mxu0
      %v2742 = vadd.f32 %v2526, %v2671
      %v2743 = vadd.f32 %v2527, %v2674
      %v2744 = vadd.f32 %v2528, %v2677
      %v2745 = vadd.f32 %v2529, %v2680
      %v2746 = vadd.f32 %v2530, %v2683
      %v2747 = vadd.f32 %v2531, %v2686
      %v2748 = vadd.f32 %v2532, %v2689
      %v2749 = vadd.f32 %v2533, %v2692
      %v2750 = vadd.f32 %v2534, %v2695
      %v2751 = vadd.f32 %v2535, %v2698
      %v2752 = vadd.f32 %v2536, %v2701
      %v2753 = vadd.f32 %v2537, %v2704
      %v2754 = vadd.f32 %v2538, %v2707
      %v2755 = vadd.f32 %v2539, %v2710
      %v2756 = vadd.f32 %v2540, %v2713
      %v2757 = vadd.f32 %v2541, %v2716
      %v2758 = vadd.f32 %v2542, %v2719
      %v2759 = vadd.f32 %v2543, %v2722
      %v2760 = vadd.f32 %v2544, %v2725
      %v2761 = vadd.f32 %v2545, %v2728
      %v2762 = vadd.f32 %v2546, %v2731
      %v2763 = vadd.f32 %v2547, %v2734
      %v2764 = vadd.f32 %v2548, %v2737
      %v2765 = vadd.f32 %v2549, %v2740
      %v2766 = vld [vmem:[%s206 + $0x24] sm:$0xff]
      %v2767 = vld [vmem:[%s206 + $0x2c] sm:$0xff]
      %v2768 = vld [vmem:[%s206 + $0x34] sm:$0xff]
      %v2769 = vld [vmem:[%s206 + $0x3c] sm:$0xff]
      %v2770 = vld [vmem:[%s206 + $0x44] sm:$0xff]
      %v2771 = vld [vmem:[%s206 + $0x4c] sm:$0xff]
      %v2772 = vld [vmem:[%s206 + $0x54] sm:$0xff]
      %v2773 = vld [vmem:[%s206 + $0x5c] sm:$0xff]
      %v2774 = vld [vmem:[%s206 + $0x64] sm:$0xff]
      %v2775 = vld [vmem:[%s206 + $0x6c] sm:$0xff]
      %v2776 = vld [vmem:[%s206 + $0x74] sm:$0xff]
      %v2777 = vld [vmem:[%s206 + $0x7c] sm:$0xff]
      %v2778 = vld [vmem:[%s206 + $0x84] sm:$0xff]
      %v2779 = vld [vmem:[%s206 + $0x8c] sm:$0xff]
      %v2780 = vld [vmem:[%s206 + $0x94] sm:$0xff]
      %v2781 = vld [vmem:[%s206 + $0x9c] sm:$0xff]
      %v2782 = vld [vmem:[%s206 + $0xa4] sm:$0xff]
      %v2783 = vld [vmem:[%s206 + $0xac] sm:$0xff]
      %v2784 = vld [vmem:[%s206 + $0xb4] sm:$0xff]
      %v2785 = vld [vmem:[%s206 + $0xbc] sm:$0xff]
      %v2786 = vld [vmem:[%s206 + $0xc4] sm:$0xff]
      %v2787 = vld [vmem:[%s206 + $0xcc] sm:$0xff]
      %v2788 = vld [vmem:[%s206 + $0xd4] sm:$0xff]
      %v2789 = vld [vmem:[%s206 + $0xdc] sm:$0xff]
      %s2790 = scalar_lea.vmem %s210, 576
      %v2791 = vld [vmem:[%s2790] sm:$0xff]
      %v2792 = vld [vmem:[%s2790 + $0x8] sm:$0xff]
      %v2793 = vld [vmem:[%s2790 + $0x10] sm:$0xff]
      %v2794 = vld [vmem:[%s2790 + $0x18] sm:$0xff]
      %v2795 = vld [vmem:[%s2790 + $0x20] sm:$0xff]
      %v2796 = vld [vmem:[%s2790 + $0x28] sm:$0xff]
      %v2798 = vsel %vm283, %v2766, 0
      %v2801 = vsel %vm283, %v2767, 0
      %v2804 = vsel %vm283, %v2768, 0
      %v2807 = vsel %vm283, %v2769, 0
      %v2810 = vsel %vm283, %v2770, 0
      %v2813 = vsel %vm283, %v2771, 0
      %v2816 = vsel %vm283, %v2772, 0
      %v2819 = vsel %vm283, %v2773, 0
      %v2822 = vsel %vm283, %v2774, 0
      %v2825 = vsel %vm283, %v2775, 0
      %v2828 = vsel %vm283, %v2776, 0
      %v2831 = vsel %vm283, %v2777, 0
      %v2834 = vsel %vm283, %v2778, 0
      %v2837 = vsel %vm283, %v2779, 0
      %v2840 = vsel %vm283, %v2780, 0
      %v2843 = vsel %vm283, %v2781, 0
      %v2846 = vsel %vm283, %v2782, 0
      %v2849 = vsel %vm283, %v2783, 0
      %v2852 = vsel %vm283, %v2784, 0
      %v2855 = vsel %vm283, %v2785, 0
      %v2858 = vsel %vm283, %v2786, 0
      %v2861 = vsel %vm283, %v2787, 0
      %v2864 = vsel %vm283, %v2788, 0
      %v2867 = vsel %vm283, %v2789, 0
      %2869 = vmatpush.msra.mxu0 0.0
      %2870 = vmatpush.msra.mxu0 0.0
      %2871 = vmatpush.msra.mxu0 0.0
      %2872 = vmatpush.msra.mxu0 0.0
      %2873 = vmatpush.msra.mxu0 0.0
      %2874 = vmatpush.msra.mxu0 0.0
      %2875 = vmatpush.msra.mxu0 0.0
      %2876 = vmatpush.msra.mxu0 0.0
      %2877 = vmatpush.msra.mxu0 0.0
      %2878 = vmatpush.msra.mxu0 0.0
      %2879 = vmatpush.msra.mxu0 %v2796
      %2880 = vmatpush.msra.mxu0 %v2795
      %2881 = vmatpush.msra.mxu0 %v2794
      %2882 = vmatpush.msra.mxu0 %v2793
      %2883 = vmatpush.msra.mxu0 %v2792
      %2884 = vmatpush.msra.mxu0 %v2791
      %2885 = vmatmul.f32.gmra.mxu0 %v2798
      %v2886 = vpop.f32.mrf.mxu0
      %v2887 = vadd.f32 0.0, %v2886
      %2888 = vmatmul.f32.gmra.mxu0 %v2801
      %v2889 = vpop.f32.mrf.mxu0
      %v2890 = vadd.f32 0.0, %v2889
      %2891 = vmatmul.f32.gmra.mxu0 %v2804
      %v2892 = vpop.f32.mrf.mxu0
      %v2893 = vadd.f32 0.0, %v2892
      %2894 = vmatmul.f32.gmra.mxu0 %v2807
      %v2895 = vpop.f32.mrf.mxu0
      %v2896 = vadd.f32 0.0, %v2895
      %2897 = vmatmul.f32.gmra.mxu0 %v2810
      %v2898 = vpop.f32.mrf.mxu0
      %v2899 = vadd.f32 0.0, %v2898
      %2900 = vmatmul.f32.gmra.mxu0 %v2813
      %v2901 = vpop.f32.mrf.mxu0
      %v2902 = vadd.f32 0.0, %v2901
      %2903 = vmatmul.f32.gmra.mxu0 %v2816
      %v2904 = vpop.f32.mrf.mxu0
      %v2905 = vadd.f32 0.0, %v2904
      %2906 = vmatmul.f32.gmra.mxu0 %v2819
      %v2907 = vpop.f32.mrf.mxu0
      %v2908 = vadd.f32 0.0, %v2907
      %2909 = vmatmul.f32.gmra.mxu0 %v2822
      %v2910 = vpop.f32.mrf.mxu0
      %v2911 = vadd.f32 0.0, %v2910
      %2912 = vmatmul.f32.gmra.mxu0 %v2825
      %v2913 = vpop.f32.mrf.mxu0
      %v2914 = vadd.f32 0.0, %v2913
      %2915 = vmatmul.f32.gmra.mxu0 %v2828
      %v2916 = vpop.f32.mrf.mxu0
      %v2917 = vadd.f32 0.0, %v2916
      %2918 = vmatmul.f32.gmra.mxu0 %v2831
      %v2919 = vpop.f32.mrf.mxu0
      %v2920 = vadd.f32 0.0, %v2919
      %2921 = vmatmul.f32.gmra.mxu0 %v2834
      %v2922 = vpop.f32.mrf.mxu0
      %v2923 = vadd.f32 0.0, %v2922
      %2924 = vmatmul.f32.gmra.mxu0 %v2837
      %v2925 = vpop.f32.mrf.mxu0
      %v2926 = vadd.f32 0.0, %v2925
      %2927 = vmatmul.f32.gmra.mxu0 %v2840
      %v2928 = vpop.f32.mrf.mxu0
      %v2929 = vadd.f32 0.0, %v2928
      %2930 = vmatmul.f32.gmra.mxu0 %v2843
      %v2931 = vpop.f32.mrf.mxu0
      %v2932 = vadd.f32 0.0, %v2931
      %2933 = vmatmul.f32.gmra.mxu0 %v2846
      %v2934 = vpop.f32.mrf.mxu0
      %v2935 = vadd.f32 0.0, %v2934
      %2936 = vmatmul.f32.gmra.mxu0 %v2849
      %v2937 = vpop.f32.mrf.mxu0
      %v2938 = vadd.f32 0.0, %v2937
      %2939 = vmatmul.f32.gmra.mxu0 %v2852
      %v2940 = vpop.f32.mrf.mxu0
      %v2941 = vadd.f32 0.0, %v2940
      %2942 = vmatmul.f32.gmra.mxu0 %v2855
      %v2943 = vpop.f32.mrf.mxu0
      %v2944 = vadd.f32 0.0, %v2943
      %2945 = vmatmul.f32.gmra.mxu0 %v2858
      %v2946 = vpop.f32.mrf.mxu0
      %v2947 = vadd.f32 0.0, %v2946
      %2948 = vmatmul.f32.gmra.mxu0 %v2861
      %v2949 = vpop.f32.mrf.mxu0
      %v2950 = vadd.f32 0.0, %v2949
      %2951 = vmatmul.f32.gmra.mxu0 %v2864
      %v2952 = vpop.f32.mrf.mxu0
      %v2953 = vadd.f32 0.0, %v2952
      %2954 = vmatmul.f32.gmra.mxu0 %v2867
      %v2955 = vpop.f32.mrf.mxu0
      %v2956 = vadd.f32 0.0, %v2955
      %2957 = vdwg.mxu0
      %v2958 = vadd.f32 %v2742, %v2887
      %v2959 = vadd.f32 %v2743, %v2890
      %v2960 = vadd.f32 %v2744, %v2893
      %v2961 = vadd.f32 %v2745, %v2896
      %v2962 = vadd.f32 %v2746, %v2899
      %v2963 = vadd.f32 %v2747, %v2902
      %v2964 = vadd.f32 %v2748, %v2905
      %v2965 = vadd.f32 %v2749, %v2908
      %v2966 = vadd.f32 %v2750, %v2911
      %v2967 = vadd.f32 %v2751, %v2914
      %v2968 = vadd.f32 %v2752, %v2917
      %v2969 = vadd.f32 %v2753, %v2920
      %v2970 = vadd.f32 %v2754, %v2923
      %v2971 = vadd.f32 %v2755, %v2926
      %v2972 = vadd.f32 %v2756, %v2929
      %v2973 = vadd.f32 %v2757, %v2932
      %v2974 = vadd.f32 %v2758, %v2935
      %v2975 = vadd.f32 %v2759, %v2938
      %v2976 = vadd.f32 %v2760, %v2941
      %v2977 = vadd.f32 %v2761, %v2944
      %v2978 = vadd.f32 %v2762, %v2947
      %v2979 = vadd.f32 %v2763, %v2950
      %v2980 = vadd.f32 %v2764, %v2953
      %v2981 = vadd.f32 %v2765, %v2956
      %v2982 = vld [vmem:[%s206 + $0x25] sm:$0xff]
      %v2983 = vld [vmem:[%s206 + $0x2d] sm:$0xff]
      %v2984 = vld [vmem:[%s206 + $0x35] sm:$0xff]
      %v2985 = vld [vmem:[%s206 + $0x3d] sm:$0xff]
      %v2986 = vld [vmem:[%s206 + $0x45] sm:$0xff]
      %v2987 = vld [vmem:[%s206 + $0x4d] sm:$0xff]
      %v2988 = vld [vmem:[%s206 + $0x55] sm:$0xff]
      %v2989 = vld [vmem:[%s206 + $0x5d] sm:$0xff]
      %v2990 = vld [vmem:[%s206 + $0x65] sm:$0xff]
      %v2991 = vld [vmem:[%s206 + $0x6d] sm:$0xff]
      %v2992 = vld [vmem:[%s206 + $0x75] sm:$0xff]
      %v2993 = vld [vmem:[%s206 + $0x7d] sm:$0xff]
      %v2994 = vld [vmem:[%s206 + $0x85] sm:$0xff]
      %v2995 = vld [vmem:[%s206 + $0x8d] sm:$0xff]
      %v2996 = vld [vmem:[%s206 + $0x95] sm:$0xff]
      %v2997 = vld [vmem:[%s206 + $0x9d] sm:$0xff]
      %v2998 = vld [vmem:[%s206 + $0xa5] sm:$0xff]
      %v2999 = vld [vmem:[%s206 + $0xad] sm:$0xff]
      %v3000 = vld [vmem:[%s206 + $0xb5] sm:$0xff]
      %v3001 = vld [vmem:[%s206 + $0xbd] sm:$0xff]
      %v3002 = vld [vmem:[%s206 + $0xc5] sm:$0xff]
      %v3003 = vld [vmem:[%s206 + $0xcd] sm:$0xff]
      %v3004 = vld [vmem:[%s206 + $0xd5] sm:$0xff]
      %v3005 = vld [vmem:[%s206 + $0xdd] sm:$0xff]
      %s3006 = scalar_lea.vmem %s210, 624
      %v3007 = vld [vmem:[%s3006] sm:$0xff]
      %v3008 = vld [vmem:[%s3006 + $0x8] sm:$0xff]
      %v3009 = vld [vmem:[%s3006 + $0x10] sm:$0xff]
      %v3010 = vld [vmem:[%s3006 + $0x18] sm:$0xff]
      %v3011 = vld [vmem:[%s3006 + $0x20] sm:$0xff]
      %v3012 = vld [vmem:[%s3006 + $0x28] sm:$0xff]
      %v3014 = vsel %vm283, %v2982, 0
      %v3017 = vsel %vm283, %v2983, 0
      %v3020 = vsel %vm283, %v2984, 0
      %v3023 = vsel %vm283, %v2985, 0
      %v3026 = vsel %vm283, %v2986, 0
      %v3029 = vsel %vm283, %v2987, 0
      %v3032 = vsel %vm283, %v2988, 0
      %v3035 = vsel %vm283, %v2989, 0
      %v3038 = vsel %vm283, %v2990, 0
      %v3041 = vsel %vm283, %v2991, 0
      %v3044 = vsel %vm283, %v2992, 0
      %v3047 = vsel %vm283, %v2993, 0
      %v3050 = vsel %vm283, %v2994, 0
      %v3053 = vsel %vm283, %v2995, 0
      %v3056 = vsel %vm283, %v2996, 0
      %v3059 = vsel %vm283, %v2997, 0
      %v3062 = vsel %vm283, %v2998, 0
      %v3065 = vsel %vm283, %v2999, 0
      %v3068 = vsel %vm283, %v3000, 0
      %v3071 = vsel %vm283, %v3001, 0
      %v3074 = vsel %vm283, %v3002, 0
      %v3077 = vsel %vm283, %v3003, 0
      %v3080 = vsel %vm283, %v3004, 0
      %v3083 = vsel %vm283, %v3005, 0
      %3085 = vmatpush.msra.mxu0 0.0
      %3086 = vmatpush.msra.mxu0 0.0
      %3087 = vmatpush.msra.mxu0 0.0
      %3088 = vmatpush.msra.mxu0 0.0
      %3089 = vmatpush.msra.mxu0 0.0
      %3090 = vmatpush.msra.mxu0 0.0
      %3091 = vmatpush.msra.mxu0 0.0
      %3092 = vmatpush.msra.mxu0 0.0
      %3093 = vmatpush.msra.mxu0 0.0
      %3094 = vmatpush.msra.mxu0 0.0
      %3095 = vmatpush.msra.mxu0 %v3012
      %3096 = vmatpush.msra.mxu0 %v3011
      %3097 = vmatpush.msra.mxu0 %v3010
      %3098 = vmatpush.msra.mxu0 %v3009
      %3099 = vmatpush.msra.mxu0 %v3008
      %3100 = vmatpush.msra.mxu0 %v3007
      %3101 = vmatmul.f32.gmra.mxu0 %v3014
      %v3102 = vpop.f32.mrf.mxu0
      %v3103 = vadd.f32 0.0, %v3102
      %3104 = vmatmul.f32.gmra.mxu0 %v3017
      %v3105 = vpop.f32.mrf.mxu0
      %v3106 = vadd.f32 0.0, %v3105
      %3107 = vmatmul.f32.gmra.mxu0 %v3020
      %v3108 = vpop.f32.mrf.mxu0
      %v3109 = vadd.f32 0.0, %v3108
      %3110 = vmatmul.f32.gmra.mxu0 %v3023
      %v3111 = vpop.f32.mrf.mxu0
      %v3112 = vadd.f32 0.0, %v3111
      %3113 = vmatmul.f32.gmra.mxu0 %v3026
      %v3114 = vpop.f32.mrf.mxu0
      %v3115 = vadd.f32 0.0, %v3114
      %3116 = vmatmul.f32.gmra.mxu0 %v3029
      %v3117 = vpop.f32.mrf.mxu0
      %v3118 = vadd.f32 0.0, %v3117
      %3119 = vmatmul.f32.gmra.mxu0 %v3032
      %v3120 = vpop.f32.mrf.mxu0
      %v3121 = vadd.f32 0.0, %v3120
      %3122 = vmatmul.f32.gmra.mxu0 %v3035
      %v3123 = vpop.f32.mrf.mxu0
      %v3124 = vadd.f32 0.0, %v3123
      %3125 = vmatmul.f32.gmra.mxu0 %v3038
      %v3126 = vpop.f32.mrf.mxu0
      %v3127 = vadd.f32 0.0, %v3126
      %3128 = vmatmul.f32.gmra.mxu0 %v3041
      %v3129 = vpop.f32.mrf.mxu0
      %v3130 = vadd.f32 0.0, %v3129
      %3131 = vmatmul.f32.gmra.mxu0 %v3044
      %v3132 = vpop.f32.mrf.mxu0
      %v3133 = vadd.f32 0.0, %v3132
      %3134 = vmatmul.f32.gmra.mxu0 %v3047
      %v3135 = vpop.f32.mrf.mxu0
      %v3136 = vadd.f32 0.0, %v3135
      %3137 = vmatmul.f32.gmra.mxu0 %v3050
      %v3138 = vpop.f32.mrf.mxu0
      %v3139 = vadd.f32 0.0, %v3138
      %3140 = vmatmul.f32.gmra.mxu0 %v3053
      %v3141 = vpop.f32.mrf.mxu0
      %v3142 = vadd.f32 0.0, %v3141
      %3143 = vmatmul.f32.gmra.mxu0 %v3056
      %v3144 = vpop.f32.mrf.mxu0
      %v3145 = vadd.f32 0.0, %v3144
      %3146 = vmatmul.f32.gmra.mxu0 %v3059
      %v3147 = vpop.f32.mrf.mxu0
      %v3148 = vadd.f32 0.0, %v3147
      %3149 = vmatmul.f32.gmra.mxu0 %v3062
      %v3150 = vpop.f32.mrf.mxu0
      %v3151 = vadd.f32 0.0, %v3150
      %3152 = vmatmul.f32.gmra.mxu0 %v3065
      %v3153 = vpop.f32.mrf.mxu0
      %v3154 = vadd.f32 0.0, %v3153
      %3155 = vmatmul.f32.gmra.mxu0 %v3068
      %v3156 = vpop.f32.mrf.mxu0
      %v3157 = vadd.f32 0.0, %v3156
      %3158 = vmatmul.f32.gmra.mxu0 %v3071
      %v3159 = vpop.f32.mrf.mxu0
      %v3160 = vadd.f32 0.0, %v3159
      %3161 = vmatmul.f32.gmra.mxu0 %v3074
      %v3162 = vpop.f32.mrf.mxu0
      %v3163 = vadd.f32 0.0, %v3162
      %3164 = vmatmul.f32.gmra.mxu0 %v3077
      %v3165 = vpop.f32.mrf.mxu0
      %v3166 = vadd.f32 0.0, %v3165
      %3167 = vmatmul.f32.gmra.mxu0 %v3080
      %v3168 = vpop.f32.mrf.mxu0
      %v3169 = vadd.f32 0.0, %v3168
      %3170 = vmatmul.f32.gmra.mxu0 %v3083
      %v3171 = vpop.f32.mrf.mxu0
      %v3172 = vadd.f32 0.0, %v3171
      %3173 = vdwg.mxu0
      %v3174 = vadd.f32 %v2958, %v3103
      %v3175 = vadd.f32 %v2959, %v3106
      %v3176 = vadd.f32 %v2960, %v3109
      %v3177 = vadd.f32 %v2961, %v3112
      %v3178 = vadd.f32 %v2962, %v3115
      %v3179 = vadd.f32 %v2963, %v3118
      %v3180 = vadd.f32 %v2964, %v3121
      %v3181 = vadd.f32 %v2965, %v3124
      %v3182 = vadd.f32 %v2966, %v3127
      %v3183 = vadd.f32 %v2967, %v3130
      %v3184 = vadd.f32 %v2968, %v3133
      %v3185 = vadd.f32 %v2969, %v3136
      %v3186 = vadd.f32 %v2970, %v3139
      %v3187 = vadd.f32 %v2971, %v3142
      %v3188 = vadd.f32 %v2972, %v3145
      %v3189 = vadd.f32 %v2973, %v3148
      %v3190 = vadd.f32 %v2974, %v3151
      %v3191 = vadd.f32 %v2975, %v3154
      %v3192 = vadd.f32 %v2976, %v3157
      %v3193 = vadd.f32 %v2977, %v3160
      %v3194 = vadd.f32 %v2978, %v3163
      %v3195 = vadd.f32 %v2979, %v3166
      %v3196 = vadd.f32 %v2980, %v3169
      %v3197 = vadd.f32 %v2981, %v3172
      %v3198 = vld [vmem:[%s206 + $0x26] sm:$0xff]
      %v3199 = vld [vmem:[%s206 + $0x2e] sm:$0xff]
      %v3200 = vld [vmem:[%s206 + $0x36] sm:$0xff]
      %v3201 = vld [vmem:[%s206 + $0x3e] sm:$0xff]
      %v3202 = vld [vmem:[%s206 + $0x46] sm:$0xff]
      %v3203 = vld [vmem:[%s206 + $0x4e] sm:$0xff]
      %v3204 = vld [vmem:[%s206 + $0x56] sm:$0xff]
      %v3205 = vld [vmem:[%s206 + $0x5e] sm:$0xff]
      %v3206 = vld [vmem:[%s206 + $0x66] sm:$0xff]
      %v3207 = vld [vmem:[%s206 + $0x6e] sm:$0xff]
      %v3208 = vld [vmem:[%s206 + $0x76] sm:$0xff]
      %v3209 = vld [vmem:[%s206 + $0x7e] sm:$0xff]
      %v3210 = vld [vmem:[%s206 + $0x86] sm:$0xff]
      %v3211 = vld [vmem:[%s206 + $0x8e] sm:$0xff]
      %v3212 = vld [vmem:[%s206 + $0x96] sm:$0xff]
      %v3213 = vld [vmem:[%s206 + $0x9e] sm:$0xff]
      %v3214 = vld [vmem:[%s206 + $0xa6] sm:$0xff]
      %v3215 = vld [vmem:[%s206 + $0xae] sm:$0xff]
      %v3216 = vld [vmem:[%s206 + $0xb6] sm:$0xff]
      %v3217 = vld [vmem:[%s206 + $0xbe] sm:$0xff]
      %v3218 = vld [vmem:[%s206 + $0xc6] sm:$0xff]
      %v3219 = vld [vmem:[%s206 + $0xce] sm:$0xff]
      %v3220 = vld [vmem:[%s206 + $0xd6] sm:$0xff]
      %v3221 = vld [vmem:[%s206 + $0xde] sm:$0xff]
      %s3222 = scalar_lea.vmem %s210, 672
      %v3223 = vld [vmem:[%s3222] sm:$0xff]
      %v3224 = vld [vmem:[%s3222 + $0x8] sm:$0xff]
      %v3225 = vld [vmem:[%s3222 + $0x10] sm:$0xff]
      %v3226 = vld [vmem:[%s3222 + $0x18] sm:$0xff]
      %v3227 = vld [vmem:[%s3222 + $0x20] sm:$0xff]
      %v3228 = vld [vmem:[%s3222 + $0x28] sm:$0xff]
      %v3230 = vsel %vm283, %v3198, 0
      %v3233 = vsel %vm283, %v3199, 0
      %v3236 = vsel %vm283, %v3200, 0
      %v3239 = vsel %vm283, %v3201, 0
      %v3242 = vsel %vm283, %v3202, 0
      %v3245 = vsel %vm283, %v3203, 0
      %v3248 = vsel %vm283, %v3204, 0
      %v3251 = vsel %vm283, %v3205, 0
      %v3254 = vsel %vm283, %v3206, 0
      %v3257 = vsel %vm283, %v3207, 0
      %v3260 = vsel %vm283, %v3208, 0
      %v3263 = vsel %vm283, %v3209, 0
      %v3266 = vsel %vm283, %v3210, 0
      %v3269 = vsel %vm283, %v3211, 0
      %v3272 = vsel %vm283, %v3212, 0
      %v3275 = vsel %vm283, %v3213, 0
      %v3278 = vsel %vm283, %v3214, 0
      %v3281 = vsel %vm283, %v3215, 0
      %v3284 = vsel %vm283, %v3216, 0
      %v3287 = vsel %vm283, %v3217, 0
      %v3290 = vsel %vm283, %v3218, 0
      %v3293 = vsel %vm283, %v3219, 0
      %v3296 = vsel %vm283, %v3220, 0
      %v3299 = vsel %vm283, %v3221, 0
      %3301 = vmatpush.msra.mxu0 0.0
      %3302 = vmatpush.msra.mxu0 0.0
      %3303 = vmatpush.msra.mxu0 0.0
      %3304 = vmatpush.msra.mxu0 0.0
      %3305 = vmatpush.msra.mxu0 0.0
      %3306 = vmatpush.msra.mxu0 0.0
      %3307 = vmatpush.msra.mxu0 0.0
      %3308 = vmatpush.msra.mxu0 0.0
      %3309 = vmatpush.msra.mxu0 0.0
      %3310 = vmatpush.msra.mxu0 0.0
      %3311 = vmatpush.msra.mxu0 %v3228
      %3312 = vmatpush.msra.mxu0 %v3227
      %3313 = vmatpush.msra.mxu0 %v3226
      %3314 = vmatpush.msra.mxu0 %v3225
      %3315 = vmatpush.msra.mxu0 %v3224
      %3316 = vmatpush.msra.mxu0 %v3223
      %3317 = vmatmul.f32.gmra.mxu0 %v3230
      %v3318 = vpop.f32.mrf.mxu0
      %v3319 = vadd.f32 0.0, %v3318
      %3320 = vmatmul.f32.gmra.mxu0 %v3233
      %v3321 = vpop.f32.mrf.mxu0
      %v3322 = vadd.f32 0.0, %v3321
      %3323 = vmatmul.f32.gmra.mxu0 %v3236
      %v3324 = vpop.f32.mrf.mxu0
      %v3325 = vadd.f32 0.0, %v3324
      %3326 = vmatmul.f32.gmra.mxu0 %v3239
      %v3327 = vpop.f32.mrf.mxu0
      %v3328 = vadd.f32 0.0, %v3327
      %3329 = vmatmul.f32.gmra.mxu0 %v3242
      %v3330 = vpop.f32.mrf.mxu0
      %v3331 = vadd.f32 0.0, %v3330
      %3332 = vmatmul.f32.gmra.mxu0 %v3245
      %v3333 = vpop.f32.mrf.mxu0
      %v3334 = vadd.f32 0.0, %v3333
      %3335 = vmatmul.f32.gmra.mxu0 %v3248
      %v3336 = vpop.f32.mrf.mxu0
      %v3337 = vadd.f32 0.0, %v3336
      %3338 = vmatmul.f32.gmra.mxu0 %v3251
      %v3339 = vpop.f32.mrf.mxu0
      %v3340 = vadd.f32 0.0, %v3339
      %3341 = vmatmul.f32.gmra.mxu0 %v3254
      %v3342 = vpop.f32.mrf.mxu0
      %v3343 = vadd.f32 0.0, %v3342
      %3344 = vmatmul.f32.gmra.mxu0 %v3257
      %v3345 = vpop.f32.mrf.mxu0
      %v3346 = vadd.f32 0.0, %v3345
      %3347 = vmatmul.f32.gmra.mxu0 %v3260
      %v3348 = vpop.f32.mrf.mxu0
      %v3349 = vadd.f32 0.0, %v3348
      %3350 = vmatmul.f32.gmra.mxu0 %v3263
      %v3351 = vpop.f32.mrf.mxu0
      %v3352 = vadd.f32 0.0, %v3351
      %3353 = vmatmul.f32.gmra.mxu0 %v3266
      %v3354 = vpop.f32.mrf.mxu0
      %v3355 = vadd.f32 0.0, %v3354
      %3356 = vmatmul.f32.gmra.mxu0 %v3269
      %v3357 = vpop.f32.mrf.mxu0
      %v3358 = vadd.f32 0.0, %v3357
      %3359 = vmatmul.f32.gmra.mxu0 %v3272
      %v3360 = vpop.f32.mrf.mxu0
      %v3361 = vadd.f32 0.0, %v3360
      %3362 = vmatmul.f32.gmra.mxu0 %v3275
      %v3363 = vpop.f32.mrf.mxu0
      %v3364 = vadd.f32 0.0, %v3363
      %3365 = vmatmul.f32.gmra.mxu0 %v3278
      %v3366 = vpop.f32.mrf.mxu0
      %v3367 = vadd.f32 0.0, %v3366
      %3368 = vmatmul.f32.gmra.mxu0 %v3281
      %v3369 = vpop.f32.mrf.mxu0
      %v3370 = vadd.f32 0.0, %v3369
      %3371 = vmatmul.f32.gmra.mxu0 %v3284
      %v3372 = vpop.f32.mrf.mxu0
      %v3373 = vadd.f32 0.0, %v3372
      %3374 = vmatmul.f32.gmra.mxu0 %v3287
      %v3375 = vpop.f32.mrf.mxu0
      %v3376 = vadd.f32 0.0, %v3375
      %3377 = vmatmul.f32.gmra.mxu0 %v3290
      %v3378 = vpop.f32.mrf.mxu0
      %v3379 = vadd.f32 0.0, %v3378
      %3380 = vmatmul.f32.gmra.mxu0 %v3293
      %v3381 = vpop.f32.mrf.mxu0
      %v3382 = vadd.f32 0.0, %v3381
      %3383 = vmatmul.f32.gmra.mxu0 %v3296
      %v3384 = vpop.f32.mrf.mxu0
      %v3385 = vadd.f32 0.0, %v3384
      %3386 = vmatmul.f32.gmra.mxu0 %v3299
      %v3387 = vpop.f32.mrf.mxu0
      %v3388 = vadd.f32 0.0, %v3387
      %3389 = vdwg.mxu0
      %v3390 = vadd.f32 %v3174, %v3319
      %v3391 = vadd.f32 %v3175, %v3322
      %v3392 = vadd.f32 %v3176, %v3325
      %v3393 = vadd.f32 %v3177, %v3328
      %v3394 = vadd.f32 %v3178, %v3331
      %v3395 = vadd.f32 %v3179, %v3334
      %v3396 = vadd.f32 %v3180, %v3337
      %v3397 = vadd.f32 %v3181, %v3340
      %v3398 = vadd.f32 %v3182, %v3343
      %v3399 = vadd.f32 %v3183, %v3346
      %v3400 = vadd.f32 %v3184, %v3349
      %v3401 = vadd.f32 %v3185, %v3352
      %v3402 = vadd.f32 %v3186, %v3355
      %v3403 = vadd.f32 %v3187, %v3358
      %v3404 = vadd.f32 %v3188, %v3361
      %v3405 = vadd.f32 %v3189, %v3364
      %v3406 = vadd.f32 %v3190, %v3367
      %v3407 = vadd.f32 %v3191, %v3370
      %v3408 = vadd.f32 %v3192, %v3373
      %v3409 = vadd.f32 %v3193, %v3376
      %v3410 = vadd.f32 %v3194, %v3379
      %v3411 = vadd.f32 %v3195, %v3382
      %v3412 = vadd.f32 %v3196, %v3385
      %v3413 = vadd.f32 %v3197, %v3388
      %v3414 = vld [vmem:[%s206 + $0x33] sm:$0xff]
      %v3415 = vld [vmem:[%s206 + $0x3b] sm:$0xff]
      %v3416 = vld [vmem:[%s206 + $0x43] sm:$0xff]
      %v3417 = vld [vmem:[%s206 + $0x4b] sm:$0xff]
      %v3418 = vld [vmem:[%s206 + $0x53] sm:$0xff]
      %v3419 = vld [vmem:[%s206 + $0x5b] sm:$0xff]
      %v3420 = vld [vmem:[%s206 + $0x63] sm:$0xff]
      %v3421 = vld [vmem:[%s206 + $0x6b] sm:$0xff]
      %v3422 = vld [vmem:[%s206 + $0x73] sm:$0xff]
      %v3423 = vld [vmem:[%s206 + $0x7b] sm:$0xff]
      %v3424 = vld [vmem:[%s206 + $0x83] sm:$0xff]
      %v3425 = vld [vmem:[%s206 + $0x8b] sm:$0xff]
      %v3426 = vld [vmem:[%s206 + $0x93] sm:$0xff]
      %v3427 = vld [vmem:[%s206 + $0x9b] sm:$0xff]
      %v3428 = vld [vmem:[%s206 + $0xa3] sm:$0xff]
      %v3429 = vld [vmem:[%s206 + $0xab] sm:$0xff]
      %v3430 = vld [vmem:[%s206 + $0xb3] sm:$0xff]
      %v3431 = vld [vmem:[%s206 + $0xbb] sm:$0xff]
      %v3432 = vld [vmem:[%s206 + $0xc3] sm:$0xff]
      %v3433 = vld [vmem:[%s206 + $0xcb] sm:$0xff]
      %v3434 = vld [vmem:[%s206 + $0xd3] sm:$0xff]
      %v3435 = vld [vmem:[%s206 + $0xdb] sm:$0xff]
      %v3436 = vld [vmem:[%s206 + $0xe3] sm:$0xff]
      %v3437 = vld [vmem:[%s206 + $0xeb] sm:$0xff]
      %s3438 = scalar_lea.vmem %s210, 720
      %v3439 = vld [vmem:[%s3438] sm:$0xff]
      %v3440 = vld [vmem:[%s3438 + $0x8] sm:$0xff]
      %v3441 = vld [vmem:[%s3438 + $0x10] sm:$0xff]
      %v3442 = vld [vmem:[%s3438 + $0x18] sm:$0xff]
      %v3443 = vld [vmem:[%s3438 + $0x20] sm:$0xff]
      %v3444 = vld [vmem:[%s3438 + $0x28] sm:$0xff]
      %v3446 = vsel %vm283, %v3414, 0
      %v3449 = vsel %vm283, %v3415, 0
      %v3452 = vsel %vm283, %v3416, 0
      %v3455 = vsel %vm283, %v3417, 0
      %v3458 = vsel %vm283, %v3418, 0
      %v3461 = vsel %vm283, %v3419, 0
      %v3464 = vsel %vm283, %v3420, 0
      %v3467 = vsel %vm283, %v3421, 0
      %v3470 = vsel %vm283, %v3422, 0
      %v3473 = vsel %vm283, %v3423, 0
      %v3476 = vsel %vm283, %v3424, 0
      %v3479 = vsel %vm283, %v3425, 0
      %v3482 = vsel %vm283, %v3426, 0
      %v3485 = vsel %vm283, %v3427, 0
      %v3488 = vsel %vm283, %v3428, 0
      %v3491 = vsel %vm283, %v3429, 0
      %v3494 = vsel %vm283, %v3430, 0
      %v3497 = vsel %vm283, %v3431, 0
      %v3500 = vsel %vm283, %v3432, 0
      %v3503 = vsel %vm283, %v3433, 0
      %v3506 = vsel %vm283, %v3434, 0
      %v3509 = vsel %vm283, %v3435, 0
      %v3512 = vsel %vm283, %v3436, 0
      %v3515 = vsel %vm283, %v3437, 0
      %3517 = vmatpush.msra.mxu0 0.0
      %3518 = vmatpush.msra.mxu0 0.0
      %3519 = vmatpush.msra.mxu0 0.0
      %3520 = vmatpush.msra.mxu0 0.0
      %3521 = vmatpush.msra.mxu0 0.0
      %3522 = vmatpush.msra.mxu0 0.0
      %3523 = vmatpush.msra.mxu0 0.0
      %3524 = vmatpush.msra.mxu0 0.0
      %3525 = vmatpush.msra.mxu0 0.0
      %3526 = vmatpush.msra.mxu0 0.0
      %3527 = vmatpush.msra.mxu0 %v3444
      %3528 = vmatpush.msra.mxu0 %v3443
      %3529 = vmatpush.msra.mxu0 %v3442
      %3530 = vmatpush.msra.mxu0 %v3441
      %3531 = vmatpush.msra.mxu0 %v3440
      %3532 = vmatpush.msra.mxu0 %v3439
      %3533 = vmatmul.f32.gmra.mxu0 %v3446
      %v3534 = vpop.f32.mrf.mxu0
      %v3535 = vadd.f32 0.0, %v3534
      %3536 = vmatmul.f32.gmra.mxu0 %v3449
      %v3537 = vpop.f32.mrf.mxu0
      %v3538 = vadd.f32 0.0, %v3537
      %3539 = vmatmul.f32.gmra.mxu0 %v3452
      %v3540 = vpop.f32.mrf.mxu0
      %v3541 = vadd.f32 0.0, %v3540
      %3542 = vmatmul.f32.gmra.mxu0 %v3455
      %v3543 = vpop.f32.mrf.mxu0
      %v3544 = vadd.f32 0.0, %v3543
      %3545 = vmatmul.f32.gmra.mxu0 %v3458
      %v3546 = vpop.f32.mrf.mxu0
      %v3547 = vadd.f32 0.0, %v3546
      %3548 = vmatmul.f32.gmra.mxu0 %v3461
      %v3549 = vpop.f32.mrf.mxu0
      %v3550 = vadd.f32 0.0, %v3549
      %3551 = vmatmul.f32.gmra.mxu0 %v3464
      %v3552 = vpop.f32.mrf.mxu0
      %v3553 = vadd.f32 0.0, %v3552
      %3554 = vmatmul.f32.gmra.mxu0 %v3467
      %v3555 = vpop.f32.mrf.mxu0
      %v3556 = vadd.f32 0.0, %v3555
      %3557 = vmatmul.f32.gmra.mxu0 %v3470
      %v3558 = vpop.f32.mrf.mxu0
      %v3559 = vadd.f32 0.0, %v3558
      %3560 = vmatmul.f32.gmra.mxu0 %v3473
      %v3561 = vpop.f32.mrf.mxu0
      %v3562 = vadd.f32 0.0, %v3561
      %3563 = vmatmul.f32.gmra.mxu0 %v3476
      %v3564 = vpop.f32.mrf.mxu0
      %v3565 = vadd.f32 0.0, %v3564
      %3566 = vmatmul.f32.gmra.mxu0 %v3479
      %v3567 = vpop.f32.mrf.mxu0
      %v3568 = vadd.f32 0.0, %v3567
      %3569 = vmatmul.f32.gmra.mxu0 %v3482
      %v3570 = vpop.f32.mrf.mxu0
      %v3571 = vadd.f32 0.0, %v3570
      %3572 = vmatmul.f32.gmra.mxu0 %v3485
      %v3573 = vpop.f32.mrf.mxu0
      %v3574 = vadd.f32 0.0, %v3573
      %3575 = vmatmul.f32.gmra.mxu0 %v3488
      %v3576 = vpop.f32.mrf.mxu0
      %v3577 = vadd.f32 0.0, %v3576
      %3578 = vmatmul.f32.gmra.mxu0 %v3491
      %v3579 = vpop.f32.mrf.mxu0
      %v3580 = vadd.f32 0.0, %v3579
      %3581 = vmatmul.f32.gmra.mxu0 %v3494
      %v3582 = vpop.f32.mrf.mxu0
      %v3583 = vadd.f32 0.0, %v3582
      %3584 = vmatmul.f32.gmra.mxu0 %v3497
      %v3585 = vpop.f32.mrf.mxu0
      %v3586 = vadd.f32 0.0, %v3585
      %3587 = vmatmul.f32.gmra.mxu0 %v3500
      %v3588 = vpop.f32.mrf.mxu0
      %v3589 = vadd.f32 0.0, %v3588
      %3590 = vmatmul.f32.gmra.mxu0 %v3503
      %v3591 = vpop.f32.mrf.mxu0
      %v3592 = vadd.f32 0.0, %v3591
      %3593 = vmatmul.f32.gmra.mxu0 %v3506
      %v3594 = vpop.f32.mrf.mxu0
      %v3595 = vadd.f32 0.0, %v3594
      %3596 = vmatmul.f32.gmra.mxu0 %v3509
      %v3597 = vpop.f32.mrf.mxu0
      %v3598 = vadd.f32 0.0, %v3597
      %3599 = vmatmul.f32.gmra.mxu0 %v3512
      %v3600 = vpop.f32.mrf.mxu0
      %v3601 = vadd.f32 0.0, %v3600
      %3602 = vmatmul.f32.gmra.mxu0 %v3515
      %v3603 = vpop.f32.mrf.mxu0
      %v3604 = vadd.f32 0.0, %v3603
      %3605 = vdwg.mxu0
      %v3606 = vadd.f32 %v3390, %v3535
      %v3607 = vadd.f32 %v3391, %v3538
      %v3608 = vadd.f32 %v3392, %v3541
      %v3609 = vadd.f32 %v3393, %v3544
      %v3610 = vadd.f32 %v3394, %v3547
      %v3611 = vadd.f32 %v3395, %v3550
      %v3612 = vadd.f32 %v3396, %v3553
      %v3613 = vadd.f32 %v3397, %v3556
      %v3614 = vadd.f32 %v3398, %v3559
      %v3615 = vadd.f32 %v3399, %v3562
      %v3616 = vadd.f32 %v3400, %v3565
      %v3617 = vadd.f32 %v3401, %v3568
      %v3618 = vadd.f32 %v3402, %v3571
      %v3619 = vadd.f32 %v3403, %v3574
      %v3620 = vadd.f32 %v3404, %v3577
      %v3621 = vadd.f32 %v3405, %v3580
      %v3622 = vadd.f32 %v3406, %v3583
      %v3623 = vadd.f32 %v3407, %v3586
      %v3624 = vadd.f32 %v3408, %v3589
      %v3625 = vadd.f32 %v3409, %v3592
      %v3626 = vadd.f32 %v3410, %v3595
      %v3627 = vadd.f32 %v3411, %v3598
      %v3628 = vadd.f32 %v3412, %v3601
      %v3629 = vadd.f32 %v3413, %v3604
      %v3630 = vld [vmem:[%s206 + $0x34] sm:$0xff]
      %v3631 = vld [vmem:[%s206 + $0x3c] sm:$0xff]
      %v3632 = vld [vmem:[%s206 + $0x44] sm:$0xff]
      %v3633 = vld [vmem:[%s206 + $0x4c] sm:$0xff]
      %v3634 = vld [vmem:[%s206 + $0x54] sm:$0xff]
      %v3635 = vld [vmem:[%s206 + $0x5c] sm:$0xff]
      %v3636 = vld [vmem:[%s206 + $0x64] sm:$0xff]
      %v3637 = vld [vmem:[%s206 + $0x6c] sm:$0xff]
      %v3638 = vld [vmem:[%s206 + $0x74] sm:$0xff]
      %v3639 = vld [vmem:[%s206 + $0x7c] sm:$0xff]
      %v3640 = vld [vmem:[%s206 + $0x84] sm:$0xff]
      %v3641 = vld [vmem:[%s206 + $0x8c] sm:$0xff]
      %v3642 = vld [vmem:[%s206 + $0x94] sm:$0xff]
      %v3643 = vld [vmem:[%s206 + $0x9c] sm:$0xff]
      %v3644 = vld [vmem:[%s206 + $0xa4] sm:$0xff]
      %v3645 = vld [vmem:[%s206 + $0xac] sm:$0xff]
      %v3646 = vld [vmem:[%s206 + $0xb4] sm:$0xff]
      %v3647 = vld [vmem:[%s206 + $0xbc] sm:$0xff]
      %v3648 = vld [vmem:[%s206 + $0xc4] sm:$0xff]
      %v3649 = vld [vmem:[%s206 + $0xcc] sm:$0xff]
      %v3650 = vld [vmem:[%s206 + $0xd4] sm:$0xff]
      %v3651 = vld [vmem:[%s206 + $0xdc] sm:$0xff]
      %v3652 = vld [vmem:[%s206 + $0xe4] sm:$0xff]
      %v3653 = vld [vmem:[%s206 + $0xec] sm:$0xff]
      %s3654 = scalar_lea.vmem %s210, 768
      %v3655 = vld [vmem:[%s3654] sm:$0xff]
      %v3656 = vld [vmem:[%s3654 + $0x8] sm:$0xff]
      %v3657 = vld [vmem:[%s3654 + $0x10] sm:$0xff]
      %v3658 = vld [vmem:[%s3654 + $0x18] sm:$0xff]
      %v3659 = vld [vmem:[%s3654 + $0x20] sm:$0xff]
      %v3660 = vld [vmem:[%s3654 + $0x28] sm:$0xff]
      %v3662 = vsel %vm283, %v3630, 0
      %v3665 = vsel %vm283, %v3631, 0
      %v3668 = vsel %vm283, %v3632, 0
      %v3671 = vsel %vm283, %v3633, 0
      %v3674 = vsel %vm283, %v3634, 0
      %v3677 = vsel %vm283, %v3635, 0
      %v3680 = vsel %vm283, %v3636, 0
      %v3683 = vsel %vm283, %v3637, 0
      %v3686 = vsel %vm283, %v3638, 0
      %v3689 = vsel %vm283, %v3639, 0
      %v3692 = vsel %vm283, %v3640, 0
      %v3695 = vsel %vm283, %v3641, 0
      %v3698 = vsel %vm283, %v3642, 0
      %v3701 = vsel %vm283, %v3643, 0
      %v3704 = vsel %vm283, %v3644, 0
      %v3707 = vsel %vm283, %v3645, 0
      %v3710 = vsel %vm283, %v3646, 0
      %v3713 = vsel %vm283, %v3647, 0
      %v3716 = vsel %vm283, %v3648, 0
      %v3719 = vsel %vm283, %v3649, 0
      %v3722 = vsel %vm283, %v3650, 0
      %v3725 = vsel %vm283, %v3651, 0
      %v3728 = vsel %vm283, %v3652, 0
      %v3731 = vsel %vm283, %v3653, 0
      %3733 = vmatpush.msra.mxu0 0.0
      %3734 = vmatpush.msra.mxu0 0.0
      %3735 = vmatpush.msra.mxu0 0.0
      %3736 = vmatpush.msra.mxu0 0.0
      %3737 = vmatpush.msra.mxu0 0.0
      %3738 = vmatpush.msra.mxu0 0.0
      %3739 = vmatpush.msra.mxu0 0.0
      %3740 = vmatpush.msra.mxu0 0.0
      %3741 = vmatpush.msra.mxu0 0.0
      %3742 = vmatpush.msra.mxu0 0.0
      %3743 = vmatpush.msra.mxu0 %v3660
      %3744 = vmatpush.msra.mxu0 %v3659
      %3745 = vmatpush.msra.mxu0 %v3658
      %3746 = vmatpush.msra.mxu0 %v3657
      %3747 = vmatpush.msra.mxu0 %v3656
      %3748 = vmatpush.msra.mxu0 %v3655
      %3749 = vmatmul.f32.gmra.mxu0 %v3662
      %v3750 = vpop.f32.mrf.mxu0
      %v3751 = vadd.f32 0.0, %v3750
      %3752 = vmatmul.f32.gmra.mxu0 %v3665
      %v3753 = vpop.f32.mrf.mxu0
      %v3754 = vadd.f32 0.0, %v3753
      %3755 = vmatmul.f32.gmra.mxu0 %v3668
      %v3756 = vpop.f32.mrf.mxu0
      %v3757 = vadd.f32 0.0, %v3756
      %3758 = vmatmul.f32.gmra.mxu0 %v3671
      %v3759 = vpop.f32.mrf.mxu0
      %v3760 = vadd.f32 0.0, %v3759
      %3761 = vmatmul.f32.gmra.mxu0 %v3674
      %v3762 = vpop.f32.mrf.mxu0
      %v3763 = vadd.f32 0.0, %v3762
      %3764 = vmatmul.f32.gmra.mxu0 %v3677
      %v3765 = vpop.f32.mrf.mxu0
      %v3766 = vadd.f32 0.0, %v3765
      %3767 = vmatmul.f32.gmra.mxu0 %v3680
      %v3768 = vpop.f32.mrf.mxu0
      %v3769 = vadd.f32 0.0, %v3768
      %3770 = vmatmul.f32.gmra.mxu0 %v3683
      %v3771 = vpop.f32.mrf.mxu0
      %v3772 = vadd.f32 0.0, %v3771
      %3773 = vmatmul.f32.gmra.mxu0 %v3686
      %v3774 = vpop.f32.mrf.mxu0
      %v3775 = vadd.f32 0.0, %v3774
      %3776 = vmatmul.f32.gmra.mxu0 %v3689
      %v3777 = vpop.f32.mrf.mxu0
      %v3778 = vadd.f32 0.0, %v3777
      %3779 = vmatmul.f32.gmra.mxu0 %v3692
      %v3780 = vpop.f32.mrf.mxu0
      %v3781 = vadd.f32 0.0, %v3780
      %3782 = vmatmul.f32.gmra.mxu0 %v3695
      %v3783 = vpop.f32.mrf.mxu0
      %v3784 = vadd.f32 0.0, %v3783
      %3785 = vmatmul.f32.gmra.mxu0 %v3698
      %v3786 = vpop.f32.mrf.mxu0
      %v3787 = vadd.f32 0.0, %v3786
      %3788 = vmatmul.f32.gmra.mxu0 %v3701
      %v3789 = vpop.f32.mrf.mxu0
      %v3790 = vadd.f32 0.0, %v3789
      %3791 = vmatmul.f32.gmra.mxu0 %v3704
      %v3792 = vpop.f32.mrf.mxu0
      %v3793 = vadd.f32 0.0, %v3792
      %3794 = vmatmul.f32.gmra.mxu0 %v3707
      %v3795 = vpop.f32.mrf.mxu0
      %v3796 = vadd.f32 0.0, %v3795
      %3797 = vmatmul.f32.gmra.mxu0 %v3710
      %v3798 = vpop.f32.mrf.mxu0
      %v3799 = vadd.f32 0.0, %v3798
      %3800 = vmatmul.f32.gmra.mxu0 %v3713
      %v3801 = vpop.f32.mrf.mxu0
      %v3802 = vadd.f32 0.0, %v3801
      %3803 = vmatmul.f32.gmra.mxu0 %v3716
      %v3804 = vpop.f32.mrf.mxu0
      %v3805 = vadd.f32 0.0, %v3804
      %3806 = vmatmul.f32.gmra.mxu0 %v3719
      %v3807 = vpop.f32.mrf.mxu0
      %v3808 = vadd.f32 0.0, %v3807
      %3809 = vmatmul.f32.gmra.mxu0 %v3722
      %v3810 = vpop.f32.mrf.mxu0
      %v3811 = vadd.f32 0.0, %v3810
      %3812 = vmatmul.f32.gmra.mxu0 %v3725
      %v3813 = vpop.f32.mrf.mxu0
      %v3814 = vadd.f32 0.0, %v3813
      %3815 = vmatmul.f32.gmra.mxu0 %v3728
      %v3816 = vpop.f32.mrf.mxu0
      %v3817 = vadd.f32 0.0, %v3816
      %3818 = vmatmul.f32.gmra.mxu0 %v3731
      %v3819 = vpop.f32.mrf.mxu0
      %v3820 = vadd.f32 0.0, %v3819
      %3821 = vdwg.mxu0
      %v3822 = vadd.f32 %v3606, %v3751
      %v3823 = vadd.f32 %v3607, %v3754
      %v3824 = vadd.f32 %v3608, %v3757
      %v3825 = vadd.f32 %v3609, %v3760
      %v3826 = vadd.f32 %v3610, %v3763
      %v3827 = vadd.f32 %v3611, %v3766
      %v3828 = vadd.f32 %v3612, %v3769
      %v3829 = vadd.f32 %v3613, %v3772
      %v3830 = vadd.f32 %v3614, %v3775
      %v3831 = vadd.f32 %v3615, %v3778
      %v3832 = vadd.f32 %v3616, %v3781
      %v3833 = vadd.f32 %v3617, %v3784
      %v3834 = vadd.f32 %v3618, %v3787
      %v3835 = vadd.f32 %v3619, %v3790
      %v3836 = vadd.f32 %v3620, %v3793
      %v3837 = vadd.f32 %v3621, %v3796
      %v3838 = vadd.f32 %v3622, %v3799
      %v3839 = vadd.f32 %v3623, %v3802
      %v3840 = vadd.f32 %v3624, %v3805
      %v3841 = vadd.f32 %v3625, %v3808
      %v3842 = vadd.f32 %v3626, %v3811
      %v3843 = vadd.f32 %v3627, %v3814
      %v3844 = vadd.f32 %v3628, %v3817
      %v3845 = vadd.f32 %v3629, %v3820
      %v3846 = vld [vmem:[%s206 + $0x35] sm:$0xff]
      %v3847 = vld [vmem:[%s206 + $0x3d] sm:$0xff]
      %v3848 = vld [vmem:[%s206 + $0x45] sm:$0xff]
      %v3849 = vld [vmem:[%s206 + $0x4d] sm:$0xff]
      %v3850 = vld [vmem:[%s206 + $0x55] sm:$0xff]
      %v3851 = vld [vmem:[%s206 + $0x5d] sm:$0xff]
      %v3852 = vld [vmem:[%s206 + $0x65] sm:$0xff]
      %v3853 = vld [vmem:[%s206 + $0x6d] sm:$0xff]
      %v3854 = vld [vmem:[%s206 + $0x75] sm:$0xff]
      %v3855 = vld [vmem:[%s206 + $0x7d] sm:$0xff]
      %v3856 = vld [vmem:[%s206 + $0x85] sm:$0xff]
      %v3857 = vld [vmem:[%s206 + $0x8d] sm:$0xff]
      %v3858 = vld [vmem:[%s206 + $0x95] sm:$0xff]
      %v3859 = vld [vmem:[%s206 + $0x9d] sm:$0xff]
      %v3860 = vld [vmem:[%s206 + $0xa5] sm:$0xff]
      %v3861 = vld [vmem:[%s206 + $0xad] sm:$0xff]
      %v3862 = vld [vmem:[%s206 + $0xb5] sm:$0xff]
      %v3863 = vld [vmem:[%s206 + $0xbd] sm:$0xff]
      %v3864 = vld [vmem:[%s206 + $0xc5] sm:$0xff]
      %v3865 = vld [vmem:[%s206 + $0xcd] sm:$0xff]
      %v3866 = vld [vmem:[%s206 + $0xd5] sm:$0xff]
      %v3867 = vld [vmem:[%s206 + $0xdd] sm:$0xff]
      %v3868 = vld [vmem:[%s206 + $0xe5] sm:$0xff]
      %v3869 = vld [vmem:[%s206 + $0xed] sm:$0xff]
      %s3870 = scalar_lea.vmem %s210, 816
      %v3871 = vld [vmem:[%s3870] sm:$0xff]
      %v3872 = vld [vmem:[%s3870 + $0x8] sm:$0xff]
      %v3873 = vld [vmem:[%s3870 + $0x10] sm:$0xff]
      %v3874 = vld [vmem:[%s3870 + $0x18] sm:$0xff]
      %v3875 = vld [vmem:[%s3870 + $0x20] sm:$0xff]
      %v3876 = vld [vmem:[%s3870 + $0x28] sm:$0xff]
      %v3878 = vsel %vm283, %v3846, 0
      %v3881 = vsel %vm283, %v3847, 0
      %v3884 = vsel %vm283, %v3848, 0
      %v3887 = vsel %vm283, %v3849, 0
      %v3890 = vsel %vm283, %v3850, 0
      %v3893 = vsel %vm283, %v3851, 0
      %v3896 = vsel %vm283, %v3852, 0
      %v3899 = vsel %vm283, %v3853, 0
      %v3902 = vsel %vm283, %v3854, 0
      %v3905 = vsel %vm283, %v3855, 0
      %v3908 = vsel %vm283, %v3856, 0
      %v3911 = vsel %vm283, %v3857, 0
      %v3914 = vsel %vm283, %v3858, 0
      %v3917 = vsel %vm283, %v3859, 0
      %v3920 = vsel %vm283, %v3860, 0
      %v3923 = vsel %vm283, %v3861, 0
      %v3926 = vsel %vm283, %v3862, 0
      %v3929 = vsel %vm283, %v3863, 0
      %v3932 = vsel %vm283, %v3864, 0
      %v3935 = vsel %vm283, %v3865, 0
      %v3938 = vsel %vm283, %v3866, 0
      %v3941 = vsel %vm283, %v3867, 0
      %v3944 = vsel %vm283, %v3868, 0
      %v3947 = vsel %vm283, %v3869, 0
      %3949 = vmatpush.msra.mxu0 0.0
      %3950 = vmatpush.msra.mxu0 0.0
      %3951 = vmatpush.msra.mxu0 0.0
      %3952 = vmatpush.msra.mxu0 0.0
      %3953 = vmatpush.msra.mxu0 0.0
      %3954 = vmatpush.msra.mxu0 0.0
      %3955 = vmatpush.msra.mxu0 0.0
      %3956 = vmatpush.msra.mxu0 0.0
      %3957 = vmatpush.msra.mxu0 0.0
      %3958 = vmatpush.msra.mxu0 0.0
      %3959 = vmatpush.msra.mxu0 %v3876
      %3960 = vmatpush.msra.mxu0 %v3875
      %3961 = vmatpush.msra.mxu0 %v3874
      %3962 = vmatpush.msra.mxu0 %v3873
      %3963 = vmatpush.msra.mxu0 %v3872
      %3964 = vmatpush.msra.mxu0 %v3871
      %3965 = vmatmul.f32.gmra.mxu0 %v3878
      %v3966 = vpop.f32.mrf.mxu0
      %v3967 = vadd.f32 0.0, %v3966
      %3968 = vmatmul.f32.gmra.mxu0 %v3881
      %v3969 = vpop.f32.mrf.mxu0
      %v3970 = vadd.f32 0.0, %v3969
      %3971 = vmatmul.f32.gmra.mxu0 %v3884
      %v3972 = vpop.f32.mrf.mxu0
      %v3973 = vadd.f32 0.0, %v3972
      %3974 = vmatmul.f32.gmra.mxu0 %v3887
      %v3975 = vpop.f32.mrf.mxu0
      %v3976 = vadd.f32 0.0, %v3975
      %3977 = vmatmul.f32.gmra.mxu0 %v3890
      %v3978 = vpop.f32.mrf.mxu0
      %v3979 = vadd.f32 0.0, %v3978
      %3980 = vmatmul.f32.gmra.mxu0 %v3893
      %v3981 = vpop.f32.mrf.mxu0
      %v3982 = vadd.f32 0.0, %v3981
      %3983 = vmatmul.f32.gmra.mxu0 %v3896
      %v3984 = vpop.f32.mrf.mxu0
      %v3985 = vadd.f32 0.0, %v3984
      %3986 = vmatmul.f32.gmra.mxu0 %v3899
      %v3987 = vpop.f32.mrf.mxu0
      %v3988 = vadd.f32 0.0, %v3987
      %3989 = vmatmul.f32.gmra.mxu0 %v3902
      %v3990 = vpop.f32.mrf.mxu0
      %v3991 = vadd.f32 0.0, %v3990
      %3992 = vmatmul.f32.gmra.mxu0 %v3905
      %v3993 = vpop.f32.mrf.mxu0
      %v3994 = vadd.f32 0.0, %v3993
      %3995 = vmatmul.f32.gmra.mxu0 %v3908
      %v3996 = vpop.f32.mrf.mxu0
      %v3997 = vadd.f32 0.0, %v3996
      %3998 = vmatmul.f32.gmra.mxu0 %v3911
      %v3999 = vpop.f32.mrf.mxu0
      %v4000 = vadd.f32 0.0, %v3999
      %4001 = vmatmul.f32.gmra.mxu0 %v3914
      %v4002 = vpop.f32.mrf.mxu0
      %v4003 = vadd.f32 0.0, %v4002
      %4004 = vmatmul.f32.gmra.mxu0 %v3917
      %v4005 = vpop.f32.mrf.mxu0
      %v4006 = vadd.f32 0.0, %v4005
      %4007 = vmatmul.f32.gmra.mxu0 %v3920
      %v4008 = vpop.f32.mrf.mxu0
      %v4009 = vadd.f32 0.0, %v4008
      %4010 = vmatmul.f32.gmra.mxu0 %v3923
      %v4011 = vpop.f32.mrf.mxu0
      %v4012 = vadd.f32 0.0, %v4011
      %4013 = vmatmul.f32.gmra.mxu0 %v3926
      %v4014 = vpop.f32.mrf.mxu0
      %v4015 = vadd.f32 0.0, %v4014
      %4016 = vmatmul.f32.gmra.mxu0 %v3929
      %v4017 = vpop.f32.mrf.mxu0
      %v4018 = vadd.f32 0.0, %v4017
      %4019 = vmatmul.f32.gmra.mxu0 %v3932
      %v4020 = vpop.f32.mrf.mxu0
      %v4021 = vadd.f32 0.0, %v4020
      %4022 = vmatmul.f32.gmra.mxu0 %v3935
      %v4023 = vpop.f32.mrf.mxu0
      %v4024 = vadd.f32 0.0, %v4023
      %4025 = vmatmul.f32.gmra.mxu0 %v3938
      %v4026 = vpop.f32.mrf.mxu0
      %v4027 = vadd.f32 0.0, %v4026
      %4028 = vmatmul.f32.gmra.mxu0 %v3941
      %v4029 = vpop.f32.mrf.mxu0
      %v4030 = vadd.f32 0.0, %v4029
      %4031 = vmatmul.f32.gmra.mxu0 %v3944
      %v4032 = vpop.f32.mrf.mxu0
      %v4033 = vadd.f32 0.0, %v4032
      %4034 = vmatmul.f32.gmra.mxu0 %v3947
      %v4035 = vpop.f32.mrf.mxu0
      %v4036 = vadd.f32 0.0, %v4035
      %4037 = vdwg.mxu0
      %v4038 = vadd.f32 %v3822, %v3967
      %v4039 = vadd.f32 %v3823, %v3970
      %v4040 = vadd.f32 %v3824, %v3973
      %v4041 = vadd.f32 %v3825, %v3976
      %v4042 = vadd.f32 %v3826, %v3979
      %v4043 = vadd.f32 %v3827, %v3982
      %v4044 = vadd.f32 %v3828, %v3985
      %v4045 = vadd.f32 %v3829, %v3988
      %v4046 = vadd.f32 %v3830, %v3991
      %v4047 = vadd.f32 %v3831, %v3994
      %v4048 = vadd.f32 %v3832, %v3997
      %v4049 = vadd.f32 %v3833, %v4000
      %v4050 = vadd.f32 %v3834, %v4003
      %v4051 = vadd.f32 %v3835, %v4006
      %v4052 = vadd.f32 %v3836, %v4009
      %v4053 = vadd.f32 %v3837, %v4012
      %v4054 = vadd.f32 %v3838, %v4015
      %v4055 = vadd.f32 %v3839, %v4018
      %v4056 = vadd.f32 %v3840, %v4021
      %v4057 = vadd.f32 %v3841, %v4024
      %v4058 = vadd.f32 %v3842, %v4027
      %v4059 = vadd.f32 %v3843, %v4030
      %v4060 = vadd.f32 %v3844, %v4033
      %v4061 = vadd.f32 %v3845, %v4036
      %v4062 = vld [vmem:[%s206 + $0x36] sm:$0xff]
      %v4063 = vld [vmem:[%s206 + $0x3e] sm:$0xff]
      %v4064 = vld [vmem:[%s206 + $0x46] sm:$0xff]
      %v4065 = vld [vmem:[%s206 + $0x4e] sm:$0xff]
      %v4066 = vld [vmem:[%s206 + $0x56] sm:$0xff]
      %v4067 = vld [vmem:[%s206 + $0x5e] sm:$0xff]
      %v4068 = vld [vmem:[%s206 + $0x66] sm:$0xff]
      %v4069 = vld [vmem:[%s206 + $0x6e] sm:$0xff]
      %v4070 = vld [vmem:[%s206 + $0x76] sm:$0xff]
      %v4071 = vld [vmem:[%s206 + $0x7e] sm:$0xff]
      %v4072 = vld [vmem:[%s206 + $0x86] sm:$0xff]
      %v4073 = vld [vmem:[%s206 + $0x8e] sm:$0xff]
      %v4074 = vld [vmem:[%s206 + $0x96] sm:$0xff]
      %v4075 = vld [vmem:[%s206 + $0x9e] sm:$0xff]
      %v4076 = vld [vmem:[%s206 + $0xa6] sm:$0xff]
      %v4077 = vld [vmem:[%s206 + $0xae] sm:$0xff]
      %v4078 = vld [vmem:[%s206 + $0xb6] sm:$0xff]
      %v4079 = vld [vmem:[%s206 + $0xbe] sm:$0xff]
      %v4080 = vld [vmem:[%s206 + $0xc6] sm:$0xff]
      %v4081 = vld [vmem:[%s206 + $0xce] sm:$0xff]
      %v4082 = vld [vmem:[%s206 + $0xd6] sm:$0xff]
      %v4083 = vld [vmem:[%s206 + $0xde] sm:$0xff]
      %v4084 = vld [vmem:[%s206 + $0xe6] sm:$0xff]
      %v4085 = vld [vmem:[%s206 + $0xee] sm:$0xff]
      %s4086 = scalar_lea.vmem %s210, 864
      %v4087 = vld [vmem:[%s4086] sm:$0xff]
      %v4088 = vld [vmem:[%s4086 + $0x8] sm:$0xff]
      %v4089 = vld [vmem:[%s4086 + $0x10] sm:$0xff]
      %v4090 = vld [vmem:[%s4086 + $0x18] sm:$0xff]
      %v4091 = vld [vmem:[%s4086 + $0x20] sm:$0xff]
      %v4092 = vld [vmem:[%s4086 + $0x28] sm:$0xff]
      %v4094 = vsel %vm283, %v4062, 0
      %v4097 = vsel %vm283, %v4063, 0
      %v4100 = vsel %vm283, %v4064, 0
      %v4103 = vsel %vm283, %v4065, 0
      %v4106 = vsel %vm283, %v4066, 0
      %v4109 = vsel %vm283, %v4067, 0
      %v4112 = vsel %vm283, %v4068, 0
      %v4115 = vsel %vm283, %v4069, 0
      %v4118 = vsel %vm283, %v4070, 0
      %v4121 = vsel %vm283, %v4071, 0
      %v4124 = vsel %vm283, %v4072, 0
      %v4127 = vsel %vm283, %v4073, 0
      %v4130 = vsel %vm283, %v4074, 0
      %v4133 = vsel %vm283, %v4075, 0
      %v4136 = vsel %vm283, %v4076, 0
      %v4139 = vsel %vm283, %v4077, 0
      %v4142 = vsel %vm283, %v4078, 0
      %v4145 = vsel %vm283, %v4079, 0
      %v4148 = vsel %vm283, %v4080, 0
      %v4151 = vsel %vm283, %v4081, 0
      %v4154 = vsel %vm283, %v4082, 0
      %v4157 = vsel %vm283, %v4083, 0
      %v4160 = vsel %vm283, %v4084, 0
      %v4163 = vsel %vm283, %v4085, 0
      %4165 = vmatpush.msra.mxu0 0.0
      %4166 = vmatpush.msra.mxu0 0.0
      %4167 = vmatpush.msra.mxu0 0.0
      %4168 = vmatpush.msra.mxu0 0.0
      %4169 = vmatpush.msra.mxu0 0.0
      %4170 = vmatpush.msra.mxu0 0.0
      %4171 = vmatpush.msra.mxu0 0.0
      %4172 = vmatpush.msra.mxu0 0.0
      %4173 = vmatpush.msra.mxu0 0.0
      %4174 = vmatpush.msra.mxu0 0.0
      %4175 = vmatpush.msra.mxu0 %v4092
      %4176 = vmatpush.msra.mxu0 %v4091
      %4177 = vmatpush.msra.mxu0 %v4090
      %4178 = vmatpush.msra.mxu0 %v4089
      %4179 = vmatpush.msra.mxu0 %v4088
      %4180 = vmatpush.msra.mxu0 %v4087
      %4181 = vmatmul.f32.gmra.mxu0 %v4094
      %v4182 = vpop.f32.mrf.mxu0
      %v4183 = vadd.f32 0.0, %v4182
      %4184 = vmatmul.f32.gmra.mxu0 %v4097
      %v4185 = vpop.f32.mrf.mxu0
      %v4186 = vadd.f32 0.0, %v4185
      %4187 = vmatmul.f32.gmra.mxu0 %v4100
      %v4188 = vpop.f32.mrf.mxu0
      %v4189 = vadd.f32 0.0, %v4188
      %4190 = vmatmul.f32.gmra.mxu0 %v4103
      %v4191 = vpop.f32.mrf.mxu0
      %v4192 = vadd.f32 0.0, %v4191
      %4193 = vmatmul.f32.gmra.mxu0 %v4106
      %v4194 = vpop.f32.mrf.mxu0
      %v4195 = vadd.f32 0.0, %v4194
      %4196 = vmatmul.f32.gmra.mxu0 %v4109
      %v4197 = vpop.f32.mrf.mxu0
      %v4198 = vadd.f32 0.0, %v4197
      %4199 = vmatmul.f32.gmra.mxu0 %v4112
      %v4200 = vpop.f32.mrf.mxu0
      %v4201 = vadd.f32 0.0, %v4200
      %4202 = vmatmul.f32.gmra.mxu0 %v4115
      %v4203 = vpop.f32.mrf.mxu0
      %v4204 = vadd.f32 0.0, %v4203
      %4205 = vmatmul.f32.gmra.mxu0 %v4118
      %v4206 = vpop.f32.mrf.mxu0
      %v4207 = vadd.f32 0.0, %v4206
      %4208 = vmatmul.f32.gmra.mxu0 %v4121
      %v4209 = vpop.f32.mrf.mxu0
      %v4210 = vadd.f32 0.0, %v4209
      %4211 = vmatmul.f32.gmra.mxu0 %v4124
      %v4212 = vpop.f32.mrf.mxu0
      %v4213 = vadd.f32 0.0, %v4212
      %4214 = vmatmul.f32.gmra.mxu0 %v4127
      %v4215 = vpop.f32.mrf.mxu0
      %v4216 = vadd.f32 0.0, %v4215
      %4217 = vmatmul.f32.gmra.mxu0 %v4130
      %v4218 = vpop.f32.mrf.mxu0
      %v4219 = vadd.f32 0.0, %v4218
      %4220 = vmatmul.f32.gmra.mxu0 %v4133
      %v4221 = vpop.f32.mrf.mxu0
      %v4222 = vadd.f32 0.0, %v4221
      %4223 = vmatmul.f32.gmra.mxu0 %v4136
      %v4224 = vpop.f32.mrf.mxu0
      %v4225 = vadd.f32 0.0, %v4224
      %4226 = vmatmul.f32.gmra.mxu0 %v4139
      %v4227 = vpop.f32.mrf.mxu0
      %v4228 = vadd.f32 0.0, %v4227
      %4229 = vmatmul.f32.gmra.mxu0 %v4142
      %v4230 = vpop.f32.mrf.mxu0
      %v4231 = vadd.f32 0.0, %v4230
      %4232 = vmatmul.f32.gmra.mxu0 %v4145
      %v4233 = vpop.f32.mrf.mxu0
      %v4234 = vadd.f32 0.0, %v4233
      %4235 = vmatmul.f32.gmra.mxu0 %v4148
      %v4236 = vpop.f32.mrf.mxu0
      %v4237 = vadd.f32 0.0, %v4236
      %4238 = vmatmul.f32.gmra.mxu0 %v4151
      %v4239 = vpop.f32.mrf.mxu0
      %v4240 = vadd.f32 0.0, %v4239
      %4241 = vmatmul.f32.gmra.mxu0 %v4154
      %v4242 = vpop.f32.mrf.mxu0
      %v4243 = vadd.f32 0.0, %v4242
      %4244 = vmatmul.f32.gmra.mxu0 %v4157
      %v4245 = vpop.f32.mrf.mxu0
      %v4246 = vadd.f32 0.0, %v4245
      %4247 = vmatmul.f32.gmra.mxu0 %v4160
      %v4248 = vpop.f32.mrf.mxu0
      %v4249 = vadd.f32 0.0, %v4248
      %4250 = vmatmul.f32.gmra.mxu0 %v4163
      %v4251 = vpop.f32.mrf.mxu0
      %v4252 = vadd.f32 0.0, %v4251
      %4253 = vdwg.mxu0
      %v4254 = vadd.f32 %v4038, %v4183
      %v4255 = vadd.f32 %v4039, %v4186
      %v4256 = vadd.f32 %v4040, %v4189
      %v4257 = vadd.f32 %v4041, %v4192
      %v4258 = vadd.f32 %v4042, %v4195
      %v4259 = vadd.f32 %v4043, %v4198
      %v4260 = vadd.f32 %v4044, %v4201
      %v4261 = vadd.f32 %v4045, %v4204
      %v4262 = vadd.f32 %v4046, %v4207
      %v4263 = vadd.f32 %v4047, %v4210
      %v4264 = vadd.f32 %v4048, %v4213
      %v4265 = vadd.f32 %v4049, %v4216
      %v4266 = vadd.f32 %v4050, %v4219
      %v4267 = vadd.f32 %v4051, %v4222
      %v4268 = vadd.f32 %v4052, %v4225
      %v4269 = vadd.f32 %v4053, %v4228
      %v4270 = vadd.f32 %v4054, %v4231
      %v4271 = vadd.f32 %v4055, %v4234
      %v4272 = vadd.f32 %v4056, %v4237
      %v4273 = vadd.f32 %v4057, %v4240
      %v4274 = vadd.f32 %v4058, %v4243
      %v4275 = vadd.f32 %v4059, %v4246
      %v4276 = vadd.f32 %v4060, %v4249
      %v4277 = vadd.f32 %v4061, %v4252
      %v4278 = vld [vmem:[%s206 + $0x37] sm:$0xff]
      %v4279 = vld [vmem:[%s206 + $0x3f] sm:$0xff]
      %v4280 = vld [vmem:[%s206 + $0x47] sm:$0xff]
      %v4281 = vld [vmem:[%s206 + $0x4f] sm:$0xff]
      %v4282 = vld [vmem:[%s206 + $0x57] sm:$0xff]
      %v4283 = vld [vmem:[%s206 + $0x5f] sm:$0xff]
      %v4284 = vld [vmem:[%s206 + $0x67] sm:$0xff]
      %v4285 = vld [vmem:[%s206 + $0x6f] sm:$0xff]
      %v4286 = vld [vmem:[%s206 + $0x77] sm:$0xff]
      %v4287 = vld [vmem:[%s206 + $0x7f] sm:$0xff]
      %v4288 = vld [vmem:[%s206 + $0x87] sm:$0xff]
      %v4289 = vld [vmem:[%s206 + $0x8f] sm:$0xff]
      %v4290 = vld [vmem:[%s206 + $0x97] sm:$0xff]
      %v4291 = vld [vmem:[%s206 + $0x9f] sm:$0xff]
      %v4292 = vld [vmem:[%s206 + $0xa7] sm:$0xff]
      %v4293 = vld [vmem:[%s206 + $0xaf] sm:$0xff]
      %v4294 = vld [vmem:[%s206 + $0xb7] sm:$0xff]
      %v4295 = vld [vmem:[%s206 + $0xbf] sm:$0xff]
      %v4296 = vld [vmem:[%s206 + $0xc7] sm:$0xff]
      %v4297 = vld [vmem:[%s206 + $0xcf] sm:$0xff]
      %v4298 = vld [vmem:[%s206 + $0xd7] sm:$0xff]
      %v4299 = vld [vmem:[%s206 + $0xdf] sm:$0xff]
      %v4300 = vld [vmem:[%s206 + $0xe7] sm:$0xff]
      %v4301 = vld [vmem:[%s206 + $0xef] sm:$0xff]
      %s4302 = scalar_lea.vmem %s210, 912
      %v4303 = vld [vmem:[%s4302] sm:$0xff]
      %v4304 = vld [vmem:[%s4302 + $0x8] sm:$0xff]
      %v4305 = vld [vmem:[%s4302 + $0x10] sm:$0xff]
      %v4306 = vld [vmem:[%s4302 + $0x18] sm:$0xff]
      %v4307 = vld [vmem:[%s4302 + $0x20] sm:$0xff]
      %v4308 = vld [vmem:[%s4302 + $0x28] sm:$0xff]
      %v4310 = vsel %vm283, %v4278, 0
      %v4313 = vsel %vm283, %v4279, 0
      %v4316 = vsel %vm283, %v4280, 0
      %v4319 = vsel %vm283, %v4281, 0
      %v4322 = vsel %vm283, %v4282, 0
      %v4325 = vsel %vm283, %v4283, 0
      %v4328 = vsel %vm283, %v4284, 0
      %v4331 = vsel %vm283, %v4285, 0
      %v4334 = vsel %vm283, %v4286, 0
      %v4337 = vsel %vm283, %v4287, 0
      %v4340 = vsel %vm283, %v4288, 0
      %v4343 = vsel %vm283, %v4289, 0
      %v4346 = vsel %vm283, %v4290, 0
      %v4349 = vsel %vm283, %v4291, 0
      %v4352 = vsel %vm283, %v4292, 0
      %v4355 = vsel %vm283, %v4293, 0
      %v4358 = vsel %vm283, %v4294, 0
      %v4361 = vsel %vm283, %v4295, 0
      %v4364 = vsel %vm283, %v4296, 0
      %v4367 = vsel %vm283, %v4297, 0
      %v4370 = vsel %vm283, %v4298, 0
      %v4373 = vsel %vm283, %v4299, 0
      %v4376 = vsel %vm283, %v4300, 0
      %v4379 = vsel %vm283, %v4301, 0
      %4381 = vmatpush.msra.mxu0 0.0
      %4382 = vmatpush.msra.mxu0 0.0
      %4383 = vmatpush.msra.mxu0 0.0
      %4384 = vmatpush.msra.mxu0 0.0
      %4385 = vmatpush.msra.mxu0 0.0
      %4386 = vmatpush.msra.mxu0 0.0
      %4387 = vmatpush.msra.mxu0 0.0
      %4388 = vmatpush.msra.mxu0 0.0
      %4389 = vmatpush.msra.mxu0 0.0
      %4390 = vmatpush.msra.mxu0 0.0
      %4391 = vmatpush.msra.mxu0 %v4308
      %4392 = vmatpush.msra.mxu0 %v4307
      %4393 = vmatpush.msra.mxu0 %v4306
      %4394 = vmatpush.msra.mxu0 %v4305
      %4395 = vmatpush.msra.mxu0 %v4304
      %4396 = vmatpush.msra.mxu0 %v4303
      %4397 = vmatmul.f32.gmra.mxu0 %v4310
      %v4398 = vpop.f32.mrf.mxu0
      %v4399 = vadd.f32 0.0, %v4398
      %4400 = vmatmul.f32.gmra.mxu0 %v4313
      %v4401 = vpop.f32.mrf.mxu0
      %v4402 = vadd.f32 0.0, %v4401
      %4403 = vmatmul.f32.gmra.mxu0 %v4316
      %v4404 = vpop.f32.mrf.mxu0
      %v4405 = vadd.f32 0.0, %v4404
      %4406 = vmatmul.f32.gmra.mxu0 %v4319
      %v4407 = vpop.f32.mrf.mxu0
      %v4408 = vadd.f32 0.0, %v4407
      %4409 = vmatmul.f32.gmra.mxu0 %v4322
      %v4410 = vpop.f32.mrf.mxu0
      %v4411 = vadd.f32 0.0, %v4410
      %4412 = vmatmul.f32.gmra.mxu0 %v4325
      %v4413 = vpop.f32.mrf.mxu0
      %v4414 = vadd.f32 0.0, %v4413
      %4415 = vmatmul.f32.gmra.mxu0 %v4328
      %v4416 = vpop.f32.mrf.mxu0
      %v4417 = vadd.f32 0.0, %v4416
      %4418 = vmatmul.f32.gmra.mxu0 %v4331
      %v4419 = vpop.f32.mrf.mxu0
      %v4420 = vadd.f32 0.0, %v4419
      %4421 = vmatmul.f32.gmra.mxu0 %v4334
      %v4422 = vpop.f32.mrf.mxu0
      %v4423 = vadd.f32 0.0, %v4422
      %4424 = vmatmul.f32.gmra.mxu0 %v4337
      %v4425 = vpop.f32.mrf.mxu0
      %v4426 = vadd.f32 0.0, %v4425
      %4427 = vmatmul.f32.gmra.mxu0 %v4340
      %v4428 = vpop.f32.mrf.mxu0
      %v4429 = vadd.f32 0.0, %v4428
      %4430 = vmatmul.f32.gmra.mxu0 %v4343
      %v4431 = vpop.f32.mrf.mxu0
      %v4432 = vadd.f32 0.0, %v4431
      %4433 = vmatmul.f32.gmra.mxu0 %v4346
      %v4434 = vpop.f32.mrf.mxu0
      %v4435 = vadd.f32 0.0, %v4434
      %4436 = vmatmul.f32.gmra.mxu0 %v4349
      %v4437 = vpop.f32.mrf.mxu0
      %v4438 = vadd.f32 0.0, %v4437
      %4439 = vmatmul.f32.gmra.mxu0 %v4352
      %v4440 = vpop.f32.mrf.mxu0
      %v4441 = vadd.f32 0.0, %v4440
      %4442 = vmatmul.f32.gmra.mxu0 %v4355
      %v4443 = vpop.f32.mrf.mxu0
      %v4444 = vadd.f32 0.0, %v4443
      %4445 = vmatmul.f32.gmra.mxu0 %v4358
      %v4446 = vpop.f32.mrf.mxu0
      %v4447 = vadd.f32 0.0, %v4446
      %4448 = vmatmul.f32.gmra.mxu0 %v4361
      %v4449 = vpop.f32.mrf.mxu0
      %v4450 = vadd.f32 0.0, %v4449
      %4451 = vmatmul.f32.gmra.mxu0 %v4364
      %v4452 = vpop.f32.mrf.mxu0
      %v4453 = vadd.f32 0.0, %v4452
      %4454 = vmatmul.f32.gmra.mxu0 %v4367
      %v4455 = vpop.f32.mrf.mxu0
      %v4456 = vadd.f32 0.0, %v4455
      %4457 = vmatmul.f32.gmra.mxu0 %v4370
      %v4458 = vpop.f32.mrf.mxu0
      %v4459 = vadd.f32 0.0, %v4458
      %4460 = vmatmul.f32.gmra.mxu0 %v4373
      %v4461 = vpop.f32.mrf.mxu0
      %v4462 = vadd.f32 0.0, %v4461
      %4463 = vmatmul.f32.gmra.mxu0 %v4376
      %v4464 = vpop.f32.mrf.mxu0
      %v4465 = vadd.f32 0.0, %v4464
      %4466 = vmatmul.f32.gmra.mxu0 %v4379
      %v4467 = vpop.f32.mrf.mxu0
      %v4468 = vadd.f32 0.0, %v4467
      %4469 = vdwg.mxu0
      %v4470 = vadd.f32 %v4254, %v4399
      %v4471 = vadd.f32 %v4255, %v4402
      %v4472 = vadd.f32 %v4256, %v4405
      %v4473 = vadd.f32 %v4257, %v4408
      %v4474 = vadd.f32 %v4258, %v4411
      %v4475 = vadd.f32 %v4259, %v4414
      %v4476 = vadd.f32 %v4260, %v4417
      %v4477 = vadd.f32 %v4261, %v4420
      %v4478 = vadd.f32 %v4262, %v4423
      %v4479 = vadd.f32 %v4263, %v4426
      %v4480 = vadd.f32 %v4264, %v4429
      %v4481 = vadd.f32 %v4265, %v4432
      %v4482 = vadd.f32 %v4266, %v4435
      %v4483 = vadd.f32 %v4267, %v4438
      %v4484 = vadd.f32 %v4268, %v4441
      %v4485 = vadd.f32 %v4269, %v4444
      %v4486 = vadd.f32 %v4270, %v4447
      %v4487 = vadd.f32 %v4271, %v4450
      %v4488 = vadd.f32 %v4272, %v4453
      %v4489 = vadd.f32 %v4273, %v4456
      %v4490 = vadd.f32 %v4274, %v4459
      %v4491 = vadd.f32 %v4275, %v4462
      %v4492 = vadd.f32 %v4276, %v4465
      %v4493 = vadd.f32 %v4277, %v4468
      %v4494 = vld [vmem:[%s206 + $0x44] sm:$0xff]
      %v4495 = vld [vmem:[%s206 + $0x4c] sm:$0xff]
      %v4496 = vld [vmem:[%s206 + $0x54] sm:$0xff]
      %v4497 = vld [vmem:[%s206 + $0x5c] sm:$0xff]
      %v4498 = vld [vmem:[%s206 + $0x64] sm:$0xff]
      %v4499 = vld [vmem:[%s206 + $0x6c] sm:$0xff]
      %v4500 = vld [vmem:[%s206 + $0x74] sm:$0xff]
      %v4501 = vld [vmem:[%s206 + $0x7c] sm:$0xff]
      %v4502 = vld [vmem:[%s206 + $0x84] sm:$0xff]
      %v4503 = vld [vmem:[%s206 + $0x8c] sm:$0xff]
      %v4504 = vld [vmem:[%s206 + $0x94] sm:$0xff]
      %v4505 = vld [vmem:[%s206 + $0x9c] sm:$0xff]
      %v4506 = vld [vmem:[%s206 + $0xa4] sm:$0xff]
      %v4507 = vld [vmem:[%s206 + $0xac] sm:$0xff]
      %v4508 = vld [vmem:[%s206 + $0xb4] sm:$0xff]
      %v4509 = vld [vmem:[%s206 + $0xbc] sm:$0xff]
      %v4510 = vld [vmem:[%s206 + $0xc4] sm:$0xff]
      %v4511 = vld [vmem:[%s206 + $0xcc] sm:$0xff]
      %v4512 = vld [vmem:[%s206 + $0xd4] sm:$0xff]
      %v4513 = vld [vmem:[%s206 + $0xdc] sm:$0xff]
      %v4514 = vld [vmem:[%s206 + $0xe4] sm:$0xff]
      %v4515 = vld [vmem:[%s206 + $0xec] sm:$0xff]
      %v4516 = vld [vmem:[%s206 + $0xf4] sm:$0xff]
      %v4517 = vld [vmem:[%s206 + $0xfc] sm:$0xff]
      %s4518 = scalar_lea.vmem %s210, 960
      %v4519 = vld [vmem:[%s4518] sm:$0xff]
      %v4520 = vld [vmem:[%s4518 + $0x8] sm:$0xff]
      %v4521 = vld [vmem:[%s4518 + $0x10] sm:$0xff]
      %v4522 = vld [vmem:[%s4518 + $0x18] sm:$0xff]
      %v4523 = vld [vmem:[%s4518 + $0x20] sm:$0xff]
      %v4524 = vld [vmem:[%s4518 + $0x28] sm:$0xff]
      %v4526 = vsel %vm283, %v4494, 0
      %v4529 = vsel %vm283, %v4495, 0
      %v4532 = vsel %vm283, %v4496, 0
      %v4535 = vsel %vm283, %v4497, 0
      %v4538 = vsel %vm283, %v4498, 0
      %v4541 = vsel %vm283, %v4499, 0
      %v4544 = vsel %vm283, %v4500, 0
      %v4547 = vsel %vm283, %v4501, 0
      %v4550 = vsel %vm283, %v4502, 0
      %v4553 = vsel %vm283, %v4503, 0
      %v4556 = vsel %vm283, %v4504, 0
      %v4559 = vsel %vm283, %v4505, 0
      %v4562 = vsel %vm283, %v4506, 0
      %v4565 = vsel %vm283, %v4507, 0
      %v4568 = vsel %vm283, %v4508, 0
      %v4571 = vsel %vm283, %v4509, 0
      %v4574 = vsel %vm283, %v4510, 0
      %v4577 = vsel %vm283, %v4511, 0
      %v4580 = vsel %vm283, %v4512, 0
      %v4583 = vsel %vm283, %v4513, 0
      %v4586 = vsel %vm283, %v4514, 0
      %v4589 = vsel %vm283, %v4515, 0
      %v4592 = vsel %vm283, %v4516, 0
      %v4595 = vsel %vm283, %v4517, 0
      %4597 = vmatpush.msra.mxu0 0.0
      %4598 = vmatpush.msra.mxu0 0.0
      %4599 = vmatpush.msra.mxu0 0.0
      %4600 = vmatpush.msra.mxu0 0.0
      %4601 = vmatpush.msra.mxu0 0.0
      %4602 = vmatpush.msra.mxu0 0.0
      %4603 = vmatpush.msra.mxu0 0.0
      %4604 = vmatpush.msra.mxu0 0.0
      %4605 = vmatpush.msra.mxu0 0.0
      %4606 = vmatpush.msra.mxu0 0.0
      %4607 = vmatpush.msra.mxu0 %v4524
      %4608 = vmatpush.msra.mxu0 %v4523
      %4609 = vmatpush.msra.mxu0 %v4522
      %4610 = vmatpush.msra.mxu0 %v4521
      %4611 = vmatpush.msra.mxu0 %v4520
      %4612 = vmatpush.msra.mxu0 %v4519
      %4613 = vmatmul.f32.gmra.mxu0 %v4526
      %v4614 = vpop.f32.mrf.mxu0
      %v4615 = vadd.f32 0.0, %v4614
      %4616 = vmatmul.f32.gmra.mxu0 %v4529
      %v4617 = vpop.f32.mrf.mxu0
      %v4618 = vadd.f32 0.0, %v4617
      %4619 = vmatmul.f32.gmra.mxu0 %v4532
      %v4620 = vpop.f32.mrf.mxu0
      %v4621 = vadd.f32 0.0, %v4620
      %4622 = vmatmul.f32.gmra.mxu0 %v4535
      %v4623 = vpop.f32.mrf.mxu0
      %v4624 = vadd.f32 0.0, %v4623
      %4625 = vmatmul.f32.gmra.mxu0 %v4538
      %v4626 = vpop.f32.mrf.mxu0
      %v4627 = vadd.f32 0.0, %v4626
      %4628 = vmatmul.f32.gmra.mxu0 %v4541
      %v4629 = vpop.f32.mrf.mxu0
      %v4630 = vadd.f32 0.0, %v4629
      %4631 = vmatmul.f32.gmra.mxu0 %v4544
      %v4632 = vpop.f32.mrf.mxu0
      %v4633 = vadd.f32 0.0, %v4632
      %4634 = vmatmul.f32.gmra.mxu0 %v4547
      %v4635 = vpop.f32.mrf.mxu0
      %v4636 = vadd.f32 0.0, %v4635
      %4637 = vmatmul.f32.gmra.mxu0 %v4550
      %v4638 = vpop.f32.mrf.mxu0
      %v4639 = vadd.f32 0.0, %v4638
      %4640 = vmatmul.f32.gmra.mxu0 %v4553
      %v4641 = vpop.f32.mrf.mxu0
      %v4642 = vadd.f32 0.0, %v4641
      %4643 = vmatmul.f32.gmra.mxu0 %v4556
      %v4644 = vpop.f32.mrf.mxu0
      %v4645 = vadd.f32 0.0, %v4644
      %4646 = vmatmul.f32.gmra.mxu0 %v4559
      %v4647 = vpop.f32.mrf.mxu0
      %v4648 = vadd.f32 0.0, %v4647
      %4649 = vmatmul.f32.gmra.mxu0 %v4562
      %v4650 = vpop.f32.mrf.mxu0
      %v4651 = vadd.f32 0.0, %v4650
      %4652 = vmatmul.f32.gmra.mxu0 %v4565
      %v4653 = vpop.f32.mrf.mxu0
      %v4654 = vadd.f32 0.0, %v4653
      %4655 = vmatmul.f32.gmra.mxu0 %v4568
      %v4656 = vpop.f32.mrf.mxu0
      %v4657 = vadd.f32 0.0, %v4656
      %4658 = vmatmul.f32.gmra.mxu0 %v4571
      %v4659 = vpop.f32.mrf.mxu0
      %v4660 = vadd.f32 0.0, %v4659
      %4661 = vmatmul.f32.gmra.mxu0 %v4574
      %v4662 = vpop.f32.mrf.mxu0
      %v4663 = vadd.f32 0.0, %v4662
      %4664 = vmatmul.f32.gmra.mxu0 %v4577
      %v4665 = vpop.f32.mrf.mxu0
      %v4666 = vadd.f32 0.0, %v4665
      %4667 = vmatmul.f32.gmra.mxu0 %v4580
      %v4668 = vpop.f32.mrf.mxu0
      %v4669 = vadd.f32 0.0, %v4668
      %4670 = vmatmul.f32.gmra.mxu0 %v4583
      %v4671 = vpop.f32.mrf.mxu0
      %v4672 = vadd.f32 0.0, %v4671
      %4673 = vmatmul.f32.gmra.mxu0 %v4586
      %v4674 = vpop.f32.mrf.mxu0
      %v4675 = vadd.f32 0.0, %v4674
      %4676 = vmatmul.f32.gmra.mxu0 %v4589
      %v4677 = vpop.f32.mrf.mxu0
      %v4678 = vadd.f32 0.0, %v4677
      %4679 = vmatmul.f32.gmra.mxu0 %v4592
      %v4680 = vpop.f32.mrf.mxu0
      %v4681 = vadd.f32 0.0, %v4680
      %4682 = vmatmul.f32.gmra.mxu0 %v4595
      %v4683 = vpop.f32.mrf.mxu0
      %v4684 = vadd.f32 0.0, %v4683
      %4685 = vdwg.mxu0
      %v4686 = vadd.f32 %v4470, %v4615
      %v4687 = vadd.f32 %v4471, %v4618
      %v4688 = vadd.f32 %v4472, %v4621
      %v4689 = vadd.f32 %v4473, %v4624
      %v4690 = vadd.f32 %v4474, %v4627
      %v4691 = vadd.f32 %v4475, %v4630
      %v4692 = vadd.f32 %v4476, %v4633
      %v4693 = vadd.f32 %v4477, %v4636
      %v4694 = vadd.f32 %v4478, %v4639
      %v4695 = vadd.f32 %v4479, %v4642
      %v4696 = vadd.f32 %v4480, %v4645
      %v4697 = vadd.f32 %v4481, %v4648
      %v4698 = vadd.f32 %v4482, %v4651
      %v4699 = vadd.f32 %v4483, %v4654
      %v4700 = vadd.f32 %v4484, %v4657
      %v4701 = vadd.f32 %v4485, %v4660
      %v4702 = vadd.f32 %v4486, %v4663
      %v4703 = vadd.f32 %v4487, %v4666
      %v4704 = vadd.f32 %v4488, %v4669
      %v4705 = vadd.f32 %v4489, %v4672
      %v4706 = vadd.f32 %v4490, %v4675
      %v4707 = vadd.f32 %v4491, %v4678
      %v4708 = vadd.f32 %v4492, %v4681
      %v4709 = vadd.f32 %v4493, %v4684
      %v4710 = vld [vmem:[%s206 + $0x45] sm:$0xff]
      %v4711 = vld [vmem:[%s206 + $0x4d] sm:$0xff]
      %v4712 = vld [vmem:[%s206 + $0x55] sm:$0xff]
      %v4713 = vld [vmem:[%s206 + $0x5d] sm:$0xff]
      %v4714 = vld [vmem:[%s206 + $0x65] sm:$0xff]
      %v4715 = vld [vmem:[%s206 + $0x6d] sm:$0xff]
      %v4716 = vld [vmem:[%s206 + $0x75] sm:$0xff]
      %v4717 = vld [vmem:[%s206 + $0x7d] sm:$0xff]
      %v4718 = vld [vmem:[%s206 + $0x85] sm:$0xff]
      %v4719 = vld [vmem:[%s206 + $0x8d] sm:$0xff]
      %v4720 = vld [vmem:[%s206 + $0x95] sm:$0xff]
      %v4721 = vld [vmem:[%s206 + $0x9d] sm:$0xff]
      %v4722 = vld [vmem:[%s206 + $0xa5] sm:$0xff]
      %v4723 = vld [vmem:[%s206 + $0xad] sm:$0xff]
      %v4724 = vld [vmem:[%s206 + $0xb5] sm:$0xff]
      %v4725 = vld [vmem:[%s206 + $0xbd] sm:$0xff]
      %v4726 = vld [vmem:[%s206 + $0xc5] sm:$0xff]
      %v4727 = vld [vmem:[%s206 + $0xcd] sm:$0xff]
      %v4728 = vld [vmem:[%s206 + $0xd5] sm:$0xff]
      %v4729 = vld [vmem:[%s206 + $0xdd] sm:$0xff]
      %v4730 = vld [vmem:[%s206 + $0xe5] sm:$0xff]
      %v4731 = vld [vmem:[%s206 + $0xed] sm:$0xff]
      %v4732 = vld [vmem:[%s206 + $0xf5] sm:$0xff]
      %v4733 = vld [vmem:[%s206 + $0xfd] sm:$0xff]
      %s4734 = scalar_lea.vmem %s210, 1008
      %v4735 = vld [vmem:[%s4734] sm:$0xff]
      %v4736 = vld [vmem:[%s4734 + $0x8] sm:$0xff]
      %v4737 = vld [vmem:[%s4734 + $0x10] sm:$0xff]
      %v4738 = vld [vmem:[%s4734 + $0x18] sm:$0xff]
      %v4739 = vld [vmem:[%s4734 + $0x20] sm:$0xff]
      %v4740 = vld [vmem:[%s4734 + $0x28] sm:$0xff]
      %v4742 = vsel %vm283, %v4710, 0
      %v4745 = vsel %vm283, %v4711, 0
      %v4748 = vsel %vm283, %v4712, 0
      %v4751 = vsel %vm283, %v4713, 0
      %v4754 = vsel %vm283, %v4714, 0
      %v4757 = vsel %vm283, %v4715, 0
      %v4760 = vsel %vm283, %v4716, 0
      %v4763 = vsel %vm283, %v4717, 0
      %v4766 = vsel %vm283, %v4718, 0
      %v4769 = vsel %vm283, %v4719, 0
      %v4772 = vsel %vm283, %v4720, 0
      %v4775 = vsel %vm283, %v4721, 0
      %v4778 = vsel %vm283, %v4722, 0
      %v4781 = vsel %vm283, %v4723, 0
      %v4784 = vsel %vm283, %v4724, 0
      %v4787 = vsel %vm283, %v4725, 0
      %v4790 = vsel %vm283, %v4726, 0
      %v4793 = vsel %vm283, %v4727, 0
      %v4796 = vsel %vm283, %v4728, 0
      %v4799 = vsel %vm283, %v4729, 0
      %v4802 = vsel %vm283, %v4730, 0
      %v4805 = vsel %vm283, %v4731, 0
      %v4808 = vsel %vm283, %v4732, 0
      %v4811 = vsel %vm283, %v4733, 0
      %4813 = vmatpush.msra.mxu0 0.0
      %4814 = vmatpush.msra.mxu0 0.0
      %4815 = vmatpush.msra.mxu0 0.0
      %4816 = vmatpush.msra.mxu0 0.0
      %4817 = vmatpush.msra.mxu0 0.0
      %4818 = vmatpush.msra.mxu0 0.0
      %4819 = vmatpush.msra.mxu0 0.0
      %4820 = vmatpush.msra.mxu0 0.0
      %4821 = vmatpush.msra.mxu0 0.0
      %4822 = vmatpush.msra.mxu0 0.0
      %4823 = vmatpush.msra.mxu0 %v4740
      %4824 = vmatpush.msra.mxu0 %v4739
      %4825 = vmatpush.msra.mxu0 %v4738
      %4826 = vmatpush.msra.mxu0 %v4737
      %4827 = vmatpush.msra.mxu0 %v4736
      %4828 = vmatpush.msra.mxu0 %v4735
      %4829 = vmatmul.f32.gmra.mxu0 %v4742
      %v4830 = vpop.f32.mrf.mxu0
      %v4831 = vadd.f32 0.0, %v4830
      %4832 = vmatmul.f32.gmra.mxu0 %v4745
      %v4833 = vpop.f32.mrf.mxu0
      %v4834 = vadd.f32 0.0, %v4833
      %4835 = vmatmul.f32.gmra.mxu0 %v4748
      %v4836 = vpop.f32.mrf.mxu0
      %v4837 = vadd.f32 0.0, %v4836
      %4838 = vmatmul.f32.gmra.mxu0 %v4751
      %v4839 = vpop.f32.mrf.mxu0
      %v4840 = vadd.f32 0.0, %v4839
      %4841 = vmatmul.f32.gmra.mxu0 %v4754
      %v4842 = vpop.f32.mrf.mxu0
      %v4843 = vadd.f32 0.0, %v4842
      %4844 = vmatmul.f32.gmra.mxu0 %v4757
      %v4845 = vpop.f32.mrf.mxu0
      %v4846 = vadd.f32 0.0, %v4845
      %4847 = vmatmul.f32.gmra.mxu0 %v4760
      %v4848 = vpop.f32.mrf.mxu0
      %v4849 = vadd.f32 0.0, %v4848
      %4850 = vmatmul.f32.gmra.mxu0 %v4763
      %v4851 = vpop.f32.mrf.mxu0
      %v4852 = vadd.f32 0.0, %v4851
      %4853 = vmatmul.f32.gmra.mxu0 %v4766
      %v4854 = vpop.f32.mrf.mxu0
      %v4855 = vadd.f32 0.0, %v4854
      %4856 = vmatmul.f32.gmra.mxu0 %v4769
      %v4857 = vpop.f32.mrf.mxu0
      %v4858 = vadd.f32 0.0, %v4857
      %4859 = vmatmul.f32.gmra.mxu0 %v4772
      %v4860 = vpop.f32.mrf.mxu0
      %v4861 = vadd.f32 0.0, %v4860
      %4862 = vmatmul.f32.gmra.mxu0 %v4775
      %v4863 = vpop.f32.mrf.mxu0
      %v4864 = vadd.f32 0.0, %v4863
      %4865 = vmatmul.f32.gmra.mxu0 %v4778
      %v4866 = vpop.f32.mrf.mxu0
      %v4867 = vadd.f32 0.0, %v4866
      %4868 = vmatmul.f32.gmra.mxu0 %v4781
      %v4869 = vpop.f32.mrf.mxu0
      %v4870 = vadd.f32 0.0, %v4869
      %4871 = vmatmul.f32.gmra.mxu0 %v4784
      %v4872 = vpop.f32.mrf.mxu0
      %v4873 = vadd.f32 0.0, %v4872
      %4874 = vmatmul.f32.gmra.mxu0 %v4787
      %v4875 = vpop.f32.mrf.mxu0
      %v4876 = vadd.f32 0.0, %v4875
      %4877 = vmatmul.f32.gmra.mxu0 %v4790
      %v4878 = vpop.f32.mrf.mxu0
      %v4879 = vadd.f32 0.0, %v4878
      %4880 = vmatmul.f32.gmra.mxu0 %v4793
      %v4881 = vpop.f32.mrf.mxu0
      %v4882 = vadd.f32 0.0, %v4881
      %4883 = vmatmul.f32.gmra.mxu0 %v4796
      %v4884 = vpop.f32.mrf.mxu0
      %v4885 = vadd.f32 0.0, %v4884
      %4886 = vmatmul.f32.gmra.mxu0 %v4799
      %v4887 = vpop.f32.mrf.mxu0
      %v4888 = vadd.f32 0.0, %v4887
      %4889 = vmatmul.f32.gmra.mxu0 %v4802
      %v4890 = vpop.f32.mrf.mxu0
      %v4891 = vadd.f32 0.0, %v4890
      %4892 = vmatmul.f32.gmra.mxu0 %v4805
      %v4893 = vpop.f32.mrf.mxu0
      %v4894 = vadd.f32 0.0, %v4893
      %4895 = vmatmul.f32.gmra.mxu0 %v4808
      %v4896 = vpop.f32.mrf.mxu0
      %v4897 = vadd.f32 0.0, %v4896
      %4898 = vmatmul.f32.gmra.mxu0 %v4811
      %v4899 = vpop.f32.mrf.mxu0
      %v4900 = vadd.f32 0.0, %v4899
      %4901 = vdwg.mxu0
      %v4902 = vadd.f32 %v4686, %v4831
      %v4903 = vadd.f32 %v4687, %v4834
      %v4904 = vadd.f32 %v4688, %v4837
      %v4905 = vadd.f32 %v4689, %v4840
      %v4906 = vadd.f32 %v4690, %v4843
      %v4907 = vadd.f32 %v4691, %v4846
      %v4908 = vadd.f32 %v4692, %v4849
      %v4909 = vadd.f32 %v4693, %v4852
      %v4910 = vadd.f32 %v4694, %v4855
      %v4911 = vadd.f32 %v4695, %v4858
      %v4912 = vadd.f32 %v4696, %v4861
      %v4913 = vadd.f32 %v4697, %v4864
      %v4914 = vadd.f32 %v4698, %v4867
      %v4915 = vadd.f32 %v4699, %v4870
      %v4916 = vadd.f32 %v4700, %v4873
      %v4917 = vadd.f32 %v4701, %v4876
      %v4918 = vadd.f32 %v4702, %v4879
      %v4919 = vadd.f32 %v4703, %v4882
      %v4920 = vadd.f32 %v4704, %v4885
      %v4921 = vadd.f32 %v4705, %v4888
      %v4922 = vadd.f32 %v4706, %v4891
      %v4923 = vadd.f32 %v4707, %v4894
      %v4924 = vadd.f32 %v4708, %v4897
      %v4925 = vadd.f32 %v4709, %v4900
      %v4926 = vld [vmem:[%s206 + $0x46] sm:$0xff]
      %v4927 = vld [vmem:[%s206 + $0x4e] sm:$0xff]
      %v4928 = vld [vmem:[%s206 + $0x56] sm:$0xff]
      %v4929 = vld [vmem:[%s206 + $0x5e] sm:$0xff]
      %v4930 = vld [vmem:[%s206 + $0x66] sm:$0xff]
      %v4931 = vld [vmem:[%s206 + $0x6e] sm:$0xff]
      %v4932 = vld [vmem:[%s206 + $0x76] sm:$0xff]
      %v4933 = vld [vmem:[%s206 + $0x7e] sm:$0xff]
      %v4934 = vld [vmem:[%s206 + $0x86] sm:$0xff]
      %v4935 = vld [vmem:[%s206 + $0x8e] sm:$0xff]
      %v4936 = vld [vmem:[%s206 + $0x96] sm:$0xff]
      %v4937 = vld [vmem:[%s206 + $0x9e] sm:$0xff]
      %v4938 = vld [vmem:[%s206 + $0xa6] sm:$0xff]
      %v4939 = vld [vmem:[%s206 + $0xae] sm:$0xff]
      %v4940 = vld [vmem:[%s206 + $0xb6] sm:$0xff]
      %v4941 = vld [vmem:[%s206 + $0xbe] sm:$0xff]
      %v4942 = vld [vmem:[%s206 + $0xc6] sm:$0xff]
      %v4943 = vld [vmem:[%s206 + $0xce] sm:$0xff]
      %v4944 = vld [vmem:[%s206 + $0xd6] sm:$0xff]
      %v4945 = vld [vmem:[%s206 + $0xde] sm:$0xff]
      %v4946 = vld [vmem:[%s206 + $0xe6] sm:$0xff]
      %v4947 = vld [vmem:[%s206 + $0xee] sm:$0xff]
      %v4948 = vld [vmem:[%s206 + $0xf6] sm:$0xff]
      %v4949 = vld [vmem:[%s206 + $0xfe] sm:$0xff]
      %s4950 = scalar_lea.vmem %s210, 1056
      %v4951 = vld [vmem:[%s4950] sm:$0xff]
      %v4952 = vld [vmem:[%s4950 + $0x8] sm:$0xff]
      %v4953 = vld [vmem:[%s4950 + $0x10] sm:$0xff]
      %v4954 = vld [vmem:[%s4950 + $0x18] sm:$0xff]
      %v4955 = vld [vmem:[%s4950 + $0x20] sm:$0xff]
      %v4956 = vld [vmem:[%s4950 + $0x28] sm:$0xff]
      %v4958 = vsel %vm283, %v4926, 0
      %v4961 = vsel %vm283, %v4927, 0
      %v4964 = vsel %vm283, %v4928, 0
      %v4967 = vsel %vm283, %v4929, 0
      %v4970 = vsel %vm283, %v4930, 0
      %v4973 = vsel %vm283, %v4931, 0
      %v4976 = vsel %vm283, %v4932, 0
      %v4979 = vsel %vm283, %v4933, 0
      %v4982 = vsel %vm283, %v4934, 0
      %v4985 = vsel %vm283, %v4935, 0
      %v4988 = vsel %vm283, %v4936, 0
      %v4991 = vsel %vm283, %v4937, 0
      %v4994 = vsel %vm283, %v4938, 0
      %v4997 = vsel %vm283, %v4939, 0
      %v5000 = vsel %vm283, %v4940, 0
      %v5003 = vsel %vm283, %v4941, 0
      %v5006 = vsel %vm283, %v4942, 0
      %v5009 = vsel %vm283, %v4943, 0
      %v5012 = vsel %vm283, %v4944, 0
      %v5015 = vsel %vm283, %v4945, 0
      %v5018 = vsel %vm283, %v4946, 0
      %v5021 = vsel %vm283, %v4947, 0
      %v5024 = vsel %vm283, %v4948, 0
      %v5027 = vsel %vm283, %v4949, 0
      %5029 = vmatpush.msra.mxu0 0.0
      %5030 = vmatpush.msra.mxu0 0.0
      %5031 = vmatpush.msra.mxu0 0.0
      %5032 = vmatpush.msra.mxu0 0.0
      %5033 = vmatpush.msra.mxu0 0.0
      %5034 = vmatpush.msra.mxu0 0.0
      %5035 = vmatpush.msra.mxu0 0.0
      %5036 = vmatpush.msra.mxu0 0.0
      %5037 = vmatpush.msra.mxu0 0.0
      %5038 = vmatpush.msra.mxu0 0.0
      %5039 = vmatpush.msra.mxu0 %v4956
      %5040 = vmatpush.msra.mxu0 %v4955
      %5041 = vmatpush.msra.mxu0 %v4954
      %5042 = vmatpush.msra.mxu0 %v4953
      %5043 = vmatpush.msra.mxu0 %v4952
      %5044 = vmatpush.msra.mxu0 %v4951
      %5045 = vmatmul.f32.gmra.mxu0 %v4958
      %v5046 = vpop.f32.mrf.mxu0
      %v5047 = vadd.f32 0.0, %v5046
      %5048 = vmatmul.f32.gmra.mxu0 %v4961
      %v5049 = vpop.f32.mrf.mxu0
      %v5050 = vadd.f32 0.0, %v5049
      %5051 = vmatmul.f32.gmra.mxu0 %v4964
      %v5052 = vpop.f32.mrf.mxu0
      %v5053 = vadd.f32 0.0, %v5052
      %5054 = vmatmul.f32.gmra.mxu0 %v4967
      %v5055 = vpop.f32.mrf.mxu0
      %v5056 = vadd.f32 0.0, %v5055
      %5057 = vmatmul.f32.gmra.mxu0 %v4970
      %v5058 = vpop.f32.mrf.mxu0
      %v5059 = vadd.f32 0.0, %v5058
      %5060 = vmatmul.f32.gmra.mxu0 %v4973
      %v5061 = vpop.f32.mrf.mxu0
      %v5062 = vadd.f32 0.0, %v5061
      %5063 = vmatmul.f32.gmra.mxu0 %v4976
      %v5064 = vpop.f32.mrf.mxu0
      %v5065 = vadd.f32 0.0, %v5064
      %5066 = vmatmul.f32.gmra.mxu0 %v4979
      %v5067 = vpop.f32.mrf.mxu0
      %v5068 = vadd.f32 0.0, %v5067
      %5069 = vmatmul.f32.gmra.mxu0 %v4982
      %v5070 = vpop.f32.mrf.mxu0
      %v5071 = vadd.f32 0.0, %v5070
      %5072 = vmatmul.f32.gmra.mxu0 %v4985
      %v5073 = vpop.f32.mrf.mxu0
      %v5074 = vadd.f32 0.0, %v5073
      %5075 = vmatmul.f32.gmra.mxu0 %v4988
      %v5076 = vpop.f32.mrf.mxu0
      %v5077 = vadd.f32 0.0, %v5076
      %5078 = vmatmul.f32.gmra.mxu0 %v4991
      %v5079 = vpop.f32.mrf.mxu0
      %v5080 = vadd.f32 0.0, %v5079
      %5081 = vmatmul.f32.gmra.mxu0 %v4994
      %v5082 = vpop.f32.mrf.mxu0
      %v5083 = vadd.f32 0.0, %v5082
      %5084 = vmatmul.f32.gmra.mxu0 %v4997
      %v5085 = vpop.f32.mrf.mxu0
      %v5086 = vadd.f32 0.0, %v5085
      %5087 = vmatmul.f32.gmra.mxu0 %v5000
      %v5088 = vpop.f32.mrf.mxu0
      %v5089 = vadd.f32 0.0, %v5088
      %5090 = vmatmul.f32.gmra.mxu0 %v5003
      %v5091 = vpop.f32.mrf.mxu0
      %v5092 = vadd.f32 0.0, %v5091
      %5093 = vmatmul.f32.gmra.mxu0 %v5006
      %v5094 = vpop.f32.mrf.mxu0
      %v5095 = vadd.f32 0.0, %v5094
      %5096 = vmatmul.f32.gmra.mxu0 %v5009
      %v5097 = vpop.f32.mrf.mxu0
      %v5098 = vadd.f32 0.0, %v5097
      %5099 = vmatmul.f32.gmra.mxu0 %v5012
      %v5100 = vpop.f32.mrf.mxu0
      %v5101 = vadd.f32 0.0, %v5100
      %5102 = vmatmul.f32.gmra.mxu0 %v5015
      %v5103 = vpop.f32.mrf.mxu0
      %v5104 = vadd.f32 0.0, %v5103
      %5105 = vmatmul.f32.gmra.mxu0 %v5018
      %v5106 = vpop.f32.mrf.mxu0
      %v5107 = vadd.f32 0.0, %v5106
      %5108 = vmatmul.f32.gmra.mxu0 %v5021
      %v5109 = vpop.f32.mrf.mxu0
      %v5110 = vadd.f32 0.0, %v5109
      %5111 = vmatmul.f32.gmra.mxu0 %v5024
      %v5112 = vpop.f32.mrf.mxu0
      %v5113 = vadd.f32 0.0, %v5112
      %5114 = vmatmul.f32.gmra.mxu0 %v5027
      %v5115 = vpop.f32.mrf.mxu0
      %v5116 = vadd.f32 0.0, %v5115
      %5117 = vdwg.mxu0
      %v5118 = vadd.f32 %v4902, %v5047
      %v5119 = vadd.f32 %v4903, %v5050
      %v5120 = vadd.f32 %v4904, %v5053
      %v5121 = vadd.f32 %v4905, %v5056
      %v5122 = vadd.f32 %v4906, %v5059
      %v5123 = vadd.f32 %v4907, %v5062
      %v5124 = vadd.f32 %v4908, %v5065
      %v5125 = vadd.f32 %v4909, %v5068
      %v5126 = vadd.f32 %v4910, %v5071
      %v5127 = vadd.f32 %v4911, %v5074
      %v5128 = vadd.f32 %v4912, %v5077
      %v5129 = vadd.f32 %v4913, %v5080
      %v5130 = vadd.f32 %v4914, %v5083
      %v5131 = vadd.f32 %v4915, %v5086
      %v5132 = vadd.f32 %v4916, %v5089
      %v5133 = vadd.f32 %v4917, %v5092
      %v5134 = vadd.f32 %v4918, %v5095
      %v5135 = vadd.f32 %v4919, %v5098
      %v5136 = vadd.f32 %v4920, %v5101
      %v5137 = vadd.f32 %v4921, %v5104
      %v5138 = vadd.f32 %v4922, %v5107
      %v5139 = vadd.f32 %v4923, %v5110
      %v5140 = vadd.f32 %v4924, %v5113
      %v5141 = vadd.f32 %v4925, %v5116
      %v5142 = vld [vmem:[%s206 + $0x47] sm:$0xff]
      %v5143 = vld [vmem:[%s206 + $0x4f] sm:$0xff]
      %v5144 = vld [vmem:[%s206 + $0x57] sm:$0xff]
      %v5145 = vld [vmem:[%s206 + $0x5f] sm:$0xff]
      %v5146 = vld [vmem:[%s206 + $0x67] sm:$0xff]
      %v5147 = vld [vmem:[%s206 + $0x6f] sm:$0xff]
      %v5148 = vld [vmem:[%s206 + $0x77] sm:$0xff]
      %v5149 = vld [vmem:[%s206 + $0x7f] sm:$0xff]
      %v5150 = vld [vmem:[%s206 + $0x87] sm:$0xff]
      %v5151 = vld [vmem:[%s206 + $0x8f] sm:$0xff]
      %v5152 = vld [vmem:[%s206 + $0x97] sm:$0xff]
      %v5153 = vld [vmem:[%s206 + $0x9f] sm:$0xff]
      %v5154 = vld [vmem:[%s206 + $0xa7] sm:$0xff]
      %v5155 = vld [vmem:[%s206 + $0xaf] sm:$0xff]
      %v5156 = vld [vmem:[%s206 + $0xb7] sm:$0xff]
      %v5157 = vld [vmem:[%s206 + $0xbf] sm:$0xff]
      %v5158 = vld [vmem:[%s206 + $0xc7] sm:$0xff]
      %v5159 = vld [vmem:[%s206 + $0xcf] sm:$0xff]
      %v5160 = vld [vmem:[%s206 + $0xd7] sm:$0xff]
      %v5161 = vld [vmem:[%s206 + $0xdf] sm:$0xff]
      %v5162 = vld [vmem:[%s206 + $0xe7] sm:$0xff]
      %v5163 = vld [vmem:[%s206 + $0xef] sm:$0xff]
      %v5164 = vld [vmem:[%s206 + $0xf7] sm:$0xff]
      %v5165 = vld [vmem:[%s206 + $0xff] sm:$0xff]
      %s5166 = scalar_lea.vmem %s210, 1104
      %v5167 = vld [vmem:[%s5166] sm:$0xff]
      %v5168 = vld [vmem:[%s5166 + $0x8] sm:$0xff]
      %v5169 = vld [vmem:[%s5166 + $0x10] sm:$0xff]
      %v5170 = vld [vmem:[%s5166 + $0x18] sm:$0xff]
      %v5171 = vld [vmem:[%s5166 + $0x20] sm:$0xff]
      %v5172 = vld [vmem:[%s5166 + $0x28] sm:$0xff]
      %v5174 = vsel %vm283, %v5142, 0
      %v5177 = vsel %vm283, %v5143, 0
      %v5180 = vsel %vm283, %v5144, 0
      %v5183 = vsel %vm283, %v5145, 0
      %v5186 = vsel %vm283, %v5146, 0
      %v5189 = vsel %vm283, %v5147, 0
      %v5192 = vsel %vm283, %v5148, 0
      %v5195 = vsel %vm283, %v5149, 0
      %v5198 = vsel %vm283, %v5150, 0
      %v5201 = vsel %vm283, %v5151, 0
      %v5204 = vsel %vm283, %v5152, 0
      %v5207 = vsel %vm283, %v5153, 0
      %v5210 = vsel %vm283, %v5154, 0
      %v5213 = vsel %vm283, %v5155, 0
      %v5216 = vsel %vm283, %v5156, 0
      %v5219 = vsel %vm283, %v5157, 0
      %v5222 = vsel %vm283, %v5158, 0
      %v5225 = vsel %vm283, %v5159, 0
      %v5228 = vsel %vm283, %v5160, 0
      %v5231 = vsel %vm283, %v5161, 0
      %v5234 = vsel %vm283, %v5162, 0
      %v5237 = vsel %vm283, %v5163, 0
      %v5240 = vsel %vm283, %v5164, 0
      %v5243 = vsel %vm283, %v5165, 0
      %5245 = vmatpush.msra.mxu0 0.0
      %5246 = vmatpush.msra.mxu0 0.0
      %5247 = vmatpush.msra.mxu0 0.0
      %5248 = vmatpush.msra.mxu0 0.0
      %5249 = vmatpush.msra.mxu0 0.0
      %5250 = vmatpush.msra.mxu0 0.0
      %5251 = vmatpush.msra.mxu0 0.0
      %5252 = vmatpush.msra.mxu0 0.0
      %5253 = vmatpush.msra.mxu0 0.0
      %5254 = vmatpush.msra.mxu0 0.0
      %5255 = vmatpush.msra.mxu0 %v5172
      %5256 = vmatpush.msra.mxu0 %v5171
      %5257 = vmatpush.msra.mxu0 %v5170
      %5258 = vmatpush.msra.mxu0 %v5169
      %5259 = vmatpush.msra.mxu0 %v5168
      %5260 = vmatpush.msra.mxu0 %v5167
      %5261 = vmatmul.f32.gmra.mxu0 %v5174
      %v5262 = vpop.f32.mrf.mxu0
      %v5263 = vadd.f32 0.0, %v5262
      %5264 = vmatmul.f32.gmra.mxu0 %v5177
      %v5265 = vpop.f32.mrf.mxu0
      %v5266 = vadd.f32 0.0, %v5265
      %5267 = vmatmul.f32.gmra.mxu0 %v5180
      %v5268 = vpop.f32.mrf.mxu0
      %v5269 = vadd.f32 0.0, %v5268
      %5270 = vmatmul.f32.gmra.mxu0 %v5183
      %v5271 = vpop.f32.mrf.mxu0
      %v5272 = vadd.f32 0.0, %v5271
      %5273 = vmatmul.f32.gmra.mxu0 %v5186
      %v5274 = vpop.f32.mrf.mxu0
      %v5275 = vadd.f32 0.0, %v5274
      %5276 = vmatmul.f32.gmra.mxu0 %v5189
      %v5277 = vpop.f32.mrf.mxu0
      %v5278 = vadd.f32 0.0, %v5277
      %5279 = vmatmul.f32.gmra.mxu0 %v5192
      %v5280 = vpop.f32.mrf.mxu0
      %v5281 = vadd.f32 0.0, %v5280
      %5282 = vmatmul.f32.gmra.mxu0 %v5195
      %v5283 = vpop.f32.mrf.mxu0
      %v5284 = vadd.f32 0.0, %v5283
      %5285 = vmatmul.f32.gmra.mxu0 %v5198
      %v5286 = vpop.f32.mrf.mxu0
      %v5287 = vadd.f32 0.0, %v5286
      %5288 = vmatmul.f32.gmra.mxu0 %v5201
      %v5289 = vpop.f32.mrf.mxu0
      %v5290 = vadd.f32 0.0, %v5289
      %5291 = vmatmul.f32.gmra.mxu0 %v5204
      %v5292 = vpop.f32.mrf.mxu0
      %v5293 = vadd.f32 0.0, %v5292
      %5294 = vmatmul.f32.gmra.mxu0 %v5207
      %v5295 = vpop.f32.mrf.mxu0
      %v5296 = vadd.f32 0.0, %v5295
      %5297 = vmatmul.f32.gmra.mxu0 %v5210
      %v5298 = vpop.f32.mrf.mxu0
      %v5299 = vadd.f32 0.0, %v5298
      %5300 = vmatmul.f32.gmra.mxu0 %v5213
      %v5301 = vpop.f32.mrf.mxu0
      %v5302 = vadd.f32 0.0, %v5301
      %5303 = vmatmul.f32.gmra.mxu0 %v5216
      %v5304 = vpop.f32.mrf.mxu0
      %v5305 = vadd.f32 0.0, %v5304
      %5306 = vmatmul.f32.gmra.mxu0 %v5219
      %v5307 = vpop.f32.mrf.mxu0
      %v5308 = vadd.f32 0.0, %v5307
      %5309 = vmatmul.f32.gmra.mxu0 %v5222
      %v5310 = vpop.f32.mrf.mxu0
      %v5311 = vadd.f32 0.0, %v5310
      %5312 = vmatmul.f32.gmra.mxu0 %v5225
      %v5313 = vpop.f32.mrf.mxu0
      %v5314 = vadd.f32 0.0, %v5313
      %5315 = vmatmul.f32.gmra.mxu0 %v5228
      %v5316 = vpop.f32.mrf.mxu0
      %v5317 = vadd.f32 0.0, %v5316
      %5318 = vmatmul.f32.gmra.mxu0 %v5231
      %v5319 = vpop.f32.mrf.mxu0
      %v5320 = vadd.f32 0.0, %v5319
      %5321 = vmatmul.f32.gmra.mxu0 %v5234
      %v5322 = vpop.f32.mrf.mxu0
      %v5323 = vadd.f32 0.0, %v5322
      %5324 = vmatmul.f32.gmra.mxu0 %v5237
      %v5325 = vpop.f32.mrf.mxu0
      %v5326 = vadd.f32 0.0, %v5325
      %5327 = vmatmul.f32.gmra.mxu0 %v5240
      %v5328 = vpop.f32.mrf.mxu0
      %v5329 = vadd.f32 0.0, %v5328
      %5330 = vmatmul.f32.gmra.mxu0 %v5243
      %v5331 = vpop.f32.mrf.mxu0
      %v5332 = vadd.f32 0.0, %v5331
      %5333 = vdwg.mxu0
      %v5334 = vadd.f32 %v5118, %v5263
      %v5335 = vadd.f32 %v5119, %v5266
      %v5336 = vadd.f32 %v5120, %v5269
      %v5337 = vadd.f32 %v5121, %v5272
      %v5338 = vadd.f32 %v5122, %v5275
      %v5339 = vadd.f32 %v5123, %v5278
      %v5340 = vadd.f32 %v5124, %v5281
      %v5341 = vadd.f32 %v5125, %v5284
      %v5342 = vadd.f32 %v5126, %v5287
      %v5343 = vadd.f32 %v5127, %v5290
      %v5344 = vadd.f32 %v5128, %v5293
      %v5345 = vadd.f32 %v5129, %v5296
      %v5346 = vadd.f32 %v5130, %v5299
      %v5347 = vadd.f32 %v5131, %v5302
      %v5348 = vadd.f32 %v5132, %v5305
      %v5349 = vadd.f32 %v5133, %v5308
      %v5350 = vadd.f32 %v5134, %v5311
      %v5351 = vadd.f32 %v5135, %v5314
      %v5352 = vadd.f32 %v5136, %v5317
      %v5353 = vadd.f32 %v5137, %v5320
      %v5354 = vadd.f32 %v5138, %v5323
      %v5355 = vadd.f32 %v5139, %v5326
      %v5356 = vadd.f32 %v5140, %v5329
      %v5357 = vadd.f32 %v5141, %v5332
      %v5358 = vld [vmem:[%s206 + $0x48] sm:$0xff]
      %v5359 = vld [vmem:[%s206 + $0x50] sm:$0xff]
      %v5360 = vld [vmem:[%s206 + $0x58] sm:$0xff]
      %v5361 = vld [vmem:[%s206 + $0x60] sm:$0xff]
      %v5362 = vld [vmem:[%s206 + $0x68] sm:$0xff]
      %v5363 = vld [vmem:[%s206 + $0x70] sm:$0xff]
      %v5364 = vld [vmem:[%s206 + $0x78] sm:$0xff]
      %v5365 = vld [vmem:[%s206 + $0x80] sm:$0xff]
      %v5366 = vld [vmem:[%s206 + $0x88] sm:$0xff]
      %v5367 = vld [vmem:[%s206 + $0x90] sm:$0xff]
      %v5368 = vld [vmem:[%s206 + $0x98] sm:$0xff]
      %v5369 = vld [vmem:[%s206 + $0xa0] sm:$0xff]
      %v5370 = vld [vmem:[%s206 + $0xa8] sm:$0xff]
      %v5371 = vld [vmem:[%s206 + $0xb0] sm:$0xff]
      %v5372 = vld [vmem:[%s206 + $0xb8] sm:$0xff]
      %v5373 = vld [vmem:[%s206 + $0xc0] sm:$0xff]
      %v5374 = vld [vmem:[%s206 + $0xc8] sm:$0xff]
      %v5375 = vld [vmem:[%s206 + $0xd0] sm:$0xff]
      %v5376 = vld [vmem:[%s206 + $0xd8] sm:$0xff]
      %v5377 = vld [vmem:[%s206 + $0xe0] sm:$0xff]
      %v5378 = vld [vmem:[%s206 + $0xe8] sm:$0xff]
      %v5379 = vld [vmem:[%s206 + $0xf0] sm:$0xff]
      %v5380 = vld [vmem:[%s206 + $0xf8] sm:$0xff]
      %v5381 = vld [vmem:[%s206 + $0x100] sm:$0xff]
      %s5382 = scalar_lea.vmem %s210, 1152
      %v5383 = vld [vmem:[%s5382] sm:$0xff]
      %v5384 = vld [vmem:[%s5382 + $0x8] sm:$0xff]
      %v5385 = vld [vmem:[%s5382 + $0x10] sm:$0xff]
      %v5386 = vld [vmem:[%s5382 + $0x18] sm:$0xff]
      %v5387 = vld [vmem:[%s5382 + $0x20] sm:$0xff]
      %v5388 = vld [vmem:[%s5382 + $0x28] sm:$0xff]
      %v5390 = vsel %vm283, %v5358, 0
      %v5393 = vsel %vm283, %v5359, 0
      %v5396 = vsel %vm283, %v5360, 0
      %v5399 = vsel %vm283, %v5361, 0
      %v5402 = vsel %vm283, %v5362, 0
      %v5405 = vsel %vm283, %v5363, 0
      %v5408 = vsel %vm283, %v5364, 0
      %v5411 = vsel %vm283, %v5365, 0
      %v5414 = vsel %vm283, %v5366, 0
      %v5417 = vsel %vm283, %v5367, 0
      %v5420 = vsel %vm283, %v5368, 0
      %v5423 = vsel %vm283, %v5369, 0
      %v5426 = vsel %vm283, %v5370, 0
      %v5429 = vsel %vm283, %v5371, 0
      %v5432 = vsel %vm283, %v5372, 0
      %v5435 = vsel %vm283, %v5373, 0
      %v5438 = vsel %vm283, %v5374, 0
      %v5441 = vsel %vm283, %v5375, 0
      %v5444 = vsel %vm283, %v5376, 0
      %v5447 = vsel %vm283, %v5377, 0
      %v5450 = vsel %vm283, %v5378, 0
      %v5453 = vsel %vm283, %v5379, 0
      %v5456 = vsel %vm283, %v5380, 0
      %v5459 = vsel %vm283, %v5381, 0
      %5461 = vmatpush.msra.mxu0 0.0
      %5462 = vmatpush.msra.mxu0 0.0
      %5463 = vmatpush.msra.mxu0 0.0
      %5464 = vmatpush.msra.mxu0 0.0
      %5465 = vmatpush.msra.mxu0 0.0
      %5466 = vmatpush.msra.mxu0 0.0
      %5467 = vmatpush.msra.mxu0 0.0
      %5468 = vmatpush.msra.mxu0 0.0
      %5469 = vmatpush.msra.mxu0 0.0
      %5470 = vmatpush.msra.mxu0 0.0
      %5471 = vmatpush.msra.mxu0 %v5388
      %5472 = vmatpush.msra.mxu0 %v5387
      %5473 = vmatpush.msra.mxu0 %v5386
      %5474 = vmatpush.msra.mxu0 %v5385
      %5475 = vmatpush.msra.mxu0 %v5384
      %5476 = vmatpush.msra.mxu0 %v5383
      %5477 = vmatmul.f32.gmra.mxu0 %v5390
      %v5478 = vpop.f32.mrf.mxu0
      %v5479 = vadd.f32 0.0, %v5478
      %5480 = vmatmul.f32.gmra.mxu0 %v5393
      %v5481 = vpop.f32.mrf.mxu0
      %v5482 = vadd.f32 0.0, %v5481
      %5483 = vmatmul.f32.gmra.mxu0 %v5396
      %v5484 = vpop.f32.mrf.mxu0
      %v5485 = vadd.f32 0.0, %v5484
      %5486 = vmatmul.f32.gmra.mxu0 %v5399
      %v5487 = vpop.f32.mrf.mxu0
      %v5488 = vadd.f32 0.0, %v5487
      %5489 = vmatmul.f32.gmra.mxu0 %v5402
      %v5490 = vpop.f32.mrf.mxu0
      %v5491 = vadd.f32 0.0, %v5490
      %5492 = vmatmul.f32.gmra.mxu0 %v5405
      %v5493 = vpop.f32.mrf.mxu0
      %v5494 = vadd.f32 0.0, %v5493
      %5495 = vmatmul.f32.gmra.mxu0 %v5408
      %v5496 = vpop.f32.mrf.mxu0
      %v5497 = vadd.f32 0.0, %v5496
      %5498 = vmatmul.f32.gmra.mxu0 %v5411
      %v5499 = vpop.f32.mrf.mxu0
      %v5500 = vadd.f32 0.0, %v5499
      %5501 = vmatmul.f32.gmra.mxu0 %v5414
      %v5502 = vpop.f32.mrf.mxu0
      %v5503 = vadd.f32 0.0, %v5502
      %5504 = vmatmul.f32.gmra.mxu0 %v5417
      %v5505 = vpop.f32.mrf.mxu0
      %v5506 = vadd.f32 0.0, %v5505
      %5507 = vmatmul.f32.gmra.mxu0 %v5420
      %v5508 = vpop.f32.mrf.mxu0
      %v5509 = vadd.f32 0.0, %v5508
      %5510 = vmatmul.f32.gmra.mxu0 %v5423
      %v5511 = vpop.f32.mrf.mxu0
      %v5512 = vadd.f32 0.0, %v5511
      %5513 = vmatmul.f32.gmra.mxu0 %v5426
      %v5514 = vpop.f32.mrf.mxu0
      %v5515 = vadd.f32 0.0, %v5514
      %5516 = vmatmul.f32.gmra.mxu0 %v5429
      %v5517 = vpop.f32.mrf.mxu0
      %v5518 = vadd.f32 0.0, %v5517
      %5519 = vmatmul.f32.gmra.mxu0 %v5432
      %v5520 = vpop.f32.mrf.mxu0
      %v5521 = vadd.f32 0.0, %v5520
      %5522 = vmatmul.f32.gmra.mxu0 %v5435
      %v5523 = vpop.f32.mrf.mxu0
      %v5524 = vadd.f32 0.0, %v5523
      %5525 = vmatmul.f32.gmra.mxu0 %v5438
      %v5526 = vpop.f32.mrf.mxu0
      %v5527 = vadd.f32 0.0, %v5526
      %5528 = vmatmul.f32.gmra.mxu0 %v5441
      %v5529 = vpop.f32.mrf.mxu0
      %v5530 = vadd.f32 0.0, %v5529
      %5531 = vmatmul.f32.gmra.mxu0 %v5444
      %v5532 = vpop.f32.mrf.mxu0
      %v5533 = vadd.f32 0.0, %v5532
      %5534 = vmatmul.f32.gmra.mxu0 %v5447
      %v5535 = vpop.f32.mrf.mxu0
      %v5536 = vadd.f32 0.0, %v5535
      %5537 = vmatmul.f32.gmra.mxu0 %v5450
      %v5538 = vpop.f32.mrf.mxu0
      %v5539 = vadd.f32 0.0, %v5538
      %5540 = vmatmul.f32.gmra.mxu0 %v5453
      %v5541 = vpop.f32.mrf.mxu0
      %v5542 = vadd.f32 0.0, %v5541
      %5543 = vmatmul.f32.gmra.mxu0 %v5456
      %v5544 = vpop.f32.mrf.mxu0
      %v5545 = vadd.f32 0.0, %v5544
      %5546 = vmatmul.f32.gmra.mxu0 %v5459
      %v5547 = vpop.f32.mrf.mxu0
      %v5548 = vadd.f32 0.0, %v5547
      %5549 = vdwg.mxu0
      %v5550 = vadd.f32 %v5334, %v5479
      %v5551 = vadd.f32 %v5335, %v5482
      %v5552 = vadd.f32 %v5336, %v5485
      %v5553 = vadd.f32 %v5337, %v5488
      %v5554 = vadd.f32 %v5338, %v5491
      %v5555 = vadd.f32 %v5339, %v5494
      %v5556 = vadd.f32 %v5340, %v5497
      %v5557 = vadd.f32 %v5341, %v5500
      %v5558 = vadd.f32 %v5342, %v5503
      %v5559 = vadd.f32 %v5343, %v5506
      %v5560 = vadd.f32 %v5344, %v5509
      %v5561 = vadd.f32 %v5345, %v5512
      %v5562 = vadd.f32 %v5346, %v5515
      %v5563 = vadd.f32 %v5347, %v5518
      %v5564 = vadd.f32 %v5348, %v5521
      %v5565 = vadd.f32 %v5349, %v5524
      %v5566 = vadd.f32 %v5350, %v5527
      %v5567 = vadd.f32 %v5351, %v5530
      %v5568 = vadd.f32 %v5352, %v5533
      %v5569 = vadd.f32 %v5353, %v5536
      %v5570 = vadd.f32 %v5354, %v5539
      %v5571 = vadd.f32 %v5355, %v5542
      %v5572 = vadd.f32 %v5356, %v5545
      %v5573 = vadd.f32 %v5357, %v5548
      %v5574 = vld [vmem:[%s213] sm:$0x1]
      %v5576 = vperm.slane %v5574, 0
      %v5578 = vadd.f32 %v5550, %v5576
      %v5579 = vadd.f32 %v5551, %v5576
      %v5580 = vadd.f32 %v5552, %v5576
      %v5581 = vadd.f32 %v5553, %v5576
      %v5582 = vadd.f32 %v5554, %v5576
      %v5583 = vadd.f32 %v5555, %v5576
      %v5584 = vadd.f32 %v5556, %v5576
      %v5585 = vadd.f32 %v5557, %v5576
      %v5586 = vadd.f32 %v5558, %v5576
      %v5587 = vadd.f32 %v5559, %v5576
      %v5588 = vadd.f32 %v5560, %v5576
      %v5589 = vadd.f32 %v5561, %v5576
      %v5590 = vadd.f32 %v5562, %v5576
      %v5591 = vadd.f32 %v5563, %v5576
      %v5592 = vadd.f32 %v5564, %v5576
      %v5593 = vadd.f32 %v5565, %v5576
      %v5594 = vadd.f32 %v5566, %v5576
      %v5595 = vadd.f32 %v5567, %v5576
      %v5596 = vadd.f32 %v5568, %v5576
      %v5597 = vadd.f32 %v5569, %v5576
      %v5598 = vadd.f32 %v5570, %v5576
      %v5599 = vadd.f32 %v5571, %v5576
      %v5600 = vadd.f32 %v5572, %v5576
      %v5601 = vadd.f32 %v5573, %v5576
      %vm5602 = vcmask 261120
      %5603 = vst.msk [vmem:[%s221] sm:$0xff] %vm5602, %v5578
      %5604 = vst.msk [vmem:[%s221 + $0x8] sm:$0xff] %vm5602, %v5579
      %5605 = vst.msk [vmem:[%s221 + $0x10] sm:$0xff] %vm5602, %v5580
      %5606 = vst.msk [vmem:[%s221 + $0x18] sm:$0xff] %vm5602, %v5581
      %5607 = vst.msk [vmem:[%s221 + $0x20] sm:$0xff] %vm5602, %v5582
      %5608 = vst.msk [vmem:[%s221 + $0x28] sm:$0xff] %vm5602, %v5583
      %5609 = vst.msk [vmem:[%s221 + $0x30] sm:$0xff] %vm5602, %v5584
      %5610 = vst.msk [vmem:[%s221 + $0x38] sm:$0xff] %vm5602, %v5585
      %5611 = vst.msk [vmem:[%s221 + $0x40] sm:$0xff] %vm5602, %v5586
      %5612 = vst.msk [vmem:[%s221 + $0x48] sm:$0xff] %vm5602, %v5587
      %5613 = vst.msk [vmem:[%s221 + $0x50] sm:$0xff] %vm5602, %v5588
      %5614 = vst.msk [vmem:[%s221 + $0x58] sm:$0xff] %vm5602, %v5589
      %5615 = vst.msk [vmem:[%s221 + $0x60] sm:$0xff] %vm5602, %v5590
      %5616 = vst.msk [vmem:[%s221 + $0x68] sm:$0xff] %vm5602, %v5591
      %5617 = vst.msk [vmem:[%s221 + $0x70] sm:$0xff] %vm5602, %v5592
      %5618 = vst.msk [vmem:[%s221 + $0x78] sm:$0xff] %vm5602, %v5593
      %5619 = vst.msk [vmem:[%s221 + $0x80] sm:$0xff] %vm5602, %v5594
      %5620 = vst.msk [vmem:[%s221 + $0x88] sm:$0xff] %vm5602, %v5595
      %5621 = vst.msk [vmem:[%s221 + $0x90] sm:$0xff] %vm5602, %v5596
      %5622 = vst.msk [vmem:[%s221 + $0x98] sm:$0xff] %vm5602, %v5597
      %5623 = vst.msk [vmem:[%s221 + $0xa0] sm:$0xff] %vm5602, %v5598
      %5624 = vst.msk [vmem:[%s221 + $0xa8] sm:$0xff] %vm5602, %v5599
      %5625 = vst.msk [vmem:[%s221 + $0xb0] sm:$0xff] %vm5602, %v5600
      %5626 = vst.msk [vmem:[%s221 + $0xb8] sm:$0xff] %vm5602, %v5601
      %p5627 = scmp.lt.s32.totalorder %s19, 1
      %s5628 = scalar_select %p5627, %s19, 1
      %p5629 = scmp.lt.s32.totalorder %s18, 0
      %s5630 = scalar_select %p5629, %s18, 0
      %s5631 = smul.addr %s5628, 24
      %s5632 = sadd.s32 %s5630, %s5631
      %s5633 = smul.addr %s5632, 8
      %s5634 = scalar_lea.vmem %s3, %s5633
      // Predicated region
      $region33: #{tfblock_v4_forward.7} parent=31 // pred_check
        %p5635 = pneg %p124
      $region34: #{tfblock_v4_forward.7} parent=31 // pred_check_branch
        %5637 = sbr.rel (%p5635) target = $region36
      $region35: #{tfblock_v4_forward.7} parent=31 // pred_region
        _
      $region36: #{tfblock_v4_forward.7} parent=31 // pred_fallthru
        _
    $region32: #{tfblock_v4_forward.7} parent=5 // pred_fallthru
      _
    %p5638 = scmp.le.s32.totalorder 2, %s9
    // Predicated region
    $region37: #{tfblock_v4_forward.7} parent=5 // pred_check
      %p5639 = pneg %p5638
    $region38: #{tfblock_v4_forward.7} parent=5 // pred_check_branch
      %5641 = sbr.rel (%p5639) target = $region40
    $region39: #{tfblock_v4_forward.7} parent=5 // pred_region
      %s5642 = ssub.s32 %s9, 2
      // Predicated region
      $region41: #{tfblock_v4_forward.7} parent=39 // pred_check
        %p5643 = pneg %p130
      $region42: #{tfblock_v4_forward.7} parent=39 // pred_check_branch
        %5645 = sbr.rel (%p5643) target = $region44
      $region43: #{tfblock_v4_forward.7} parent=39 // pred_region
        %p5646 = scmp.lt.s32.totalorder %s21, 1
        %s5647 = scalar_select %p5646, %s21, 1
        %p5648 = scmp.lt.s32.totalorder %s20, 0
        %s5649 = scalar_select %p5648, %s20, 0
        %s5650 = smul.addr %s5647, 24
        %s5651 = sadd.s32 %s5649, %s5650
        %s5652 = smul.addr %s5651, 8
        %s5653 = scalar_lea.vmem %s3, %s5652
      $region44: #{tfblock_v4_forward.7} parent=39 // pred_fallthru
        _
    $region40: #{tfblock_v4_forward.7} parent=5 // pred_fallthru
      _
  $region6: #{tfblock_v4_forward.7} parent=0 // loop_footer
    %s13 = sadd.s32 1, %s9
  $region7: #{tfblock_v4_forward.7} parent=0 // loop_footer_branch
    %8 = sbr.rel target = $region3
  $region8: #{tfblock_v4_forward.7} parent=0 // loop_exit
    _

</llo_original>
